<compile_context>
chip_gen: v7x
topology: tpu7x:2x2x1
jax: 0.10.0
libtpu: 0.0.40
codegen_flags: <defaults>
</compile_context>

<pallas_src>
import functools

import jax
import jax.numpy as jnp
from jax import lax
from jax.experimental import pallas as pl
from jax.experimental.pallas import tpu as pltpu


def _round_up(x, m):
    return (x + m - 1) // m * m


def _decoder_kernel(
    feat_ref,        # (TB, P, F)   encoder features (batch tile)
    att1_ref,        # (TB, P, A)   precomputed encoder attention projection
    emb_ref,         # (L, TB, E)   time-major token embeddings
    w_init_ref,      # (F, 2H)      [W_init_h | W_init_c]
    b_init_ref,      # (1, 2H)
    w_hcat_ref,      # (H, A+F+4H)  [W_dec | W_fbeta | W_hh]
    b_hcat_ref,      # (1, A+F+4H)
    w_ih_ref,        # (E+F, 4H)    LSTMCell W_ih (input part, un-split)
    b_ih_ref,        # (1, 4H)
    w_full_ref,      # (1, A)
    b_full_ref,      # (1, 1)
    w_fc_ref,        # (H, Vp)      vocab head, lane-padded
    b_fc_ref,        # (1, Vp)
    preds_ref,       # (L, TB, Vp)  time-major, lane-dense
    alphas_ref,      # (L, TB, Pp)  time-major, lane-dense
    *,
    hidden_size, att_size, feat_size, num_pixels,
):
    H, A, F, P = hidden_size, att_size, feat_size, num_pixels
    L = emb_ref.shape[0]
    TB = feat_ref.shape[0]
    Pp = alphas_ref.shape[-1]

    feats = feat_ref[...]                                         # (TB, P, F)
    att1 = att1_ref[...]                                          # (TB, P, A)

    # Loop-invariant weight loads / constants (hoisted out of the recurrence).
    w_hcat = w_hcat_ref[...]
    b_hcat = b_hcat_ref[...]
    w_ih = w_ih_ref[...]
    b_ih = b_ih_ref[...]
    w_full = w_full_ref[...].reshape(1, 1, A)
    b_full = b_full_ref[...]
    w_fc = w_fc_ref[...]
    b_fc = b_fc_ref[...]
    alpha_lane_pad = (jnp.zeros((TB, Pp - P), jnp.float32)
                      if Pp > P else None)

    # ---- init: h0/c0 = mean(features) @ [W_init_h | W_init_c] + b (fused) ----
    fmean = jnp.mean(feats, axis=1)                               # (TB, F)
    init = jnp.dot(fmean, w_init_ref[...],
                   preferred_element_type=jnp.float32) + b_init_ref[...]
    h0 = init[:, :H]
    c0 = init[:, H:]

    def step(t, carry):
        h, c = carry

        # One fused matmul for everything that consumes h:
        #   [ att2 | f_beta pre-activation | W_hh gates ]
        hcat = jnp.dot(h, w_hcat, preferred_element_type=jnp.float32) + b_hcat
        att2 = hcat[:, :A]                                        # (TB, A)
        fbeta_pre = hcat[:, A:A + F]                              # (TB, F)
        hh_gates = hcat[:, A + F:]                                # (TB, 4H)

        # ---- attention (att1 precomputed, loop-invariant) ----
        att = jnp.maximum(att1 + att2[:, None, :], 0.0)           # (TB, P, A)
        e = jnp.sum(att * w_full, axis=-1) + b_full               # (TB, P)
        e_max = jnp.max(e, axis=1, keepdims=True)
        p_exp = jnp.exp(e - e_max)
        denom = jnp.sum(p_exp, axis=1, keepdims=True)
        alpha = p_exp * pl.reciprocal(denom, approx=True)         # (TB, P)
        context = jnp.sum(feats * alpha[:, :, None], axis=1)      # (TB, F)

        gate = jax.nn.sigmoid(fbeta_pre)
        gated = gate * context                                    # (TB, F)

        # ---- LSTMCell([emb_t, gated_context], (h, c)) ----
        emb_t = emb_ref[t]                                        # (TB, E)
        x = jnp.concatenate([emb_t, gated], axis=-1)              # (TB, E+F)
        gates = (jnp.dot(x, w_ih, preferred_element_type=jnp.float32)
                 + b_ih + hh_gates)                               # (TB, 4H)
        i_g = jax.nn.sigmoid(gates[:, 0 * H:1 * H])
        f_g = jax.nn.sigmoid(gates[:, 1 * H:2 * H])
        g_g = jnp.tanh(gates[:, 2 * H:3 * H])
        o_g = jax.nn.sigmoid(gates[:, 3 * H:4 * H])
        c_new = f_g * c + i_g * g_g
        h_new = o_g * jnp.tanh(c_new)

        # ---- vocab head (dropout == identity in eval mode) ----
        preds = jnp.dot(h_new, w_fc, preferred_element_type=jnp.float32) + b_fc
        preds_ref[t] = preds                                      # full-lane store
        if alpha_lane_pad is not None:
            alphas_ref[t] = jnp.concatenate([alpha, alpha_lane_pad], axis=-1)
        else:
            alphas_ref[t] = alpha
        return h_new, c_new

    lax.fori_loop(0, L, step, (h0, c0), unroll=True)


def attention_decoder_forward(features, captions, p, *, batch_tile=8):
    B, P, F = features.shape
    L = captions.shape[1]
    E = p["embedding"].shape[1]
    H = p["w_hh"].shape[0]
    A = p["w_enc"].shape[1]
    V = p["w_fc"].shape[1]

    TB = batch_tile
    Bp = _round_up(B, TB)
    Vp = _round_up(V, 128)
    Pp = _round_up(P, 128)
    f32 = jnp.float32

    # --- glue: batch padding, embedding lookup, loop-invariant projections ---
    feats_p = jnp.zeros((Bp, P, F), f32).at[:B].set(features.astype(f32))
    emb = jnp.take(p["embedding"], captions, axis=0).astype(f32)   # (B, L, E)
    emb_p = jnp.zeros((Bp, L, E), f32).at[:B].set(emb)
    emb_tm = jnp.transpose(emb_p, (1, 0, 2))                       # (L, Bp, E)

    # encoder projection is loop-invariant -> hoisted out of the recurrence
    att1_pre = jnp.einsum("bpf,fa->bpa", feats_p, p["w_enc"]) + p["b_enc"]

    # --- packed / fused weights ---
    w_init = jnp.concatenate([p["w_init_h"], p["w_init_c"]], axis=1)   # (F, 2H)
    b_init = jnp.concatenate([p["b_init_h"], p["b_init_c"]], axis=1)   # (1, 2H)
    w_hcat = jnp.concatenate([p["w_dec"], p["w_fbeta"], p["w_hh"]], axis=1)
    b_hcat = jnp.concatenate([p["b_dec"], p["b_fbeta"], p["b_hh"]], axis=1)
    w_ih = jnp.concatenate([p["w_ih_emb"], p["w_ih_ctx"]], axis=0)     # (E+F, 4H)
    w_fc = jnp.pad(p["w_fc"], ((0, 0), (0, Vp - V)))                   # lane-dense
    b_fc = jnp.pad(p["b_fc"], ((0, 0), (0, Vp - V)))

    weights = [w_init, b_init, w_hcat, b_hcat, w_ih, p["b_ih"],
               p["w_full"], p["b_full"], w_fc, b_fc]

    def _full(arr):
        nd = arr.ndim
        return pl.BlockSpec(arr.shape, lambda b, _n=nd: (0,) * _n)

    in_specs = (
        [pl.BlockSpec((TB, P, F), lambda b: (b, 0, 0)),   # features (batch tile)
         pl.BlockSpec((TB, P, A), lambda b: (b, 0, 0)),   # precomputed att1
         pl.BlockSpec((L, TB, E), lambda b: (0, b, 0))]   # embeddings (time-major)
        + [_full(w) for w in weights])
    out_specs = [
        pl.BlockSpec((L, TB, Vp), lambda b: (0, b, 0)),   # predictions
        pl.BlockSpec((L, TB, Pp), lambda b: (0, b, 0)),   # alphas
    ]

    kernel = functools.partial(
        _decoder_kernel, hidden_size=H, att_size=A, feat_size=F, num_pixels=P)

    preds_tm, alphas_tm = pl.pallas_call(
        kernel,
        out_shape=(jax.ShapeDtypeStruct((L, Bp, Vp), f32),
                   jax.ShapeDtypeStruct((L, Bp, Pp), f32)),
        grid_spec=pltpu.PrefetchScalarGridSpec(
            num_scalar_prefetch=0,
            grid=(Bp // TB,),                  # batch tiles; shards across TCs on v7x
            in_specs=in_specs,
            out_specs=out_specs,
        ),
        compiler_params=pltpu.CompilerParams(
            dimension_semantics=("parallel",)),
    )(feats_p, att1_pre, emb_tm, *weights)

    predictions = jnp.transpose(preds_tm, (1, 0, 2))[:B, :, :V]
    alphas = jnp.transpose(alphas_tm, (1, 0, 2))[:B, :, :P]
    return predictions, alphas


def make_params(key, *, E, H, A, V, F):
    """Deterministic synthetic parameters. Linear weights are stored pre-transposed
    to (in_features, out_features); biases as (1, out_features)."""
    ks = jax.random.split(key, 16)
    u = lambda k, shape, s=0.1: jax.random.uniform(k, shape, jnp.float32, -s, s)
    p = {}
    p["embedding"] = u(ks[0], (V, E))                    # uniform_(-0.1, 0.1)
    p["w_init_h"], p["b_init_h"] = u(ks[1], (F, H)), u(ks[2], (1, H))
    p["w_init_c"], p["b_init_c"] = u(ks[3], (F, H)), u(ks[4], (1, H))
    p["w_enc"], p["b_enc"] = u(ks[5], (F, A)), u(ks[6], (1, A))
    p["w_dec"], p["b_dec"] = u(ks[7], (H, A)), u(ks[8], (1, A))
    p["w_full"], p["b_full"] = u(ks[9], (1, A)), u(ks[10], (1, 1))
    p["w_fbeta"], p["b_fbeta"] = u(ks[11], (H, F)), u(ks[12], (1, F))
    p["w_ih_emb"] = u(ks[13], (E, 4 * H))                # LSTMCell W_ih: emb part
    p["w_ih_ctx"] = u(ks[14], (F, 4 * H))                #                ctx part
    p["b_ih"] = u(ks[15], (1, 4 * H))
    k2 = jax.random.split(jax.random.fold_in(key, 1), 4)
    p["w_hh"], p["b_hh"] = u(k2[0], (H, 4 * H)), u(k2[1], (1, 4 * H))
    p["w_fc"] = u(k2[2], (H, V))                         # fc.weight uniform_(-0.1, 0.1)
    p["b_fc"] = jnp.zeros((1, V), jnp.float32)           # fc.bias.fill_(0)
    return p


def reference_forward(features, captions, p):
    """Pure-JAX reference mirroring the PyTorch forward (eval-mode dropout)."""
    B, P, F = features.shape
    L = captions.shape[1]
    H = p["w_hh"].shape[0]
    emb = jnp.take(p["embedding"], captions, axis=0)
    fmean = features.mean(axis=1)
    h = fmean @ p["w_init_h"] + p["b_init_h"]
    c = fmean @ p["w_init_c"] + p["b_init_c"]
    preds_l, alpha_l = [], []
    for t in range(L):
        att1 = jnp.einsum("bpf,fa->bpa", features, p["w_enc"]) + p["b_enc"]
        att2 = h @ p["w_dec"] + p["b_dec"]
        att = jax.nn.relu(att1 + att2[:, None, :])
        e = jnp.sum(att * p["w_full"][None], axis=-1) + p["b_full"]
        alpha = jax.nn.softmax(e, axis=1)
        context = jnp.sum(features * alpha[:, :, None], axis=1)
        gate = jax.nn.sigmoid(h @ p["w_fbeta"] + p["b_fbeta"])
        gated = gate * context
        gates = (emb[:, t] @ p["w_ih_emb"] + gated @ p["w_ih_ctx"] + p["b_ih"]
                 + h @ p["w_hh"] + p["b_hh"])
        i = jax.nn.sigmoid(gates[:, :H])
        f = jax.nn.sigmoid(gates[:, H:2 * H])
        g = jnp.tanh(gates[:, 2 * H:3 * H])
        o = jax.nn.sigmoid(gates[:, 3 * H:])
        c = f * c + i * g
        h = o * jnp.tanh(c)
        preds_l.append(h @ p["w_fc"] + p["b_fc"])
        alpha_l.append(alpha)
    return jnp.stack(preds_l, axis=1), jnp.stack(alpha_l, axis=1)


if __name__ == "__main__":
    # Small shapes consistent with the module's forward.
    B, P, F = 2, 8, 32                   # batch, num_pixels, feature_size
    E, H, A, V, L = 16, 32, 16, 32, 8    # embedding, hidden, attention, vocab, seq len

    key = jax.random.PRNGKey(0)
    kp, kf, kc = jax.random.split(key, 3)
    params = make_params(kp, E=E, H=H, A=A, V=V, F=F)
    features = jax.random.normal(kf, (B, P, F), jnp.float32)
    captions = jax.random.randint(kc, (B, L), 0, V, jnp.int32)

    preds, alphas = attention_decoder_forward(features, captions, params)
    preds = jax.block_until_ready(preds)
    alphas = jax.block_until_ready(alphas)

    ref_preds, ref_alphas = reference_forward(features, captions, params)
    assert preds.shape == (B, L, V) and alphas.shape == (B, L, P)
    assert jnp.allclose(preds, ref_preds, atol=2e-3, rtol=2e-3)
    assert jnp.allclose(alphas, ref_alphas, atol=2e-3, rtol=2e-3)

    print("KERNEL_OK")
</pallas_src>

<mosaic_0001>
module attributes {stable_mosaic.version = 11 : i64} {
  func.func @_decoder_kernel(%arg0: i32, %arg1: memref<8x8x32xf32, #tpu.memory_space<vmem>>, %arg2: memref<8x8x16xf32, #tpu.memory_space<vmem>>, %arg3: memref<8x8x16xf32, #tpu.memory_space<vmem>>, %arg4: memref<32x64xf32, #tpu.memory_space<vmem>>, %arg5: memref<1x64xf32, #tpu.memory_space<vmem>>, %arg6: memref<32x176xf32, #tpu.memory_space<vmem>>, %arg7: memref<1x176xf32, #tpu.memory_space<vmem>>, %arg8: memref<48x128xf32, #tpu.memory_space<vmem>>, %arg9: memref<1x128xf32, #tpu.memory_space<vmem>>, %arg10: memref<1x16xf32, #tpu.memory_space<vmem>>, %arg11: memref<1x1xf32, #tpu.memory_space<vmem>>, %arg12: memref<32x128xf32, #tpu.memory_space<vmem>>, %arg13: memref<1x128xf32, #tpu.memory_space<vmem>>, %arg14: memref<8x8x128xf32, #tpu.memory_space<vmem>>, %arg15: memref<8x8x128xf32, #tpu.memory_space<vmem>>) attributes {dimension_semantics = [#tpu.dimension_semantics<parallel>], iteration_bounds = array<i64: 1>, scalar_prefetch = 0 : i64, scratch_operands = 0 : i64, tpu.core_type = #tpu.core_type<tc>, window_params = [{transform_indices = @transform_0, window_bounds = array<i64: 8, 8, 32>}, {transform_indices = @transform_1, window_bounds = array<i64: 8, 8, 16>}, {transform_indices = @transform_2, window_bounds = array<i64: 8, 8, 16>}, {pipeline_mode = #tpu.pipeline_mode<synchronous>, transform_indices = @transform_3, window_bounds = array<i64: 32, 64>}, {pipeline_mode = #tpu.pipeline_mode<synchronous>, transform_indices = @transform_4, window_bounds = array<i64: 1, 64>}, {pipeline_mode = #tpu.pipeline_mode<synchronous>, transform_indices = @transform_5, window_bounds = array<i64: 32, 176>}, {pipeline_mode = #tpu.pipeline_mode<synchronous>, transform_indices = @transform_6, window_bounds = array<i64: 1, 176>}, {pipeline_mode = #tpu.pipeline_mode<synchronous>, transform_indices = @transform_7, window_bounds = array<i64: 48, 128>}, {pipeline_mode = #tpu.pipeline_mode<synchronous>, transform_indices = @transform_8, window_bounds = array<i64: 1, 128>}, {pipeline_mode = #tpu.pipeline_mode<synchronous>, transform_indices = @transform_9, window_bounds = array<i64: 1, 16>}, {pipeline_mode = #tpu.pipeline_mode<synchronous>, transform_indices = @transform_10, window_bounds = array<i64: 1, 1>}, {pipeline_mode = #tpu.pipeline_mode<synchronous>, transform_indices = @transform_11, window_bounds = array<i64: 32, 128>}, {pipeline_mode = #tpu.pipeline_mode<synchronous>, transform_indices = @transform_12, window_bounds = array<i64: 1, 128>}, {transform_indices = @transform_13, window_bounds = array<i64: 8, 8, 128>}, {transform_indices = @transform_14, window_bounds = array<i64: 8, 8, 128>}]} {
    %c0 = arith.constant 0 : index
    %c0_0 = arith.constant 0 : index
    %c0_1 = arith.constant 0 : index
    %0 = vector.load %arg1[%c0, %c0_0, %c0_1] : memref<8x8x32xf32, #tpu.memory_space<vmem>>, vector<8x8x32xf32>
    %c0_2 = arith.constant 0 : index
    %c0_3 = arith.constant 0 : index
    %c0_4 = arith.constant 0 : index
    %1 = vector.load %arg2[%c0_2, %c0_3, %c0_4] : memref<8x8x16xf32, #tpu.memory_space<vmem>>, vector<8x8x16xf32>
    %c0_5 = arith.constant 0 : index
    %c0_6 = arith.constant 0 : index
    %2 = vector.load %arg6[%c0_5, %c0_6] : memref<32x176xf32, #tpu.memory_space<vmem>>, vector<32x176xf32>
    %c0_7 = arith.constant 0 : index
    %c0_8 = arith.constant 0 : index
    %3 = vector.load %arg7[%c0_7, %c0_8] : memref<1x176xf32, #tpu.memory_space<vmem>>, vector<1x176xf32>
    %c0_9 = arith.constant 0 : index
    %c0_10 = arith.constant 0 : index
    %4 = vector.load %arg8[%c0_9, %c0_10] : memref<48x128xf32, #tpu.memory_space<vmem>>, vector<48x128xf32>
    %c0_11 = arith.constant 0 : index
    %c0_12 = arith.constant 0 : index
    %5 = vector.load %arg9[%c0_11, %c0_12] : memref<1x128xf32, #tpu.memory_space<vmem>>, vector<1x128xf32>
    %c0_13 = arith.constant 0 : index
    %c0_14 = arith.constant 0 : index
    %6 = vector.load %arg10[%c0_13, %c0_14] : memref<1x16xf32, #tpu.memory_space<vmem>>, vector<1x16xf32>
    %7 = vector.shape_cast %6 : vector<1x16xf32> to vector<1x1x16xf32>
    %c0_15 = arith.constant 0 : index
    %c0_16 = arith.constant 0 : index
    %8 = vector.load %arg11[%c0_15, %c0_16] : memref<1x1xf32, #tpu.memory_space<vmem>>, vector<1x1xf32>
    %c0_17 = arith.constant 0 : index
    %c0_18 = arith.constant 0 : index
    %9 = vector.load %arg12[%c0_17, %c0_18] : memref<32x128xf32, #tpu.memory_space<vmem>>, vector<32x128xf32>
    %c0_19 = arith.constant 0 : index
    %c0_20 = arith.constant 0 : index
    %10 = vector.load %arg13[%c0_19, %c0_20] : memref<1x128xf32, #tpu.memory_space<vmem>>, vector<1x128xf32>
    %cst = arith.constant 0.000000e+00 : f32
    %11 = vector.broadcast %cst : f32 to vector<8x120xf32>
    %cst_21 = arith.constant dense<0.000000e+00> : vector<8x32xf32>
    %12 = vector.multi_reduction <add>, %0, %cst_21 [1] : vector<8x8x32xf32> to vector<8x32xf32>
    %cst_22 = arith.constant 8.000000e+00 : f32
    %13 = vector.broadcast %cst_22 : f32 to vector<8x32xf32>
    %14 = arith.divf %12, %13 : vector<8x32xf32>
    %c0_23 = arith.constant 0 : index
    %c0_24 = arith.constant 0 : index
    %15 = vector.load %arg4[%c0_23, %c0_24] : memref<32x64xf32, #tpu.memory_space<vmem>>, vector<32x64xf32>
    %cst_25 = arith.constant dense<0.000000e+00> : vector<8x64xf32>
    %16 = tpu.matmul %14, %15, %cst_25 {dimension_numbers = #tpu.dot_dimension_numbers<[1], [0], [0], [1], [0, 0, 1, 1], [], []>} : vector<8x32xf32>, vector<32x64xf32>, vector<8x64xf32> -> vector<8x64xf32>
    %c0_26 = arith.constant 0 : index
    %c0_27 = arith.constant 0 : index
    %17 = vector.load %arg5[%c0_26, %c0_27] : memref<1x64xf32, #tpu.memory_space<vmem>>, vector<1x64xf32>
    %18 = vector.broadcast %17 : vector<1x64xf32> to vector<8x64xf32>
    %19 = arith.addf %16, %18 : vector<8x64xf32>
    %20 = vector.extract_strided_slice %19 {offsets = [0, 0], sizes = [8, 32], strides = [1, 1]} : vector<8x64xf32> to vector<8x32xf32>
    %21 = vector.extract_strided_slice %19 {offsets = [0, 32], sizes = [8, 32], strides = [1, 1]} : vector<8x64xf32> to vector<8x32xf32>
    %c0_i32 = arith.constant 0 : i32
    %cst_28 = arith.constant dense<0.000000e+00> : vector<8x176xf32>
    %22 = tpu.matmul %20, %2, %cst_28 {dimension_numbers = #tpu.dot_dimension_numbers<[1], [0], [0], [1], [0, 0, 1, 1], [], []>} : vector<8x32xf32>, vector<32x176xf32>, vector<8x176xf32> -> vector<8x176xf32>
    %23 = vector.broadcast %3 : vector<1x176xf32> to vector<8x176xf32>
    %24 = arith.addf %22, %23 : vector<8x176xf32>
    %25 = vector.extract_strided_slice %24 {offsets = [0, 0], sizes = [8, 16], strides = [1, 1]} : vector<8x176xf32> to vector<8x16xf32>
    %26 = vector.extract_strided_slice %24 {offsets = [0, 16], sizes = [8, 32], strides = [1, 1]} : vector<8x176xf32> to vector<8x32xf32>
    %27 = vector.extract_strided_slice %24 {offsets = [0, 48], sizes = [8, 128], strides = [1, 1]} : vector<8x176xf32> to vector<8x128xf32>
    %28 = vector.shape_cast %25 : vector<8x16xf32> to vector<8x1x16xf32>
    %29 = vector.broadcast %28 : vector<8x1x16xf32> to vector<8x8x16xf32>
    %30 = arith.addf %1, %29 : vector<8x8x16xf32>
    %cst_29 = arith.constant 0.000000e+00 : f32
    %31 = vector.broadcast %cst_29 : f32 to vector<8x8x16xf32>
    %32 = arith.maximumf %30, %31 : vector<8x8x16xf32>
    %33 = vector.broadcast %7 : vector<1x1x16xf32> to vector<8x8x16xf32>
    %34 = arith.mulf %32, %33 : vector<8x8x16xf32>
    %cst_30 = arith.constant dense<0.000000e+00> : vector<8x8xf32>
    %35 = vector.multi_reduction <add>, %34, %cst_30 [2] : vector<8x8x16xf32> to vector<8x8xf32>
    %36 = vector.broadcast %8 : vector<1x1xf32> to vector<8x8xf32>
    %37 = arith.addf %35, %36 : vector<8x8xf32>
    %cst_31 = arith.constant dense<0xFF800000> : vector<8xf32>
    %38 = vector.multi_reduction <maximumf>, %37, %cst_31 [1] : vector<8x8xf32> to vector<8xf32>
    %39 = vector.shape_cast %38 : vector<8xf32> to vector<8x1xf32>
    %40 = vector.broadcast %39 : vector<8x1xf32> to vector<8x8xf32>
    %41 = arith.subf %37, %40 : vector<8x8xf32>
    %42 = math.exp %41 : vector<8x8xf32>
    %cst_32 = arith.constant dense<0.000000e+00> : vector<8xf32>
    %43 = vector.multi_reduction <add>, %42, %cst_32 [1] : vector<8x8xf32> to vector<8xf32>
    %44 = vector.shape_cast %43 : vector<8xf32> to vector<8x1xf32>
    %45 = tpu.reciprocal %44 {approx = true} : vector<8x1xf32> -> vector<8x1xf32>
    %46 = vector.broadcast %45 : vector<8x1xf32> to vector<8x8xf32>
    %47 = arith.mulf %42, %46 : vector<8x8xf32>
    %48 = vector.shape_cast %47 : vector<8x8xf32> to vector<8x8x1xf32>
    %49 = vector.broadcast %48 : vector<8x8x1xf32> to vector<8x8x32xf32>
    %50 = arith.mulf %0, %49 : vector<8x8x32xf32>
    %cst_33 = arith.constant dense<0.000000e+00> : vector<8x32xf32>
    %51 = vector.multi_reduction <add>, %50, %cst_33 [1] : vector<8x8x32xf32> to vector<8x32xf32>
    %52 = arith.negf %26 : vector<8x32xf32>
    %53 = math.exp %52 : vector<8x32xf32>
    %cst_34 = arith.constant 1.000000e+00 : f32
    %54 = vector.broadcast %cst_34 : f32 to vector<8x32xf32>
    %55 = arith.addf %54, %53 : vector<8x32xf32>
    %56 = arith.divf %54, %55 : vector<8x32xf32>
    %57 = arith.mulf %56, %51 : vector<8x32xf32>
    %58 = arith.index_cast %c0_i32 : i32 to index
    %c0_35 = arith.constant 0 : index
    %c0_36 = arith.constant 0 : index
    %59 = vector.load %arg3[%58, %c0_35, %c0_36] : memref<8x8x16xf32, #tpu.memory_space<vmem>>, vector<1x8x16xf32>
    %60 = vector.shape_cast %59 : vector<1x8x16xf32> to vector<8x16xf32>
    %61 = tpu.concatenate %60, %57 in 1 : vector<8x16xf32>, vector<8x32xf32> -> vector<8x48xf32>
    %cst_37 = arith.constant dense<0.000000e+00> : vector<8x128xf32>
    %62 = tpu.matmul %61, %4, %cst_37 {dimension_numbers = #tpu.dot_dimension_numbers<[1], [0], [0], [1], [0, 0, 1, 1], [], []>} : vector<8x48xf32>, vector<48x128xf32>, vector<8x128xf32> -> vector<8x128xf32>
    %63 = vector.broadcast %5 : vector<1x128xf32> to vector<8x128xf32>
    %64 = arith.addf %62, %63 : vector<8x128xf32>
    %65 = arith.addf %64, %27 : vector<8x128xf32>
    %66 = vector.extract_strided_slice %65 {offsets = [0, 0], sizes = [8, 32], strides = [1, 1]} : vector<8x128xf32> to vector<8x32xf32>
    %67 = arith.negf %66 : vector<8x32xf32>
    %68 = math.exp %67 : vector<8x32xf32>
    %cst_38 = arith.constant 1.000000e+00 : f32
    %69 = vector.broadcast %cst_38 : f32 to vector<8x32xf32>
    %70 = arith.addf %69, %68 : vector<8x32xf32>
    %71 = arith.divf %69, %70 : vector<8x32xf32>
    %72 = vector.extract_strided_slice %65 {offsets = [0, 32], sizes = [8, 32], strides = [1, 1]} : vector<8x128xf32> to vector<8x32xf32>
    %73 = arith.negf %72 : vector<8x32xf32>
    %74 = math.exp %73 : vector<8x32xf32>
    %cst_39 = arith.constant 1.000000e+00 : f32
    %75 = vector.broadcast %cst_39 : f32 to vector<8x32xf32>
    %76 = arith.addf %75, %74 : vector<8x32xf32>
    %77 = arith.divf %75, %76 : vector<8x32xf32>
    %78 = vector.extract_strided_slice %65 {offsets = [0, 64], sizes = [8, 32], strides = [1, 1]} : vector<8x128xf32> to vector<8x32xf32>
    %79 = math.tanh %78 : vector<8x32xf32>
    %80 = vector.extract_strided_slice %65 {offsets = [0, 96], sizes = [8, 32], strides = [1, 1]} : vector<8x128xf32> to vector<8x32xf32>
    %81 = arith.negf %80 : vector<8x32xf32>
    %82 = math.exp %81 : vector<8x32xf32>
    %cst_40 = arith.constant 1.000000e+00 : f32
    %83 = vector.broadcast %cst_40 : f32 to vector<8x32xf32>
    %84 = arith.addf %83, %82 : vector<8x32xf32>
    %85 = arith.divf %83, %84 : vector<8x32xf32>
    %86 = arith.mulf %77, %21 : vector<8x32xf32>
    %87 = arith.mulf %71, %79 : vector<8x32xf32>
    %88 = arith.addf %86, %87 : vector<8x32xf32>
    %89 = math.tanh %88 : vector<8x32xf32>
    %90 = arith.mulf %85, %89 : vector<8x32xf32>
    %cst_41 = arith.constant dense<0.000000e+00> : vector<8x128xf32>
    %91 = tpu.matmul %90, %9, %cst_41 {dimension_numbers = #tpu.dot_dimension_numbers<[1], [0], [0], [1], [0, 0, 1, 1], [], []>} : vector<8x32xf32>, vector<32x128xf32>, vector<8x128xf32> -> vector<8x128xf32>
    %92 = vector.broadcast %10 : vector<1x128xf32> to vector<8x128xf32>
    %93 = arith.addf %91, %92 : vector<8x128xf32>
    %94 = arith.index_cast %c0_i32 : i32 to index
    %c0_42 = arith.constant 0 : index
    %c0_43 = arith.constant 0 : index
    %95 = vector.load %arg14[%94, %c0_42, %c0_43] : memref<8x8x128xf32, #tpu.memory_space<vmem>>, vector<1x8x128xf32>
    %96 = vector.shape_cast %95 : vector<1x8x128xf32> to vector<8x128xf32>
    %97 = vector.shape_cast %93 : vector<8x128xf32> to vector<1x8x128xf32>
    tpu.vector_store %arg14[%94, %c0_42, %c0_43], %97 {strides = array<i32>} : memref<8x8x128xf32, #tpu.memory_space<vmem>>, vector<1x8x128xf32>,
    %98 = tpu.concatenate %47, %11 in 1 : vector<8x8xf32>, vector<8x120xf32> -> vector<8x128xf32>
    %99 = arith.index_cast %c0_i32 : i32 to index
    %c0_44 = arith.constant 0 : index
    %c0_45 = arith.constant 0 : index
    %100 = vector.load %arg15[%99, %c0_44, %c0_45] : memref<8x8x128xf32, #tpu.memory_space<vmem>>, vector<1x8x128xf32>
    %101 = vector.shape_cast %100 : vector<1x8x128xf32> to vector<8x128xf32>
    %102 = vector.shape_cast %98 : vector<8x128xf32> to vector<1x8x128xf32>
    tpu.vector_store %arg15[%99, %c0_44, %c0_45], %102 {strides = array<i32>} : memref<8x8x128xf32, #tpu.memory_space<vmem>>, vector<1x8x128xf32>,
    %c1_i32 = arith.constant 1 : i32
    %cst_46 = arith.constant dense<0.000000e+00> : vector<8x176xf32>
    %103 = tpu.matmul %90, %2, %cst_46 {dimension_numbers = #tpu.dot_dimension_numbers<[1], [0], [0], [1], [0, 0, 1, 1], [], []>} : vector<8x32xf32>, vector<32x176xf32>, vector<8x176xf32> -> vector<8x176xf32>
    %104 = vector.broadcast %3 : vector<1x176xf32> to vector<8x176xf32>
    %105 = arith.addf %103, %104 : vector<8x176xf32>
    %106 = vector.extract_strided_slice %105 {offsets = [0, 0], sizes = [8, 16], strides = [1, 1]} : vector<8x176xf32> to vector<8x16xf32>
    %107 = vector.extract_strided_slice %105 {offsets = [0, 16], sizes = [8, 32], strides = [1, 1]} : vector<8x176xf32> to vector<8x32xf32>
    %108 = vector.extract_strided_slice %105 {offsets = [0, 48], sizes = [8, 128], strides = [1, 1]} : vector<8x176xf32> to vector<8x128xf32>
    %109 = vector.shape_cast %106 : vector<8x16xf32> to vector<8x1x16xf32>
    %110 = vector.broadcast %109 : vector<8x1x16xf32> to vector<8x8x16xf32>
    %111 = arith.addf %1, %110 : vector<8x8x16xf32>
    %cst_47 = arith.constant 0.000000e+00 : f32
    %112 = vector.broadcast %cst_47 : f32 to vector<8x8x16xf32>
    %113 = arith.maximumf %111, %112 : vector<8x8x16xf32>
    %114 = vector.broadcast %7 : vector<1x1x16xf32> to vector<8x8x16xf32>
    %115 = arith.mulf %113, %114 : vector<8x8x16xf32>
    %cst_48 = arith.constant dense<0.000000e+00> : vector<8x8xf32>
    %116 = vector.multi_reduction <add>, %115, %cst_48 [2] : vector<8x8x16xf32> to vector<8x8xf32>
    %117 = vector.broadcast %8 : vector<1x1xf32> to vector<8x8xf32>
    %118 = arith.addf %116, %117 : vector<8x8xf32>
    %cst_49 = arith.constant dense<0xFF800000> : vector<8xf32>
    %119 = vector.multi_reduction <maximumf>, %118, %cst_49 [1] : vector<8x8xf32> to vector<8xf32>
    %120 = vector.shape_cast %119 : vector<8xf32> to vector<8x1xf32>
    %121 = vector.broadcast %120 : vector<8x1xf32> to vector<8x8xf32>
    %122 = arith.subf %118, %121 : vector<8x8xf32>
    %123 = math.exp %122 : vector<8x8xf32>
    %cst_50 = arith.constant dense<0.000000e+00> : vector<8xf32>
    %124 = vector.multi_reduction <add>, %123, %cst_50 [1] : vector<8x8xf32> to vector<8xf32>
    %125 = vector.shape_cast %124 : vector<8xf32> to vector<8x1xf32>
    %126 = tpu.reciprocal %125 {approx = true} : vector<8x1xf32> -> vector<8x1xf32>
    %127 = vector.broadcast %126 : vector<8x1xf32> to vector<8x8xf32>
    %128 = arith.mulf %123, %127 : vector<8x8xf32>
    %129 = vector.shape_cast %128 : vector<8x8xf32> to vector<8x8x1xf32>
    %130 = vector.broadcast %129 : vector<8x8x1xf32> to vector<8x8x32xf32>
    %131 = arith.mulf %0, %130 : vector<8x8x32xf32>
    %cst_51 = arith.constant dense<0.000000e+00> : vector<8x32xf32>
    %132 = vector.multi_reduction <add>, %131, %cst_51 [1] : vector<8x8x32xf32> to vector<8x32xf32>
    %133 = arith.negf %107 : vector<8x32xf32>
    %134 = math.exp %133 : vector<8x32xf32>
    %cst_52 = arith.constant 1.000000e+00 : f32
    %135 = vector.broadcast %cst_52 : f32 to vector<8x32xf32>
    %136 = arith.addf %135, %134 : vector<8x32xf32>
    %137 = arith.divf %135, %136 : vector<8x32xf32>
    %138 = arith.mulf %137, %132 : vector<8x32xf32>
    %139 = arith.index_cast %c1_i32 : i32 to index
    %c0_53 = arith.constant 0 : index
    %c0_54 = arith.constant 0 : index
    %140 = vector.load %arg3[%139, %c0_53, %c0_54] : memref<8x8x16xf32, #tpu.memory_space<vmem>>, vector<1x8x16xf32>
    %141 = vector.shape_cast %140 : vector<1x8x16xf32> to vector<8x16xf32>
    %142 = tpu.concatenate %141, %138 in 1 : vector<8x16xf32>, vector<8x32xf32> -> vector<8x48xf32>
    %cst_55 = arith.constant dense<0.000000e+00> : vector<8x128xf32>
    %143 = tpu.matmul %142, %4, %cst_55 {dimension_numbers = #tpu.dot_dimension_numbers<[1], [0], [0], [1], [0, 0, 1, 1], [], []>} : vector<8x48xf32>, vector<48x128xf32>, vector<8x128xf32> -> vector<8x128xf32>
    %144 = vector.broadcast %5 : vector<1x128xf32> to vector<8x128xf32>
    %145 = arith.addf %143, %144 : vector<8x128xf32>
    %146 = arith.addf %145, %108 : vector<8x128xf32>
    %147 = vector.extract_strided_slice %146 {offsets = [0, 0], sizes = [8, 32], strides = [1, 1]} : vector<8x128xf32> to vector<8x32xf32>
    %148 = arith.negf %147 : vector<8x32xf32>
    %149 = math.exp %148 : vector<8x32xf32>
    %cst_56 = arith.constant 1.000000e+00 : f32
    %150 = vector.broadcast %cst_56 : f32 to vector<8x32xf32>
    %151 = arith.addf %150, %149 : vector<8x32xf32>
    %152 = arith.divf %150, %151 : vector<8x32xf32>
    %153 = vector.extract_strided_slice %146 {offsets = [0, 32], sizes = [8, 32], strides = [1, 1]} : vector<8x128xf32> to vector<8x32xf32>
    %154 = arith.negf %153 : vector<8x32xf32>
    %155 = math.exp %154 : vector<8x32xf32>
    %cst_57 = arith.constant 1.000000e+00 : f32
    %156 = vector.broadcast %cst_57 : f32 to vector<8x32xf32>
    %157 = arith.addf %156, %155 : vector<8x32xf32>
    %158 = arith.divf %156, %157 : vector<8x32xf32>
    %159 = vector.extract_strided_slice %146 {offsets = [0, 64], sizes = [8, 32], strides = [1, 1]} : vector<8x128xf32> to vector<8x32xf32>
    %160 = math.tanh %159 : vector<8x32xf32>
    %161 = vector.extract_strided_slice %146 {offsets = [0, 96], sizes = [8, 32], strides = [1, 1]} : vector<8x128xf32> to vector<8x32xf32>
    %162 = arith.negf %161 : vector<8x32xf32>
    %163 = math.exp %162 : vector<8x32xf32>
    %cst_58 = arith.constant 1.000000e+00 : f32
    %164 = vector.broadcast %cst_58 : f32 to vector<8x32xf32>
    %165 = arith.addf %164, %163 : vector<8x32xf32>
    %166 = arith.divf %164, %165 : vector<8x32xf32>
    %167 = arith.mulf %158, %88 : vector<8x32xf32>
    %168 = arith.mulf %152, %160 : vector<8x32xf32>
    %169 = arith.addf %167, %168 : vector<8x32xf32>
    %170 = math.tanh %169 : vector<8x32xf32>
    %171 = arith.mulf %166, %170 : vector<8x32xf32>
    %cst_59 = arith.constant dense<0.000000e+00> : vector<8x128xf32>
    %172 = tpu.matmul %171, %9, %cst_59 {dimension_numbers = #tpu.dot_dimension_numbers<[1], [0], [0], [1], [0, 0, 1, 1], [], []>} : vector<8x32xf32>, vector<32x128xf32>, vector<8x128xf32> -> vector<8x128xf32>
    %173 = vector.broadcast %10 : vector<1x128xf32> to vector<8x128xf32>
    %174 = arith.addf %172, %173 : vector<8x128xf32>
    %175 = arith.index_cast %c1_i32 : i32 to index
    %c0_60 = arith.constant 0 : index
    %c0_61 = arith.constant 0 : index
    %176 = vector.load %arg14[%175, %c0_60, %c0_61] : memref<8x8x128xf32, #tpu.memory_space<vmem>>, vector<1x8x128xf32>
    %177 = vector.shape_cast %176 : vector<1x8x128xf32> to vector<8x128xf32>
    %178 = vector.shape_cast %174 : vector<8x128xf32> to vector<1x8x128xf32>
    tpu.vector_store %arg14[%175, %c0_60, %c0_61], %178 {strides = array<i32>} : memref<8x8x128xf32, #tpu.memory_space<vmem>>, vector<1x8x128xf32>,
    %179 = tpu.concatenate %128, %11 in 1 : vector<8x8xf32>, vector<8x120xf32> -> vector<8x128xf32>
    %180 = arith.index_cast %c1_i32 : i32 to index
    %c0_62 = arith.constant 0 : index
    %c0_63 = arith.constant 0 : index
    %181 = vector.load %arg15[%180, %c0_62, %c0_63] : memref<8x8x128xf32, #tpu.memory_space<vmem>>, vector<1x8x128xf32>
    %182 = vector.shape_cast %181 : vector<1x8x128xf32> to vector<8x128xf32>
    %183 = vector.shape_cast %179 : vector<8x128xf32> to vector<1x8x128xf32>
    tpu.vector_store %arg15[%180, %c0_62, %c0_63], %183 {strides = array<i32>} : memref<8x8x128xf32, #tpu.memory_space<vmem>>, vector<1x8x128xf32>,
    %c2_i32 = arith.constant 2 : i32
    %cst_64 = arith.constant dense<0.000000e+00> : vector<8x176xf32>
    %184 = tpu.matmul %171, %2, %cst_64 {dimension_numbers = #tpu.dot_dimension_numbers<[1], [0], [0], [1], [0, 0, 1, 1], [], []>} : vector<8x32xf32>, vector<32x176xf32>, vector<8x176xf32> -> vector<8x176xf32>
    %185 = vector.broadcast %3 : vector<1x176xf32> to vector<8x176xf32>
    %186 = arith.addf %184, %185 : vector<8x176xf32>
    %187 = vector.extract_strided_slice %186 {offsets = [0, 0], sizes = [8, 16], strides = [1, 1]} : vector<8x176xf32> to vector<8x16xf32>
    %188 = vector.extract_strided_slice %186 {offsets = [0, 16], sizes = [8, 32], strides = [1, 1]} : vector<8x176xf32> to vector<8x32xf32>
    %189 = vector.extract_strided_slice %186 {offsets = [0, 48], sizes = [8, 128], strides = [1, 1]} : vector<8x176xf32> to vector<8x128xf32>
    %190 = vector.shape_cast %187 : vector<8x16xf32> to vector<8x1x16xf32>
    %191 = vector.broadcast %190 : vector<8x1x16xf32> to vector<8x8x16xf32>
    %192 = arith.addf %1, %191 : vector<8x8x16xf32>
    %cst_65 = arith.constant 0.000000e+00 : f32
    %193 = vector.broadcast %cst_65 : f32 to vector<8x8x16xf32>
    %194 = arith.maximumf %192, %193 : vector<8x8x16xf32>
    %195 = vector.broadcast %7 : vector<1x1x16xf32> to vector<8x8x16xf32>
    %196 = arith.mulf %194, %195 : vector<8x8x16xf32>
    %cst_66 = arith.constant dense<0.000000e+00> : vector<8x8xf32>
    %197 = vector.multi_reduction <add>, %196, %cst_66 [2] : vector<8x8x16xf32> to vector<8x8xf32>
    %198 = vector.broadcast %8 : vector<1x1xf32> to vector<8x8xf32>
    %199 = arith.addf %197, %198 : vector<8x8xf32>
    %cst_67 = arith.constant dense<0xFF800000> : vector<8xf32>
    %200 = vector.multi_reduction <maximumf>, %199, %cst_67 [1] : vector<8x8xf32> to vector<8xf32>
    %201 = vector.shape_cast %200 : vector<8xf32> to vector<8x1xf32>
    %202 = vector.broadcast %201 : vector<8x1xf32> to vector<8x8xf32>
    %203 = arith.subf %199, %202 : vector<8x8xf32>
    %204 = math.exp %203 : vector<8x8xf32>
    %cst_68 = arith.constant dense<0.000000e+00> : vector<8xf32>
    %205 = vector.multi_reduction <add>, %204, %cst_68 [1] : vector<8x8xf32> to vector<8xf32>
    %206 = vector.shape_cast %205 : vector<8xf32> to vector<8x1xf32>
    %207 = tpu.reciprocal %206 {approx = true} : vector<8x1xf32> -> vector<8x1xf32>
    %208 = vector.broadcast %207 : vector<8x1xf32> to vector<8x8xf32>
    %209 = arith.mulf %204, %208 : vector<8x8xf32>
    %210 = vector.shape_cast %209 : vector<8x8xf32> to vector<8x8x1xf32>
    %211 = vector.broadcast %210 : vector<8x8x1xf32> to vector<8x8x32xf32>
    %212 = arith.mulf %0, %211 : vector<8x8x32xf32>
    %cst_69 = arith.constant dense<0.000000e+00> : vector<8x32xf32>
    %213 = vector.multi_reduction <add>, %212, %cst_69 [1] : vector<8x8x32xf32> to vector<8x32xf32>
    %214 = arith.negf %188 : vector<8x32xf32>
    %215 = math.exp %214 : vector<8x32xf32>
    %cst_70 = arith.constant 1.000000e+00 : f32
    %216 = vector.broadcast %cst_70 : f32 to vector<8x32xf32>
    %217 = arith.addf %216, %215 : vector<8x32xf32>
    %218 = arith.divf %216, %217 : vector<8x32xf32>
    %219 = arith.mulf %218, %213 : vector<8x32xf32>
    %220 = arith.index_cast %c2_i32 : i32 to index
    %c0_71 = arith.constant 0 : index
    %c0_72 = arith.constant 0 : index
    %221 = vector.load %arg3[%220, %c0_71, %c0_72] : memref<8x8x16xf32, #tpu.memory_space<vmem>>, vector<1x8x16xf32>
    %222 = vector.shape_cast %221 : vector<1x8x16xf32> to vector<8x16xf32>
    %223 = tpu.concatenate %222, %219 in 1 : vector<8x16xf32>, vector<8x32xf32> -> vector<8x48xf32>
    %cst_73 = arith.constant dense<0.000000e+00> : vector<8x128xf32>
    %224 = tpu.matmul %223, %4, %cst_73 {dimension_numbers = #tpu.dot_dimension_numbers<[1], [0], [0], [1], [0, 0, 1, 1], [], []>} : vector<8x48xf32>, vector<48x128xf32>, vector<8x128xf32> -> vector<8x128xf32>
    %225 = vector.broadcast %5 : vector<1x128xf32> to vector<8x128xf32>
    %226 = arith.addf %224, %225 : vector<8x128xf32>
    %227 = arith.addf %226, %189 : vector<8x128xf32>
    %228 = vector.extract_strided_slice %227 {offsets = [0, 0], sizes = [8, 32], strides = [1, 1]} : vector<8x128xf32> to vector<8x32xf32>
    %229 = arith.negf %228 : vector<8x32xf32>
    %230 = math.exp %229 : vector<8x32xf32>
    %cst_74 = arith.constant 1.000000e+00 : f32
    %231 = vector.broadcast %cst_74 : f32 to vector<8x32xf32>
    %232 = arith.addf %231, %230 : vector<8x32xf32>
    %233 = arith.divf %231, %232 : vector<8x32xf32>
    %234 = vector.extract_strided_slice %227 {offsets = [0, 32], sizes = [8, 32], strides = [1, 1]} : vector<8x128xf32> to vector<8x32xf32>
    %235 = arith.negf %234 : vector<8x32xf32>
    %236 = math.exp %235 : vector<8x32xf32>
    %cst_75 = arith.constant 1.000000e+00 : f32
    %237 = vector.broadcast %cst_75 : f32 to vector<8x32xf32>
    %238 = arith.addf %237, %236 : vector<8x32xf32>
    %239 = arith.divf %237, %238 : vector<8x32xf32>
    %240 = vector.extract_strided_slice %227 {offsets = [0, 64], sizes = [8, 32], strides = [1, 1]} : vector<8x128xf32> to vector<8x32xf32>
    %241 = math.tanh %240 : vector<8x32xf32>
    %242 = vector.extract_strided_slice %227 {offsets = [0, 96], sizes = [8, 32], strides = [1, 1]} : vector<8x128xf32> to vector<8x32xf32>
    %243 = arith.negf %242 : vector<8x32xf32>
    %244 = math.exp %243 : vector<8x32xf32>
    %cst_76 = arith.constant 1.000000e+00 : f32
    %245 = vector.broadcast %cst_76 : f32 to vector<8x32xf32>
    %246 = arith.addf %245, %244 : vector<8x32xf32>
    %247 = arith.divf %245, %246 : vector<8x32xf32>
    %248 = arith.mulf %239, %169 : vector<8x32xf32>
    %249 = arith.mulf %233, %241 : vector<8x32xf32>
    %250 = arith.addf %248, %249 : vector<8x32xf32>
    %251 = math.tanh %250 : vector<8x32xf32>
    %252 = arith.mulf %247, %251 : vector<8x32xf32>
    %cst_77 = arith.constant dense<0.000000e+00> : vector<8x128xf32>
    %253 = tpu.matmul %252, %9, %cst_77 {dimension_numbers = #tpu.dot_dimension_numbers<[1], [0], [0], [1], [0, 0, 1, 1], [], []>} : vector<8x32xf32>, vector<32x128xf32>, vector<8x128xf32> -> vector<8x128xf32>
    %254 = vector.broadcast %10 : vector<1x128xf32> to vector<8x128xf32>
    %255 = arith.addf %253, %254 : vector<8x128xf32>
    %256 = arith.index_cast %c2_i32 : i32 to index
    %c0_78 = arith.constant 0 : index
    %c0_79 = arith.constant 0 : index
    %257 = vector.load %arg14[%256, %c0_78, %c0_79] : memref<8x8x128xf32, #tpu.memory_space<vmem>>, vector<1x8x128xf32>
    %258 = vector.shape_cast %257 : vector<1x8x128xf32> to vector<8x128xf32>
    %259 = vector.shape_cast %255 : vector<8x128xf32> to vector<1x8x128xf32>
    tpu.vector_store %arg14[%256, %c0_78, %c0_79], %259 {strides = array<i32>} : memref<8x8x128xf32, #tpu.memory_space<vmem>>, vector<1x8x128xf32>,
    %260 = tpu.concatenate %209, %11 in 1 : vector<8x8xf32>, vector<8x120xf32> -> vector<8x128xf32>
    %261 = arith.index_cast %c2_i32 : i32 to index
    %c0_80 = arith.constant 0 : index
    %c0_81 = arith.constant 0 : index
    %262 = vector.load %arg15[%261, %c0_80, %c0_81] : memref<8x8x128xf32, #tpu.memory_space<vmem>>, vector<1x8x128xf32>
    %263 = vector.shape_cast %262 : vector<1x8x128xf32> to vector<8x128xf32>
    %264 = vector.shape_cast %260 : vector<8x128xf32> to vector<1x8x128xf32>
    tpu.vector_store %arg15[%261, %c0_80, %c0_81], %264 {strides = array<i32>} : memref<8x8x128xf32, #tpu.memory_space<vmem>>, vector<1x8x128xf32>,
    %c3_i32 = arith.constant 3 : i32
    %cst_82 = arith.constant dense<0.000000e+00> : vector<8x176xf32>
    %265 = tpu.matmul %252, %2, %cst_82 {dimension_numbers = #tpu.dot_dimension_numbers<[1], [0], [0], [1], [0, 0, 1, 1], [], []>} : vector<8x32xf32>, vector<32x176xf32>, vector<8x176xf32> -> vector<8x176xf32>
    %266 = vector.broadcast %3 : vector<1x176xf32> to vector<8x176xf32>
    %267 = arith.addf %265, %266 : vector<8x176xf32>
    %268 = vector.extract_strided_slice %267 {offsets = [0, 0], sizes = [8, 16], strides = [1, 1]} : vector<8x176xf32> to vector<8x16xf32>
    %269 = vector.extract_strided_slice %267 {offsets = [0, 16], sizes = [8, 32], strides = [1, 1]} : vector<8x176xf32> to vector<8x32xf32>
    %270 = vector.extract_strided_slice %267 {offsets = [0, 48], sizes = [8, 128], strides = [1, 1]} : vector<8x176xf32> to vector<8x128xf32>
    %271 = vector.shape_cast %268 : vector<8x16xf32> to vector<8x1x16xf32>
    %272 = vector.broadcast %271 : vector<8x1x16xf32> to vector<8x8x16xf32>
    %273 = arith.addf %1, %272 : vector<8x8x16xf32>
    %cst_83 = arith.constant 0.000000e+00 : f32
    %274 = vector.broadcast %cst_83 : f32 to vector<8x8x16xf32>
    %275 = arith.maximumf %273, %274 : vector<8x8x16xf32>
    %276 = vector.broadcast %7 : vector<1x1x16xf32> to vector<8x8x16xf32>
    %277 = arith.mulf %275, %276 : vector<8x8x16xf32>
    %cst_84 = arith.constant dense<0.000000e+00> : vector<8x8xf32>
    %278 = vector.multi_reduction <add>, %277, %cst_84 [2] : vector<8x8x16xf32> to vector<8x8xf32>
    %279 = vector.broadcast %8 : vector<1x1xf32> to vector<8x8xf32>
    %280 = arith.addf %278, %279 : vector<8x8xf32>
    %cst_85 = arith.constant dense<0xFF800000> : vector<8xf32>
    %281 = vector.multi_reduction <maximumf>, %280, %cst_85 [1] : vector<8x8xf32> to vector<8xf32>
    %282 = vector.shape_cast %281 : vector<8xf32> to vector<8x1xf32>
    %283 = vector.broadcast %282 : vector<8x1xf32> to vector<8x8xf32>
    %284 = arith.subf %280, %283 : vector<8x8xf32>
    %285 = math.exp %284 : vector<8x8xf32>
    %cst_86 = arith.constant dense<0.000000e+00> : vector<8xf32>
    %286 = vector.multi_reduction <add>, %285, %cst_86 [1] : vector<8x8xf32> to vector<8xf32>
    %287 = vector.shape_cast %286 : vector<8xf32> to vector<8x1xf32>
    %288 = tpu.reciprocal %287 {approx = true} : vector<8x1xf32> -> vector<8x1xf32>
    %289 = vector.broadcast %288 : vector<8x1xf32> to vector<8x8xf32>
    %290 = arith.mulf %285, %289 : vector<8x8xf32>
    %291 = vector.shape_cast %290 : vector<8x8xf32> to vector<8x8x1xf32>
    %292 = vector.broadcast %291 : vector<8x8x1xf32> to vector<8x8x32xf32>
    %293 = arith.mulf %0, %292 : vector<8x8x32xf32>
    %cst_87 = arith.constant dense<0.000000e+00> : vector<8x32xf32>
    %294 = vector.multi_reduction <add>, %293, %cst_87 [1] : vector<8x8x32xf32> to vector<8x32xf32>
    %295 = arith.negf %269 : vector<8x32xf32>
    %296 = math.exp %295 : vector<8x32xf32>
    %cst_88 = arith.constant 1.000000e+00 : f32
    %297 = vector.broadcast %cst_88 : f32 to vector<8x32xf32>
    %298 = arith.addf %297, %296 : vector<8x32xf32>
    %299 = arith.divf %297, %298 : vector<8x32xf32>
    %300 = arith.mulf %299, %294 : vector<8x32xf32>
    %301 = arith.index_cast %c3_i32 : i32 to index
    %c0_89 = arith.constant 0 : index
    %c0_90 = arith.constant 0 : index
    %302 = vector.load %arg3[%301, %c0_89, %c0_90] : memref<8x8x16xf32, #tpu.memory_space<vmem>>, vector<1x8x16xf32>
    %303 = vector.shape_cast %302 : vector<1x8x16xf32> to vector<8x16xf32>
    %304 = tpu.concatenate %303, %300 in 1 : vector<8x16xf32>, vector<8x32xf32> -> vector<8x48xf32>
    %cst_91 = arith.constant dense<0.000000e+00> : vector<8x128xf32>
    %305 = tpu.matmul %304, %4, %cst_91 {dimension_numbers = #tpu.dot_dimension_numbers<[1], [0], [0], [1], [0, 0, 1, 1], [], []>} : vector<8x48xf32>, vector<48x128xf32>, vector<8x128xf32> -> vector<8x128xf32>
    %306 = vector.broadcast %5 : vector<1x128xf32> to vector<8x128xf32>
    %307 = arith.addf %305, %306 : vector<8x128xf32>
    %308 = arith.addf %307, %270 : vector<8x128xf32>
    %309 = vector.extract_strided_slice %308 {offsets = [0, 0], sizes = [8, 32], strides = [1, 1]} : vector<8x128xf32> to vector<8x32xf32>
    %310 = arith.negf %309 : vector<8x32xf32>
    %311 = math.exp %310 : vector<8x32xf32>
    %cst_92 = arith.constant 1.000000e+00 : f32
    %312 = vector.broadcast %cst_92 : f32 to vector<8x32xf32>
    %313 = arith.addf %312, %311 : vector<8x32xf32>
    %314 = arith.divf %312, %313 : vector<8x32xf32>
    %315 = vector.extract_strided_slice %308 {offsets = [0, 32], sizes = [8, 32], strides = [1, 1]} : vector<8x128xf32> to vector<8x32xf32>
    %316 = arith.negf %315 : vector<8x32xf32>
    %317 = math.exp %316 : vector<8x32xf32>
    %cst_93 = arith.constant 1.000000e+00 : f32
    %318 = vector.broadcast %cst_93 : f32 to vector<8x32xf32>
    %319 = arith.addf %318, %317 : vector<8x32xf32>
    %320 = arith.divf %318, %319 : vector<8x32xf32>
    %321 = vector.extract_strided_slice %308 {offsets = [0, 64], sizes = [8, 32], strides = [1, 1]} : vector<8x128xf32> to vector<8x32xf32>
    %322 = math.tanh %321 : vector<8x32xf32>
    %323 = vector.extract_strided_slice %308 {offsets = [0, 96], sizes = [8, 32], strides = [1, 1]} : vector<8x128xf32> to vector<8x32xf32>
    %324 = arith.negf %323 : vector<8x32xf32>
    %325 = math.exp %324 : vector<8x32xf32>
    %cst_94 = arith.constant 1.000000e+00 : f32
    %326 = vector.broadcast %cst_94 : f32 to vector<8x32xf32>
    %327 = arith.addf %326, %325 : vector<8x32xf32>
    %328 = arith.divf %326, %327 : vector<8x32xf32>
    %329 = arith.mulf %320, %250 : vector<8x32xf32>
    %330 = arith.mulf %314, %322 : vector<8x32xf32>
    %331 = arith.addf %329, %330 : vector<8x32xf32>
    %332 = math.tanh %331 : vector<8x32xf32>
    %333 = arith.mulf %328, %332 : vector<8x32xf32>
    %cst_95 = arith.constant dense<0.000000e+00> : vector<8x128xf32>
    %334 = tpu.matmul %333, %9, %cst_95 {dimension_numbers = #tpu.dot_dimension_numbers<[1], [0], [0], [1], [0, 0, 1, 1], [], []>} : vector<8x32xf32>, vector<32x128xf32>, vector<8x128xf32> -> vector<8x128xf32>
    %335 = vector.broadcast %10 : vector<1x128xf32> to vector<8x128xf32>
    %336 = arith.addf %334, %335 : vector<8x128xf32>
    %337 = arith.index_cast %c3_i32 : i32 to index
    %c0_96 = arith.constant 0 : index
    %c0_97 = arith.constant 0 : index
    %338 = vector.load %arg14[%337, %c0_96, %c0_97] : memref<8x8x128xf32, #tpu.memory_space<vmem>>, vector<1x8x128xf32>
    %339 = vector.shape_cast %338 : vector<1x8x128xf32> to vector<8x128xf32>
    %340 = vector.shape_cast %336 : vector<8x128xf32> to vector<1x8x128xf32>
    tpu.vector_store %arg14[%337, %c0_96, %c0_97], %340 {strides = array<i32>} : memref<8x8x128xf32, #tpu.memory_space<vmem>>, vector<1x8x128xf32>,
    %341 = tpu.concatenate %290, %11 in 1 : vector<8x8xf32>, vector<8x120xf32> -> vector<8x128xf32>
    %342 = arith.index_cast %c3_i32 : i32 to index
    %c0_98 = arith.constant 0 : index
    %c0_99 = arith.constant 0 : index
    %343 = vector.load %arg15[%342, %c0_98, %c0_99] : memref<8x8x128xf32, #tpu.memory_space<vmem>>, vector<1x8x128xf32>
    %344 = vector.shape_cast %343 : vector<1x8x128xf32> to vector<8x128xf32>
    %345 = vector.shape_cast %341 : vector<8x128xf32> to vector<1x8x128xf32>
    tpu.vector_store %arg15[%342, %c0_98, %c0_99], %345 {strides = array<i32>} : memref<8x8x128xf32, #tpu.memory_space<vmem>>, vector<1x8x128xf32>,
    %c4_i32 = arith.constant 4 : i32
    %cst_100 = arith.constant dense<0.000000e+00> : vector<8x176xf32>
    %346 = tpu.matmul %333, %2, %cst_100 {dimension_numbers = #tpu.dot_dimension_numbers<[1], [0], [0], [1], [0, 0, 1, 1], [], []>} : vector<8x32xf32>, vector<32x176xf32>, vector<8x176xf32> -> vector<8x176xf32>
    %347 = vector.broadcast %3 : vector<1x176xf32> to vector<8x176xf32>
    %348 = arith.addf %346, %347 : vector<8x176xf32>
    %349 = vector.extract_strided_slice %348 {offsets = [0, 0], sizes = [8, 16], strides = [1, 1]} : vector<8x176xf32> to vector<8x16xf32>
    %350 = vector.extract_strided_slice %348 {offsets = [0, 16], sizes = [8, 32], strides = [1, 1]} : vector<8x176xf32> to vector<8x32xf32>
    %351 = vector.extract_strided_slice %348 {offsets = [0, 48], sizes = [8, 128], strides = [1, 1]} : vector<8x176xf32> to vector<8x128xf32>
    %352 = vector.shape_cast %349 : vector<8x16xf32> to vector<8x1x16xf32>
    %353 = vector.broadcast %352 : vector<8x1x16xf32> to vector<8x8x16xf32>
    %354 = arith.addf %1, %353 : vector<8x8x16xf32>
    %cst_101 = arith.constant 0.000000e+00 : f32
    %355 = vector.broadcast %cst_101 : f32 to vector<8x8x16xf32>
    %356 = arith.maximumf %354, %355 : vector<8x8x16xf32>
    %357 = vector.broadcast %7 : vector<1x1x16xf32> to vector<8x8x16xf32>
    %358 = arith.mulf %356, %357 : vector<8x8x16xf32>
    %cst_102 = arith.constant dense<0.000000e+00> : vector<8x8xf32>
    %359 = vector.multi_reduction <add>, %358, %cst_102 [2] : vector<8x8x16xf32> to vector<8x8xf32>
    %360 = vector.broadcast %8 : vector<1x1xf32> to vector<8x8xf32>
    %361 = arith.addf %359, %360 : vector<8x8xf32>
    %cst_103 = arith.constant dense<0xFF800000> : vector<8xf32>
    %362 = vector.multi_reduction <maximumf>, %361, %cst_103 [1] : vector<8x8xf32> to vector<8xf32>
    %363 = vector.shape_cast %362 : vector<8xf32> to vector<8x1xf32>
    %364 = vector.broadcast %363 : vector<8x1xf32> to vector<8x8xf32>
    %365 = arith.subf %361, %364 : vector<8x8xf32>
    %366 = math.exp %365 : vector<8x8xf32>
    %cst_104 = arith.constant dense<0.000000e+00> : vector<8xf32>
    %367 = vector.multi_reduction <add>, %366, %cst_104 [1] : vector<8x8xf32> to vector<8xf32>
    %368 = vector.shape_cast %367 : vector<8xf32> to vector<8x1xf32>
    %369 = tpu.reciprocal %368 {approx = true} : vector<8x1xf32> -> vector<8x1xf32>
    %370 = vector.broadcast %369 : vector<8x1xf32> to vector<8x8xf32>
    %371 = arith.mulf %366, %370 : vector<8x8xf32>
    %372 = vector.shape_cast %371 : vector<8x8xf32> to vector<8x8x1xf32>
    %373 = vector.broadcast %372 : vector<8x8x1xf32> to vector<8x8x32xf32>
    %374 = arith.mulf %0, %373 : vector<8x8x32xf32>
    %cst_105 = arith.constant dense<0.000000e+00> : vector<8x32xf32>
    %375 = vector.multi_reduction <add>, %374, %cst_105 [1] : vector<8x8x32xf32> to vector<8x32xf32>
    %376 = arith.negf %350 : vector<8x32xf32>
    %377 = math.exp %376 : vector<8x32xf32>
    %cst_106 = arith.constant 1.000000e+00 : f32
    %378 = vector.broadcast %cst_106 : f32 to vector<8x32xf32>
    %379 = arith.addf %378, %377 : vector<8x32xf32>
    %380 = arith.divf %378, %379 : vector<8x32xf32>
    %381 = arith.mulf %380, %375 : vector<8x32xf32>
    %382 = arith.index_cast %c4_i32 : i32 to index
    %c0_107 = arith.constant 0 : index
    %c0_108 = arith.constant 0 : index
    %383 = vector.load %arg3[%382, %c0_107, %c0_108] : memref<8x8x16xf32, #tpu.memory_space<vmem>>, vector<1x8x16xf32>
    %384 = vector.shape_cast %383 : vector<1x8x16xf32> to vector<8x16xf32>
    %385 = tpu.concatenate %384, %381 in 1 : vector<8x16xf32>, vector<8x32xf32> -> vector<8x48xf32>
    %cst_109 = arith.constant dense<0.000000e+00> : vector<8x128xf32>
    %386 = tpu.matmul %385, %4, %cst_109 {dimension_numbers = #tpu.dot_dimension_numbers<[1], [0], [0], [1], [0, 0, 1, 1], [], []>} : vector<8x48xf32>, vector<48x128xf32>, vector<8x128xf32> -> vector<8x128xf32>
    %387 = vector.broadcast %5 : vector<1x128xf32> to vector<8x128xf32>
    %388 = arith.addf %386, %387 : vector<8x128xf32>
    %389 = arith.addf %388, %351 : vector<8x128xf32>
    %390 = vector.extract_strided_slice %389 {offsets = [0, 0], sizes = [8, 32], strides = [1, 1]} : vector<8x128xf32> to vector<8x32xf32>
    %391 = arith.negf %390 : vector<8x32xf32>
    %392 = math.exp %391 : vector<8x32xf32>
    %cst_110 = arith.constant 1.000000e+00 : f32
    %393 = vector.broadcast %cst_110 : f32 to vector<8x32xf32>
    %394 = arith.addf %393, %392 : vector<8x32xf32>
    %395 = arith.divf %393, %394 : vector<8x32xf32>
    %396 = vector.extract_strided_slice %389 {offsets = [0, 32], sizes = [8, 32], strides = [1, 1]} : vector<8x128xf32> to vector<8x32xf32>
    %397 = arith.negf %396 : vector<8x32xf32>
    %398 = math.exp %397 : vector<8x32xf32>
    %cst_111 = arith.constant 1.000000e+00 : f32
    %399 = vector.broadcast %cst_111 : f32 to vector<8x32xf32>
    %400 = arith.addf %399, %398 : vector<8x32xf32>
    %401 = arith.divf %399, %400 : vector<8x32xf32>
    %402 = vector.extract_strided_slice %389 {offsets = [0, 64], sizes = [8, 32], strides = [1, 1]} : vector<8x128xf32> to vector<8x32xf32>
    %403 = math.tanh %402 : vector<8x32xf32>
    %404 = vector.extract_strided_slice %389 {offsets = [0, 96], sizes = [8, 32], strides = [1, 1]} : vector<8x128xf32> to vector<8x32xf32>
    %405 = arith.negf %404 : vector<8x32xf32>
    %406 = math.exp %405 : vector<8x32xf32>
    %cst_112 = arith.constant 1.000000e+00 : f32
    %407 = vector.broadcast %cst_112 : f32 to vector<8x32xf32>
    %408 = arith.addf %407, %406 : vector<8x32xf32>
    %409 = arith.divf %407, %408 : vector<8x32xf32>
    %410 = arith.mulf %401, %331 : vector<8x32xf32>
    %411 = arith.mulf %395, %403 : vector<8x32xf32>
    %412 = arith.addf %410, %411 : vector<8x32xf32>
    %413 = math.tanh %412 : vector<8x32xf32>
    %414 = arith.mulf %409, %413 : vector<8x32xf32>
    %cst_113 = arith.constant dense<0.000000e+00> : vector<8x128xf32>
    %415 = tpu.matmul %414, %9, %cst_113 {dimension_numbers = #tpu.dot_dimension_numbers<[1], [0], [0], [1], [0, 0, 1, 1], [], []>} : vector<8x32xf32>, vector<32x128xf32>, vector<8x128xf32> -> vector<8x128xf32>
    %416 = vector.broadcast %10 : vector<1x128xf32> to vector<8x128xf32>
    %417 = arith.addf %415, %416 : vector<8x128xf32>
    %418 = arith.index_cast %c4_i32 : i32 to index
    %c0_114 = arith.constant 0 : index
    %c0_115 = arith.constant 0 : index
    %419 = vector.load %arg14[%418, %c0_114, %c0_115] : memref<8x8x128xf32, #tpu.memory_space<vmem>>, vector<1x8x128xf32>
    %420 = vector.shape_cast %419 : vector<1x8x128xf32> to vector<8x128xf32>
    %421 = vector.shape_cast %417 : vector<8x128xf32> to vector<1x8x128xf32>
    tpu.vector_store %arg14[%418, %c0_114, %c0_115], %421 {strides = array<i32>} : memref<8x8x128xf32, #tpu.memory_space<vmem>>, vector<1x8x128xf32>,
    %422 = tpu.concatenate %371, %11 in 1 : vector<8x8xf32>, vector<8x120xf32> -> vector<8x128xf32>
    %423 = arith.index_cast %c4_i32 : i32 to index
    %c0_116 = arith.constant 0 : index
    %c0_117 = arith.constant 0 : index
    %424 = vector.load %arg15[%423, %c0_116, %c0_117] : memref<8x8x128xf32, #tpu.memory_space<vmem>>, vector<1x8x128xf32>
    %425 = vector.shape_cast %424 : vector<1x8x128xf32> to vector<8x128xf32>
    %426 = vector.shape_cast %422 : vector<8x128xf32> to vector<1x8x128xf32>
    tpu.vector_store %arg15[%423, %c0_116, %c0_117], %426 {strides = array<i32>} : memref<8x8x128xf32, #tpu.memory_space<vmem>>, vector<1x8x128xf32>,
    %c5_i32 = arith.constant 5 : i32
    %cst_118 = arith.constant dense<0.000000e+00> : vector<8x176xf32>
    %427 = tpu.matmul %414, %2, %cst_118 {dimension_numbers = #tpu.dot_dimension_numbers<[1], [0], [0], [1], [0, 0, 1, 1], [], []>} : vector<8x32xf32>, vector<32x176xf32>, vector<8x176xf32> -> vector<8x176xf32>
    %428 = vector.broadcast %3 : vector<1x176xf32> to vector<8x176xf32>
    %429 = arith.addf %427, %428 : vector<8x176xf32>
    %430 = vector.extract_strided_slice %429 {offsets = [0, 0], sizes = [8, 16], strides = [1, 1]} : vector<8x176xf32> to vector<8x16xf32>
    %431 = vector.extract_strided_slice %429 {offsets = [0, 16], sizes = [8, 32], strides = [1, 1]} : vector<8x176xf32> to vector<8x32xf32>
    %432 = vector.extract_strided_slice %429 {offsets = [0, 48], sizes = [8, 128], strides = [1, 1]} : vector<8x176xf32> to vector<8x128xf32>
    %433 = vector.shape_cast %430 : vector<8x16xf32> to vector<8x1x16xf32>
    %434 = vector.broadcast %433 : vector<8x1x16xf32> to vector<8x8x16xf32>
    %435 = arith.addf %1, %434 : vector<8x8x16xf32>
    %cst_119 = arith.constant 0.000000e+00 : f32
    %436 = vector.broadcast %cst_119 : f32 to vector<8x8x16xf32>
    %437 = arith.maximumf %435, %436 : vector<8x8x16xf32>
    %438 = vector.broadcast %7 : vector<1x1x16xf32> to vector<8x8x16xf32>
    %439 = arith.mulf %437, %438 : vector<8x8x16xf32>
    %cst_120 = arith.constant dense<0.000000e+00> : vector<8x8xf32>
    %440 = vector.multi_reduction <add>, %439, %cst_120 [2] : vector<8x8x16xf32> to vector<8x8xf32>
    %441 = vector.broadcast %8 : vector<1x1xf32> to vector<8x8xf32>
    %442 = arith.addf %440, %441 : vector<8x8xf32>
    %cst_121 = arith.constant dense<0xFF800000> : vector<8xf32>
    %443 = vector.multi_reduction <maximumf>, %442, %cst_121 [1] : vector<8x8xf32> to vector<8xf32>
    %444 = vector.shape_cast %443 : vector<8xf32> to vector<8x1xf32>
    %445 = vector.broadcast %444 : vector<8x1xf32> to vector<8x8xf32>
    %446 = arith.subf %442, %445 : vector<8x8xf32>
    %447 = math.exp %446 : vector<8x8xf32>
    %cst_122 = arith.constant dense<0.000000e+00> : vector<8xf32>
    %448 = vector.multi_reduction <add>, %447, %cst_122 [1] : vector<8x8xf32> to vector<8xf32>
    %449 = vector.shape_cast %448 : vector<8xf32> to vector<8x1xf32>
    %450 = tpu.reciprocal %449 {approx = true} : vector<8x1xf32> -> vector<8x1xf32>
    %451 = vector.broadcast %450 : vector<8x1xf32> to vector<8x8xf32>
    %452 = arith.mulf %447, %451 : vector<8x8xf32>
    %453 = vector.shape_cast %452 : vector<8x8xf32> to vector<8x8x1xf32>
    %454 = vector.broadcast %453 : vector<8x8x1xf32> to vector<8x8x32xf32>
    %455 = arith.mulf %0, %454 : vector<8x8x32xf32>
    %cst_123 = arith.constant dense<0.000000e+00> : vector<8x32xf32>
    %456 = vector.multi_reduction <add>, %455, %cst_123 [1] : vector<8x8x32xf32> to vector<8x32xf32>
    %457 = arith.negf %431 : vector<8x32xf32>
    %458 = math.exp %457 : vector<8x32xf32>
    %cst_124 = arith.constant 1.000000e+00 : f32
    %459 = vector.broadcast %cst_124 : f32 to vector<8x32xf32>
    %460 = arith.addf %459, %458 : vector<8x32xf32>
    %461 = arith.divf %459, %460 : vector<8x32xf32>
    %462 = arith.mulf %461, %456 : vector<8x32xf32>
    %463 = arith.index_cast %c5_i32 : i32 to index
    %c0_125 = arith.constant 0 : index
    %c0_126 = arith.constant 0 : index
    %464 = vector.load %arg3[%463, %c0_125, %c0_126] : memref<8x8x16xf32, #tpu.memory_space<vmem>>, vector<1x8x16xf32>
    %465 = vector.shape_cast %464 : vector<1x8x16xf32> to vector<8x16xf32>
    %466 = tpu.concatenate %465, %462 in 1 : vector<8x16xf32>, vector<8x32xf32> -> vector<8x48xf32>
    %cst_127 = arith.constant dense<0.000000e+00> : vector<8x128xf32>
    %467 = tpu.matmul %466, %4, %cst_127 {dimension_numbers = #tpu.dot_dimension_numbers<[1], [0], [0], [1], [0, 0, 1, 1], [], []>} : vector<8x48xf32>, vector<48x128xf32>, vector<8x128xf32> -> vector<8x128xf32>
    %468 = vector.broadcast %5 : vector<1x128xf32> to vector<8x128xf32>
    %469 = arith.addf %467, %468 : vector<8x128xf32>
    %470 = arith.addf %469, %432 : vector<8x128xf32>
    %471 = vector.extract_strided_slice %470 {offsets = [0, 0], sizes = [8, 32], strides = [1, 1]} : vector<8x128xf32> to vector<8x32xf32>
    %472 = arith.negf %471 : vector<8x32xf32>
    %473 = math.exp %472 : vector<8x32xf32>
    %cst_128 = arith.constant 1.000000e+00 : f32
    %474 = vector.broadcast %cst_128 : f32 to vector<8x32xf32>
    %475 = arith.addf %474, %473 : vector<8x32xf32>
    %476 = arith.divf %474, %475 : vector<8x32xf32>
    %477 = vector.extract_strided_slice %470 {offsets = [0, 32], sizes = [8, 32], strides = [1, 1]} : vector<8x128xf32> to vector<8x32xf32>
    %478 = arith.negf %477 : vector<8x32xf32>
    %479 = math.exp %478 : vector<8x32xf32>
    %cst_129 = arith.constant 1.000000e+00 : f32
    %480 = vector.broadcast %cst_129 : f32 to vector<8x32xf32>
    %481 = arith.addf %480, %479 : vector<8x32xf32>
    %482 = arith.divf %480, %481 : vector<8x32xf32>
    %483 = vector.extract_strided_slice %470 {offsets = [0, 64], sizes = [8, 32], strides = [1, 1]} : vector<8x128xf32> to vector<8x32xf32>
    %484 = math.tanh %483 : vector<8x32xf32>
    %485 = vector.extract_strided_slice %470 {offsets = [0, 96], sizes = [8, 32], strides = [1, 1]} : vector<8x128xf32> to vector<8x32xf32>
    %486 = arith.negf %485 : vector<8x32xf32>
    %487 = math.exp %486 : vector<8x32xf32>
    %cst_130 = arith.constant 1.000000e+00 : f32
    %488 = vector.broadcast %cst_130 : f32 to vector<8x32xf32>
    %489 = arith.addf %488, %487 : vector<8x32xf32>
    %490 = arith.divf %488, %489 : vector<8x32xf32>
    %491 = arith.mulf %482, %412 : vector<8x32xf32>
    %492 = arith.mulf %476, %484 : vector<8x32xf32>
    %493 = arith.addf %491, %492 : vector<8x32xf32>
    %494 = math.tanh %493 : vector<8x32xf32>
    %495 = arith.mulf %490, %494 : vector<8x32xf32>
    %cst_131 = arith.constant dense<0.000000e+00> : vector<8x128xf32>
    %496 = tpu.matmul %495, %9, %cst_131 {dimension_numbers = #tpu.dot_dimension_numbers<[1], [0], [0], [1], [0, 0, 1, 1], [], []>} : vector<8x32xf32>, vector<32x128xf32>, vector<8x128xf32> -> vector<8x128xf32>
    %497 = vector.broadcast %10 : vector<1x128xf32> to vector<8x128xf32>
    %498 = arith.addf %496, %497 : vector<8x128xf32>
    %499 = arith.index_cast %c5_i32 : i32 to index
    %c0_132 = arith.constant 0 : index
    %c0_133 = arith.constant 0 : index
    %500 = vector.load %arg14[%499, %c0_132, %c0_133] : memref<8x8x128xf32, #tpu.memory_space<vmem>>, vector<1x8x128xf32>
    %501 = vector.shape_cast %500 : vector<1x8x128xf32> to vector<8x128xf32>
    %502 = vector.shape_cast %498 : vector<8x128xf32> to vector<1x8x128xf32>
    tpu.vector_store %arg14[%499, %c0_132, %c0_133], %502 {strides = array<i32>} : memref<8x8x128xf32, #tpu.memory_space<vmem>>, vector<1x8x128xf32>,
    %503 = tpu.concatenate %452, %11 in 1 : vector<8x8xf32>, vector<8x120xf32> -> vector<8x128xf32>
    %504 = arith.index_cast %c5_i32 : i32 to index
    %c0_134 = arith.constant 0 : index
    %c0_135 = arith.constant 0 : index
    %505 = vector.load %arg15[%504, %c0_134, %c0_135] : memref<8x8x128xf32, #tpu.memory_space<vmem>>, vector<1x8x128xf32>
    %506 = vector.shape_cast %505 : vector<1x8x128xf32> to vector<8x128xf32>
    %507 = vector.shape_cast %503 : vector<8x128xf32> to vector<1x8x128xf32>
    tpu.vector_store %arg15[%504, %c0_134, %c0_135], %507 {strides = array<i32>} : memref<8x8x128xf32, #tpu.memory_space<vmem>>, vector<1x8x128xf32>,
    %c6_i32 = arith.constant 6 : i32
    %cst_136 = arith.constant dense<0.000000e+00> : vector<8x176xf32>
    %508 = tpu.matmul %495, %2, %cst_136 {dimension_numbers = #tpu.dot_dimension_numbers<[1], [0], [0], [1], [0, 0, 1, 1], [], []>} : vector<8x32xf32>, vector<32x176xf32>, vector<8x176xf32> -> vector<8x176xf32>
    %509 = vector.broadcast %3 : vector<1x176xf32> to vector<8x176xf32>
    %510 = arith.addf %508, %509 : vector<8x176xf32>
    %511 = vector.extract_strided_slice %510 {offsets = [0, 0], sizes = [8, 16], strides = [1, 1]} : vector<8x176xf32> to vector<8x16xf32>
    %512 = vector.extract_strided_slice %510 {offsets = [0, 16], sizes = [8, 32], strides = [1, 1]} : vector<8x176xf32> to vector<8x32xf32>
    %513 = vector.extract_strided_slice %510 {offsets = [0, 48], sizes = [8, 128], strides = [1, 1]} : vector<8x176xf32> to vector<8x128xf32>
    %514 = vector.shape_cast %511 : vector<8x16xf32> to vector<8x1x16xf32>
    %515 = vector.broadcast %514 : vector<8x1x16xf32> to vector<8x8x16xf32>
    %516 = arith.addf %1, %515 : vector<8x8x16xf32>
    %cst_137 = arith.constant 0.000000e+00 : f32
    %517 = vector.broadcast %cst_137 : f32 to vector<8x8x16xf32>
    %518 = arith.maximumf %516, %517 : vector<8x8x16xf32>
    %519 = vector.broadcast %7 : vector<1x1x16xf32> to vector<8x8x16xf32>
    %520 = arith.mulf %518, %519 : vector<8x8x16xf32>
    %cst_138 = arith.constant dense<0.000000e+00> : vector<8x8xf32>
    %521 = vector.multi_reduction <add>, %520, %cst_138 [2] : vector<8x8x16xf32> to vector<8x8xf32>
    %522 = vector.broadcast %8 : vector<1x1xf32> to vector<8x8xf32>
    %523 = arith.addf %521, %522 : vector<8x8xf32>
    %cst_139 = arith.constant dense<0xFF800000> : vector<8xf32>
    %524 = vector.multi_reduction <maximumf>, %523, %cst_139 [1] : vector<8x8xf32> to vector<8xf32>
    %525 = vector.shape_cast %524 : vector<8xf32> to vector<8x1xf32>
    %526 = vector.broadcast %525 : vector<8x1xf32> to vector<8x8xf32>
    %527 = arith.subf %523, %526 : vector<8x8xf32>
    %528 = math.exp %527 : vector<8x8xf32>
    %cst_140 = arith.constant dense<0.000000e+00> : vector<8xf32>
    %529 = vector.multi_reduction <add>, %528, %cst_140 [1] : vector<8x8xf32> to vector<8xf32>
    %530 = vector.shape_cast %529 : vector<8xf32> to vector<8x1xf32>
    %531 = tpu.reciprocal %530 {approx = true} : vector<8x1xf32> -> vector<8x1xf32>
    %532 = vector.broadcast %531 : vector<8x1xf32> to vector<8x8xf32>
    %533 = arith.mulf %528, %532 : vector<8x8xf32>
    %534 = vector.shape_cast %533 : vector<8x8xf32> to vector<8x8x1xf32>
    %535 = vector.broadcast %534 : vector<8x8x1xf32> to vector<8x8x32xf32>
    %536 = arith.mulf %0, %535 : vector<8x8x32xf32>
    %cst_141 = arith.constant dense<0.000000e+00> : vector<8x32xf32>
    %537 = vector.multi_reduction <add>, %536, %cst_141 [1] : vector<8x8x32xf32> to vector<8x32xf32>
    %538 = arith.negf %512 : vector<8x32xf32>
    %539 = math.exp %538 : vector<8x32xf32>
    %cst_142 = arith.constant 1.000000e+00 : f32
    %540 = vector.broadcast %cst_142 : f32 to vector<8x32xf32>
    %541 = arith.addf %540, %539 : vector<8x32xf32>
    %542 = arith.divf %540, %541 : vector<8x32xf32>
    %543 = arith.mulf %542, %537 : vector<8x32xf32>
    %544 = arith.index_cast %c6_i32 : i32 to index
    %c0_143 = arith.constant 0 : index
    %c0_144 = arith.constant 0 : index
    %545 = vector.load %arg3[%544, %c0_143, %c0_144] : memref<8x8x16xf32, #tpu.memory_space<vmem>>, vector<1x8x16xf32>
    %546 = vector.shape_cast %545 : vector<1x8x16xf32> to vector<8x16xf32>
    %547 = tpu.concatenate %546, %543 in 1 : vector<8x16xf32>, vector<8x32xf32> -> vector<8x48xf32>
    %cst_145 = arith.constant dense<0.000000e+00> : vector<8x128xf32>
    %548 = tpu.matmul %547, %4, %cst_145 {dimension_numbers = #tpu.dot_dimension_numbers<[1], [0], [0], [1], [0, 0, 1, 1], [], []>} : vector<8x48xf32>, vector<48x128xf32>, vector<8x128xf32> -> vector<8x128xf32>
    %549 = vector.broadcast %5 : vector<1x128xf32> to vector<8x128xf32>
    %550 = arith.addf %548, %549 : vector<8x128xf32>
    %551 = arith.addf %550, %513 : vector<8x128xf32>
    %552 = vector.extract_strided_slice %551 {offsets = [0, 0], sizes = [8, 32], strides = [1, 1]} : vector<8x128xf32> to vector<8x32xf32>
    %553 = arith.negf %552 : vector<8x32xf32>
    %554 = math.exp %553 : vector<8x32xf32>
    %cst_146 = arith.constant 1.000000e+00 : f32
    %555 = vector.broadcast %cst_146 : f32 to vector<8x32xf32>
    %556 = arith.addf %555, %554 : vector<8x32xf32>
    %557 = arith.divf %555, %556 : vector<8x32xf32>
    %558 = vector.extract_strided_slice %551 {offsets = [0, 32], sizes = [8, 32], strides = [1, 1]} : vector<8x128xf32> to vector<8x32xf32>
    %559 = arith.negf %558 : vector<8x32xf32>
    %560 = math.exp %559 : vector<8x32xf32>
    %cst_147 = arith.constant 1.000000e+00 : f32
    %561 = vector.broadcast %cst_147 : f32 to vector<8x32xf32>
    %562 = arith.addf %561, %560 : vector<8x32xf32>
    %563 = arith.divf %561, %562 : vector<8x32xf32>
    %564 = vector.extract_strided_slice %551 {offsets = [0, 64], sizes = [8, 32], strides = [1, 1]} : vector<8x128xf32> to vector<8x32xf32>
    %565 = math.tanh %564 : vector<8x32xf32>
    %566 = vector.extract_strided_slice %551 {offsets = [0, 96], sizes = [8, 32], strides = [1, 1]} : vector<8x128xf32> to vector<8x32xf32>
    %567 = arith.negf %566 : vector<8x32xf32>
    %568 = math.exp %567 : vector<8x32xf32>
    %cst_148 = arith.constant 1.000000e+00 : f32
    %569 = vector.broadcast %cst_148 : f32 to vector<8x32xf32>
    %570 = arith.addf %569, %568 : vector<8x32xf32>
    %571 = arith.divf %569, %570 : vector<8x32xf32>
    %572 = arith.mulf %563, %493 : vector<8x32xf32>
    %573 = arith.mulf %557, %565 : vector<8x32xf32>
    %574 = arith.addf %572, %573 : vector<8x32xf32>
    %575 = math.tanh %574 : vector<8x32xf32>
    %576 = arith.mulf %571, %575 : vector<8x32xf32>
    %cst_149 = arith.constant dense<0.000000e+00> : vector<8x128xf32>
    %577 = tpu.matmul %576, %9, %cst_149 {dimension_numbers = #tpu.dot_dimension_numbers<[1], [0], [0], [1], [0, 0, 1, 1], [], []>} : vector<8x32xf32>, vector<32x128xf32>, vector<8x128xf32> -> vector<8x128xf32>
    %578 = vector.broadcast %10 : vector<1x128xf32> to vector<8x128xf32>
    %579 = arith.addf %577, %578 : vector<8x128xf32>
    %580 = arith.index_cast %c6_i32 : i32 to index
    %c0_150 = arith.constant 0 : index
    %c0_151 = arith.constant 0 : index
    %581 = vector.load %arg14[%580, %c0_150, %c0_151] : memref<8x8x128xf32, #tpu.memory_space<vmem>>, vector<1x8x128xf32>
    %582 = vector.shape_cast %581 : vector<1x8x128xf32> to vector<8x128xf32>
    %583 = vector.shape_cast %579 : vector<8x128xf32> to vector<1x8x128xf32>
    tpu.vector_store %arg14[%580, %c0_150, %c0_151], %583 {strides = array<i32>} : memref<8x8x128xf32, #tpu.memory_space<vmem>>, vector<1x8x128xf32>,
    %584 = tpu.concatenate %533, %11 in 1 : vector<8x8xf32>, vector<8x120xf32> -> vector<8x128xf32>
    %585 = arith.index_cast %c6_i32 : i32 to index
    %c0_152 = arith.constant 0 : index
    %c0_153 = arith.constant 0 : index
    %586 = vector.load %arg15[%585, %c0_152, %c0_153] : memref<8x8x128xf32, #tpu.memory_space<vmem>>, vector<1x8x128xf32>
    %587 = vector.shape_cast %586 : vector<1x8x128xf32> to vector<8x128xf32>
    %588 = vector.shape_cast %584 : vector<8x128xf32> to vector<1x8x128xf32>
    tpu.vector_store %arg15[%585, %c0_152, %c0_153], %588 {strides = array<i32>} : memref<8x8x128xf32, #tpu.memory_space<vmem>>, vector<1x8x128xf32>,
    %c7_i32 = arith.constant 7 : i32
    %cst_154 = arith.constant dense<0.000000e+00> : vector<8x176xf32>
    %589 = tpu.matmul %576, %2, %cst_154 {dimension_numbers = #tpu.dot_dimension_numbers<[1], [0], [0], [1], [0, 0, 1, 1], [], []>} : vector<8x32xf32>, vector<32x176xf32>, vector<8x176xf32> -> vector<8x176xf32>
    %590 = vector.broadcast %3 : vector<1x176xf32> to vector<8x176xf32>
    %591 = arith.addf %589, %590 : vector<8x176xf32>
    %592 = vector.extract_strided_slice %591 {offsets = [0, 0], sizes = [8, 16], strides = [1, 1]} : vector<8x176xf32> to vector<8x16xf32>
    %593 = vector.extract_strided_slice %591 {offsets = [0, 16], sizes = [8, 32], strides = [1, 1]} : vector<8x176xf32> to vector<8x32xf32>
    %594 = vector.extract_strided_slice %591 {offsets = [0, 48], sizes = [8, 128], strides = [1, 1]} : vector<8x176xf32> to vector<8x128xf32>
    %595 = vector.shape_cast %592 : vector<8x16xf32> to vector<8x1x16xf32>
    %596 = vector.broadcast %595 : vector<8x1x16xf32> to vector<8x8x16xf32>
    %597 = arith.addf %1, %596 : vector<8x8x16xf32>
    %cst_155 = arith.constant 0.000000e+00 : f32
    %598 = vector.broadcast %cst_155 : f32 to vector<8x8x16xf32>
    %599 = arith.maximumf %597, %598 : vector<8x8x16xf32>
    %600 = vector.broadcast %7 : vector<1x1x16xf32> to vector<8x8x16xf32>
    %601 = arith.mulf %599, %600 : vector<8x8x16xf32>
    %cst_156 = arith.constant dense<0.000000e+00> : vector<8x8xf32>
    %602 = vector.multi_reduction <add>, %601, %cst_156 [2] : vector<8x8x16xf32> to vector<8x8xf32>
    %603 = vector.broadcast %8 : vector<1x1xf32> to vector<8x8xf32>
    %604 = arith.addf %602, %603 : vector<8x8xf32>
    %cst_157 = arith.constant dense<0xFF800000> : vector<8xf32>
    %605 = vector.multi_reduction <maximumf>, %604, %cst_157 [1] : vector<8x8xf32> to vector<8xf32>
    %606 = vector.shape_cast %605 : vector<8xf32> to vector<8x1xf32>
    %607 = vector.broadcast %606 : vector<8x1xf32> to vector<8x8xf32>
    %608 = arith.subf %604, %607 : vector<8x8xf32>
    %609 = math.exp %608 : vector<8x8xf32>
    %cst_158 = arith.constant dense<0.000000e+00> : vector<8xf32>
    %610 = vector.multi_reduction <add>, %609, %cst_158 [1] : vector<8x8xf32> to vector<8xf32>
    %611 = vector.shape_cast %610 : vector<8xf32> to vector<8x1xf32>
    %612 = tpu.reciprocal %611 {approx = true} : vector<8x1xf32> -> vector<8x1xf32>
    %613 = vector.broadcast %612 : vector<8x1xf32> to vector<8x8xf32>
    %614 = arith.mulf %609, %613 : vector<8x8xf32>
    %615 = vector.shape_cast %614 : vector<8x8xf32> to vector<8x8x1xf32>
    %616 = vector.broadcast %615 : vector<8x8x1xf32> to vector<8x8x32xf32>
    %617 = arith.mulf %0, %616 : vector<8x8x32xf32>
    %cst_159 = arith.constant dense<0.000000e+00> : vector<8x32xf32>
    %618 = vector.multi_reduction <add>, %617, %cst_159 [1] : vector<8x8x32xf32> to vector<8x32xf32>
    %619 = arith.negf %593 : vector<8x32xf32>
    %620 = math.exp %619 : vector<8x32xf32>
    %cst_160 = arith.constant 1.000000e+00 : f32
    %621 = vector.broadcast %cst_160 : f32 to vector<8x32xf32>
    %622 = arith.addf %621, %620 : vector<8x32xf32>
    %623 = arith.divf %621, %622 : vector<8x32xf32>
    %624 = arith.mulf %623, %618 : vector<8x32xf32>
    %625 = arith.index_cast %c7_i32 : i32 to index
    %c0_161 = arith.constant 0 : index
    %c0_162 = arith.constant 0 : index
    %626 = vector.load %arg3[%625, %c0_161, %c0_162] : memref<8x8x16xf32, #tpu.memory_space<vmem>>, vector<1x8x16xf32>
    %627 = vector.shape_cast %626 : vector<1x8x16xf32> to vector<8x16xf32>
    %628 = tpu.concatenate %627, %624 in 1 : vector<8x16xf32>, vector<8x32xf32> -> vector<8x48xf32>
    %cst_163 = arith.constant dense<0.000000e+00> : vector<8x128xf32>
    %629 = tpu.matmul %628, %4, %cst_163 {dimension_numbers = #tpu.dot_dimension_numbers<[1], [0], [0], [1], [0, 0, 1, 1], [], []>} : vector<8x48xf32>, vector<48x128xf32>, vector<8x128xf32> -> vector<8x128xf32>
    %630 = vector.broadcast %5 : vector<1x128xf32> to vector<8x128xf32>
    %631 = arith.addf %629, %630 : vector<8x128xf32>
    %632 = arith.addf %631, %594 : vector<8x128xf32>
    %633 = vector.extract_strided_slice %632 {offsets = [0, 0], sizes = [8, 32], strides = [1, 1]} : vector<8x128xf32> to vector<8x32xf32>
    %634 = arith.negf %633 : vector<8x32xf32>
    %635 = math.exp %634 : vector<8x32xf32>
    %cst_164 = arith.constant 1.000000e+00 : f32
    %636 = vector.broadcast %cst_164 : f32 to vector<8x32xf32>
    %637 = arith.addf %636, %635 : vector<8x32xf32>
    %638 = arith.divf %636, %637 : vector<8x32xf32>
    %639 = vector.extract_strided_slice %632 {offsets = [0, 32], sizes = [8, 32], strides = [1, 1]} : vector<8x128xf32> to vector<8x32xf32>
    %640 = arith.negf %639 : vector<8x32xf32>
    %641 = math.exp %640 : vector<8x32xf32>
    %cst_165 = arith.constant 1.000000e+00 : f32
    %642 = vector.broadcast %cst_165 : f32 to vector<8x32xf32>
    %643 = arith.addf %642, %641 : vector<8x32xf32>
    %644 = arith.divf %642, %643 : vector<8x32xf32>
    %645 = vector.extract_strided_slice %632 {offsets = [0, 64], sizes = [8, 32], strides = [1, 1]} : vector<8x128xf32> to vector<8x32xf32>
    %646 = math.tanh %645 : vector<8x32xf32>
    %647 = vector.extract_strided_slice %632 {offsets = [0, 96], sizes = [8, 32], strides = [1, 1]} : vector<8x128xf32> to vector<8x32xf32>
    %648 = arith.negf %647 : vector<8x32xf32>
    %649 = math.exp %648 : vector<8x32xf32>
    %cst_166 = arith.constant 1.000000e+00 : f32
    %650 = vector.broadcast %cst_166 : f32 to vector<8x32xf32>
    %651 = arith.addf %650, %649 : vector<8x32xf32>
    %652 = arith.divf %650, %651 : vector<8x32xf32>
    %653 = arith.mulf %644, %574 : vector<8x32xf32>
    %654 = arith.mulf %638, %646 : vector<8x32xf32>
    %655 = arith.addf %653, %654 : vector<8x32xf32>
    %656 = math.tanh %655 : vector<8x32xf32>
    %657 = arith.mulf %652, %656 : vector<8x32xf32>
    %cst_167 = arith.constant dense<0.000000e+00> : vector<8x128xf32>
    %658 = tpu.matmul %657, %9, %cst_167 {dimension_numbers = #tpu.dot_dimension_numbers<[1], [0], [0], [1], [0, 0, 1, 1], [], []>} : vector<8x32xf32>, vector<32x128xf32>, vector<8x128xf32> -> vector<8x128xf32>
    %659 = vector.broadcast %10 : vector<1x128xf32> to vector<8x128xf32>
    %660 = arith.addf %658, %659 : vector<8x128xf32>
    %661 = arith.index_cast %c7_i32 : i32 to index
    %c0_168 = arith.constant 0 : index
    %c0_169 = arith.constant 0 : index
    %662 = vector.load %arg14[%661, %c0_168, %c0_169] : memref<8x8x128xf32, #tpu.memory_space<vmem>>, vector<1x8x128xf32>
    %663 = vector.shape_cast %662 : vector<1x8x128xf32> to vector<8x128xf32>
    %664 = vector.shape_cast %660 : vector<8x128xf32> to vector<1x8x128xf32>
    tpu.vector_store %arg14[%661, %c0_168, %c0_169], %664 {strides = array<i32>} : memref<8x8x128xf32, #tpu.memory_space<vmem>>, vector<1x8x128xf32>,
    %665 = tpu.concatenate %614, %11 in 1 : vector<8x8xf32>, vector<8x120xf32> -> vector<8x128xf32>
    %666 = arith.index_cast %c7_i32 : i32 to index
    %c0_170 = arith.constant 0 : index
    %c0_171 = arith.constant 0 : index
    %667 = vector.load %arg15[%666, %c0_170, %c0_171] : memref<8x8x128xf32, #tpu.memory_space<vmem>>, vector<1x8x128xf32>
    %668 = vector.shape_cast %667 : vector<1x8x128xf32> to vector<8x128xf32>
    %669 = vector.shape_cast %665 : vector<8x128xf32> to vector<1x8x128xf32>
    tpu.vector_store %arg15[%666, %c0_170, %c0_171], %669 {strides = array<i32>} : memref<8x8x128xf32, #tpu.memory_space<vmem>>, vector<1x8x128xf32>,
    %c8_i32 = arith.constant 8 : i32
    return
  }
  func.func @transform_0(%arg0: i32) -> (i32, i32, i32) {
    %c0_i32 = arith.constant 0 : i32
    %c0_i32_0 = arith.constant 0 : i32
    %c0_i32_1 = arith.constant 0 : i32
    return %arg0, %c0_i32, %c0_i32_0 : i32, i32, i32
  }
  func.func @transform_1(%arg0: i32) -> (i32, i32, i32) {
    %c0_i32 = arith.constant 0 : i32
    %c0_i32_0 = arith.constant 0 : i32
    %c0_i32_1 = arith.constant 0 : i32
    return %arg0, %c0_i32, %c0_i32_0 : i32, i32, i32
  }
  func.func @transform_2(%arg0: i32) -> (i32, i32, i32) {
    %c0_i32 = arith.constant 0 : i32
    %c0_i32_0 = arith.constant 0 : i32
    %c0_i32_1 = arith.constant 0 : i32
    return %c0_i32, %arg0, %c0_i32_0 : i32, i32, i32
  }
  func.func @transform_3(%arg0: i32) -> (i32, i32) {
    %c0_i32 = arith.constant 0 : i32
    %c0_i32_0 = arith.constant 0 : i32
    %c0_i32_1 = arith.constant 0 : i32
    return %c0_i32, %c0_i32_0 : i32, i32
  }
  func.func @transform_4(%arg0: i32) -> (i32, i32) {
    %c0_i32 = arith.constant 0 : i32
    %c0_i32_0 = arith.constant 0 : i32
    %c0_i32_1 = arith.constant 0 : i32
    return %c0_i32, %c0_i32_0 : i32, i32
  }
  func.func @transform_5(%arg0: i32) -> (i32, i32) {
    %c0_i32 = arith.constant 0 : i32
    %c0_i32_0 = arith.constant 0 : i32
    %c0_i32_1 = arith.constant 0 : i32
    return %c0_i32, %c0_i32_0 : i32, i32
  }
  func.func @transform_6(%arg0: i32) -> (i32, i32) {
    %c0_i32 = arith.constant 0 : i32
    %c0_i32_0 = arith.constant 0 : i32
    %c0_i32_1 = arith.constant 0 : i32
    return %c0_i32, %c0_i32_0 : i32, i32
  }
  func.func @transform_7(%arg0: i32) -> (i32, i32) {
    %c0_i32 = arith.constant 0 : i32
    %c0_i32_0 = arith.constant 0 : i32
    %c0_i32_1 = arith.constant 0 : i32
    return %c0_i32, %c0_i32_0 : i32, i32
  }
  func.func @transform_8(%arg0: i32) -> (i32, i32) {
    %c0_i32 = arith.constant 0 : i32
    %c0_i32_0 = arith.constant 0 : i32
    %c0_i32_1 = arith.constant 0 : i32
    return %c0_i32, %c0_i32_0 : i32, i32
  }
  func.func @transform_9(%arg0: i32) -> (i32, i32) {
    %c0_i32 = arith.constant 0 : i32
    %c0_i32_0 = arith.constant 0 : i32
    %c0_i32_1 = arith.constant 0 : i32
    return %c0_i32, %c0_i32_0 : i32, i32
  }
  func.func @transform_10(%arg0: i32) -> (i32, i32) {
    %c0_i32 = arith.constant 0 : i32
    %c0_i32_0 = arith.constant 0 : i32
    %c0_i32_1 = arith.constant 0 : i32
    return %c0_i32, %c0_i32_0 : i32, i32
  }
  func.func @transform_11(%arg0: i32) -> (i32, i32) {
    %c0_i32 = arith.constant 0 : i32
    %c0_i32_0 = arith.constant 0 : i32
    %c0_i32_1 = arith.constant 0 : i32
    return %c0_i32, %c0_i32_0 : i32, i32
  }
  func.func @transform_12(%arg0: i32) -> (i32, i32) {
    %c0_i32 = arith.constant 0 : i32
    %c0_i32_0 = arith.constant 0 : i32
    %c0_i32_1 = arith.constant 0 : i32
    return %c0_i32, %c0_i32_0 : i32, i32
  }
  func.func @transform_13(%arg0: i32) -> (i32, i32, i32) {
    %c0_i32 = arith.constant 0 : i32
    %c0_i32_0 = arith.constant 0 : i32
    %c0_i32_1 = arith.constant 0 : i32
    return %c0_i32, %arg0, %c0_i32_0 : i32, i32, i32
  }
  func.func @transform_14(%arg0: i32) -> (i32, i32, i32) {
    %c0_i32 = arith.constant 0 : i32
    %c0_i32_0 = arith.constant 0 : i32
    %c0_i32_1 = arith.constant 0 : i32
    return %c0_i32, %arg0, %c0_i32_0 : i32, i32, i32
  }
}

</mosaic_0001>

<llo_original>
// kernel: tpu_custom_call.1
$region0: #{tpu_custom_call.1}
  #allocation0 [shape = 'u32[]', space=smem, size = 0x4, offset = 0x4, fixed_abs, tag = 'smem constant byte address 0x4 - core index']
  #allocation1 [shape = 'u32[144,128]{1,0:T(1,128)}', space=vmem, size = 0x12000, scoped, tag = 'internal scratch']
  #allocation2 [shape = 'f32[1,1]{1,0:T(1,128)S(1)}', space=vmem, size = 0x200, scoped, tag = 'scoped memory for tpu_custom_call.1']
  %s0 = inlined_call_operand.hbm [shape: f32[8,8,32], index: 0, kind: input, shape index: {}]
  %s1 = inlined_call_operand.hbm [shape: f32[8,8,16], index: 1, kind: input, shape index: {}]
  %s2 = inlined_call_operand.hbm [shape: f32[8,8,16], index: 2, kind: input, shape index: {}]
  %s3 = inlined_call_operand.hbm [shape: f32[32,64], index: 3, kind: input, shape index: {}]
  %s4 = inlined_call_operand.vmem [shape: f32[1,64], index: 4, kind: input, shape index: {}]
  %s5 = inlined_call_operand.hbm [shape: f32[32,176], index: 5, kind: input, shape index: {}]
  %s6 = inlined_call_operand.vmem [shape: f32[1,176], index: 6, kind: input, shape index: {}]
  %s7 = inlined_call_operand.hbm [shape: f32[48,128], index: 7, kind: input, shape index: {}]
  %s8 = inlined_call_operand.vmem [shape: f32[1,128], index: 8, kind: input, shape index: {}]
  %s9 = inlined_call_operand.vmem [shape: f32[1,16], index: 9, kind: input, shape index: {}]
  %s10 = inlined_call_operand.<no memory space> [shape: f32[1,1], index: 10, kind: input, shape index: {}]
  %s11 = inlined_call_operand.vmem [shape: f32[32,128], index: 11, kind: input, shape index: {}]
  %s12 = inlined_call_operand.vmem [shape: f32[1,128], index: 12, kind: input, shape index: {}]
  %s13 = inlined_call_operand.hbm [shape: f32[8,8,128], index: 13, kind: output, shape index: {0}]
  %s14 = inlined_call_operand.hbm [shape: f32[8,8,128], index: 14, kind: output, shape index: {1}]
  %15 = xla_tuple %s13, %s14
  %s16 = sld [smem:[#allocation0]]
  $region94: #{tpu_custom_call.1} parent=0
    _
  %s18 = ssub.s32 1, %s16
  %s19 = scalar_select 0, %s18, %s16
  %v20 = vstv %s10
  %21 = vst [vmem:[#allocation2] sm:$0x1] %v20
  $region1: #{tpu_custom_call.1} parent=0
    #allocation3 [shape = 'u8[32768]{0}', space=vmem, size = 0x8000, scoped, tag = 'input window, operand 0, single buffered']
    #allocation4 [shape = 's32[1]{0}', space=sflag, size = 0x4, scoped, tag = 'scoped memory for tpu_custom_call.1']
    #allocation5 [shape = 's32[1]{0}', space=sflag, size = 0x4, scoped, tag = 'scoped memory for tpu_custom_call.1']
    #allocation6 [shape = 'u8[32768]{0}', space=vmem, size = 0x8000, scoped, tag = 'input window, operand 1, single buffered']
    #allocation7 [shape = 's32[1]{0}', space=sflag, size = 0x4, scoped, tag = 'scoped memory for tpu_custom_call.1']
    #allocation8 [shape = 'u8[32768]{0}', space=vmem, size = 0x8000, scoped, tag = 'input window, operand 2, single buffered']
    #allocation9 [shape = 'u8[16384]{0}', space=vmem, size = 0x4000, scoped, tag = 'input window, operand 3, single buffered']
    #allocation10 [shape = 's32[1]{0}', space=sflag, size = 0x4, scoped, tag = 'scoped memory for tpu_custom_call.1']
    #allocation11 [shape = 'u8[32768]{0}', space=vmem, size = 0x8000, scoped, tag = 'input window, operand 5, single buffered']
    #allocation12 [shape = 'u8[24576]{0}', space=vmem, size = 0x6000, scoped, tag = 'input window, operand 7, single buffered']
    #allocation13 [shape = 's32[1]{0}', space=sflag, size = 0x4, scoped, tag = 'scoped memory for tpu_custom_call.1']
    #allocation14 [shape = 'u8[32768]{0}', space=vmem, size = 0x8000, scoped, tag = 'output window, operand 0, single buffered']
    #allocation15 [shape = 'u8[32768]{0}', space=vmem, size = 0x8000, scoped, tag = 'output window, operand 1, single buffered']
    #allocation16 [shape = 's32[1]{0}', space=sflag, size = 0x4, scoped, tag = 'scoped memory for tpu_custom_call.1']
    %22 = vsyncpa [#allocation4], 0
    %23 = vsyncpa [#allocation7], 0
    %24 = vsyncpa [#allocation10], 0
    %25 = vsyncpa [#allocation13], 0
    %26 = vsyncpa [#allocation5], 0
    %27 = vsyncpa [#allocation16], 0
    // Predicated region
    $region2: #{tpu_custom_call.1} parent=1 // pred_check
      _
    $region3: #{tpu_custom_call.1} parent=1 // pred_check_branch
      %29 = sbr.rel (0) target = $region5
    $region4: #{tpu_custom_call.1} parent=1 // pred_region
      %s31 = ssub.s32 1024, 1024
      %32 = vsyncadd [#allocation4], %s31
      %s33 = sshll.u32 [#allocation3], 4
      %s34 = int_to_ptr.vmem [resolvable:$true] %s33
      %39 = dma.hbm_to_vmem [thread:$0]  %s0, 1024, %s34, [#allocation4], 128, 128, 8
    $region5: #{tpu_custom_call.1} parent=1 // pred_fallthru
      _
    // Predicated region
    $region6: #{tpu_custom_call.1} parent=1 // pred_check
      _
    $region7: #{tpu_custom_call.1} parent=1 // pred_check_branch
      %41 = sbr.rel (0) target = $region9
    $region8: #{tpu_custom_call.1} parent=1 // pred_region
      %s43 = ssub.s32 1024, 1024
      %44 = vsyncadd [#allocation7], %s43
      %s45 = sshll.u32 [#allocation6], 4
      %s46 = int_to_ptr.vmem [resolvable:$true] %s45
      %51 = dma.hbm_to_vmem [thread:$0]  %s1, 1024, %s46, [#allocation7], 128, 128, 8
    $region9: #{tpu_custom_call.1} parent=1 // pred_fallthru
      _
    // Predicated region
    $region10: #{tpu_custom_call.1} parent=1 // pred_check
      _
    $region11: #{tpu_custom_call.1} parent=1 // pred_check_branch
      %53 = sbr.rel (0) target = $region13
    $region12: #{tpu_custom_call.1} parent=1 // pred_region
      %s55 = ssub.s32 1024, 1024
      %56 = vsyncadd [#allocation7], %s55
      %s57 = sshll.u32 [#allocation8], 4
      %s58 = int_to_ptr.vmem [resolvable:$true] %s57
      %63 = dma.hbm_to_vmem [thread:$0]  %s2, 1024, %s58, [#allocation7], 128, 128, 8
    $region13: #{tpu_custom_call.1} parent=1 // pred_fallthru
      _
    // Predicated region
    $region14: #{tpu_custom_call.1} parent=1 // pred_check
      _
    $region15: #{tpu_custom_call.1} parent=1 // pred_check_branch
      %65 = sbr.rel (0) target = $region17
    $region16: #{tpu_custom_call.1} parent=1 // pred_region
      %s67 = ssub.s32 512, 512
      %68 = vsyncadd [#allocation10], %s67
      %s69 = sshll.u32 [#allocation9], 4
      %s70 = int_to_ptr.vmem [resolvable:$true] %s69
      %75 = dma.hbm_to_vmem [thread:$0]  %s3, 512, %s70, [#allocation10], 128, 128, 8
    $region17: #{tpu_custom_call.1} parent=1 // pred_fallthru
      _
    // Predicated region
    $region18: #{tpu_custom_call.1} parent=1 // pred_check
      _
    $region19: #{tpu_custom_call.1} parent=1 // pred_check_branch
      %77 = sbr.rel (0) target = $region21
    $region20: #{tpu_custom_call.1} parent=1 // pred_region
      _
    $region21: #{tpu_custom_call.1} parent=1 // pred_fallthru
      _
    // Predicated region
    $region22: #{tpu_custom_call.1} parent=1 // pred_check
      _
    $region23: #{tpu_custom_call.1} parent=1 // pred_check_branch
      %79 = sbr.rel (0) target = $region25
    $region24: #{tpu_custom_call.1} parent=1 // pred_region
      %s81 = ssub.s32 1024, 1024
      %82 = vsyncadd [#allocation10], %s81
      %s83 = sshll.u32 [#allocation11], 4
      %s84 = int_to_ptr.vmem [resolvable:$true] %s83
      %89 = dma.hbm_to_vmem [thread:$0]  %s5, 1024, %s84, [#allocation10], 256, 256, 16
    $region25: #{tpu_custom_call.1} parent=1 // pred_fallthru
      _
    // Predicated region
    $region26: #{tpu_custom_call.1} parent=1 // pred_check
      _
    $region27: #{tpu_custom_call.1} parent=1 // pred_check_branch
      %91 = sbr.rel (0) target = $region29
    $region28: #{tpu_custom_call.1} parent=1 // pred_region
      _
    $region29: #{tpu_custom_call.1} parent=1 // pred_fallthru
      _
    // Predicated region
    $region30: #{tpu_custom_call.1} parent=1 // pred_check
      _
    $region31: #{tpu_custom_call.1} parent=1 // pred_check_branch
      %93 = sbr.rel (0) target = $region33
    $region32: #{tpu_custom_call.1} parent=1 // pred_region
      %s95 = ssub.s32 768, 768
      %96 = vsyncadd [#allocation13], %s95
      %s97 = sshll.u32 [#allocation12], 4
      %s98 = int_to_ptr.vmem [resolvable:$true] %s97
      %103 = dma.hbm_to_vmem [thread:$0]  %s7, 768, %s98, [#allocation13], 128, 128, 8
    $region33: #{tpu_custom_call.1} parent=1 // pred_fallthru
      _
    // Predicated region
    $region34: #{tpu_custom_call.1} parent=1 // pred_check
      _
    $region35: #{tpu_custom_call.1} parent=1 // pred_check_branch
      %105 = sbr.rel (0) target = $region37
    $region36: #{tpu_custom_call.1} parent=1 // pred_region
      _
    $region37: #{tpu_custom_call.1} parent=1 // pred_fallthru
      _
    // Predicated region
    $region38: #{tpu_custom_call.1} parent=1 // pred_check
      _
    $region39: #{tpu_custom_call.1} parent=1 // pred_check_branch
      %107 = sbr.rel (0) target = $region41
    $region40: #{tpu_custom_call.1} parent=1 // pred_region
      _
    $region41: #{tpu_custom_call.1} parent=1 // pred_fallthru
      _
    // Predicated region
    $region42: #{tpu_custom_call.1} parent=1 // pred_check
      _
    $region43: #{tpu_custom_call.1} parent=1 // pred_check_branch
      %109 = sbr.rel (0) target = $region45
    $region44: #{tpu_custom_call.1} parent=1 // pred_region
      _
    $region45: #{tpu_custom_call.1} parent=1 // pred_fallthru
      _
    // Predicated region
    $region46: #{tpu_custom_call.1} parent=1 // pred_check
      _
    $region47: #{tpu_custom_call.1} parent=1 // pred_check_branch
      %111 = sbr.rel (0) target = $region49
    $region48: #{tpu_custom_call.1} parent=1 // pred_region
      _
    $region49: #{tpu_custom_call.1} parent=1 // pred_fallthru
      _
    // Predicated region
    $region50: #{tpu_custom_call.1} parent=1 // pred_check
      _
    $region51: #{tpu_custom_call.1} parent=1 // pred_check_branch
      %113 = sbr.rel (0) target = $region53
    $region52: #{tpu_custom_call.1} parent=1 // pred_region
      _
    $region53: #{tpu_custom_call.1} parent=1 // pred_fallthru
      _
    // Predicated region
    $region54: #{tpu_custom_call.1} parent=1 // pred_check
      _
    $region55: #{tpu_custom_call.1} parent=1 // pred_check_branch
      %115 = sbr.rel (0) target = $region57
    $region56: #{tpu_custom_call.1} parent=1 // pred_region
      %116 = dma.done [#allocation4], 1024
    $region57: #{tpu_custom_call.1} parent=1 // pred_fallthru
      _
    // Predicated region
    $region58: #{tpu_custom_call.1} parent=1 // pred_check
      _
    $region59: #{tpu_custom_call.1} parent=1 // pred_check_branch
      %118 = sbr.rel (0) target = $region61
    $region60: #{tpu_custom_call.1} parent=1 // pred_region
      %119 = dma.done [#allocation7], 1024
    $region61: #{tpu_custom_call.1} parent=1 // pred_fallthru
      _
    // Predicated region
    $region62: #{tpu_custom_call.1} parent=1 // pred_check
      _
    $region63: #{tpu_custom_call.1} parent=1 // pred_check_branch
      %121 = sbr.rel (0) target = $region65
    $region64: #{tpu_custom_call.1} parent=1 // pred_region
      %122 = dma.done [#allocation7], 1024
    $region65: #{tpu_custom_call.1} parent=1 // pred_fallthru
      _
    // Predicated region
    $region66: #{tpu_custom_call.1} parent=1 // pred_check
      _
    $region67: #{tpu_custom_call.1} parent=1 // pred_check_branch
      %124 = sbr.rel (0) target = $region69
    $region68: #{tpu_custom_call.1} parent=1 // pred_region
      %125 = dma.done [#allocation10], 512
    $region69: #{tpu_custom_call.1} parent=1 // pred_fallthru
      _
    // Predicated region
    $region70: #{tpu_custom_call.1} parent=1 // pred_check
      _
    $region71: #{tpu_custom_call.1} parent=1 // pred_check_branch
      %127 = sbr.rel (0) target = $region73
    $region72: #{tpu_custom_call.1} parent=1 // pred_region
      %128 = dma.done [#allocation10], 1024
    $region73: #{tpu_custom_call.1} parent=1 // pred_fallthru
      _
    // Predicated region
    $region74: #{tpu_custom_call.1} parent=1 // pred_check
      _
    $region75: #{tpu_custom_call.1} parent=1 // pred_check_branch
      %130 = sbr.rel (0) target = $region77
    $region76: #{tpu_custom_call.1} parent=1 // pred_region
      %131 = dma.done [#allocation13], 768
    $region77: #{tpu_custom_call.1} parent=1 // pred_fallthru
      _
    %v132 = vld [vmem:[#allocation3] sm:$0xff]
    %v133 = vld [vmem:[#allocation3 + $0x8] sm:$0xff]
    %v134 = vld [vmem:[#allocation3 + $0x10] sm:$0xff]
    %v135 = vld [vmem:[#allocation3 + $0x18] sm:$0xff]
    %v136 = vld [vmem:[#allocation3 + $0x20] sm:$0xff]
    %v137 = vld [vmem:[#allocation3 + $0x28] sm:$0xff]
    %v138 = vld [vmem:[#allocation3 + $0x30] sm:$0xff]
    %v139 = vld [vmem:[#allocation3 + $0x38] sm:$0xff]
    %v140 = vld [vmem:[#allocation6] sm:$0xff]
    %v141 = vld [vmem:[#allocation6 + $0x8] sm:$0xff]
    %v142 = vld [vmem:[#allocation6 + $0x10] sm:$0xff]
    %v143 = vld [vmem:[#allocation6 + $0x18] sm:$0xff]
    %v144 = vld [vmem:[#allocation6 + $0x20] sm:$0xff]
    %v145 = vld [vmem:[#allocation6 + $0x28] sm:$0xff]
    %v146 = vld [vmem:[#allocation6 + $0x30] sm:$0xff]
    %v147 = vld [vmem:[#allocation6 + $0x38] sm:$0xff]
    %v148 = vld [vmem:[#allocation11] sm:$0xff]
    %v149 = vld [vmem:[#allocation11 + $0x8] sm:$0xff]
    %v150 = vld [vmem:[#allocation11 + $0x10] sm:$0xff]
    %v151 = vld [vmem:[#allocation11 + $0x18] sm:$0xff]
    %v152 = vld [vmem:[#allocation11 + $0x20] sm:$0xff]
    %v153 = vld [vmem:[#allocation11 + $0x28] sm:$0xff]
    %v154 = vld [vmem:[#allocation11 + $0x30] sm:$0xff]
    %v155 = vld [vmem:[#allocation11 + $0x38] sm:$0xff]
    %v156 = vld [vmem:[%s6] sm:$0x3]
    %v157 = vld [vmem:[#allocation12] sm:$0xff]
    %v158 = vld [vmem:[#allocation12 + $0x8] sm:$0xff]
    %v159 = vld [vmem:[#allocation12 + $0x10] sm:$0xff]
    %v160 = vld [vmem:[#allocation12 + $0x18] sm:$0xff]
    %v161 = vld [vmem:[#allocation12 + $0x20] sm:$0xff]
    %v162 = vld [vmem:[#allocation12 + $0x28] sm:$0xff]
    %v163 = vld [vmem:[%s8] sm:$0x1]
    %v164 = vld [vmem:[%s9] sm:$0x1]
    %v165 = vld [vmem:[#allocation2] sm:$0x1]
    %v166 = vld [vmem:[%s11] sm:$0xff]
    %v167 = vld [vmem:[%s11 + $0x8] sm:$0xff]
    %v168 = vld [vmem:[%s11 + $0x10] sm:$0xff]
    %v169 = vld [vmem:[%s11 + $0x18] sm:$0xff]
    %v170 = vld [vmem:[%s12] sm:$0x1]
    %vm171 = vcmask 261120
    %v172 = vsel %vm171, %v132, 0.0
    %v173 = vrot.slane %v172, 4
    %v174 = vadd.f32 %v172, %v173
    %v175 = vrot.slane %v174, 2
    %v176 = vadd.f32 %v174, %v175
    %v177 = vrot.slane %v176, 1
    %v178 = vadd.f32 %v176, %v177
    %v179 = vsel %vm171, %v133, 0.0
    %v180 = vrot.slane %v179, 4
    %v181 = vadd.f32 %v179, %v180
    %v182 = vrot.slane %v181, 2
    %v183 = vadd.f32 %v181, %v182
    %v184 = vrot.slane %v183, 1
    %v185 = vadd.f32 %v183, %v184
    %v186 = vsel %vm171, %v134, 0.0
    %v187 = vrot.slane %v186, 4
    %v188 = vadd.f32 %v186, %v187
    %v189 = vrot.slane %v188, 2
    %v190 = vadd.f32 %v188, %v189
    %v191 = vrot.slane %v190, 1
    %v192 = vadd.f32 %v190, %v191
    %v193 = vsel %vm171, %v135, 0.0
    %v194 = vrot.slane %v193, 4
    %v195 = vadd.f32 %v193, %v194
    %v196 = vrot.slane %v195, 2
    %v197 = vadd.f32 %v195, %v196
    %v198 = vrot.slane %v197, 1
    %v199 = vadd.f32 %v197, %v198
    %v200 = vsel %vm171, %v136, 0.0
    %v201 = vrot.slane %v200, 4
    %v202 = vadd.f32 %v200, %v201
    %v203 = vrot.slane %v202, 2
    %v204 = vadd.f32 %v202, %v203
    %v205 = vrot.slane %v204, 1
    %v206 = vadd.f32 %v204, %v205
    %v207 = vsel %vm171, %v137, 0.0
    %v208 = vrot.slane %v207, 4
    %v209 = vadd.f32 %v207, %v208
    %v210 = vrot.slane %v209, 2
    %v211 = vadd.f32 %v209, %v210
    %v212 = vrot.slane %v211, 1
    %v213 = vadd.f32 %v211, %v212
    %v214 = vsel %vm171, %v138, 0.0
    %v215 = vrot.slane %v214, 4
    %v216 = vadd.f32 %v214, %v215
    %v217 = vrot.slane %v216, 2
    %v218 = vadd.f32 %v216, %v217
    %v219 = vrot.slane %v218, 1
    %v220 = vadd.f32 %v218, %v219
    %v221 = vsel %vm171, %v139, 0.0
    %v222 = vrot.slane %v221, 4
    %v223 = vadd.f32 %v221, %v222
    %v224 = vrot.slane %v223, 2
    %v225 = vadd.f32 %v223, %v224
    %v226 = vrot.slane %v225, 1
    %v227 = vadd.f32 %v225, %v226
    %v228 = vrcp.pop 8.0
    %v229 = vmul.f32 %v178, %v228
    %v230 = vmul.f32 %v185, %v228
    %v231 = vmul.f32 %v192, %v228
    %v232 = vmul.f32 %v199, %v228
    %v233 = vmul.f32 %v206, %v228
    %v234 = vmul.f32 %v213, %v228
    %v235 = vmul.f32 %v220, %v228
    %v236 = vmul.f32 %v227, %v228
    %v237 = vld [vmem:[#allocation9] sm:$0xff]
    %v238 = vld [vmem:[#allocation9 + $0x8] sm:$0xff]
    %v239 = vld [vmem:[#allocation9 + $0x10] sm:$0xff]
    %v240 = vld [vmem:[#allocation9 + $0x18] sm:$0xff]
    %v241 = vld [vmem:[%s4] sm:$0x1]
    %v243 = vlaneseq
    %v244 = vshrl.u32 %v243, 7
    %v245 = vsub.s32 0, %v244
    %v246 = vrot.slane %v241, %v245
    %vm256 = vcmask 1041409
    %v257 = vsel %vm256, %v230, %v229
    %vm258 = vcmask 1042434
    %v259 = vsel %vm258, %v231, %v257
    %vm260 = vcmask 1043459
    %v261 = vsel %vm260, %v232, %v259
    %vm262 = vcmask 1044484
    %v263 = vsel %vm262, %v233, %v261
    %vm264 = vcmask 1045509
    %v265 = vsel %vm264, %v234, %v263
    %vm266 = vcmask 1046534
    %v267 = vsel %vm266, %v235, %v265
    %vm268 = vcmask 1047559
    %v269 = vsel %vm268, %v236, %v267
    %v270 = vsel %vm171, %v269, 0
    %272 = vmatprep.subr.mxu0 0.0
    %273 = vmatpush1.msra.mxu0 %v237
    %274 = vmatprep.subr.mxu0 0.0
    %275 = vmatpush1.msra.mxu0 %v238
    %276 = vmatprep.subr.mxu0 0.0
    %277 = vmatpush1.msra.mxu0 %v239
    %278 = vmatprep.subr.mxu0 0.0
    %279 = vmatpush1.msra.mxu0 %v240
    %280 = vmatprep.subr.mxu0 0.0
    %281 = vmatpush1.msra.mxu0 0.0
    %282 = vmatprep.subr.mxu0 0.0
    %283 = vmatpush1.msra.mxu0 0.0
    %284 = vmatprep.subr.mxu0 0.0
    %285 = vmatpush1.msra.mxu0 0.0
    %286 = vmatprep.subr.mxu0 0.0
    %287 = vmatpush1.msra.mxu0 0.0
    %288 = vmatprep.subr.mxu0 0.0
    %289 = vmatpush1.msra.mxu0 0.0
    %290 = vmatprep.subr.mxu0 0.0
    %291 = vmatpush1.msra.mxu0 0.0
    %292 = vmatprep.subr.mxu0 0.0
    %293 = vmatpush1.msra.mxu0 0.0
    %294 = vmatprep.subr.mxu0 0.0
    %295 = vmatpush1.msra.mxu0 0.0
    %296 = vmatprep.subr.mxu0 0.0
    %297 = vmatpush1.msra.mxu0 0.0
    %298 = vmatprep.subr.mxu0 0.0
    %299 = vmatpush1.msra.mxu0 0.0
    %300 = vmatprep.subr.mxu0 0.0
    %301 = vmatpush1.msra.mxu0 0.0
    %302 = vmatprep.subr.mxu0 0.0
    %303 = vmatpush1.msra.mxu0 0.0
    %304 = vmatprep.subr.mxu0 0.0
    %305 = vmatpush1.msra.mxu0 0.0
    %306 = vmatprep.subr.mxu0 0.0
    %307 = vmatpush1.msra.mxu0 0.0
    %308 = vmatprep.subr.mxu0 0.0
    %309 = vmatpush1.msra.mxu0 0.0
    %310 = vmatprep.subr.mxu0 0.0
    %311 = vmatpush1.msra.mxu0 0.0
    %312 = vmatprep.subr.mxu0 0.0
    %313 = vmatpush1.msra.mxu0 0.0
    %314 = vmatprep.subr.mxu0 0.0
    %315 = vmatpush1.msra.mxu0 0.0
    %316 = vmatprep.subr.mxu0 0.0
    %317 = vmatpush1.msra.mxu0 0.0
    %318 = vmatprep.subr.mxu0 0.0
    %319 = vmatpush1.msra.mxu0 0.0
    %320 = vmatprep.subr.mxu0 0.0
    %321 = vmatpush1.msra.mxu0 0.0
    %322 = vmatprep.subr.mxu0 0.0
    %323 = vmatpush1.msra.mxu0 0.0
    %324 = vmatprep.subr.mxu0 0.0
    %325 = vmatpush1.msra.mxu0 0.0
    %326 = vmatprep.subr.mxu0 0.0
    %327 = vmatpush1.msra.mxu0 0.0
    %328 = vmatprep.subr.mxu0 0.0
    %329 = vmatpush1.msra.mxu0 0.0
    %330 = vmatprep.subr.mxu0 0.0
    %331 = vmatpush1.msra.mxu0 0.0
    %332 = vmatprep.subr.mxu0 0.0
    %333 = vmatpush1.msra.mxu0 0.0
    %334 = vmatprep.subr.mxu0 0.0
    %335 = vmatpush1.msra.mxu0 0.0
    %336 = vmatprep.mubr.f32.mxu0 0.0
    %337 = vmatmul.mubr.f32.gmra.mrb[0].mxu0 %v270
    %v338 = vpop.f32.mrb[0].mxu0
    %v339 = vadd.f32 %v246, %v338
    %v340 = vpop.f32.mrb[0].mxu0
    %341 = vdwg.mxu0
    %v343 = vlaneseq
    %v344 = vshrl.u32 %v343, 7
    %v345 = vsub.s32 0, %v344
    %v346 = vrot.slane %v156, %v345
    %v347 = vlaneseq
    %v348 = vshrl.u32 %v347, 7
    %v349 = vsub.s32 1, %v348
    %v350 = vrot.slane %v156, %v349
    %v354 = vsel %vm171, %v339, 0
    %356 = vmatprep.subr.mxu0 %v149
    %357 = vmatpush1.msra.mxu0 %v148
    %358 = vmatprep.subr.mxu0 %v151
    %359 = vmatpush1.msra.mxu0 %v150
    %360 = vmatprep.subr.mxu0 %v153
    %361 = vmatpush1.msra.mxu0 %v152
    %362 = vmatprep.subr.mxu0 %v155
    %363 = vmatpush1.msra.mxu0 %v154
    %364 = vmatprep.subr.mxu0 0.0
    %365 = vmatpush1.msra.mxu0 0.0
    %366 = vmatprep.subr.mxu0 0.0
    %367 = vmatpush1.msra.mxu0 0.0
    %368 = vmatprep.subr.mxu0 0.0
    %369 = vmatpush1.msra.mxu0 0.0
    %370 = vmatprep.subr.mxu0 0.0
    %371 = vmatpush1.msra.mxu0 0.0
    %372 = vmatprep.subr.mxu0 0.0
    %373 = vmatpush1.msra.mxu0 0.0
    %374 = vmatprep.subr.mxu0 0.0
    %375 = vmatpush1.msra.mxu0 0.0
    %376 = vmatprep.subr.mxu0 0.0
    %377 = vmatpush1.msra.mxu0 0.0
    %378 = vmatprep.subr.mxu0 0.0
    %379 = vmatpush1.msra.mxu0 0.0
    %380 = vmatprep.subr.mxu0 0.0
    %381 = vmatpush1.msra.mxu0 0.0
    %382 = vmatprep.subr.mxu0 0.0
    %383 = vmatpush1.msra.mxu0 0.0
    %384 = vmatprep.subr.mxu0 0.0
    %385 = vmatpush1.msra.mxu0 0.0
    %386 = vmatprep.subr.mxu0 0.0
    %387 = vmatpush1.msra.mxu0 0.0
    %388 = vmatprep.subr.mxu0 0.0
    %389 = vmatpush1.msra.mxu0 0.0
    %390 = vmatprep.subr.mxu0 0.0
    %391 = vmatpush1.msra.mxu0 0.0
    %392 = vmatprep.subr.mxu0 0.0
    %393 = vmatpush1.msra.mxu0 0.0
    %394 = vmatprep.subr.mxu0 0.0
    %395 = vmatpush1.msra.mxu0 0.0
    %396 = vmatprep.subr.mxu0 0.0
    %397 = vmatpush1.msra.mxu0 0.0
    %398 = vmatprep.subr.mxu0 0.0
    %399 = vmatpush1.msra.mxu0 0.0
    %400 = vmatprep.subr.mxu0 0.0
    %401 = vmatpush1.msra.mxu0 0.0
    %402 = vmatprep.subr.mxu0 0.0
    %403 = vmatpush1.msra.mxu0 0.0
    %404 = vmatprep.subr.mxu0 0.0
    %405 = vmatpush1.msra.mxu0 0.0
    %406 = vmatprep.subr.mxu0 0.0
    %407 = vmatpush1.msra.mxu0 0.0
    %408 = vmatprep.subr.mxu0 0.0
    %409 = vmatpush1.msra.mxu0 0.0
    %410 = vmatprep.subr.mxu0 0.0
    %411 = vmatpush1.msra.mxu0 0.0
    %412 = vmatprep.subr.mxu0 0.0
    %413 = vmatpush1.msra.mxu0 0.0
    %414 = vmatprep.subr.mxu0 0.0
    %415 = vmatpush1.msra.mxu0 0.0
    %416 = vmatprep.subr.mxu0 0.0
    %417 = vmatpush1.msra.mxu0 0.0
    %418 = vmatprep.subr.mxu0 0.0
    %419 = vmatpush1.msra.mxu0 0.0
    %420 = vmatprep.mubr.f32.mxu0 0.0
    %421 = vmatmul.mubr.f32.gmra.mrb[0].mxu0 %v354
    %v422 = vpop.f32.mrb[0].mxu0
    %v423 = vadd.f32 %v346, %v422
    %v424 = vpop.f32.mrb[0].mxu0
    %v425 = vadd.f32 %v350, %v424
    %426 = vdwg.mxu0
    %v428 = vcombine.high %v423, %v423
    %v430 = vunpack.c.l.s4 1966171168
    %v431 = vunpack.c.0.s8 %v430
    %v432 = vlaneseq
    %v433 = vshrl.u32 %v432, 7
    %v434 = vsub.s32 %v431, %v433
    %v435 = vrot.slane %v423, %v434
    %v437 = vunpack.c.l.s4 1966171168
    %v438 = vunpack.c.0.s8 %v437
    %v439 = vlaneseq
    %v440 = vshrl.u32 %v439, 7
    %v441 = vsub.s32 %v438, %v440
    %v442 = vrot.slane %v428, %v441
    %v443 = vcombine.high %v435, %v435
    %v444 = vcombine.high %v442, %v442
    %v446 = vunpack.c.l.s4 1966171168
    %v447 = vunpack.c.0.s8 %v446
    %v448 = vlaneseq
    %v449 = vshrl.u32 %v448, 7
    %v450 = vsub.s32 %v447, %v449
    %v451 = vrot.slane %v435, %v450
    %v453 = vunpack.c.l.s4 1966171168
    %v454 = vunpack.c.0.s8 %v453
    %v455 = vlaneseq
    %v456 = vshrl.u32 %v455, 7
    %v457 = vsub.s32 %v454, %v456
    %v458 = vrot.slane %v442, %v457
    %v460 = vunpack.c.l.s4 1966171168
    %v461 = vunpack.c.0.s8 %v460
    %v462 = vlaneseq
    %v463 = vshrl.u32 %v462, 7
    %v464 = vsub.s32 %v461, %v463
    %v465 = vrot.slane %v443, %v464
    %v467 = vunpack.c.l.s4 1966171168
    %v468 = vunpack.c.0.s8 %v467
    %v469 = vlaneseq
    %v470 = vshrl.u32 %v469, 7
    %v471 = vsub.s32 %v468, %v470
    %v472 = vrot.slane %v444, %v471
    %v473 = vcombine.high %v451, %v451
    %v474 = vcombine.high %v458, %v458
    %v475 = vcombine.high %v465, %v465
    %v476 = vcombine.high %v472, %v472
    %v477 = vlaneseq
    %v478 = vshrl.u32 %v477, 7
    %v479 = vsub.s32 0, %v478
    %v480 = vrot.slane %v451, %v479
    %v481 = vlaneseq
    %v482 = vshrl.u32 %v481, 7
    %v483 = vsub.s32 0, %v482
    %v484 = vrot.slane %v465, %v483
    %v485 = vlaneseq
    %v486 = vshrl.u32 %v485, 7
    %v487 = vsub.s32 0, %v486
    %v488 = vrot.slane %v473, %v487
    %v489 = vlaneseq
    %v490 = vshrl.u32 %v489, 7
    %v491 = vsub.s32 0, %v490
    %v492 = vrot.slane %v475, %v491
    %v493 = vlaneseq
    %v494 = vshrl.u32 %v493, 7
    %v495 = vsub.s32 0, %v494
    %v496 = vrot.slane %v458, %v495
    %v497 = vlaneseq
    %v498 = vshrl.u32 %v497, 7
    %v499 = vsub.s32 0, %v498
    %v500 = vrot.slane %v472, %v499
    %v501 = vlaneseq
    %v502 = vshrl.u32 %v501, 7
    %v503 = vsub.s32 0, %v502
    %v504 = vrot.slane %v474, %v503
    %v505 = vlaneseq
    %v506 = vshrl.u32 %v505, 7
    %v507 = vsub.s32 0, %v506
    %v508 = vrot.slane %v476, %v507
    %v517 = vadd.f32 %v140, %v480
    %v518 = vadd.f32 %v141, %v484
    %v519 = vadd.f32 %v142, %v488
    %v520 = vadd.f32 %v143, %v492
    %v521 = vadd.f32 %v144, %v496
    %v522 = vadd.f32 %v145, %v500
    %v523 = vadd.f32 %v146, %v504
    %v524 = vadd.f32 %v147, %v508
    %v525 = vmax.f32 %v517, 0.0
    %v526 = vmax.f32 %v518, 0.0
    %v527 = vmax.f32 %v519, 0.0
    %v528 = vmax.f32 %v520, 0.0
    %v529 = vmax.f32 %v521, 0.0
    %v530 = vmax.f32 %v522, 0.0
    %v531 = vmax.f32 %v523, 0.0
    %v532 = vmax.f32 %v524, 0.0
    %v534 = vlaneseq
    %v535 = vshrl.u32 %v534, 7
    %v536 = vsub.s32 0, %v535
    %v537 = vrot.slane %v164, %v536
    %v539 = vmul.f32 %v525, %v537
    %v540 = vmul.f32 %v526, %v537
    %v541 = vmul.f32 %v527, %v537
    %v542 = vmul.f32 %v528, %v537
    %v543 = vmul.f32 %v529, %v537
    %v544 = vmul.f32 %v530, %v537
    %v545 = vmul.f32 %v531, %v537
    %v546 = vmul.f32 %v532, %v537
    %vm547 = vcmask 130048
    %v548 = vsel %vm547, %v539, 0.0
    %549 = vadd.xlane.f32.xlu0 %v548
    %v550 = vpop.xlane.xlu0 %549
    %v551 = vsel %vm547, %v540, 0.0
    %552 = vadd.xlane.f32.xlu0 %v551
    %v553 = vpop.xlane.xlu0 %552
    %v554 = vsel %vm547, %v541, 0.0
    %555 = vadd.xlane.f32.xlu0 %v554
    %v556 = vpop.xlane.xlu0 %555
    %v557 = vsel %vm547, %v542, 0.0
    %558 = vadd.xlane.f32.xlu0 %v557
    %v559 = vpop.xlane.xlu0 %558
    %v560 = vsel %vm547, %v543, 0.0
    %561 = vadd.xlane.f32.xlu0 %v560
    %v562 = vpop.xlane.xlu0 %561
    %v563 = vsel %vm547, %v544, 0.0
    %564 = vadd.xlane.f32.xlu0 %v563
    %v565 = vpop.xlane.xlu0 %564
    %v566 = vsel %vm547, %v545, 0.0
    %567 = vadd.xlane.f32.xlu0 %v566
    %v568 = vpop.xlane.xlu0 %567
    %v569 = vsel %vm547, %v546, 0.0
    %570 = vadd.xlane.f32.xlu0 %v569
    %v571 = vpop.xlane.xlu0 %570
    %v573 = vlaneseq
    %v574 = vshrl.u32 %v573, 7
    %v575 = vsub.s32 0, %v574
    %v576 = vrot.slane %v165, %v575
    %577 = vset.pattern.permute.xlu0 0
    %578 = vperm.xlu0 %577, %v576
    %v579 = vpop.permute.xlu0 %578
    %v581 = vadd.f32 %v550, %v579
    %v582 = vadd.f32 %v553, %v579
    %v583 = vadd.f32 %v556, %v579
    %v584 = vadd.f32 %v559, %v579
    %v585 = vadd.f32 %v562, %v579
    %v586 = vadd.f32 %v565, %v579
    %v587 = vadd.f32 %v568, %v579
    %v588 = vadd.f32 %v571, %v579
    %v597 = vlaneseq
    %v598 = vand.u32 %v597, 127
    %v599 = vlaneseq
    %v600 = vshrl.u32 %v599, 7
    %v601 = vsub.s32 %v598, %v600
    %v602 = vrot.slane %v581, %v601
    %v603 = vlaneseq
    %v604 = vshrl.u32 %v603, 7
    %v605 = vsub.s32 %v598, %v604
    %v606 = vrot.slane %v582, %v605
    %v607 = vlaneseq
    %v608 = vshrl.u32 %v607, 7
    %v609 = vsub.s32 %v598, %v608
    %v610 = vrot.slane %v583, %v609
    %v611 = vlaneseq
    %v612 = vshrl.u32 %v611, 7
    %v613 = vsub.s32 %v598, %v612
    %v614 = vrot.slane %v584, %v613
    %v615 = vlaneseq
    %v616 = vshrl.u32 %v615, 7
    %v617 = vsub.s32 %v598, %v616
    %v618 = vrot.slane %v585, %v617
    %v619 = vlaneseq
    %v620 = vshrl.u32 %v619, 7
    %v621 = vsub.s32 %v598, %v620
    %v622 = vrot.slane %v586, %v621
    %v623 = vlaneseq
    %v624 = vshrl.u32 %v623, 7
    %v625 = vsub.s32 %v598, %v624
    %v626 = vrot.slane %v587, %v625
    %v627 = vlaneseq
    %v628 = vshrl.u32 %v627, 7
    %v629 = vsub.s32 %v598, %v628
    %v630 = vrot.slane %v588, %v629
    %v631 = vsel %vm256, %v606, %v602
    %v632 = vsel %vm258, %v610, %v631
    %v633 = vsel %vm260, %v614, %v632
    %v634 = vsel %vm262, %v618, %v633
    %v635 = vsel %vm264, %v622, %v634
    %v636 = vsel %vm266, %v626, %v635
    %v637 = vsel %vm268, %v630, %v636
    %vm639 = vcmask 64512
    %v640 = vsel %vm639, %v637, -inf
    %641 = vmax.xlane.f32.xlu0 %v640
    %v642 = vpop.xlane.xlu0 %641
    %v644 = vlaneseq
    %v645 = vshrl.u32 %v644, 7
    %v646 = vsub.s32 0, %v645
    %v647 = vrot.slane %v642, %v646
    %v648 = vlaneseq
    %v649 = vshrl.u32 %v648, 7
    %v650 = vsub.s32 1, %v649
    %v651 = vrot.slane %v642, %v650
    %v652 = vlaneseq
    %v653 = vshrl.u32 %v652, 7
    %v654 = vsub.s32 2, %v653
    %v655 = vrot.slane %v642, %v654
    %v656 = vlaneseq
    %v657 = vshrl.u32 %v656, 7
    %v658 = vsub.s32 3, %v657
    %v659 = vrot.slane %v642, %v658
    %v660 = vlaneseq
    %v661 = vshrl.u32 %v660, 7
    %v662 = vsub.s32 4, %v661
    %v663 = vrot.slane %v642, %v662
    %v664 = vlaneseq
    %v665 = vshrl.u32 %v664, 7
    %v666 = vsub.s32 5, %v665
    %v667 = vrot.slane %v642, %v666
    %v668 = vlaneseq
    %v669 = vshrl.u32 %v668, 7
    %v670 = vsub.s32 6, %v669
    %v671 = vrot.slane %v642, %v670
    %v672 = vlaneseq
    %v673 = vshrl.u32 %v672, 7
    %v674 = vsub.s32 7, %v673
    %v675 = vrot.slane %v642, %v674
    %v684 = vsub.f32 %v581, %v647
    %v685 = vsub.f32 %v582, %v651
    %v686 = vsub.f32 %v583, %v655
    %v687 = vsub.f32 %v584, %v659
    %v688 = vsub.f32 %v585, %v663
    %v689 = vsub.f32 %v586, %v667
    %v690 = vsub.f32 %v587, %v671
    %v691 = vsub.f32 %v588, %v675
    %v692 = vmul.f32 %v684, 1.442695
    %v693 = vpow.pop %v692
    %v694 = vmul.f32 %v685, 1.442695
    %v695 = vpow.pop %v694
    %v696 = vmul.f32 %v686, 1.442695
    %v697 = vpow.pop %v696
    %v698 = vmul.f32 %v687, 1.442695
    %v699 = vpow.pop %v698
    %v700 = vmul.f32 %v688, 1.442695
    %v701 = vpow.pop %v700
    %v702 = vmul.f32 %v689, 1.442695
    %v703 = vpow.pop %v702
    %v704 = vmul.f32 %v690, 1.442695
    %v705 = vpow.pop %v704
    %v706 = vmul.f32 %v691, 1.442695
    %v707 = vpow.pop %v706
    %716 = vset.pattern.permute.xlu0 0
    %717 = vperm.xlu0 %716, %v693
    %v718 = vpop.permute.xlu0 %717
    %719 = vset.pattern.permute.xlu0 0
    %720 = vperm.xlu0 %719, %v695
    %v721 = vpop.permute.xlu0 %720
    %722 = vset.pattern.permute.xlu0 0
    %723 = vperm.xlu0 %722, %v697
    %v724 = vpop.permute.xlu0 %723
    %725 = vset.pattern.permute.xlu0 0
    %726 = vperm.xlu0 %725, %v699
    %v727 = vpop.permute.xlu0 %726
    %728 = vset.pattern.permute.xlu0 0
    %729 = vperm.xlu0 %728, %v701
    %v730 = vpop.permute.xlu0 %729
    %731 = vset.pattern.permute.xlu0 0
    %732 = vperm.xlu0 %731, %v703
    %v733 = vpop.permute.xlu0 %732
    %734 = vset.pattern.permute.xlu0 0
    %735 = vperm.xlu0 %734, %v705
    %v736 = vpop.permute.xlu0 %735
    %737 = vset.pattern.permute.xlu0 0
    %738 = vperm.xlu0 %737, %v707
    %v739 = vpop.permute.xlu0 %738
    %v740 = vlaneseq
    %v741 = vshrl.u32 %v740, 7
    %v742 = vsub.s32 %v598, %v741
    %v743 = vrot.slane %v718, %v742
    %v744 = vlaneseq
    %v745 = vshrl.u32 %v744, 7
    %v746 = vsub.s32 %v598, %v745
    %v747 = vrot.slane %v721, %v746
    %v748 = vlaneseq
    %v749 = vshrl.u32 %v748, 7
    %v750 = vsub.s32 %v598, %v749
    %v751 = vrot.slane %v724, %v750
    %v752 = vlaneseq
    %v753 = vshrl.u32 %v752, 7
    %v754 = vsub.s32 %v598, %v753
    %v755 = vrot.slane %v727, %v754
    %v756 = vlaneseq
    %v757 = vshrl.u32 %v756, 7
    %v758 = vsub.s32 %v598, %v757
    %v759 = vrot.slane %v730, %v758
    %v760 = vlaneseq
    %v761 = vshrl.u32 %v760, 7
    %v762 = vsub.s32 %v598, %v761
    %v763 = vrot.slane %v733, %v762
    %v764 = vlaneseq
    %v765 = vshrl.u32 %v764, 7
    %v766 = vsub.s32 %v598, %v765
    %v767 = vrot.slane %v736, %v766
    %v768 = vlaneseq
    %v769 = vshrl.u32 %v768, 7
    %v770 = vsub.s32 %v598, %v769
    %v771 = vrot.slane %v739, %v770
    %v772 = vsel %vm256, %v747, %v743
    %v773 = vsel %vm258, %v751, %v772
    %v774 = vsel %vm260, %v755, %v773
    %v775 = vsel %vm262, %v759, %v774
    %v776 = vsel %vm264, %v763, %v775
    %v777 = vsel %vm266, %v767, %v776
    %v778 = vsel %vm268, %v771, %v777
    %v780 = vsel %vm639, %v778, 0.0
    %781 = vadd.xlane.f32.xlu0 %v780
    %v782 = vpop.xlane.xlu0 %781
    %v783 = vrcp.pop %v782
    %v785 = vlaneseq
    %v786 = vshrl.u32 %v785, 7
    %v787 = vsub.s32 0, %v786
    %v788 = vrot.slane %v783, %v787
    %v789 = vlaneseq
    %v790 = vshrl.u32 %v789, 7
    %v791 = vsub.s32 1, %v790
    %v792 = vrot.slane %v783, %v791
    %v793 = vlaneseq
    %v794 = vshrl.u32 %v793, 7
    %v795 = vsub.s32 2, %v794
    %v796 = vrot.slane %v783, %v795
    %v797 = vlaneseq
    %v798 = vshrl.u32 %v797, 7
    %v799 = vsub.s32 3, %v798
    %v800 = vrot.slane %v783, %v799
    %v801 = vlaneseq
    %v802 = vshrl.u32 %v801, 7
    %v803 = vsub.s32 4, %v802
    %v804 = vrot.slane %v783, %v803
    %v805 = vlaneseq
    %v806 = vshrl.u32 %v805, 7
    %v807 = vsub.s32 5, %v806
    %v808 = vrot.slane %v783, %v807
    %v809 = vlaneseq
    %v810 = vshrl.u32 %v809, 7
    %v811 = vsub.s32 6, %v810
    %v812 = vrot.slane %v783, %v811
    %v813 = vlaneseq
    %v814 = vshrl.u32 %v813, 7
    %v815 = vsub.s32 7, %v814
    %v816 = vrot.slane %v783, %v815
    %v825 = vmul.f32 %v693, %v788
    %v826 = vmul.f32 %v695, %v792
    %v827 = vmul.f32 %v697, %v796
    %v828 = vmul.f32 %v699, %v800
    %v829 = vmul.f32 %v701, %v804
    %v830 = vmul.f32 %v703, %v808
    %v831 = vmul.f32 %v705, %v812
    %v832 = vmul.f32 %v707, %v816
    %834 = vset.pattern.permute.xlu0 0
    %835 = vperm.xlu0 %834, %v825
    %v836 = vpop.permute.xlu0 %835
    %839 = vset.pattern.permute.xlu0 0
    %840 = vperm.xlu0 %839, %v826
    %v841 = vpop.permute.xlu0 %840
    %844 = vset.pattern.permute.xlu0 0
    %845 = vperm.xlu0 %844, %v827
    %v846 = vpop.permute.xlu0 %845
    %849 = vset.pattern.permute.xlu0 0
    %850 = vperm.xlu0 %849, %v828
    %v851 = vpop.permute.xlu0 %850
    %854 = vset.pattern.permute.xlu0 0
    %855 = vperm.xlu0 %854, %v829
    %v856 = vpop.permute.xlu0 %855
    %859 = vset.pattern.permute.xlu0 0
    %860 = vperm.xlu0 %859, %v830
    %v861 = vpop.permute.xlu0 %860
    %864 = vset.pattern.permute.xlu0 0
    %865 = vperm.xlu0 %864, %v831
    %v866 = vpop.permute.xlu0 %865
    %869 = vset.pattern.permute.xlu0 0
    %870 = vperm.xlu0 %869, %v832
    %v871 = vpop.permute.xlu0 %870
    %v873 = vmul.f32 %v132, %v836
    %v874 = vmul.f32 %v133, %v841
    %v875 = vmul.f32 %v134, %v846
    %v876 = vmul.f32 %v135, %v851
    %v877 = vmul.f32 %v136, %v856
    %v878 = vmul.f32 %v137, %v861
    %v879 = vmul.f32 %v138, %v866
    %v880 = vmul.f32 %v139, %v871
    %v881 = vsel %vm171, %v873, 0.0
    %v882 = vrot.slane %v881, 4
    %v883 = vadd.f32 %v881, %v882
    %v884 = vrot.slane %v883, 2
    %v885 = vadd.f32 %v883, %v884
    %v886 = vrot.slane %v885, 1
    %v887 = vadd.f32 %v885, %v886
    %v888 = vsel %vm171, %v874, 0.0
    %v889 = vrot.slane %v888, 4
    %v890 = vadd.f32 %v888, %v889
    %v891 = vrot.slane %v890, 2
    %v892 = vadd.f32 %v890, %v891
    %v893 = vrot.slane %v892, 1
    %v894 = vadd.f32 %v892, %v893
    %v895 = vsel %vm171, %v875, 0.0
    %v896 = vrot.slane %v895, 4
    %v897 = vadd.f32 %v895, %v896
    %v898 = vrot.slane %v897, 2
    %v899 = vadd.f32 %v897, %v898
    %v900 = vrot.slane %v899, 1
    %v901 = vadd.f32 %v899, %v900
    %v902 = vsel %vm171, %v876, 0.0
    %v903 = vrot.slane %v902, 4
    %v904 = vadd.f32 %v902, %v903
    %v905 = vrot.slane %v904, 2
    %v906 = vadd.f32 %v904, %v905
    %v907 = vrot.slane %v906, 1
    %v908 = vadd.f32 %v906, %v907
    %v909 = vsel %vm171, %v877, 0.0
    %v910 = vrot.slane %v909, 4
    %v911 = vadd.f32 %v909, %v910
    %v912 = vrot.slane %v911, 2
    %v913 = vadd.f32 %v911, %v912
    %v914 = vrot.slane %v913, 1
    %v915 = vadd.f32 %v913, %v914
    %v916 = vsel %vm171, %v878, 0.0
    %v917 = vrot.slane %v916, 4
    %v918 = vadd.f32 %v916, %v917
    %v919 = vrot.slane %v918, 2
    %v920 = vadd.f32 %v918, %v919
    %v921 = vrot.slane %v920, 1
    %v922 = vadd.f32 %v920, %v921
    %v923 = vsel %vm171, %v879, 0.0
    %v924 = vrot.slane %v923, 4
    %v925 = vadd.f32 %v923, %v924
    %v926 = vrot.slane %v925, 2
    %v927 = vadd.f32 %v925, %v926
    %v928 = vrot.slane %v927, 1
    %v929 = vadd.f32 %v927, %v928
    %v930 = vsel %vm171, %v880, 0.0
    %v931 = vrot.slane %v930, 4
    %v932 = vadd.f32 %v930, %v931
    %v933 = vrot.slane %v932, 2
    %v934 = vadd.f32 %v932, %v933
    %v935 = vrot.slane %v934, 1
    %v936 = vadd.f32 %v934, %v935
    %v937 = vxor.u32 %v423, 2147483648
    %v938 = vmul.f32 %v937, 1.442695
    %v939 = vpow.pop %v938
    %v940 = vadd.f32 %v939, 1.0
    %v941 = vrcp.pop %v940
    %v942 = vmul.f32 1.0, %v941
    %v951 = vsel %vm256, %v894, %v887
    %v952 = vsel %vm258, %v901, %v951
    %v953 = vsel %vm260, %v908, %v952
    %v954 = vsel %vm262, %v915, %v953
    %v955 = vsel %vm264, %v922, %v954
    %v956 = vsel %vm266, %v929, %v955
    %v957 = vsel %vm268, %v936, %v956
    %958 = vrot.lane.b32.xlu0 %v957, 16
    %v959 = vpop.permute.xlu0 %958
    %v961 = vmul.f32 %v942, %v959
    %v962 = vld [vmem:[#allocation8] sm:$0xff]
    %v963 = vsel %vm547, %v962, %v961
    %v965 = vlaneseq
    %v966 = vshrl.u32 %v965, 7
    %v967 = vsub.s32 0, %v966
    %v968 = vrot.slane %v163, %v967
    %vm970 = vcmask 392192
    %v972 = vsel %vm970, %v963, 0
    %974 = vmatprep.subr.mxu0 0.0
    %975 = vmatpush1.msra.mxu0 %v157
    %976 = vmatprep.subr.mxu0 0.0
    %977 = vmatpush1.msra.mxu0 %v158
    %978 = vmatprep.subr.mxu0 0.0
    %979 = vmatpush1.msra.mxu0 %v159
    %980 = vmatprep.subr.mxu0 0.0
    %981 = vmatpush1.msra.mxu0 %v160
    %982 = vmatprep.subr.mxu0 0.0
    %983 = vmatpush1.msra.mxu0 %v161
    %984 = vmatprep.subr.mxu0 0.0
    %985 = vmatpush1.msra.mxu0 %v162
    %986 = vmatprep.subr.mxu0 0.0
    %987 = vmatpush1.msra.mxu0 0.0
    %988 = vmatprep.subr.mxu0 0.0
    %989 = vmatpush1.msra.mxu0 0.0
    %990 = vmatprep.subr.mxu0 0.0
    %991 = vmatpush1.msra.mxu0 0.0
    %992 = vmatprep.subr.mxu0 0.0
    %993 = vmatpush1.msra.mxu0 0.0
    %994 = vmatprep.subr.mxu0 0.0
    %995 = vmatpush1.msra.mxu0 0.0
    %996 = vmatprep.subr.mxu0 0.0
    %997 = vmatpush1.msra.mxu0 0.0
    %998 = vmatprep.subr.mxu0 0.0
    %999 = vmatpush1.msra.mxu0 0.0
    %1000 = vmatprep.subr.mxu0 0.0
    %1001 = vmatpush1.msra.mxu0 0.0
    %1002 = vmatprep.subr.mxu0 0.0
    %1003 = vmatpush1.msra.mxu0 0.0
    %1004 = vmatprep.subr.mxu0 0.0
    %1005 = vmatpush1.msra.mxu0 0.0
    %1006 = vmatprep.subr.mxu0 0.0
    %1007 = vmatpush1.msra.mxu0 0.0
    %1008 = vmatprep.subr.mxu0 0.0
    %1009 = vmatpush1.msra.mxu0 0.0
    %1010 = vmatprep.subr.mxu0 0.0
    %1011 = vmatpush1.msra.mxu0 0.0
    %1012 = vmatprep.subr.mxu0 0.0
    %1013 = vmatpush1.msra.mxu0 0.0
    %1014 = vmatprep.subr.mxu0 0.0
    %1015 = vmatpush1.msra.mxu0 0.0
    %1016 = vmatprep.subr.mxu0 0.0
    %1017 = vmatpush1.msra.mxu0 0.0
    %1018 = vmatprep.subr.mxu0 0.0
    %1019 = vmatpush1.msra.mxu0 0.0
    %1020 = vmatprep.subr.mxu0 0.0
    %1021 = vmatpush1.msra.mxu0 0.0
    %1022 = vmatprep.subr.mxu0 0.0
    %1023 = vmatpush1.msra.mxu0 0.0
    %1024 = vmatprep.subr.mxu0 0.0
    %1025 = vmatpush1.msra.mxu0 0.0
    %1026 = vmatprep.subr.mxu0 0.0
    %1027 = vmatpush1.msra.mxu0 0.0
    %1028 = vmatprep.subr.mxu0 0.0
    %1029 = vmatpush1.msra.mxu0 0.0
    %1030 = vmatprep.subr.mxu0 0.0
    %1031 = vmatpush1.msra.mxu0 0.0
    %1032 = vmatprep.subr.mxu0 0.0
    %1033 = vmatpush1.msra.mxu0 0.0
    %1034 = vmatprep.subr.mxu0 0.0
    %1035 = vmatpush1.msra.mxu0 0.0
    %1036 = vmatprep.subr.mxu0 0.0
    %1037 = vmatpush1.msra.mxu0 0.0
    %1038 = vmatprep.mubr.f32.mxu0 0.0
    %1039 = vmatmul.mubr.f32.gmra.mrb[0].mxu0 %v972
    %v1040 = vpop.f32.mrb[0].mxu0
    %v1041 = vadd.f32 %v968, %v1040
    %v1042 = vpop.f32.mrb[0].mxu0
    %1043 = vdwg.mxu0
    %1045 = vrot.lane.b32.xlu0 %v423, 80
    %v1046 = vpop.permute.xlu0 %1045
    %1047 = vrot.lane.b32.xlu0 %v425, 80
    %v1048 = vpop.permute.xlu0 %1047
    %vm1049 = vcmask 654336
    %v1050 = vsel %vm1049, %v1046, %v1048
    %v1052 = vadd.f32 %v1041, %v1050
    %v1053 = vxor.u32 %v1052, 2147483648
    %v1054 = vmul.f32 %v1053, 1.442695
    %v1055 = vpow.pop %v1054
    %v1056 = vadd.f32 %v1055, 1.0
    %v1057 = vrcp.pop %v1056
    %v1058 = vmul.f32 1.0, %v1057
    %v1059 = vtanh.pop %v1052
    %v1060 = vmul.f32 %v1058, %v339
    %1062 = vrot.lane.b32.xlu0 %v1059, 64
    %v1063 = vpop.permute.xlu0 %1062
    %v1065 = vmul.f32 %v1058, %v1063
    %1067 = vrot.lane.b32.xlu0 %v1065, 32
    %v1068 = vpop.permute.xlu0 %1067
    %v1070 = vadd.f32 %v1060, %v1068
    %v1071 = vtanh.pop %v1070
    %1073 = vrot.lane.b32.xlu0 %v1071, 64
    %v1074 = vpop.permute.xlu0 %1073
    %v1076 = vmul.f32 %v1058, %v1074
    %v1078 = vlaneseq
    %v1079 = vshrl.u32 %v1078, 7
    %v1080 = vsub.s32 0, %v1079
    %v1081 = vrot.slane %v170, %v1080
    %1084 = vrot.lane.b32.xlu0 %v1076, 32
    %v1085 = vpop.permute.xlu0 %1084
    %v1086 = vsel %vm171, %v1085, 0
    %1088 = vmatprep.subr.mxu0 0.0
    %1089 = vmatpush1.msra.mxu0 %v166
    %1090 = vmatprep.subr.mxu0 0.0
    %1091 = vmatpush1.msra.mxu0 %v167
    %1092 = vmatprep.subr.mxu0 0.0
    %1093 = vmatpush1.msra.mxu0 %v168
    %1094 = vmatprep.subr.mxu0 0.0
    %1095 = vmatpush1.msra.mxu0 %v169
    %1096 = vmatprep.subr.mxu0 0.0
    %1097 = vmatpush1.msra.mxu0 0.0
    %1098 = vmatprep.subr.mxu0 0.0
    %1099 = vmatpush1.msra.mxu0 0.0
    %1100 = vmatprep.subr.mxu0 0.0
    %1101 = vmatpush1.msra.mxu0 0.0
    %1102 = vmatprep.subr.mxu0 0.0
    %1103 = vmatpush1.msra.mxu0 0.0
    %1104 = vmatprep.subr.mxu0 0.0
    %1105 = vmatpush1.msra.mxu0 0.0
    %1106 = vmatprep.subr.mxu0 0.0
    %1107 = vmatpush1.msra.mxu0 0.0
    %1108 = vmatprep.subr.mxu0 0.0
    %1109 = vmatpush1.msra.mxu0 0.0
    %1110 = vmatprep.subr.mxu0 0.0
    %1111 = vmatpush1.msra.mxu0 0.0
    %1112 = vmatprep.subr.mxu0 0.0
    %1113 = vmatpush1.msra.mxu0 0.0
    %1114 = vmatprep.subr.mxu0 0.0
    %1115 = vmatpush1.msra.mxu0 0.0
    %1116 = vmatprep.subr.mxu0 0.0
    %1117 = vmatpush1.msra.mxu0 0.0
    %1118 = vmatprep.subr.mxu0 0.0
    %1119 = vmatpush1.msra.mxu0 0.0
    %1120 = vmatprep.subr.mxu0 0.0
    %1121 = vmatpush1.msra.mxu0 0.0
    %1122 = vmatprep.subr.mxu0 0.0
    %1123 = vmatpush1.msra.mxu0 0.0
    %1124 = vmatprep.subr.mxu0 0.0
    %1125 = vmatpush1.msra.mxu0 0.0
    %1126 = vmatprep.subr.mxu0 0.0
    %1127 = vmatpush1.msra.mxu0 0.0
    %1128 = vmatprep.subr.mxu0 0.0
    %1129 = vmatpush1.msra.mxu0 0.0
    %1130 = vmatprep.subr.mxu0 0.0
    %1131 = vmatpush1.msra.mxu0 0.0
    %1132 = vmatprep.subr.mxu0 0.0
    %1133 = vmatpush1.msra.mxu0 0.0
    %1134 = vmatprep.subr.mxu0 0.0
    %1135 = vmatpush1.msra.mxu0 0.0
    %1136 = vmatprep.subr.mxu0 0.0
    %1137 = vmatpush1.msra.mxu0 0.0
    %1138 = vmatprep.subr.mxu0 0.0
    %1139 = vmatpush1.msra.mxu0 0.0
    %1140 = vmatprep.subr.mxu0 0.0
    %1141 = vmatpush1.msra.mxu0 0.0
    %1142 = vmatprep.subr.mxu0 0.0
    %1143 = vmatpush1.msra.mxu0 0.0
    %1144 = vmatprep.subr.mxu0 0.0
    %1145 = vmatpush1.msra.mxu0 0.0
    %1146 = vmatprep.subr.mxu0 0.0
    %1147 = vmatpush1.msra.mxu0 0.0
    %1148 = vmatprep.subr.mxu0 0.0
    %1149 = vmatpush1.msra.mxu0 0.0
    %1150 = vmatprep.subr.mxu0 0.0
    %1151 = vmatpush1.msra.mxu0 0.0
    %1152 = vmatprep.mubr.f32.mxu0 0.0
    %1153 = vmatmul.mubr.f32.gmra.mrb[0].mxu0 %v1086
    %v1154 = vpop.f32.mrb[0].mxu0
    %v1155 = vadd.f32 %v1081, %v1154
    %v1156 = vpop.f32.mrb[0].mxu0
    %1157 = vdwg.mxu0
    %1158 = vst [vmem:[#allocation14] sm:$0xff] %v1155
    %v1159 = vlaneseq
    %v1160 = vshrl.u32 %v1159, 7
    %v1161 = vsub.s32 %v598, %v1160
    %v1162 = vrot.slane %v836, %v1161
    %v1163 = vlaneseq
    %v1164 = vshrl.u32 %v1163, 7
    %v1165 = vsub.s32 %v598, %v1164
    %v1166 = vrot.slane %v841, %v1165
    %v1167 = vlaneseq
    %v1168 = vshrl.u32 %v1167, 7
    %v1169 = vsub.s32 %v598, %v1168
    %v1170 = vrot.slane %v846, %v1169
    %v1171 = vlaneseq
    %v1172 = vshrl.u32 %v1171, 7
    %v1173 = vsub.s32 %v598, %v1172
    %v1174 = vrot.slane %v851, %v1173
    %v1175 = vlaneseq
    %v1176 = vshrl.u32 %v1175, 7
    %v1177 = vsub.s32 %v598, %v1176
    %v1178 = vrot.slane %v856, %v1177
    %v1179 = vlaneseq
    %v1180 = vshrl.u32 %v1179, 7
    %v1181 = vsub.s32 %v598, %v1180
    %v1182 = vrot.slane %v861, %v1181
    %v1183 = vlaneseq
    %v1184 = vshrl.u32 %v1183, 7
    %v1185 = vsub.s32 %v598, %v1184
    %v1186 = vrot.slane %v866, %v1185
    %v1187 = vlaneseq
    %v1188 = vshrl.u32 %v1187, 7
    %v1189 = vsub.s32 %v598, %v1188
    %v1190 = vrot.slane %v871, %v1189
    %v1191 = vsel %vm256, %v1166, %v1162
    %v1192 = vsel %vm258, %v1170, %v1191
    %v1193 = vsel %vm260, %v1174, %v1192
    %v1194 = vsel %vm262, %v1178, %v1193
    %v1195 = vsel %vm264, %v1182, %v1194
    %v1196 = vsel %vm266, %v1186, %v1195
    %v1197 = vsel %vm268, %v1190, %v1196
    %v1199 = vsel %vm639, %v1197, 0.0
    %1200 = vst [vmem:[#allocation15] sm:$0xff] %v1199
    %1201 = vmatprep.subr.mxu0 %v149
    %1202 = vmatpush1.msra.mxu0 %v148
    %1203 = vmatprep.subr.mxu0 %v151
    %1204 = vmatpush1.msra.mxu0 %v150
    %1205 = vmatprep.subr.mxu0 %v153
    %1206 = vmatpush1.msra.mxu0 %v152
    %1207 = vmatprep.subr.mxu0 %v155
    %1208 = vmatpush1.msra.mxu0 %v154
    %1209 = vmatprep.subr.mxu0 0.0
    %1210 = vmatpush1.msra.mxu0 0.0
    %1211 = vmatprep.subr.mxu0 0.0
    %1212 = vmatpush1.msra.mxu0 0.0
    %1213 = vmatprep.subr.mxu0 0.0
    %1214 = vmatpush1.msra.mxu0 0.0
    %1215 = vmatprep.subr.mxu0 0.0
    %1216 = vmatpush1.msra.mxu0 0.0
    %1217 = vmatprep.subr.mxu0 0.0
    %1218 = vmatpush1.msra.mxu0 0.0
    %1219 = vmatprep.subr.mxu0 0.0
    %1220 = vmatpush1.msra.mxu0 0.0
    %1221 = vmatprep.subr.mxu0 0.0
    %1222 = vmatpush1.msra.mxu0 0.0
    %1223 = vmatprep.subr.mxu0 0.0
    %1224 = vmatpush1.msra.mxu0 0.0
    %1225 = vmatprep.subr.mxu0 0.0
    %1226 = vmatpush1.msra.mxu0 0.0
    %1227 = vmatprep.subr.mxu0 0.0
    %1228 = vmatpush1.msra.mxu0 0.0
    %1229 = vmatprep.subr.mxu0 0.0
    %1230 = vmatpush1.msra.mxu0 0.0
    %1231 = vmatprep.subr.mxu0 0.0
    %1232 = vmatpush1.msra.mxu0 0.0
    %1233 = vmatprep.subr.mxu0 0.0
    %1234 = vmatpush1.msra.mxu0 0.0
    %1235 = vmatprep.subr.mxu0 0.0
    %1236 = vmatpush1.msra.mxu0 0.0
    %1237 = vmatprep.subr.mxu0 0.0
    %1238 = vmatpush1.msra.mxu0 0.0
    %1239 = vmatprep.subr.mxu0 0.0
    %1240 = vmatpush1.msra.mxu0 0.0
    %1241 = vmatprep.subr.mxu0 0.0
    %1242 = vmatpush1.msra.mxu0 0.0
    %1243 = vmatprep.subr.mxu0 0.0
    %1244 = vmatpush1.msra.mxu0 0.0
    %1245 = vmatprep.subr.mxu0 0.0
    %1246 = vmatpush1.msra.mxu0 0.0
    %1247 = vmatprep.subr.mxu0 0.0
    %1248 = vmatpush1.msra.mxu0 0.0
    %1249 = vmatprep.subr.mxu0 0.0
    %1250 = vmatpush1.msra.mxu0 0.0
    %1251 = vmatprep.subr.mxu0 0.0
    %1252 = vmatpush1.msra.mxu0 0.0
    %1253 = vmatprep.subr.mxu0 0.0
    %1254 = vmatpush1.msra.mxu0 0.0
    %1255 = vmatprep.subr.mxu0 0.0
    %1256 = vmatpush1.msra.mxu0 0.0
    %1257 = vmatprep.subr.mxu0 0.0
    %1258 = vmatpush1.msra.mxu0 0.0
    %1259 = vmatprep.subr.mxu0 0.0
    %1260 = vmatpush1.msra.mxu0 0.0
    %1261 = vmatprep.subr.mxu0 0.0
    %1262 = vmatpush1.msra.mxu0 0.0
    %1263 = vmatprep.subr.mxu0 0.0
    %1264 = vmatpush1.msra.mxu0 0.0
    %1265 = vmatprep.mubr.f32.mxu0 0.0
    %1266 = vmatmul.mubr.f32.gmra.mrb[0].mxu0 %v1086
    %v1267 = vpop.f32.mrb[0].mxu0
    %v1268 = vadd.f32 %v346, %v1267
    %v1269 = vpop.f32.mrb[0].mxu0
    %v1270 = vadd.f32 %v350, %v1269
    %1271 = vdwg.mxu0
    %v1273 = vcombine.high %v1268, %v1268
    %v1275 = vunpack.c.l.s4 1966171168
    %v1276 = vunpack.c.0.s8 %v1275
    %v1277 = vlaneseq
    %v1278 = vshrl.u32 %v1277, 7
    %v1279 = vsub.s32 %v1276, %v1278
    %v1280 = vrot.slane %v1268, %v1279
    %v1282 = vunpack.c.l.s4 1966171168
    %v1283 = vunpack.c.0.s8 %v1282
    %v1284 = vlaneseq
    %v1285 = vshrl.u32 %v1284, 7
    %v1286 = vsub.s32 %v1283, %v1285
    %v1287 = vrot.slane %v1273, %v1286
    %v1288 = vcombine.high %v1280, %v1280
    %v1289 = vcombine.high %v1287, %v1287
    %v1291 = vunpack.c.l.s4 1966171168
    %v1292 = vunpack.c.0.s8 %v1291
    %v1293 = vlaneseq
    %v1294 = vshrl.u32 %v1293, 7
    %v1295 = vsub.s32 %v1292, %v1294
    %v1296 = vrot.slane %v1280, %v1295
    %v1298 = vunpack.c.l.s4 1966171168
    %v1299 = vunpack.c.0.s8 %v1298
    %v1300 = vlaneseq
    %v1301 = vshrl.u32 %v1300, 7
    %v1302 = vsub.s32 %v1299, %v1301
    %v1303 = vrot.slane %v1287, %v1302
    %v1305 = vunpack.c.l.s4 1966171168
    %v1306 = vunpack.c.0.s8 %v1305
    %v1307 = vlaneseq
    %v1308 = vshrl.u32 %v1307, 7
    %v1309 = vsub.s32 %v1306, %v1308
    %v1310 = vrot.slane %v1288, %v1309
    %v1312 = vunpack.c.l.s4 1966171168
    %v1313 = vunpack.c.0.s8 %v1312
    %v1314 = vlaneseq
    %v1315 = vshrl.u32 %v1314, 7
    %v1316 = vsub.s32 %v1313, %v1315
    %v1317 = vrot.slane %v1289, %v1316
    %v1318 = vcombine.high %v1296, %v1296
    %v1319 = vcombine.high %v1303, %v1303
    %v1320 = vcombine.high %v1310, %v1310
    %v1321 = vcombine.high %v1317, %v1317
    %v1322 = vlaneseq
    %v1323 = vshrl.u32 %v1322, 7
    %v1324 = vsub.s32 0, %v1323
    %v1325 = vrot.slane %v1296, %v1324
    %v1326 = vlaneseq
    %v1327 = vshrl.u32 %v1326, 7
    %v1328 = vsub.s32 0, %v1327
    %v1329 = vrot.slane %v1310, %v1328
    %v1330 = vlaneseq
    %v1331 = vshrl.u32 %v1330, 7
    %v1332 = vsub.s32 0, %v1331
    %v1333 = vrot.slane %v1318, %v1332
    %v1334 = vlaneseq
    %v1335 = vshrl.u32 %v1334, 7
    %v1336 = vsub.s32 0, %v1335
    %v1337 = vrot.slane %v1320, %v1336
    %v1338 = vlaneseq
    %v1339 = vshrl.u32 %v1338, 7
    %v1340 = vsub.s32 0, %v1339
    %v1341 = vrot.slane %v1303, %v1340
    %v1342 = vlaneseq
    %v1343 = vshrl.u32 %v1342, 7
    %v1344 = vsub.s32 0, %v1343
    %v1345 = vrot.slane %v1317, %v1344
    %v1346 = vlaneseq
    %v1347 = vshrl.u32 %v1346, 7
    %v1348 = vsub.s32 0, %v1347
    %v1349 = vrot.slane %v1319, %v1348
    %v1350 = vlaneseq
    %v1351 = vshrl.u32 %v1350, 7
    %v1352 = vsub.s32 0, %v1351
    %v1353 = vrot.slane %v1321, %v1352
    %v1362 = vadd.f32 %v140, %v1325
    %v1363 = vadd.f32 %v141, %v1329
    %v1364 = vadd.f32 %v142, %v1333
    %v1365 = vadd.f32 %v143, %v1337
    %v1366 = vadd.f32 %v144, %v1341
    %v1367 = vadd.f32 %v145, %v1345
    %v1368 = vadd.f32 %v146, %v1349
    %v1369 = vadd.f32 %v147, %v1353
    %v1370 = vmax.f32 %v1362, 0.0
    %v1371 = vmax.f32 %v1363, 0.0
    %v1372 = vmax.f32 %v1364, 0.0
    %v1373 = vmax.f32 %v1365, 0.0
    %v1374 = vmax.f32 %v1366, 0.0
    %v1375 = vmax.f32 %v1367, 0.0
    %v1376 = vmax.f32 %v1368, 0.0
    %v1377 = vmax.f32 %v1369, 0.0
    %v1378 = vmul.f32 %v1370, %v537
    %v1379 = vmul.f32 %v1371, %v537
    %v1380 = vmul.f32 %v1372, %v537
    %v1381 = vmul.f32 %v1373, %v537
    %v1382 = vmul.f32 %v1374, %v537
    %v1383 = vmul.f32 %v1375, %v537
    %v1384 = vmul.f32 %v1376, %v537
    %v1385 = vmul.f32 %v1377, %v537
    %v1386 = vsel %vm547, %v1378, 0.0
    %1387 = vadd.xlane.f32.xlu0 %v1386
    %v1388 = vpop.xlane.xlu0 %1387
    %v1389 = vsel %vm547, %v1379, 0.0
    %1390 = vadd.xlane.f32.xlu0 %v1389
    %v1391 = vpop.xlane.xlu0 %1390
    %v1392 = vsel %vm547, %v1380, 0.0
    %1393 = vadd.xlane.f32.xlu0 %v1392
    %v1394 = vpop.xlane.xlu0 %1393
    %v1395 = vsel %vm547, %v1381, 0.0
    %1396 = vadd.xlane.f32.xlu0 %v1395
    %v1397 = vpop.xlane.xlu0 %1396
    %v1398 = vsel %vm547, %v1382, 0.0
    %1399 = vadd.xlane.f32.xlu0 %v1398
    %v1400 = vpop.xlane.xlu0 %1399
    %v1401 = vsel %vm547, %v1383, 0.0
    %1402 = vadd.xlane.f32.xlu0 %v1401
    %v1403 = vpop.xlane.xlu0 %1402
    %v1404 = vsel %vm547, %v1384, 0.0
    %1405 = vadd.xlane.f32.xlu0 %v1404
    %v1406 = vpop.xlane.xlu0 %1405
    %v1407 = vsel %vm547, %v1385, 0.0
    %1408 = vadd.xlane.f32.xlu0 %v1407
    %v1409 = vpop.xlane.xlu0 %1408
    %v1410 = vadd.f32 %v1388, %v579
    %v1411 = vadd.f32 %v1391, %v579
    %v1412 = vadd.f32 %v1394, %v579
    %v1413 = vadd.f32 %v1397, %v579
    %v1414 = vadd.f32 %v1400, %v579
    %v1415 = vadd.f32 %v1403, %v579
    %v1416 = vadd.f32 %v1406, %v579
    %v1417 = vadd.f32 %v1409, %v579
    %v1426 = vlaneseq
    %v1427 = vshrl.u32 %v1426, 7
    %v1428 = vsub.s32 %v598, %v1427
    %v1429 = vrot.slane %v1410, %v1428
    %v1430 = vlaneseq
    %v1431 = vshrl.u32 %v1430, 7
    %v1432 = vsub.s32 %v598, %v1431
    %v1433 = vrot.slane %v1411, %v1432
    %v1434 = vlaneseq
    %v1435 = vshrl.u32 %v1434, 7
    %v1436 = vsub.s32 %v598, %v1435
    %v1437 = vrot.slane %v1412, %v1436
    %v1438 = vlaneseq
    %v1439 = vshrl.u32 %v1438, 7
    %v1440 = vsub.s32 %v598, %v1439
    %v1441 = vrot.slane %v1413, %v1440
    %v1442 = vlaneseq
    %v1443 = vshrl.u32 %v1442, 7
    %v1444 = vsub.s32 %v598, %v1443
    %v1445 = vrot.slane %v1414, %v1444
    %v1446 = vlaneseq
    %v1447 = vshrl.u32 %v1446, 7
    %v1448 = vsub.s32 %v598, %v1447
    %v1449 = vrot.slane %v1415, %v1448
    %v1450 = vlaneseq
    %v1451 = vshrl.u32 %v1450, 7
    %v1452 = vsub.s32 %v598, %v1451
    %v1453 = vrot.slane %v1416, %v1452
    %v1454 = vlaneseq
    %v1455 = vshrl.u32 %v1454, 7
    %v1456 = vsub.s32 %v598, %v1455
    %v1457 = vrot.slane %v1417, %v1456
    %v1458 = vsel %vm256, %v1433, %v1429
    %v1459 = vsel %vm258, %v1437, %v1458
    %v1460 = vsel %vm260, %v1441, %v1459
    %v1461 = vsel %vm262, %v1445, %v1460
    %v1462 = vsel %vm264, %v1449, %v1461
    %v1463 = vsel %vm266, %v1453, %v1462
    %v1464 = vsel %vm268, %v1457, %v1463
    %v1466 = vsel %vm639, %v1464, -inf
    %1467 = vmax.xlane.f32.xlu0 %v1466
    %v1468 = vpop.xlane.xlu0 %1467
    %v1470 = vlaneseq
    %v1471 = vshrl.u32 %v1470, 7
    %v1472 = vsub.s32 0, %v1471
    %v1473 = vrot.slane %v1468, %v1472
    %v1474 = vlaneseq
    %v1475 = vshrl.u32 %v1474, 7
    %v1476 = vsub.s32 1, %v1475
    %v1477 = vrot.slane %v1468, %v1476
    %v1478 = vlaneseq
    %v1479 = vshrl.u32 %v1478, 7
    %v1480 = vsub.s32 2, %v1479
    %v1481 = vrot.slane %v1468, %v1480
    %v1482 = vlaneseq
    %v1483 = vshrl.u32 %v1482, 7
    %v1484 = vsub.s32 3, %v1483
    %v1485 = vrot.slane %v1468, %v1484
    %v1486 = vlaneseq
    %v1487 = vshrl.u32 %v1486, 7
    %v1488 = vsub.s32 4, %v1487
    %v1489 = vrot.slane %v1468, %v1488
    %v1490 = vlaneseq
    %v1491 = vshrl.u32 %v1490, 7
    %v1492 = vsub.s32 5, %v1491
    %v1493 = vrot.slane %v1468, %v1492
    %v1494 = vlaneseq
    %v1495 = vshrl.u32 %v1494, 7
    %v1496 = vsub.s32 6, %v1495
    %v1497 = vrot.slane %v1468, %v1496
    %v1498 = vlaneseq
    %v1499 = vshrl.u32 %v1498, 7
    %v1500 = vsub.s32 7, %v1499
    %v1501 = vrot.slane %v1468, %v1500
    %v1510 = vsub.f32 %v1410, %v1473
    %v1511 = vsub.f32 %v1411, %v1477
    %v1512 = vsub.f32 %v1412, %v1481
    %v1513 = vsub.f32 %v1413, %v1485
    %v1514 = vsub.f32 %v1414, %v1489
    %v1515 = vsub.f32 %v1415, %v1493
    %v1516 = vsub.f32 %v1416, %v1497
    %v1517 = vsub.f32 %v1417, %v1501
    %v1518 = vmul.f32 %v1510, 1.442695
    %v1519 = vpow.pop %v1518
    %v1520 = vmul.f32 %v1511, 1.442695
    %v1521 = vpow.pop %v1520
    %v1522 = vmul.f32 %v1512, 1.442695
    %v1523 = vpow.pop %v1522
    %v1524 = vmul.f32 %v1513, 1.442695
    %v1525 = vpow.pop %v1524
    %v1526 = vmul.f32 %v1514, 1.442695
    %v1527 = vpow.pop %v1526
    %v1528 = vmul.f32 %v1515, 1.442695
    %v1529 = vpow.pop %v1528
    %v1530 = vmul.f32 %v1516, 1.442695
    %v1531 = vpow.pop %v1530
    %v1532 = vmul.f32 %v1517, 1.442695
    %v1533 = vpow.pop %v1532
    %1542 = vset.pattern.permute.xlu0 0
    %1543 = vperm.xlu0 %1542, %v1519
    %v1544 = vpop.permute.xlu0 %1543
    %1545 = vset.pattern.permute.xlu0 0
    %1546 = vperm.xlu0 %1545, %v1521
    %v1547 = vpop.permute.xlu0 %1546
    %1548 = vset.pattern.permute.xlu0 0
    %1549 = vperm.xlu0 %1548, %v1523
    %v1550 = vpop.permute.xlu0 %1549
    %1551 = vset.pattern.permute.xlu0 0
    %1552 = vperm.xlu0 %1551, %v1525
    %v1553 = vpop.permute.xlu0 %1552
    %1554 = vset.pattern.permute.xlu0 0
    %1555 = vperm.xlu0 %1554, %v1527
    %v1556 = vpop.permute.xlu0 %1555
    %1557 = vset.pattern.permute.xlu0 0
    %1558 = vperm.xlu0 %1557, %v1529
    %v1559 = vpop.permute.xlu0 %1558
    %1560 = vset.pattern.permute.xlu0 0
    %1561 = vperm.xlu0 %1560, %v1531
    %v1562 = vpop.permute.xlu0 %1561
    %1563 = vset.pattern.permute.xlu0 0
    %1564 = vperm.xlu0 %1563, %v1533
    %v1565 = vpop.permute.xlu0 %1564
    %v1566 = vlaneseq
    %v1567 = vshrl.u32 %v1566, 7
    %v1568 = vsub.s32 %v598, %v1567
    %v1569 = vrot.slane %v1544, %v1568
    %v1570 = vlaneseq
    %v1571 = vshrl.u32 %v1570, 7
    %v1572 = vsub.s32 %v598, %v1571
    %v1573 = vrot.slane %v1547, %v1572
    %v1574 = vlaneseq
    %v1575 = vshrl.u32 %v1574, 7
    %v1576 = vsub.s32 %v598, %v1575
    %v1577 = vrot.slane %v1550, %v1576
    %v1578 = vlaneseq
    %v1579 = vshrl.u32 %v1578, 7
    %v1580 = vsub.s32 %v598, %v1579
    %v1581 = vrot.slane %v1553, %v1580
    %v1582 = vlaneseq
    %v1583 = vshrl.u32 %v1582, 7
    %v1584 = vsub.s32 %v598, %v1583
    %v1585 = vrot.slane %v1556, %v1584
    %v1586 = vlaneseq
    %v1587 = vshrl.u32 %v1586, 7
    %v1588 = vsub.s32 %v598, %v1587
    %v1589 = vrot.slane %v1559, %v1588
    %v1590 = vlaneseq
    %v1591 = vshrl.u32 %v1590, 7
    %v1592 = vsub.s32 %v598, %v1591
    %v1593 = vrot.slane %v1562, %v1592
    %v1594 = vlaneseq
    %v1595 = vshrl.u32 %v1594, 7
    %v1596 = vsub.s32 %v598, %v1595
    %v1597 = vrot.slane %v1565, %v1596
    %v1598 = vsel %vm256, %v1573, %v1569
    %v1599 = vsel %vm258, %v1577, %v1598
    %v1600 = vsel %vm260, %v1581, %v1599
    %v1601 = vsel %vm262, %v1585, %v1600
    %v1602 = vsel %vm264, %v1589, %v1601
    %v1603 = vsel %vm266, %v1593, %v1602
    %v1604 = vsel %vm268, %v1597, %v1603
    %v1606 = vsel %vm639, %v1604, 0.0
    %1607 = vadd.xlane.f32.xlu0 %v1606
    %v1608 = vpop.xlane.xlu0 %1607
    %v1609 = vrcp.pop %v1608
    %v1611 = vlaneseq
    %v1612 = vshrl.u32 %v1611, 7
    %v1613 = vsub.s32 0, %v1612
    %v1614 = vrot.slane %v1609, %v1613
    %v1615 = vlaneseq
    %v1616 = vshrl.u32 %v1615, 7
    %v1617 = vsub.s32 1, %v1616
    %v1618 = vrot.slane %v1609, %v1617
    %v1619 = vlaneseq
    %v1620 = vshrl.u32 %v1619, 7
    %v1621 = vsub.s32 2, %v1620
    %v1622 = vrot.slane %v1609, %v1621
    %v1623 = vlaneseq
    %v1624 = vshrl.u32 %v1623, 7
    %v1625 = vsub.s32 3, %v1624
    %v1626 = vrot.slane %v1609, %v1625
    %v1627 = vlaneseq
    %v1628 = vshrl.u32 %v1627, 7
    %v1629 = vsub.s32 4, %v1628
    %v1630 = vrot.slane %v1609, %v1629
    %v1631 = vlaneseq
    %v1632 = vshrl.u32 %v1631, 7
    %v1633 = vsub.s32 5, %v1632
    %v1634 = vrot.slane %v1609, %v1633
    %v1635 = vlaneseq
    %v1636 = vshrl.u32 %v1635, 7
    %v1637 = vsub.s32 6, %v1636
    %v1638 = vrot.slane %v1609, %v1637
    %v1639 = vlaneseq
    %v1640 = vshrl.u32 %v1639, 7
    %v1641 = vsub.s32 7, %v1640
    %v1642 = vrot.slane %v1609, %v1641
    %v1651 = vmul.f32 %v1519, %v1614
    %v1652 = vmul.f32 %v1521, %v1618
    %v1653 = vmul.f32 %v1523, %v1622
    %v1654 = vmul.f32 %v1525, %v1626
    %v1655 = vmul.f32 %v1527, %v1630
    %v1656 = vmul.f32 %v1529, %v1634
    %v1657 = vmul.f32 %v1531, %v1638
    %v1658 = vmul.f32 %v1533, %v1642
    %1660 = vset.pattern.permute.xlu0 0
    %1661 = vperm.xlu0 %1660, %v1651
    %v1662 = vpop.permute.xlu0 %1661
    %1665 = vset.pattern.permute.xlu0 0
    %1666 = vperm.xlu0 %1665, %v1652
    %v1667 = vpop.permute.xlu0 %1666
    %1670 = vset.pattern.permute.xlu0 0
    %1671 = vperm.xlu0 %1670, %v1653
    %v1672 = vpop.permute.xlu0 %1671
    %1675 = vset.pattern.permute.xlu0 0
    %1676 = vperm.xlu0 %1675, %v1654
    %v1677 = vpop.permute.xlu0 %1676
    %1680 = vset.pattern.permute.xlu0 0
    %1681 = vperm.xlu0 %1680, %v1655
    %v1682 = vpop.permute.xlu0 %1681
    %1685 = vset.pattern.permute.xlu0 0
    %1686 = vperm.xlu0 %1685, %v1656
    %v1687 = vpop.permute.xlu0 %1686
    %1690 = vset.pattern.permute.xlu0 0
    %1691 = vperm.xlu0 %1690, %v1657
    %v1692 = vpop.permute.xlu0 %1691
    %1695 = vset.pattern.permute.xlu0 0
    %1696 = vperm.xlu0 %1695, %v1658
    %v1697 = vpop.permute.xlu0 %1696
    %v1699 = vmul.f32 %v132, %v1662
    %v1700 = vmul.f32 %v133, %v1667
    %v1701 = vmul.f32 %v134, %v1672
    %v1702 = vmul.f32 %v135, %v1677
    %v1703 = vmul.f32 %v136, %v1682
    %v1704 = vmul.f32 %v137, %v1687
    %v1705 = vmul.f32 %v138, %v1692
    %v1706 = vmul.f32 %v139, %v1697
    %v1707 = vsel %vm171, %v1699, 0.0
    %v1708 = vrot.slane %v1707, 4
    %v1709 = vadd.f32 %v1707, %v1708
    %v1710 = vrot.slane %v1709, 2
    %v1711 = vadd.f32 %v1709, %v1710
    %v1712 = vrot.slane %v1711, 1
    %v1713 = vadd.f32 %v1711, %v1712
    %v1714 = vsel %vm171, %v1700, 0.0
    %v1715 = vrot.slane %v1714, 4
    %v1716 = vadd.f32 %v1714, %v1715
    %v1717 = vrot.slane %v1716, 2
    %v1718 = vadd.f32 %v1716, %v1717
    %v1719 = vrot.slane %v1718, 1
    %v1720 = vadd.f32 %v1718, %v1719
    %v1721 = vsel %vm171, %v1701, 0.0
    %v1722 = vrot.slane %v1721, 4
    %v1723 = vadd.f32 %v1721, %v1722
    %v1724 = vrot.slane %v1723, 2
    %v1725 = vadd.f32 %v1723, %v1724
    %v1726 = vrot.slane %v1725, 1
    %v1727 = vadd.f32 %v1725, %v1726
    %v1728 = vsel %vm171, %v1702, 0.0
    %v1729 = vrot.slane %v1728, 4
    %v1730 = vadd.f32 %v1728, %v1729
    %v1731 = vrot.slane %v1730, 2
    %v1732 = vadd.f32 %v1730, %v1731
    %v1733 = vrot.slane %v1732, 1
    %v1734 = vadd.f32 %v1732, %v1733
    %v1735 = vsel %vm171, %v1703, 0.0
    %v1736 = vrot.slane %v1735, 4
    %v1737 = vadd.f32 %v1735, %v1736
    %v1738 = vrot.slane %v1737, 2
    %v1739 = vadd.f32 %v1737, %v1738
    %v1740 = vrot.slane %v1739, 1
    %v1741 = vadd.f32 %v1739, %v1740
    %v1742 = vsel %vm171, %v1704, 0.0
    %v1743 = vrot.slane %v1742, 4
    %v1744 = vadd.f32 %v1742, %v1743
    %v1745 = vrot.slane %v1744, 2
    %v1746 = vadd.f32 %v1744, %v1745
    %v1747 = vrot.slane %v1746, 1
    %v1748 = vadd.f32 %v1746, %v1747
    %v1749 = vsel %vm171, %v1705, 0.0
    %v1750 = vrot.slane %v1749, 4
    %v1751 = vadd.f32 %v1749, %v1750
    %v1752 = vrot.slane %v1751, 2
    %v1753 = vadd.f32 %v1751, %v1752
    %v1754 = vrot.slane %v1753, 1
    %v1755 = vadd.f32 %v1753, %v1754
    %v1756 = vsel %vm171, %v1706, 0.0
    %v1757 = vrot.slane %v1756, 4
    %v1758 = vadd.f32 %v1756, %v1757
    %v1759 = vrot.slane %v1758, 2
    %v1760 = vadd.f32 %v1758, %v1759
    %v1761 = vrot.slane %v1760, 1
    %v1762 = vadd.f32 %v1760, %v1761
    %v1763 = vxor.u32 %v1268, 2147483648
    %v1764 = vmul.f32 %v1763, 1.442695
    %v1765 = vpow.pop %v1764
    %v1766 = vadd.f32 %v1765, 1.0
    %v1767 = vrcp.pop %v1766
    %v1768 = vmul.f32 1.0, %v1767
    %v1777 = vsel %vm256, %v1720, %v1713
    %v1778 = vsel %vm258, %v1727, %v1777
    %v1779 = vsel %vm260, %v1734, %v1778
    %v1780 = vsel %vm262, %v1741, %v1779
    %v1781 = vsel %vm264, %v1748, %v1780
    %v1782 = vsel %vm266, %v1755, %v1781
    %v1783 = vsel %vm268, %v1762, %v1782
    %1784 = vrot.lane.b32.xlu0 %v1783, 16
    %v1785 = vpop.permute.xlu0 %1784
    %v1787 = vmul.f32 %v1768, %v1785
    %s1788 = scalar_lea.vmem [#allocation8], 8
    %v1789 = vld [vmem:[%s1788] sm:$0xff]
    %v1790 = vsel %vm547, %v1789, %v1787
    %v1792 = vsel %vm970, %v1790, 0
    %1794 = vmatprep.subr.mxu0 0.0
    %1795 = vmatpush1.msra.mxu0 %v157
    %1796 = vmatprep.subr.mxu0 0.0
    %1797 = vmatpush1.msra.mxu0 %v158
    %1798 = vmatprep.subr.mxu0 0.0
    %1799 = vmatpush1.msra.mxu0 %v159
    %1800 = vmatprep.subr.mxu0 0.0
    %1801 = vmatpush1.msra.mxu0 %v160
    %1802 = vmatprep.subr.mxu0 0.0
    %1803 = vmatpush1.msra.mxu0 %v161
    %1804 = vmatprep.subr.mxu0 0.0
    %1805 = vmatpush1.msra.mxu0 %v162
    %1806 = vmatprep.subr.mxu0 0.0
    %1807 = vmatpush1.msra.mxu0 0.0
    %1808 = vmatprep.subr.mxu0 0.0
    %1809 = vmatpush1.msra.mxu0 0.0
    %1810 = vmatprep.subr.mxu0 0.0
    %1811 = vmatpush1.msra.mxu0 0.0
    %1812 = vmatprep.subr.mxu0 0.0
    %1813 = vmatpush1.msra.mxu0 0.0
    %1814 = vmatprep.subr.mxu0 0.0
    %1815 = vmatpush1.msra.mxu0 0.0
    %1816 = vmatprep.subr.mxu0 0.0
    %1817 = vmatpush1.msra.mxu0 0.0
    %1818 = vmatprep.subr.mxu0 0.0
    %1819 = vmatpush1.msra.mxu0 0.0
    %1820 = vmatprep.subr.mxu0 0.0
    %1821 = vmatpush1.msra.mxu0 0.0
    %1822 = vmatprep.subr.mxu0 0.0
    %1823 = vmatpush1.msra.mxu0 0.0
    %1824 = vmatprep.subr.mxu0 0.0
    %1825 = vmatpush1.msra.mxu0 0.0
    %1826 = vmatprep.subr.mxu0 0.0
    %1827 = vmatpush1.msra.mxu0 0.0
    %1828 = vmatprep.subr.mxu0 0.0
    %1829 = vmatpush1.msra.mxu0 0.0
    %1830 = vmatprep.subr.mxu0 0.0
    %1831 = vmatpush1.msra.mxu0 0.0
    %1832 = vmatprep.subr.mxu0 0.0
    %1833 = vmatpush1.msra.mxu0 0.0
    %1834 = vmatprep.subr.mxu0 0.0
    %1835 = vmatpush1.msra.mxu0 0.0
    %1836 = vmatprep.subr.mxu0 0.0
    %1837 = vmatpush1.msra.mxu0 0.0
    %1838 = vmatprep.subr.mxu0 0.0
    %1839 = vmatpush1.msra.mxu0 0.0
    %1840 = vmatprep.subr.mxu0 0.0
    %1841 = vmatpush1.msra.mxu0 0.0
    %1842 = vmatprep.subr.mxu0 0.0
    %1843 = vmatpush1.msra.mxu0 0.0
    %1844 = vmatprep.subr.mxu0 0.0
    %1845 = vmatpush1.msra.mxu0 0.0
    %1846 = vmatprep.subr.mxu0 0.0
    %1847 = vmatpush1.msra.mxu0 0.0
    %1848 = vmatprep.subr.mxu0 0.0
    %1849 = vmatpush1.msra.mxu0 0.0
    %1850 = vmatprep.subr.mxu0 0.0
    %1851 = vmatpush1.msra.mxu0 0.0
    %1852 = vmatprep.subr.mxu0 0.0
    %1853 = vmatpush1.msra.mxu0 0.0
    %1854 = vmatprep.subr.mxu0 0.0
    %1855 = vmatpush1.msra.mxu0 0.0
    %1856 = vmatprep.subr.mxu0 0.0
    %1857 = vmatpush1.msra.mxu0 0.0
    %1858 = vmatprep.mubr.f32.mxu0 0.0
    %1859 = vmatmul.mubr.f32.gmra.mrb[0].mxu0 %v1792
    %v1860 = vpop.f32.mrb[0].mxu0
    %v1861 = vadd.f32 %v968, %v1860
    %v1862 = vpop.f32.mrb[0].mxu0
    %1863 = vdwg.mxu0
    %1865 = vrot.lane.b32.xlu0 %v1268, 80
    %v1866 = vpop.permute.xlu0 %1865
    %1867 = vrot.lane.b32.xlu0 %v1270, 80
    %v1868 = vpop.permute.xlu0 %1867
    %v1869 = vsel %vm1049, %v1866, %v1868
    %v1871 = vadd.f32 %v1861, %v1869
    %v1872 = vxor.u32 %v1871, 2147483648
    %v1873 = vmul.f32 %v1872, 1.442695
    %v1874 = vpow.pop %v1873
    %v1875 = vadd.f32 %v1874, 1.0
    %v1876 = vrcp.pop %v1875
    %v1877 = vmul.f32 1.0, %v1876
    %v1878 = vtanh.pop %v1871
    %v1879 = vmul.f32 %v1877, %v1070
    %1881 = vrot.lane.b32.xlu0 %v1878, 64
    %v1882 = vpop.permute.xlu0 %1881
    %v1884 = vmul.f32 %v1877, %v1882
    %1886 = vrot.lane.b32.xlu0 %v1884, 32
    %v1887 = vpop.permute.xlu0 %1886
    %v1889 = vadd.f32 %v1879, %v1887
    %v1890 = vtanh.pop %v1889
    %1892 = vrot.lane.b32.xlu0 %v1890, 64
    %v1893 = vpop.permute.xlu0 %1892
    %v1895 = vmul.f32 %v1877, %v1893
    %1897 = vrot.lane.b32.xlu0 %v1895, 32
    %v1898 = vpop.permute.xlu0 %1897
    %v1899 = vsel %vm171, %v1898, 0
    %1901 = vmatprep.subr.mxu0 0.0
    %1902 = vmatpush1.msra.mxu0 %v166
    %1903 = vmatprep.subr.mxu0 0.0
    %1904 = vmatpush1.msra.mxu0 %v167
    %1905 = vmatprep.subr.mxu0 0.0
    %1906 = vmatpush1.msra.mxu0 %v168
    %1907 = vmatprep.subr.mxu0 0.0
    %1908 = vmatpush1.msra.mxu0 %v169
    %1909 = vmatprep.subr.mxu0 0.0
    %1910 = vmatpush1.msra.mxu0 0.0
    %1911 = vmatprep.subr.mxu0 0.0
    %1912 = vmatpush1.msra.mxu0 0.0
    %1913 = vmatprep.subr.mxu0 0.0
    %1914 = vmatpush1.msra.mxu0 0.0
    %1915 = vmatprep.subr.mxu0 0.0
    %1916 = vmatpush1.msra.mxu0 0.0
    %1917 = vmatprep.subr.mxu0 0.0
    %1918 = vmatpush1.msra.mxu0 0.0
    %1919 = vmatprep.subr.mxu0 0.0
    %1920 = vmatpush1.msra.mxu0 0.0
    %1921 = vmatprep.subr.mxu0 0.0
    %1922 = vmatpush1.msra.mxu0 0.0
    %1923 = vmatprep.subr.mxu0 0.0
    %1924 = vmatpush1.msra.mxu0 0.0
    %1925 = vmatprep.subr.mxu0 0.0
    %1926 = vmatpush1.msra.mxu0 0.0
    %1927 = vmatprep.subr.mxu0 0.0
    %1928 = vmatpush1.msra.mxu0 0.0
    %1929 = vmatprep.subr.mxu0 0.0
    %1930 = vmatpush1.msra.mxu0 0.0
    %1931 = vmatprep.subr.mxu0 0.0
    %1932 = vmatpush1.msra.mxu0 0.0
    %1933 = vmatprep.subr.mxu0 0.0
    %1934 = vmatpush1.msra.mxu0 0.0
    %1935 = vmatprep.subr.mxu0 0.0
    %1936 = vmatpush1.msra.mxu0 0.0
    %1937 = vmatprep.subr.mxu0 0.0
    %1938 = vmatpush1.msra.mxu0 0.0
    %1939 = vmatprep.subr.mxu0 0.0
    %1940 = vmatpush1.msra.mxu0 0.0
    %1941 = vmatprep.subr.mxu0 0.0
    %1942 = vmatpush1.msra.mxu0 0.0
    %1943 = vmatprep.subr.mxu0 0.0
    %1944 = vmatpush1.msra.mxu0 0.0
    %1945 = vmatprep.subr.mxu0 0.0
    %1946 = vmatpush1.msra.mxu0 0.0
    %1947 = vmatprep.subr.mxu0 0.0
    %1948 = vmatpush1.msra.mxu0 0.0
    %1949 = vmatprep.subr.mxu0 0.0
    %1950 = vmatpush1.msra.mxu0 0.0
    %1951 = vmatprep.subr.mxu0 0.0
    %1952 = vmatpush1.msra.mxu0 0.0
    %1953 = vmatprep.subr.mxu0 0.0
    %1954 = vmatpush1.msra.mxu0 0.0
    %1955 = vmatprep.subr.mxu0 0.0
    %1956 = vmatpush1.msra.mxu0 0.0
    %1957 = vmatprep.subr.mxu0 0.0
    %1958 = vmatpush1.msra.mxu0 0.0
    %1959 = vmatprep.subr.mxu0 0.0
    %1960 = vmatpush1.msra.mxu0 0.0
    %1961 = vmatprep.subr.mxu0 0.0
    %1962 = vmatpush1.msra.mxu0 0.0
    %1963 = vmatprep.subr.mxu0 0.0
    %1964 = vmatpush1.msra.mxu0 0.0
    %1965 = vmatprep.mubr.f32.mxu0 0.0
    %1966 = vmatmul.mubr.f32.gmra.mrb[0].mxu0 %v1899
    %v1967 = vpop.f32.mrb[0].mxu0
    %v1968 = vadd.f32 %v1081, %v1967
    %v1969 = vpop.f32.mrb[0].mxu0
    %1970 = vdwg.mxu0
    %s1971 = scalar_lea.vmem [#allocation14], 8
    %1972 = vst [vmem:[%s1971] sm:$0xff] %v1968
    %v1973 = vlaneseq
    %v1974 = vshrl.u32 %v1973, 7
    %v1975 = vsub.s32 %v598, %v1974
    %v1976 = vrot.slane %v1662, %v1975
    %v1977 = vlaneseq
    %v1978 = vshrl.u32 %v1977, 7
    %v1979 = vsub.s32 %v598, %v1978
    %v1980 = vrot.slane %v1667, %v1979
    %v1981 = vlaneseq
    %v1982 = vshrl.u32 %v1981, 7
    %v1983 = vsub.s32 %v598, %v1982
    %v1984 = vrot.slane %v1672, %v1983
    %v1985 = vlaneseq
    %v1986 = vshrl.u32 %v1985, 7
    %v1987 = vsub.s32 %v598, %v1986
    %v1988 = vrot.slane %v1677, %v1987
    %v1989 = vlaneseq
    %v1990 = vshrl.u32 %v1989, 7
    %v1991 = vsub.s32 %v598, %v1990
    %v1992 = vrot.slane %v1682, %v1991
    %v1993 = vlaneseq
    %v1994 = vshrl.u32 %v1993, 7
    %v1995 = vsub.s32 %v598, %v1994
    %v1996 = vrot.slane %v1687, %v1995
    %v1997 = vlaneseq
    %v1998 = vshrl.u32 %v1997, 7
    %v1999 = vsub.s32 %v598, %v1998
    %v2000 = vrot.slane %v1692, %v1999
    %v2001 = vlaneseq
    %v2002 = vshrl.u32 %v2001, 7
    %v2003 = vsub.s32 %v598, %v2002
    %v2004 = vrot.slane %v1697, %v2003
    %v2005 = vsel %vm256, %v1980, %v1976
    %v2006 = vsel %vm258, %v1984, %v2005
    %v2007 = vsel %vm260, %v1988, %v2006
    %v2008 = vsel %vm262, %v1992, %v2007
    %v2009 = vsel %vm264, %v1996, %v2008
    %v2010 = vsel %vm266, %v2000, %v2009
    %v2011 = vsel %vm268, %v2004, %v2010
    %v2013 = vsel %vm639, %v2011, 0.0
    %s2014 = scalar_lea.vmem [#allocation15], 8
    %2015 = vst [vmem:[%s2014] sm:$0xff] %v2013
    %2016 = vmatprep.subr.mxu0 %v149
    %2017 = vmatpush1.msra.mxu0 %v148
    %2018 = vmatprep.subr.mxu0 %v151
    %2019 = vmatpush1.msra.mxu0 %v150
    %2020 = vmatprep.subr.mxu0 %v153
    %2021 = vmatpush1.msra.mxu0 %v152
    %2022 = vmatprep.subr.mxu0 %v155
    %2023 = vmatpush1.msra.mxu0 %v154
    %2024 = vmatprep.subr.mxu0 0.0
    %2025 = vmatpush1.msra.mxu0 0.0
    %2026 = vmatprep.subr.mxu0 0.0
    %2027 = vmatpush1.msra.mxu0 0.0
    %2028 = vmatprep.subr.mxu0 0.0
    %2029 = vmatpush1.msra.mxu0 0.0
    %2030 = vmatprep.subr.mxu0 0.0
    %2031 = vmatpush1.msra.mxu0 0.0
    %2032 = vmatprep.subr.mxu0 0.0
    %2033 = vmatpush1.msra.mxu0 0.0
    %2034 = vmatprep.subr.mxu0 0.0
    %2035 = vmatpush1.msra.mxu0 0.0
    %2036 = vmatprep.subr.mxu0 0.0
    %2037 = vmatpush1.msra.mxu0 0.0
    %2038 = vmatprep.subr.mxu0 0.0
    %2039 = vmatpush1.msra.mxu0 0.0
    %2040 = vmatprep.subr.mxu0 0.0
    %2041 = vmatpush1.msra.mxu0 0.0
    %2042 = vmatprep.subr.mxu0 0.0
    %2043 = vmatpush1.msra.mxu0 0.0
    %2044 = vmatprep.subr.mxu0 0.0
    %2045 = vmatpush1.msra.mxu0 0.0
    %2046 = vmatprep.subr.mxu0 0.0
    %2047 = vmatpush1.msra.mxu0 0.0
    %2048 = vmatprep.subr.mxu0 0.0
    %2049 = vmatpush1.msra.mxu0 0.0
    %2050 = vmatprep.subr.mxu0 0.0
    %2051 = vmatpush1.msra.mxu0 0.0
    %2052 = vmatprep.subr.mxu0 0.0
    %2053 = vmatpush1.msra.mxu0 0.0
    %2054 = vmatprep.subr.mxu0 0.0
    %2055 = vmatpush1.msra.mxu0 0.0
    %2056 = vmatprep.subr.mxu0 0.0
    %2057 = vmatpush1.msra.mxu0 0.0
    %2058 = vmatprep.subr.mxu0 0.0
    %2059 = vmatpush1.msra.mxu0 0.0
    %2060 = vmatprep.subr.mxu0 0.0
    %2061 = vmatpush1.msra.mxu0 0.0
    %2062 = vmatprep.subr.mxu0 0.0
    %2063 = vmatpush1.msra.mxu0 0.0
    %2064 = vmatprep.subr.mxu0 0.0
    %2065 = vmatpush1.msra.mxu0 0.0
    %2066 = vmatprep.subr.mxu0 0.0
    %2067 = vmatpush1.msra.mxu0 0.0
    %2068 = vmatprep.subr.mxu0 0.0
    %2069 = vmatpush1.msra.mxu0 0.0
    %2070 = vmatprep.subr.mxu0 0.0
    %2071 = vmatpush1.msra.mxu0 0.0
    %2072 = vmatprep.subr.mxu0 0.0
    %2073 = vmatpush1.msra.mxu0 0.0
    %2074 = vmatprep.subr.mxu0 0.0
    %2075 = vmatpush1.msra.mxu0 0.0
    %2076 = vmatprep.subr.mxu0 0.0
    %2077 = vmatpush1.msra.mxu0 0.0
    %2078 = vmatprep.subr.mxu0 0.0
    %2079 = vmatpush1.msra.mxu0 0.0
    %2080 = vmatprep.mubr.f32.mxu0 0.0
    %2081 = vmatmul.mubr.f32.gmra.mrb[0].mxu0 %v1899
    %v2082 = vpop.f32.mrb[0].mxu0
    %v2083 = vadd.f32 %v346, %v2082
    %v2084 = vpop.f32.mrb[0].mxu0
    %v2085 = vadd.f32 %v350, %v2084
    %2086 = vdwg.mxu0
    %v2088 = vcombine.high %v2083, %v2083
    %v2090 = vunpack.c.l.s4 1966171168
    %v2091 = vunpack.c.0.s8 %v2090
    %v2092 = vlaneseq
    %v2093 = vshrl.u32 %v2092, 7
    %v2094 = vsub.s32 %v2091, %v2093
    %v2095 = vrot.slane %v2083, %v2094
    %v2097 = vunpack.c.l.s4 1966171168
    %v2098 = vunpack.c.0.s8 %v2097
    %v2099 = vlaneseq
    %v2100 = vshrl.u32 %v2099, 7
    %v2101 = vsub.s32 %v2098, %v2100
    %v2102 = vrot.slane %v2088, %v2101
    %v2103 = vcombine.high %v2095, %v2095
    %v2104 = vcombine.high %v2102, %v2102
    %v2106 = vunpack.c.l.s4 1966171168
    %v2107 = vunpack.c.0.s8 %v2106
    %v2108 = vlaneseq
    %v2109 = vshrl.u32 %v2108, 7
    %v2110 = vsub.s32 %v2107, %v2109
    %v2111 = vrot.slane %v2095, %v2110
    %v2113 = vunpack.c.l.s4 1966171168
    %v2114 = vunpack.c.0.s8 %v2113
    %v2115 = vlaneseq
    %v2116 = vshrl.u32 %v2115, 7
    %v2117 = vsub.s32 %v2114, %v2116
    %v2118 = vrot.slane %v2102, %v2117
    %v2120 = vunpack.c.l.s4 1966171168
    %v2121 = vunpack.c.0.s8 %v2120
    %v2122 = vlaneseq
    %v2123 = vshrl.u32 %v2122, 7
    %v2124 = vsub.s32 %v2121, %v2123
    %v2125 = vrot.slane %v2103, %v2124
    %v2127 = vunpack.c.l.s4 1966171168
    %v2128 = vunpack.c.0.s8 %v2127
    %v2129 = vlaneseq
    %v2130 = vshrl.u32 %v2129, 7
    %v2131 = vsub.s32 %v2128, %v2130
    %v2132 = vrot.slane %v2104, %v2131
    %v2133 = vcombine.high %v2111, %v2111
    %v2134 = vcombine.high %v2118, %v2118
    %v2135 = vcombine.high %v2125, %v2125
    %v2136 = vcombine.high %v2132, %v2132
    %v2137 = vlaneseq
    %v2138 = vshrl.u32 %v2137, 7
    %v2139 = vsub.s32 0, %v2138
    %v2140 = vrot.slane %v2111, %v2139
    %v2141 = vlaneseq
    %v2142 = vshrl.u32 %v2141, 7
    %v2143 = vsub.s32 0, %v2142
    %v2144 = vrot.slane %v2125, %v2143
    %v2145 = vlaneseq
    %v2146 = vshrl.u32 %v2145, 7
    %v2147 = vsub.s32 0, %v2146
    %v2148 = vrot.slane %v2133, %v2147
    %v2149 = vlaneseq
    %v2150 = vshrl.u32 %v2149, 7
    %v2151 = vsub.s32 0, %v2150
    %v2152 = vrot.slane %v2135, %v2151
    %v2153 = vlaneseq
    %v2154 = vshrl.u32 %v2153, 7
    %v2155 = vsub.s32 0, %v2154
    %v2156 = vrot.slane %v2118, %v2155
    %v2157 = vlaneseq
    %v2158 = vshrl.u32 %v2157, 7
    %v2159 = vsub.s32 0, %v2158
    %v2160 = vrot.slane %v2132, %v2159
    %v2161 = vlaneseq
    %v2162 = vshrl.u32 %v2161, 7
    %v2163 = vsub.s32 0, %v2162
    %v2164 = vrot.slane %v2134, %v2163
    %v2165 = vlaneseq
    %v2166 = vshrl.u32 %v2165, 7
    %v2167 = vsub.s32 0, %v2166
    %v2168 = vrot.slane %v2136, %v2167
    %v2177 = vadd.f32 %v140, %v2140
    %v2178 = vadd.f32 %v141, %v2144
    %v2179 = vadd.f32 %v142, %v2148
    %v2180 = vadd.f32 %v143, %v2152
    %v2181 = vadd.f32 %v144, %v2156
    %v2182 = vadd.f32 %v145, %v2160
    %v2183 = vadd.f32 %v146, %v2164
    %v2184 = vadd.f32 %v147, %v2168
    %v2185 = vmax.f32 %v2177, 0.0
    %v2186 = vmax.f32 %v2178, 0.0
    %v2187 = vmax.f32 %v2179, 0.0
    %v2188 = vmax.f32 %v2180, 0.0
    %v2189 = vmax.f32 %v2181, 0.0
    %v2190 = vmax.f32 %v2182, 0.0
    %v2191 = vmax.f32 %v2183, 0.0
    %v2192 = vmax.f32 %v2184, 0.0
    %v2193 = vmul.f32 %v2185, %v537
    %v2194 = vmul.f32 %v2186, %v537
    %v2195 = vmul.f32 %v2187, %v537
    %v2196 = vmul.f32 %v2188, %v537
    %v2197 = vmul.f32 %v2189, %v537
    %v2198 = vmul.f32 %v2190, %v537
    %v2199 = vmul.f32 %v2191, %v537
    %v2200 = vmul.f32 %v2192, %v537
    %v2201 = vsel %vm547, %v2193, 0.0
    %2202 = vadd.xlane.f32.xlu0 %v2201
    %v2203 = vpop.xlane.xlu0 %2202
    %v2204 = vsel %vm547, %v2194, 0.0
    %2205 = vadd.xlane.f32.xlu0 %v2204
    %v2206 = vpop.xlane.xlu0 %2205
    %v2207 = vsel %vm547, %v2195, 0.0
    %2208 = vadd.xlane.f32.xlu0 %v2207
    %v2209 = vpop.xlane.xlu0 %2208
    %v2210 = vsel %vm547, %v2196, 0.0
    %2211 = vadd.xlane.f32.xlu0 %v2210
    %v2212 = vpop.xlane.xlu0 %2211
    %v2213 = vsel %vm547, %v2197, 0.0
    %2214 = vadd.xlane.f32.xlu0 %v2213
    %v2215 = vpop.xlane.xlu0 %2214
    %v2216 = vsel %vm547, %v2198, 0.0
    %2217 = vadd.xlane.f32.xlu0 %v2216
    %v2218 = vpop.xlane.xlu0 %2217
    %v2219 = vsel %vm547, %v2199, 0.0
    %2220 = vadd.xlane.f32.xlu0 %v2219
    %v2221 = vpop.xlane.xlu0 %2220
    %v2222 = vsel %vm547, %v2200, 0.0
    %2223 = vadd.xlane.f32.xlu0 %v2222
    %v2224 = vpop.xlane.xlu0 %2223
    %v2225 = vadd.f32 %v2203, %v579
    %v2226 = vadd.f32 %v2206, %v579
    %v2227 = vadd.f32 %v2209, %v579
    %v2228 = vadd.f32 %v2212, %v579
    %v2229 = vadd.f32 %v2215, %v579
    %v2230 = vadd.f32 %v2218, %v579
    %v2231 = vadd.f32 %v2221, %v579
    %v2232 = vadd.f32 %v2224, %v579
    %v2241 = vlaneseq
    %v2242 = vshrl.u32 %v2241, 7
    %v2243 = vsub.s32 %v598, %v2242
    %v2244 = vrot.slane %v2225, %v2243
    %v2245 = vlaneseq
    %v2246 = vshrl.u32 %v2245, 7
    %v2247 = vsub.s32 %v598, %v2246
    %v2248 = vrot.slane %v2226, %v2247
    %v2249 = vlaneseq
    %v2250 = vshrl.u32 %v2249, 7
    %v2251 = vsub.s32 %v598, %v2250
    %v2252 = vrot.slane %v2227, %v2251
    %v2253 = vlaneseq
    %v2254 = vshrl.u32 %v2253, 7
    %v2255 = vsub.s32 %v598, %v2254
    %v2256 = vrot.slane %v2228, %v2255
    %v2257 = vlaneseq
    %v2258 = vshrl.u32 %v2257, 7
    %v2259 = vsub.s32 %v598, %v2258
    %v2260 = vrot.slane %v2229, %v2259
    %v2261 = vlaneseq
    %v2262 = vshrl.u32 %v2261, 7
    %v2263 = vsub.s32 %v598, %v2262
    %v2264 = vrot.slane %v2230, %v2263
    %v2265 = vlaneseq
    %v2266 = vshrl.u32 %v2265, 7
    %v2267 = vsub.s32 %v598, %v2266
    %v2268 = vrot.slane %v2231, %v2267
    %v2269 = vlaneseq
    %v2270 = vshrl.u32 %v2269, 7
    %v2271 = vsub.s32 %v598, %v2270
    %v2272 = vrot.slane %v2232, %v2271
    %v2273 = vsel %vm256, %v2248, %v2244
    %v2274 = vsel %vm258, %v2252, %v2273
    %v2275 = vsel %vm260, %v2256, %v2274
    %v2276 = vsel %vm262, %v2260, %v2275
    %v2277 = vsel %vm264, %v2264, %v2276
    %v2278 = vsel %vm266, %v2268, %v2277
    %v2279 = vsel %vm268, %v2272, %v2278
    %v2281 = vsel %vm639, %v2279, -inf
    %2282 = vmax.xlane.f32.xlu0 %v2281
    %v2283 = vpop.xlane.xlu0 %2282
    %v2285 = vlaneseq
    %v2286 = vshrl.u32 %v2285, 7
    %v2287 = vsub.s32 0, %v2286
    %v2288 = vrot.slane %v2283, %v2287
    %v2289 = vlaneseq
    %v2290 = vshrl.u32 %v2289, 7
    %v2291 = vsub.s32 1, %v2290
    %v2292 = vrot.slane %v2283, %v2291
    %v2293 = vlaneseq
    %v2294 = vshrl.u32 %v2293, 7
    %v2295 = vsub.s32 2, %v2294
    %v2296 = vrot.slane %v2283, %v2295
    %v2297 = vlaneseq
    %v2298 = vshrl.u32 %v2297, 7
    %v2299 = vsub.s32 3, %v2298
    %v2300 = vrot.slane %v2283, %v2299
    %v2301 = vlaneseq
    %v2302 = vshrl.u32 %v2301, 7
    %v2303 = vsub.s32 4, %v2302
    %v2304 = vrot.slane %v2283, %v2303
    %v2305 = vlaneseq
    %v2306 = vshrl.u32 %v2305, 7
    %v2307 = vsub.s32 5, %v2306
    %v2308 = vrot.slane %v2283, %v2307
    %v2309 = vlaneseq
    %v2310 = vshrl.u32 %v2309, 7
    %v2311 = vsub.s32 6, %v2310
    %v2312 = vrot.slane %v2283, %v2311
    %v2313 = vlaneseq
    %v2314 = vshrl.u32 %v2313, 7
    %v2315 = vsub.s32 7, %v2314
    %v2316 = vrot.slane %v2283, %v2315
    %v2325 = vsub.f32 %v2225, %v2288
    %v2326 = vsub.f32 %v2226, %v2292
    %v2327 = vsub.f32 %v2227, %v2296
    %v2328 = vsub.f32 %v2228, %v2300
    %v2329 = vsub.f32 %v2229, %v2304
    %v2330 = vsub.f32 %v2230, %v2308
    %v2331 = vsub.f32 %v2231, %v2312
    %v2332 = vsub.f32 %v2232, %v2316
    %v2333 = vmul.f32 %v2325, 1.442695
    %v2334 = vpow.pop %v2333
    %v2335 = vmul.f32 %v2326, 1.442695
    %v2336 = vpow.pop %v2335
    %v2337 = vmul.f32 %v2327, 1.442695
    %v2338 = vpow.pop %v2337
    %v2339 = vmul.f32 %v2328, 1.442695
    %v2340 = vpow.pop %v2339
    %v2341 = vmul.f32 %v2329, 1.442695
    %v2342 = vpow.pop %v2341
    %v2343 = vmul.f32 %v2330, 1.442695
    %v2344 = vpow.pop %v2343
    %v2345 = vmul.f32 %v2331, 1.442695
    %v2346 = vpow.pop %v2345
    %v2347 = vmul.f32 %v2332, 1.442695
    %v2348 = vpow.pop %v2347
    %2357 = vset.pattern.permute.xlu0 0
    %2358 = vperm.xlu0 %2357, %v2334
    %v2359 = vpop.permute.xlu0 %2358
    %2360 = vset.pattern.permute.xlu0 0
    %2361 = vperm.xlu0 %2360, %v2336
    %v2362 = vpop.permute.xlu0 %2361
    %2363 = vset.pattern.permute.xlu0 0
    %2364 = vperm.xlu0 %2363, %v2338
    %v2365 = vpop.permute.xlu0 %2364
    %2366 = vset.pattern.permute.xlu0 0
    %2367 = vperm.xlu0 %2366, %v2340
    %v2368 = vpop.permute.xlu0 %2367
    %2369 = vset.pattern.permute.xlu0 0
    %2370 = vperm.xlu0 %2369, %v2342
    %v2371 = vpop.permute.xlu0 %2370
    %2372 = vset.pattern.permute.xlu0 0
    %2373 = vperm.xlu0 %2372, %v2344
    %v2374 = vpop.permute.xlu0 %2373
    %2375 = vset.pattern.permute.xlu0 0
    %2376 = vperm.xlu0 %2375, %v2346
    %v2377 = vpop.permute.xlu0 %2376
    %2378 = vset.pattern.permute.xlu0 0
    %2379 = vperm.xlu0 %2378, %v2348
    %v2380 = vpop.permute.xlu0 %2379
    %v2381 = vlaneseq
    %v2382 = vshrl.u32 %v2381, 7
    %v2383 = vsub.s32 %v598, %v2382
    %v2384 = vrot.slane %v2359, %v2383
    %v2385 = vlaneseq
    %v2386 = vshrl.u32 %v2385, 7
    %v2387 = vsub.s32 %v598, %v2386
    %v2388 = vrot.slane %v2362, %v2387
    %v2389 = vlaneseq
    %v2390 = vshrl.u32 %v2389, 7
    %v2391 = vsub.s32 %v598, %v2390
    %v2392 = vrot.slane %v2365, %v2391
    %v2393 = vlaneseq
    %v2394 = vshrl.u32 %v2393, 7
    %v2395 = vsub.s32 %v598, %v2394
    %v2396 = vrot.slane %v2368, %v2395
    %v2397 = vlaneseq
    %v2398 = vshrl.u32 %v2397, 7
    %v2399 = vsub.s32 %v598, %v2398
    %v2400 = vrot.slane %v2371, %v2399
    %v2401 = vlaneseq
    %v2402 = vshrl.u32 %v2401, 7
    %v2403 = vsub.s32 %v598, %v2402
    %v2404 = vrot.slane %v2374, %v2403
    %v2405 = vlaneseq
    %v2406 = vshrl.u32 %v2405, 7
    %v2407 = vsub.s32 %v598, %v2406
    %v2408 = vrot.slane %v2377, %v2407
    %v2409 = vlaneseq
    %v2410 = vshrl.u32 %v2409, 7
    %v2411 = vsub.s32 %v598, %v2410
    %v2412 = vrot.slane %v2380, %v2411
    %v2413 = vsel %vm256, %v2388, %v2384
    %v2414 = vsel %vm258, %v2392, %v2413
    %v2415 = vsel %vm260, %v2396, %v2414
    %v2416 = vsel %vm262, %v2400, %v2415
    %v2417 = vsel %vm264, %v2404, %v2416
    %v2418 = vsel %vm266, %v2408, %v2417
    %v2419 = vsel %vm268, %v2412, %v2418
    %v2421 = vsel %vm639, %v2419, 0.0
    %2422 = vadd.xlane.f32.xlu0 %v2421
    %v2423 = vpop.xlane.xlu0 %2422
    %v2424 = vrcp.pop %v2423
    %v2426 = vlaneseq
    %v2427 = vshrl.u32 %v2426, 7
    %v2428 = vsub.s32 0, %v2427
    %v2429 = vrot.slane %v2424, %v2428
    %v2430 = vlaneseq
    %v2431 = vshrl.u32 %v2430, 7
    %v2432 = vsub.s32 1, %v2431
    %v2433 = vrot.slane %v2424, %v2432
    %v2434 = vlaneseq
    %v2435 = vshrl.u32 %v2434, 7
    %v2436 = vsub.s32 2, %v2435
    %v2437 = vrot.slane %v2424, %v2436
    %v2438 = vlaneseq
    %v2439 = vshrl.u32 %v2438, 7
    %v2440 = vsub.s32 3, %v2439
    %v2441 = vrot.slane %v2424, %v2440
    %v2442 = vlaneseq
    %v2443 = vshrl.u32 %v2442, 7
    %v2444 = vsub.s32 4, %v2443
    %v2445 = vrot.slane %v2424, %v2444
    %v2446 = vlaneseq
    %v2447 = vshrl.u32 %v2446, 7
    %v2448 = vsub.s32 5, %v2447
    %v2449 = vrot.slane %v2424, %v2448
    %v2450 = vlaneseq
    %v2451 = vshrl.u32 %v2450, 7
    %v2452 = vsub.s32 6, %v2451
    %v2453 = vrot.slane %v2424, %v2452
    %v2454 = vlaneseq
    %v2455 = vshrl.u32 %v2454, 7
    %v2456 = vsub.s32 7, %v2455
    %v2457 = vrot.slane %v2424, %v2456
    %v2466 = vmul.f32 %v2334, %v2429
    %v2467 = vmul.f32 %v2336, %v2433
    %v2468 = vmul.f32 %v2338, %v2437
    %v2469 = vmul.f32 %v2340, %v2441
    %v2470 = vmul.f32 %v2342, %v2445
    %v2471 = vmul.f32 %v2344, %v2449
    %v2472 = vmul.f32 %v2346, %v2453
    %v2473 = vmul.f32 %v2348, %v2457
    %2475 = vset.pattern.permute.xlu0 0
    %2476 = vperm.xlu0 %2475, %v2466
    %v2477 = vpop.permute.xlu0 %2476
    %2480 = vset.pattern.permute.xlu0 0
    %2481 = vperm.xlu0 %2480, %v2467
    %v2482 = vpop.permute.xlu0 %2481
    %2485 = vset.pattern.permute.xlu0 0
    %2486 = vperm.xlu0 %2485, %v2468
    %v2487 = vpop.permute.xlu0 %2486
    %2490 = vset.pattern.permute.xlu0 0
    %2491 = vperm.xlu0 %2490, %v2469
    %v2492 = vpop.permute.xlu0 %2491
    %2495 = vset.pattern.permute.xlu0 0
    %2496 = vperm.xlu0 %2495, %v2470
    %v2497 = vpop.permute.xlu0 %2496
    %2500 = vset.pattern.permute.xlu0 0
    %2501 = vperm.xlu0 %2500, %v2471
    %v2502 = vpop.permute.xlu0 %2501
    %2505 = vset.pattern.permute.xlu0 0
    %2506 = vperm.xlu0 %2505, %v2472
    %v2507 = vpop.permute.xlu0 %2506
    %2510 = vset.pattern.permute.xlu0 0
    %2511 = vperm.xlu0 %2510, %v2473
    %v2512 = vpop.permute.xlu0 %2511
    %v2514 = vmul.f32 %v132, %v2477
    %v2515 = vmul.f32 %v133, %v2482
    %v2516 = vmul.f32 %v134, %v2487
    %v2517 = vmul.f32 %v135, %v2492
    %v2518 = vmul.f32 %v136, %v2497
    %v2519 = vmul.f32 %v137, %v2502
    %v2520 = vmul.f32 %v138, %v2507
    %v2521 = vmul.f32 %v139, %v2512
    %v2522 = vsel %vm171, %v2514, 0.0
    %v2523 = vrot.slane %v2522, 4
    %v2524 = vadd.f32 %v2522, %v2523
    %v2525 = vrot.slane %v2524, 2
    %v2526 = vadd.f32 %v2524, %v2525
    %v2527 = vrot.slane %v2526, 1
    %v2528 = vadd.f32 %v2526, %v2527
    %v2529 = vsel %vm171, %v2515, 0.0
    %v2530 = vrot.slane %v2529, 4
    %v2531 = vadd.f32 %v2529, %v2530
    %v2532 = vrot.slane %v2531, 2
    %v2533 = vadd.f32 %v2531, %v2532
    %v2534 = vrot.slane %v2533, 1
    %v2535 = vadd.f32 %v2533, %v2534
    %v2536 = vsel %vm171, %v2516, 0.0
    %v2537 = vrot.slane %v2536, 4
    %v2538 = vadd.f32 %v2536, %v2537
    %v2539 = vrot.slane %v2538, 2
    %v2540 = vadd.f32 %v2538, %v2539
    %v2541 = vrot.slane %v2540, 1
    %v2542 = vadd.f32 %v2540, %v2541
    %v2543 = vsel %vm171, %v2517, 0.0
    %v2544 = vrot.slane %v2543, 4
    %v2545 = vadd.f32 %v2543, %v2544
    %v2546 = vrot.slane %v2545, 2
    %v2547 = vadd.f32 %v2545, %v2546
    %v2548 = vrot.slane %v2547, 1
    %v2549 = vadd.f32 %v2547, %v2548
    %v2550 = vsel %vm171, %v2518, 0.0
    %v2551 = vrot.slane %v2550, 4
    %v2552 = vadd.f32 %v2550, %v2551
    %v2553 = vrot.slane %v2552, 2
    %v2554 = vadd.f32 %v2552, %v2553
    %v2555 = vrot.slane %v2554, 1
    %v2556 = vadd.f32 %v2554, %v2555
    %v2557 = vsel %vm171, %v2519, 0.0
    %v2558 = vrot.slane %v2557, 4
    %v2559 = vadd.f32 %v2557, %v2558
    %v2560 = vrot.slane %v2559, 2
    %v2561 = vadd.f32 %v2559, %v2560
    %v2562 = vrot.slane %v2561, 1
    %v2563 = vadd.f32 %v2561, %v2562
    %v2564 = vsel %vm171, %v2520, 0.0
    %v2565 = vrot.slane %v2564, 4
    %v2566 = vadd.f32 %v2564, %v2565
    %v2567 = vrot.slane %v2566, 2
    %v2568 = vadd.f32 %v2566, %v2567
    %v2569 = vrot.slane %v2568, 1
    %v2570 = vadd.f32 %v2568, %v2569
    %v2571 = vsel %vm171, %v2521, 0.0
    %v2572 = vrot.slane %v2571, 4
    %v2573 = vadd.f32 %v2571, %v2572
    %v2574 = vrot.slane %v2573, 2
    %v2575 = vadd.f32 %v2573, %v2574
    %v2576 = vrot.slane %v2575, 1
    %v2577 = vadd.f32 %v2575, %v2576
    %v2578 = vxor.u32 %v2083, 2147483648
    %v2579 = vmul.f32 %v2578, 1.442695
    %v2580 = vpow.pop %v2579
    %v2581 = vadd.f32 %v2580, 1.0
    %v2582 = vrcp.pop %v2581
    %v2583 = vmul.f32 1.0, %v2582
    %v2592 = vsel %vm256, %v2535, %v2528
    %v2593 = vsel %vm258, %v2542, %v2592
    %v2594 = vsel %vm260, %v2549, %v2593
    %v2595 = vsel %vm262, %v2556, %v2594
    %v2596 = vsel %vm264, %v2563, %v2595
    %v2597 = vsel %vm266, %v2570, %v2596
    %v2598 = vsel %vm268, %v2577, %v2597
    %2599 = vrot.lane.b32.xlu0 %v2598, 16
    %v2600 = vpop.permute.xlu0 %2599
    %v2602 = vmul.f32 %v2583, %v2600
    %s2603 = scalar_lea.vmem [#allocation8], 16
    %v2604 = vld [vmem:[%s2603] sm:$0xff]
    %v2605 = vsel %vm547, %v2604, %v2602
    %v2607 = vsel %vm970, %v2605, 0
    %2609 = vmatprep.subr.mxu0 0.0
    %2610 = vmatpush1.msra.mxu0 %v157
    %2611 = vmatprep.subr.mxu0 0.0
    %2612 = vmatpush1.msra.mxu0 %v158
    %2613 = vmatprep.subr.mxu0 0.0
    %2614 = vmatpush1.msra.mxu0 %v159
    %2615 = vmatprep.subr.mxu0 0.0
    %2616 = vmatpush1.msra.mxu0 %v160
    %2617 = vmatprep.subr.mxu0 0.0
    %2618 = vmatpush1.msra.mxu0 %v161
    %2619 = vmatprep.subr.mxu0 0.0
    %2620 = vmatpush1.msra.mxu0 %v162
    %2621 = vmatprep.subr.mxu0 0.0
    %2622 = vmatpush1.msra.mxu0 0.0
    %2623 = vmatprep.subr.mxu0 0.0
    %2624 = vmatpush1.msra.mxu0 0.0
    %2625 = vmatprep.subr.mxu0 0.0
    %2626 = vmatpush1.msra.mxu0 0.0
    %2627 = vmatprep.subr.mxu0 0.0
    %2628 = vmatpush1.msra.mxu0 0.0
    %2629 = vmatprep.subr.mxu0 0.0
    %2630 = vmatpush1.msra.mxu0 0.0
    %2631 = vmatprep.subr.mxu0 0.0
    %2632 = vmatpush1.msra.mxu0 0.0
    %2633 = vmatprep.subr.mxu0 0.0
    %2634 = vmatpush1.msra.mxu0 0.0
    %2635 = vmatprep.subr.mxu0 0.0
    %2636 = vmatpush1.msra.mxu0 0.0
    %2637 = vmatprep.subr.mxu0 0.0
    %2638 = vmatpush1.msra.mxu0 0.0
    %2639 = vmatprep.subr.mxu0 0.0
    %2640 = vmatpush1.msra.mxu0 0.0
    %2641 = vmatprep.subr.mxu0 0.0
    %2642 = vmatpush1.msra.mxu0 0.0
    %2643 = vmatprep.subr.mxu0 0.0
    %2644 = vmatpush1.msra.mxu0 0.0
    %2645 = vmatprep.subr.mxu0 0.0
    %2646 = vmatpush1.msra.mxu0 0.0
    %2647 = vmatprep.subr.mxu0 0.0
    %2648 = vmatpush1.msra.mxu0 0.0
    %2649 = vmatprep.subr.mxu0 0.0
    %2650 = vmatpush1.msra.mxu0 0.0
    %2651 = vmatprep.subr.mxu0 0.0
    %2652 = vmatpush1.msra.mxu0 0.0
    %2653 = vmatprep.subr.mxu0 0.0
    %2654 = vmatpush1.msra.mxu0 0.0
    %2655 = vmatprep.subr.mxu0 0.0
    %2656 = vmatpush1.msra.mxu0 0.0
    %2657 = vmatprep.subr.mxu0 0.0
    %2658 = vmatpush1.msra.mxu0 0.0
    %2659 = vmatprep.subr.mxu0 0.0
    %2660 = vmatpush1.msra.mxu0 0.0
    %2661 = vmatprep.subr.mxu0 0.0
    %2662 = vmatpush1.msra.mxu0 0.0
    %2663 = vmatprep.subr.mxu0 0.0
    %2664 = vmatpush1.msra.mxu0 0.0
    %2665 = vmatprep.subr.mxu0 0.0
    %2666 = vmatpush1.msra.mxu0 0.0
    %2667 = vmatprep.subr.mxu0 0.0
    %2668 = vmatpush1.msra.mxu0 0.0
    %2669 = vmatprep.subr.mxu0 0.0
    %2670 = vmatpush1.msra.mxu0 0.0
    %2671 = vmatprep.subr.mxu0 0.0
    %2672 = vmatpush1.msra.mxu0 0.0
    %2673 = vmatprep.mubr.f32.mxu0 0.0
    %2674 = vmatmul.mubr.f32.gmra.mrb[0].mxu0 %v2607
    %v2675 = vpop.f32.mrb[0].mxu0
    %v2676 = vadd.f32 %v968, %v2675
    %v2677 = vpop.f32.mrb[0].mxu0
    %2678 = vdwg.mxu0
    %2680 = vrot.lane.b32.xlu0 %v2083, 80
    %v2681 = vpop.permute.xlu0 %2680
    %2682 = vrot.lane.b32.xlu0 %v2085, 80
    %v2683 = vpop.permute.xlu0 %2682
    %v2684 = vsel %vm1049, %v2681, %v2683
    %v2686 = vadd.f32 %v2676, %v2684
    %v2687 = vxor.u32 %v2686, 2147483648
    %v2688 = vmul.f32 %v2687, 1.442695
    %v2689 = vpow.pop %v2688
    %v2690 = vadd.f32 %v2689, 1.0
    %v2691 = vrcp.pop %v2690
    %v2692 = vmul.f32 1.0, %v2691
    %v2693 = vtanh.pop %v2686
    %v2694 = vmul.f32 %v2692, %v1889
    %2696 = vrot.lane.b32.xlu0 %v2693, 64
    %v2697 = vpop.permute.xlu0 %2696
    %v2699 = vmul.f32 %v2692, %v2697
    %2701 = vrot.lane.b32.xlu0 %v2699, 32
    %v2702 = vpop.permute.xlu0 %2701
    %v2704 = vadd.f32 %v2694, %v2702
    %v2705 = vtanh.pop %v2704
    %2707 = vrot.lane.b32.xlu0 %v2705, 64
    %v2708 = vpop.permute.xlu0 %2707
    %v2710 = vmul.f32 %v2692, %v2708
    %2712 = vrot.lane.b32.xlu0 %v2710, 32
    %v2713 = vpop.permute.xlu0 %2712
    %v2714 = vsel %vm171, %v2713, 0
    %2716 = vmatprep.subr.mxu0 0.0
    %2717 = vmatpush1.msra.mxu0 %v166
    %2718 = vmatprep.subr.mxu0 0.0
    %2719 = vmatpush1.msra.mxu0 %v167
    %2720 = vmatprep.subr.mxu0 0.0
    %2721 = vmatpush1.msra.mxu0 %v168
    %2722 = vmatprep.subr.mxu0 0.0
    %2723 = vmatpush1.msra.mxu0 %v169
    %2724 = vmatprep.subr.mxu0 0.0
    %2725 = vmatpush1.msra.mxu0 0.0
    %2726 = vmatprep.subr.mxu0 0.0
    %2727 = vmatpush1.msra.mxu0 0.0
    %2728 = vmatprep.subr.mxu0 0.0
    %2729 = vmatpush1.msra.mxu0 0.0
    %2730 = vmatprep.subr.mxu0 0.0
    %2731 = vmatpush1.msra.mxu0 0.0
    %2732 = vmatprep.subr.mxu0 0.0
    %2733 = vmatpush1.msra.mxu0 0.0
    %2734 = vmatprep.subr.mxu0 0.0
    %2735 = vmatpush1.msra.mxu0 0.0
    %2736 = vmatprep.subr.mxu0 0.0
    %2737 = vmatpush1.msra.mxu0 0.0
    %2738 = vmatprep.subr.mxu0 0.0
    %2739 = vmatpush1.msra.mxu0 0.0
    %2740 = vmatprep.subr.mxu0 0.0
    %2741 = vmatpush1.msra.mxu0 0.0
    %2742 = vmatprep.subr.mxu0 0.0
    %2743 = vmatpush1.msra.mxu0 0.0
    %2744 = vmatprep.subr.mxu0 0.0
    %2745 = vmatpush1.msra.mxu0 0.0
    %2746 = vmatprep.subr.mxu0 0.0
    %2747 = vmatpush1.msra.mxu0 0.0
    %2748 = vmatprep.subr.mxu0 0.0
    %2749 = vmatpush1.msra.mxu0 0.0
    %2750 = vmatprep.subr.mxu0 0.0
    %2751 = vmatpush1.msra.mxu0 0.0
    %2752 = vmatprep.subr.mxu0 0.0
    %2753 = vmatpush1.msra.mxu0 0.0
    %2754 = vmatprep.subr.mxu0 0.0
    %2755 = vmatpush1.msra.mxu0 0.0
    %2756 = vmatprep.subr.mxu0 0.0
    %2757 = vmatpush1.msra.mxu0 0.0
    %2758 = vmatprep.subr.mxu0 0.0
    %2759 = vmatpush1.msra.mxu0 0.0
    %2760 = vmatprep.subr.mxu0 0.0
    %2761 = vmatpush1.msra.mxu0 0.0
    %2762 = vmatprep.subr.mxu0 0.0
    %2763 = vmatpush1.msra.mxu0 0.0
    %2764 = vmatprep.subr.mxu0 0.0
    %2765 = vmatpush1.msra.mxu0 0.0
    %2766 = vmatprep.subr.mxu0 0.0
    %2767 = vmatpush1.msra.mxu0 0.0
    %2768 = vmatprep.subr.mxu0 0.0
    %2769 = vmatpush1.msra.mxu0 0.0
    %2770 = vmatprep.subr.mxu0 0.0
    %2771 = vmatpush1.msra.mxu0 0.0
    %2772 = vmatprep.subr.mxu0 0.0
    %2773 = vmatpush1.msra.mxu0 0.0
    %2774 = vmatprep.subr.mxu0 0.0
    %2775 = vmatpush1.msra.mxu0 0.0
    %2776 = vmatprep.subr.mxu0 0.0
    %2777 = vmatpush1.msra.mxu0 0.0
    %2778 = vmatprep.subr.mxu0 0.0
    %2779 = vmatpush1.msra.mxu0 0.0
    %2780 = vmatprep.mubr.f32.mxu0 0.0
    %2781 = vmatmul.mubr.f32.gmra.mrb[0].mxu0 %v2714
    %v2782 = vpop.f32.mrb[0].mxu0
    %v2783 = vadd.f32 %v1081, %v2782
    %v2784 = vpop.f32.mrb[0].mxu0
    %2785 = vdwg.mxu0
    %s2786 = scalar_lea.vmem [#allocation14], 16
    %2787 = vst [vmem:[%s2786] sm:$0xff] %v2783
    %v2788 = vlaneseq
    %v2789 = vshrl.u32 %v2788, 7
    %v2790 = vsub.s32 %v598, %v2789
    %v2791 = vrot.slane %v2477, %v2790
    %v2792 = vlaneseq
    %v2793 = vshrl.u32 %v2792, 7
    %v2794 = vsub.s32 %v598, %v2793
    %v2795 = vrot.slane %v2482, %v2794
    %v2796 = vlaneseq
    %v2797 = vshrl.u32 %v2796, 7
    %v2798 = vsub.s32 %v598, %v2797
    %v2799 = vrot.slane %v2487, %v2798
    %v2800 = vlaneseq
    %v2801 = vshrl.u32 %v2800, 7
    %v2802 = vsub.s32 %v598, %v2801
    %v2803 = vrot.slane %v2492, %v2802
    %v2804 = vlaneseq
    %v2805 = vshrl.u32 %v2804, 7
    %v2806 = vsub.s32 %v598, %v2805
    %v2807 = vrot.slane %v2497, %v2806
    %v2808 = vlaneseq
    %v2809 = vshrl.u32 %v2808, 7
    %v2810 = vsub.s32 %v598, %v2809
    %v2811 = vrot.slane %v2502, %v2810
    %v2812 = vlaneseq
    %v2813 = vshrl.u32 %v2812, 7
    %v2814 = vsub.s32 %v598, %v2813
    %v2815 = vrot.slane %v2507, %v2814
    %v2816 = vlaneseq
    %v2817 = vshrl.u32 %v2816, 7
    %v2818 = vsub.s32 %v598, %v2817
    %v2819 = vrot.slane %v2512, %v2818
    %v2820 = vsel %vm256, %v2795, %v2791
    %v2821 = vsel %vm258, %v2799, %v2820
    %v2822 = vsel %vm260, %v2803, %v2821
    %v2823 = vsel %vm262, %v2807, %v2822
    %v2824 = vsel %vm264, %v2811, %v2823
    %v2825 = vsel %vm266, %v2815, %v2824
    %v2826 = vsel %vm268, %v2819, %v2825
    %v2828 = vsel %vm639, %v2826, 0.0
    %s2829 = scalar_lea.vmem [#allocation15], 16
    %2830 = vst [vmem:[%s2829] sm:$0xff] %v2828
    %2831 = vmatprep.subr.mxu0 %v149
    %2832 = vmatpush1.msra.mxu0 %v148
    %2833 = vmatprep.subr.mxu0 %v151
    %2834 = vmatpush1.msra.mxu0 %v150
    %2835 = vmatprep.subr.mxu0 %v153
    %2836 = vmatpush1.msra.mxu0 %v152
    %2837 = vmatprep.subr.mxu0 %v155
    %2838 = vmatpush1.msra.mxu0 %v154
    %2839 = vmatprep.subr.mxu0 0.0
    %2840 = vmatpush1.msra.mxu0 0.0
    %2841 = vmatprep.subr.mxu0 0.0
    %2842 = vmatpush1.msra.mxu0 0.0
    %2843 = vmatprep.subr.mxu0 0.0
    %2844 = vmatpush1.msra.mxu0 0.0
    %2845 = vmatprep.subr.mxu0 0.0
    %2846 = vmatpush1.msra.mxu0 0.0
    %2847 = vmatprep.subr.mxu0 0.0
    %2848 = vmatpush1.msra.mxu0 0.0
    %2849 = vmatprep.subr.mxu0 0.0
    %2850 = vmatpush1.msra.mxu0 0.0
    %2851 = vmatprep.subr.mxu0 0.0
    %2852 = vmatpush1.msra.mxu0 0.0
    %2853 = vmatprep.subr.mxu0 0.0
    %2854 = vmatpush1.msra.mxu0 0.0
    %2855 = vmatprep.subr.mxu0 0.0
    %2856 = vmatpush1.msra.mxu0 0.0
    %2857 = vmatprep.subr.mxu0 0.0
    %2858 = vmatpush1.msra.mxu0 0.0
    %2859 = vmatprep.subr.mxu0 0.0
    %2860 = vmatpush1.msra.mxu0 0.0
    %2861 = vmatprep.subr.mxu0 0.0
    %2862 = vmatpush1.msra.mxu0 0.0
    %2863 = vmatprep.subr.mxu0 0.0
    %2864 = vmatpush1.msra.mxu0 0.0
    %2865 = vmatprep.subr.mxu0 0.0
    %2866 = vmatpush1.msra.mxu0 0.0
    %2867 = vmatprep.subr.mxu0 0.0
    %2868 = vmatpush1.msra.mxu0 0.0
    %2869 = vmatprep.subr.mxu0 0.0
    %2870 = vmatpush1.msra.mxu0 0.0
    %2871 = vmatprep.subr.mxu0 0.0
    %2872 = vmatpush1.msra.mxu0 0.0
    %2873 = vmatprep.subr.mxu0 0.0
    %2874 = vmatpush1.msra.mxu0 0.0
    %2875 = vmatprep.subr.mxu0 0.0
    %2876 = vmatpush1.msra.mxu0 0.0
    %2877 = vmatprep.subr.mxu0 0.0
    %2878 = vmatpush1.msra.mxu0 0.0
    %2879 = vmatprep.subr.mxu0 0.0
    %2880 = vmatpush1.msra.mxu0 0.0
    %2881 = vmatprep.subr.mxu0 0.0
    %2882 = vmatpush1.msra.mxu0 0.0
    %2883 = vmatprep.subr.mxu0 0.0
    %2884 = vmatpush1.msra.mxu0 0.0
    %2885 = vmatprep.subr.mxu0 0.0
    %2886 = vmatpush1.msra.mxu0 0.0
    %2887 = vmatprep.subr.mxu0 0.0
    %2888 = vmatpush1.msra.mxu0 0.0
    %2889 = vmatprep.subr.mxu0 0.0
    %2890 = vmatpush1.msra.mxu0 0.0
    %2891 = vmatprep.subr.mxu0 0.0
    %2892 = vmatpush1.msra.mxu0 0.0
    %2893 = vmatprep.subr.mxu0 0.0
    %2894 = vmatpush1.msra.mxu0 0.0
    %2895 = vmatprep.mubr.f32.mxu0 0.0
    %2896 = vmatmul.mubr.f32.gmra.mrb[0].mxu0 %v2714
    %v2897 = vpop.f32.mrb[0].mxu0
    %v2898 = vadd.f32 %v346, %v2897
    %v2899 = vpop.f32.mrb[0].mxu0
    %v2900 = vadd.f32 %v350, %v2899
    %2901 = vdwg.mxu0
    %v2903 = vcombine.high %v2898, %v2898
    %v2905 = vunpack.c.l.s4 1966171168
    %v2906 = vunpack.c.0.s8 %v2905
    %v2907 = vlaneseq
    %v2908 = vshrl.u32 %v2907, 7
    %v2909 = vsub.s32 %v2906, %v2908
    %v2910 = vrot.slane %v2898, %v2909
    %v2912 = vunpack.c.l.s4 1966171168
    %v2913 = vunpack.c.0.s8 %v2912
    %v2914 = vlaneseq
    %v2915 = vshrl.u32 %v2914, 7
    %v2916 = vsub.s32 %v2913, %v2915
    %v2917 = vrot.slane %v2903, %v2916
    %v2918 = vcombine.high %v2910, %v2910
    %v2919 = vcombine.high %v2917, %v2917
    %v2921 = vunpack.c.l.s4 1966171168
    %v2922 = vunpack.c.0.s8 %v2921
    %v2923 = vlaneseq
    %v2924 = vshrl.u32 %v2923, 7
    %v2925 = vsub.s32 %v2922, %v2924
    %v2926 = vrot.slane %v2910, %v2925
    %v2928 = vunpack.c.l.s4 1966171168
    %v2929 = vunpack.c.0.s8 %v2928
    %v2930 = vlaneseq
    %v2931 = vshrl.u32 %v2930, 7
    %v2932 = vsub.s32 %v2929, %v2931
    %v2933 = vrot.slane %v2917, %v2932
    %v2935 = vunpack.c.l.s4 1966171168
    %v2936 = vunpack.c.0.s8 %v2935
    %v2937 = vlaneseq
    %v2938 = vshrl.u32 %v2937, 7
    %v2939 = vsub.s32 %v2936, %v2938
    %v2940 = vrot.slane %v2918, %v2939
    %v2942 = vunpack.c.l.s4 1966171168
    %v2943 = vunpack.c.0.s8 %v2942
    %v2944 = vlaneseq
    %v2945 = vshrl.u32 %v2944, 7
    %v2946 = vsub.s32 %v2943, %v2945
    %v2947 = vrot.slane %v2919, %v2946
    %v2948 = vcombine.high %v2926, %v2926
    %v2949 = vcombine.high %v2933, %v2933
    %v2950 = vcombine.high %v2940, %v2940
    %v2951 = vcombine.high %v2947, %v2947
    %v2952 = vlaneseq
    %v2953 = vshrl.u32 %v2952, 7
    %v2954 = vsub.s32 0, %v2953
    %v2955 = vrot.slane %v2926, %v2954
    %v2956 = vlaneseq
    %v2957 = vshrl.u32 %v2956, 7
    %v2958 = vsub.s32 0, %v2957
    %v2959 = vrot.slane %v2940, %v2958
    %v2960 = vlaneseq
    %v2961 = vshrl.u32 %v2960, 7
    %v2962 = vsub.s32 0, %v2961
    %v2963 = vrot.slane %v2948, %v2962
    %v2964 = vlaneseq
    %v2965 = vshrl.u32 %v2964, 7
    %v2966 = vsub.s32 0, %v2965
    %v2967 = vrot.slane %v2950, %v2966
    %v2968 = vlaneseq
    %v2969 = vshrl.u32 %v2968, 7
    %v2970 = vsub.s32 0, %v2969
    %v2971 = vrot.slane %v2933, %v2970
    %v2972 = vlaneseq
    %v2973 = vshrl.u32 %v2972, 7
    %v2974 = vsub.s32 0, %v2973
    %v2975 = vrot.slane %v2947, %v2974
    %v2976 = vlaneseq
    %v2977 = vshrl.u32 %v2976, 7
    %v2978 = vsub.s32 0, %v2977
    %v2979 = vrot.slane %v2949, %v2978
    %v2980 = vlaneseq
    %v2981 = vshrl.u32 %v2980, 7
    %v2982 = vsub.s32 0, %v2981
    %v2983 = vrot.slane %v2951, %v2982
    %v2992 = vadd.f32 %v140, %v2955
    %v2993 = vadd.f32 %v141, %v2959
    %v2994 = vadd.f32 %v142, %v2963
    %v2995 = vadd.f32 %v143, %v2967
    %v2996 = vadd.f32 %v144, %v2971
    %v2997 = vadd.f32 %v145, %v2975
    %v2998 = vadd.f32 %v146, %v2979
    %v2999 = vadd.f32 %v147, %v2983
    %v3000 = vmax.f32 %v2992, 0.0
    %v3001 = vmax.f32 %v2993, 0.0
    %v3002 = vmax.f32 %v2994, 0.0
    %v3003 = vmax.f32 %v2995, 0.0
    %v3004 = vmax.f32 %v2996, 0.0
    %v3005 = vmax.f32 %v2997, 0.0
    %v3006 = vmax.f32 %v2998, 0.0
    %v3007 = vmax.f32 %v2999, 0.0
    %v3008 = vmul.f32 %v3000, %v537
    %v3009 = vmul.f32 %v3001, %v537
    %v3010 = vmul.f32 %v3002, %v537
    %v3011 = vmul.f32 %v3003, %v537
    %v3012 = vmul.f32 %v3004, %v537
    %v3013 = vmul.f32 %v3005, %v537
    %v3014 = vmul.f32 %v3006, %v537
    %v3015 = vmul.f32 %v3007, %v537
    %v3016 = vsel %vm547, %v3008, 0.0
    %3017 = vadd.xlane.f32.xlu0 %v3016
    %v3018 = vpop.xlane.xlu0 %3017
    %v3019 = vsel %vm547, %v3009, 0.0
    %3020 = vadd.xlane.f32.xlu0 %v3019
    %v3021 = vpop.xlane.xlu0 %3020
    %v3022 = vsel %vm547, %v3010, 0.0
    %3023 = vadd.xlane.f32.xlu0 %v3022
    %v3024 = vpop.xlane.xlu0 %3023
    %v3025 = vsel %vm547, %v3011, 0.0
    %3026 = vadd.xlane.f32.xlu0 %v3025
    %v3027 = vpop.xlane.xlu0 %3026
    %v3028 = vsel %vm547, %v3012, 0.0
    %3029 = vadd.xlane.f32.xlu0 %v3028
    %v3030 = vpop.xlane.xlu0 %3029
    %v3031 = vsel %vm547, %v3013, 0.0
    %3032 = vadd.xlane.f32.xlu0 %v3031
    %v3033 = vpop.xlane.xlu0 %3032
    %v3034 = vsel %vm547, %v3014, 0.0
    %3035 = vadd.xlane.f32.xlu0 %v3034
    %v3036 = vpop.xlane.xlu0 %3035
    %v3037 = vsel %vm547, %v3015, 0.0
    %3038 = vadd.xlane.f32.xlu0 %v3037
    %v3039 = vpop.xlane.xlu0 %3038
    %v3040 = vadd.f32 %v3018, %v579
    %v3041 = vadd.f32 %v3021, %v579
    %v3042 = vadd.f32 %v3024, %v579
    %v3043 = vadd.f32 %v3027, %v579
    %v3044 = vadd.f32 %v3030, %v579
    %v3045 = vadd.f32 %v3033, %v579
    %v3046 = vadd.f32 %v3036, %v579
    %v3047 = vadd.f32 %v3039, %v579
    %v3056 = vlaneseq
    %v3057 = vshrl.u32 %v3056, 7
    %v3058 = vsub.s32 %v598, %v3057
    %v3059 = vrot.slane %v3040, %v3058
    %v3060 = vlaneseq
    %v3061 = vshrl.u32 %v3060, 7
    %v3062 = vsub.s32 %v598, %v3061
    %v3063 = vrot.slane %v3041, %v3062
    %v3064 = vlaneseq
    %v3065 = vshrl.u32 %v3064, 7
    %v3066 = vsub.s32 %v598, %v3065
    %v3067 = vrot.slane %v3042, %v3066
    %v3068 = vlaneseq
    %v3069 = vshrl.u32 %v3068, 7
    %v3070 = vsub.s32 %v598, %v3069
    %v3071 = vrot.slane %v3043, %v3070
    %v3072 = vlaneseq
    %v3073 = vshrl.u32 %v3072, 7
    %v3074 = vsub.s32 %v598, %v3073
    %v3075 = vrot.slane %v3044, %v3074
    %v3076 = vlaneseq
    %v3077 = vshrl.u32 %v3076, 7
    %v3078 = vsub.s32 %v598, %v3077
    %v3079 = vrot.slane %v3045, %v3078
    %v3080 = vlaneseq
    %v3081 = vshrl.u32 %v3080, 7
    %v3082 = vsub.s32 %v598, %v3081
    %v3083 = vrot.slane %v3046, %v3082
    %v3084 = vlaneseq
    %v3085 = vshrl.u32 %v3084, 7
    %v3086 = vsub.s32 %v598, %v3085
    %v3087 = vrot.slane %v3047, %v3086
    %v3088 = vsel %vm256, %v3063, %v3059
    %v3089 = vsel %vm258, %v3067, %v3088
    %v3090 = vsel %vm260, %v3071, %v3089
    %v3091 = vsel %vm262, %v3075, %v3090
    %v3092 = vsel %vm264, %v3079, %v3091
    %v3093 = vsel %vm266, %v3083, %v3092
    %v3094 = vsel %vm268, %v3087, %v3093
    %v3096 = vsel %vm639, %v3094, -inf
    %3097 = vmax.xlane.f32.xlu0 %v3096
    %v3098 = vpop.xlane.xlu0 %3097
    %v3100 = vlaneseq
    %v3101 = vshrl.u32 %v3100, 7
    %v3102 = vsub.s32 0, %v3101
    %v3103 = vrot.slane %v3098, %v3102
    %v3104 = vlaneseq
    %v3105 = vshrl.u32 %v3104, 7
    %v3106 = vsub.s32 1, %v3105
    %v3107 = vrot.slane %v3098, %v3106
    %v3108 = vlaneseq
    %v3109 = vshrl.u32 %v3108, 7
    %v3110 = vsub.s32 2, %v3109
    %v3111 = vrot.slane %v3098, %v3110
    %v3112 = vlaneseq
    %v3113 = vshrl.u32 %v3112, 7
    %v3114 = vsub.s32 3, %v3113
    %v3115 = vrot.slane %v3098, %v3114
    %v3116 = vlaneseq
    %v3117 = vshrl.u32 %v3116, 7
    %v3118 = vsub.s32 4, %v3117
    %v3119 = vrot.slane %v3098, %v3118
    %v3120 = vlaneseq
    %v3121 = vshrl.u32 %v3120, 7
    %v3122 = vsub.s32 5, %v3121
    %v3123 = vrot.slane %v3098, %v3122
    %v3124 = vlaneseq
    %v3125 = vshrl.u32 %v3124, 7
    %v3126 = vsub.s32 6, %v3125
    %v3127 = vrot.slane %v3098, %v3126
    %v3128 = vlaneseq
    %v3129 = vshrl.u32 %v3128, 7
    %v3130 = vsub.s32 7, %v3129
    %v3131 = vrot.slane %v3098, %v3130
    %v3140 = vsub.f32 %v3040, %v3103
    %v3141 = vsub.f32 %v3041, %v3107
    %v3142 = vsub.f32 %v3042, %v3111
    %v3143 = vsub.f32 %v3043, %v3115
    %v3144 = vsub.f32 %v3044, %v3119
    %v3145 = vsub.f32 %v3045, %v3123
    %v3146 = vsub.f32 %v3046, %v3127
    %v3147 = vsub.f32 %v3047, %v3131
    %v3148 = vmul.f32 %v3140, 1.442695
    %v3149 = vpow.pop %v3148
    %v3150 = vmul.f32 %v3141, 1.442695
    %v3151 = vpow.pop %v3150
    %v3152 = vmul.f32 %v3142, 1.442695
    %v3153 = vpow.pop %v3152
    %v3154 = vmul.f32 %v3143, 1.442695
    %v3155 = vpow.pop %v3154
    %v3156 = vmul.f32 %v3144, 1.442695
    %v3157 = vpow.pop %v3156
    %v3158 = vmul.f32 %v3145, 1.442695
    %v3159 = vpow.pop %v3158
    %v3160 = vmul.f32 %v3146, 1.442695
    %v3161 = vpow.pop %v3160
    %v3162 = vmul.f32 %v3147, 1.442695
    %v3163 = vpow.pop %v3162
    %3172 = vset.pattern.permute.xlu0 0
    %3173 = vperm.xlu0 %3172, %v3149
    %v3174 = vpop.permute.xlu0 %3173
    %3175 = vset.pattern.permute.xlu0 0
    %3176 = vperm.xlu0 %3175, %v3151
    %v3177 = vpop.permute.xlu0 %3176
    %3178 = vset.pattern.permute.xlu0 0
    %3179 = vperm.xlu0 %3178, %v3153
    %v3180 = vpop.permute.xlu0 %3179
    %3181 = vset.pattern.permute.xlu0 0
    %3182 = vperm.xlu0 %3181, %v3155
    %v3183 = vpop.permute.xlu0 %3182
    %3184 = vset.pattern.permute.xlu0 0
    %3185 = vperm.xlu0 %3184, %v3157
    %v3186 = vpop.permute.xlu0 %3185
    %3187 = vset.pattern.permute.xlu0 0
    %3188 = vperm.xlu0 %3187, %v3159
    %v3189 = vpop.permute.xlu0 %3188
    %3190 = vset.pattern.permute.xlu0 0
    %3191 = vperm.xlu0 %3190, %v3161
    %v3192 = vpop.permute.xlu0 %3191
    %3193 = vset.pattern.permute.xlu0 0
    %3194 = vperm.xlu0 %3193, %v3163
    %v3195 = vpop.permute.xlu0 %3194
    %v3196 = vlaneseq
    %v3197 = vshrl.u32 %v3196, 7
    %v3198 = vsub.s32 %v598, %v3197
    %v3199 = vrot.slane %v3174, %v3198
    %v3200 = vlaneseq
    %v3201 = vshrl.u32 %v3200, 7
    %v3202 = vsub.s32 %v598, %v3201
    %v3203 = vrot.slane %v3177, %v3202
    %v3204 = vlaneseq
    %v3205 = vshrl.u32 %v3204, 7
    %v3206 = vsub.s32 %v598, %v3205
    %v3207 = vrot.slane %v3180, %v3206
    %v3208 = vlaneseq
    %v3209 = vshrl.u32 %v3208, 7
    %v3210 = vsub.s32 %v598, %v3209
    %v3211 = vrot.slane %v3183, %v3210
    %v3212 = vlaneseq
    %v3213 = vshrl.u32 %v3212, 7
    %v3214 = vsub.s32 %v598, %v3213
    %v3215 = vrot.slane %v3186, %v3214
    %v3216 = vlaneseq
    %v3217 = vshrl.u32 %v3216, 7
    %v3218 = vsub.s32 %v598, %v3217
    %v3219 = vrot.slane %v3189, %v3218
    %v3220 = vlaneseq
    %v3221 = vshrl.u32 %v3220, 7
    %v3222 = vsub.s32 %v598, %v3221
    %v3223 = vrot.slane %v3192, %v3222
    %v3224 = vlaneseq
    %v3225 = vshrl.u32 %v3224, 7
    %v3226 = vsub.s32 %v598, %v3225
    %v3227 = vrot.slane %v3195, %v3226
    %v3228 = vsel %vm256, %v3203, %v3199
    %v3229 = vsel %vm258, %v3207, %v3228
    %v3230 = vsel %vm260, %v3211, %v3229
    %v3231 = vsel %vm262, %v3215, %v3230
    %v3232 = vsel %vm264, %v3219, %v3231
    %v3233 = vsel %vm266, %v3223, %v3232
    %v3234 = vsel %vm268, %v3227, %v3233
    %v3236 = vsel %vm639, %v3234, 0.0
    %3237 = vadd.xlane.f32.xlu0 %v3236
    %v3238 = vpop.xlane.xlu0 %3237
    %v3239 = vrcp.pop %v3238
    %v3241 = vlaneseq
    %v3242 = vshrl.u32 %v3241, 7
    %v3243 = vsub.s32 0, %v3242
    %v3244 = vrot.slane %v3239, %v3243
    %v3245 = vlaneseq
    %v3246 = vshrl.u32 %v3245, 7
    %v3247 = vsub.s32 1, %v3246
    %v3248 = vrot.slane %v3239, %v3247
    %v3249 = vlaneseq
    %v3250 = vshrl.u32 %v3249, 7
    %v3251 = vsub.s32 2, %v3250
    %v3252 = vrot.slane %v3239, %v3251
    %v3253 = vlaneseq
    %v3254 = vshrl.u32 %v3253, 7
    %v3255 = vsub.s32 3, %v3254
    %v3256 = vrot.slane %v3239, %v3255
    %v3257 = vlaneseq
    %v3258 = vshrl.u32 %v3257, 7
    %v3259 = vsub.s32 4, %v3258
    %v3260 = vrot.slane %v3239, %v3259
    %v3261 = vlaneseq
    %v3262 = vshrl.u32 %v3261, 7
    %v3263 = vsub.s32 5, %v3262
    %v3264 = vrot.slane %v3239, %v3263
    %v3265 = vlaneseq
    %v3266 = vshrl.u32 %v3265, 7
    %v3267 = vsub.s32 6, %v3266
    %v3268 = vrot.slane %v3239, %v3267
    %v3269 = vlaneseq
    %v3270 = vshrl.u32 %v3269, 7
    %v3271 = vsub.s32 7, %v3270
    %v3272 = vrot.slane %v3239, %v3271
    %v3281 = vmul.f32 %v3149, %v3244
    %v3282 = vmul.f32 %v3151, %v3248
    %v3283 = vmul.f32 %v3153, %v3252
    %v3284 = vmul.f32 %v3155, %v3256
    %v3285 = vmul.f32 %v3157, %v3260
    %v3286 = vmul.f32 %v3159, %v3264
    %v3287 = vmul.f32 %v3161, %v3268
    %v3288 = vmul.f32 %v3163, %v3272
    %3290 = vset.pattern.permute.xlu0 0
    %3291 = vperm.xlu0 %3290, %v3281
    %v3292 = vpop.permute.xlu0 %3291
    %3295 = vset.pattern.permute.xlu0 0
    %3296 = vperm.xlu0 %3295, %v3282
    %v3297 = vpop.permute.xlu0 %3296
    %3300 = vset.pattern.permute.xlu0 0
    %3301 = vperm.xlu0 %3300, %v3283
    %v3302 = vpop.permute.xlu0 %3301
    %3305 = vset.pattern.permute.xlu0 0
    %3306 = vperm.xlu0 %3305, %v3284
    %v3307 = vpop.permute.xlu0 %3306
    %3310 = vset.pattern.permute.xlu0 0
    %3311 = vperm.xlu0 %3310, %v3285
    %v3312 = vpop.permute.xlu0 %3311
    %3315 = vset.pattern.permute.xlu0 0
    %3316 = vperm.xlu0 %3315, %v3286
    %v3317 = vpop.permute.xlu0 %3316
    %3320 = vset.pattern.permute.xlu0 0
    %3321 = vperm.xlu0 %3320, %v3287
    %v3322 = vpop.permute.xlu0 %3321
    %3325 = vset.pattern.permute.xlu0 0
    %3326 = vperm.xlu0 %3325, %v3288
    %v3327 = vpop.permute.xlu0 %3326
    %v3329 = vmul.f32 %v132, %v3292
    %v3330 = vmul.f32 %v133, %v3297
    %v3331 = vmul.f32 %v134, %v3302
    %v3332 = vmul.f32 %v135, %v3307
    %v3333 = vmul.f32 %v136, %v3312
    %v3334 = vmul.f32 %v137, %v3317
    %v3335 = vmul.f32 %v138, %v3322
    %v3336 = vmul.f32 %v139, %v3327
    %v3337 = vsel %vm171, %v3329, 0.0
    %v3338 = vrot.slane %v3337, 4
    %v3339 = vadd.f32 %v3337, %v3338
    %v3340 = vrot.slane %v3339, 2
    %v3341 = vadd.f32 %v3339, %v3340
    %v3342 = vrot.slane %v3341, 1
    %v3343 = vadd.f32 %v3341, %v3342
    %v3344 = vsel %vm171, %v3330, 0.0
    %v3345 = vrot.slane %v3344, 4
    %v3346 = vadd.f32 %v3344, %v3345
    %v3347 = vrot.slane %v3346, 2
    %v3348 = vadd.f32 %v3346, %v3347
    %v3349 = vrot.slane %v3348, 1
    %v3350 = vadd.f32 %v3348, %v3349
    %v3351 = vsel %vm171, %v3331, 0.0
    %v3352 = vrot.slane %v3351, 4
    %v3353 = vadd.f32 %v3351, %v3352
    %v3354 = vrot.slane %v3353, 2
    %v3355 = vadd.f32 %v3353, %v3354
    %v3356 = vrot.slane %v3355, 1
    %v3357 = vadd.f32 %v3355, %v3356
    %v3358 = vsel %vm171, %v3332, 0.0
    %v3359 = vrot.slane %v3358, 4
    %v3360 = vadd.f32 %v3358, %v3359
    %v3361 = vrot.slane %v3360, 2
    %v3362 = vadd.f32 %v3360, %v3361
    %v3363 = vrot.slane %v3362, 1
    %v3364 = vadd.f32 %v3362, %v3363
    %v3365 = vsel %vm171, %v3333, 0.0
    %v3366 = vrot.slane %v3365, 4
    %v3367 = vadd.f32 %v3365, %v3366
    %v3368 = vrot.slane %v3367, 2
    %v3369 = vadd.f32 %v3367, %v3368
    %v3370 = vrot.slane %v3369, 1
    %v3371 = vadd.f32 %v3369, %v3370
    %v3372 = vsel %vm171, %v3334, 0.0
    %v3373 = vrot.slane %v3372, 4
    %v3374 = vadd.f32 %v3372, %v3373
    %v3375 = vrot.slane %v3374, 2
    %v3376 = vadd.f32 %v3374, %v3375
    %v3377 = vrot.slane %v3376, 1
    %v3378 = vadd.f32 %v3376, %v3377
    %v3379 = vsel %vm171, %v3335, 0.0
    %v3380 = vrot.slane %v3379, 4
    %v3381 = vadd.f32 %v3379, %v3380
    %v3382 = vrot.slane %v3381, 2
    %v3383 = vadd.f32 %v3381, %v3382
    %v3384 = vrot.slane %v3383, 1
    %v3385 = vadd.f32 %v3383, %v3384
    %v3386 = vsel %vm171, %v3336, 0.0
    %v3387 = vrot.slane %v3386, 4
    %v3388 = vadd.f32 %v3386, %v3387
    %v3389 = vrot.slane %v3388, 2
    %v3390 = vadd.f32 %v3388, %v3389
    %v3391 = vrot.slane %v3390, 1
    %v3392 = vadd.f32 %v3390, %v3391
    %v3393 = vxor.u32 %v2898, 2147483648
    %v3394 = vmul.f32 %v3393, 1.442695
    %v3395 = vpow.pop %v3394
    %v3396 = vadd.f32 %v3395, 1.0
    %v3397 = vrcp.pop %v3396
    %v3398 = vmul.f32 1.0, %v3397
    %v3407 = vsel %vm256, %v3350, %v3343
    %v3408 = vsel %vm258, %v3357, %v3407
    %v3409 = vsel %vm260, %v3364, %v3408
    %v3410 = vsel %vm262, %v3371, %v3409
    %v3411 = vsel %vm264, %v3378, %v3410
    %v3412 = vsel %vm266, %v3385, %v3411
    %v3413 = vsel %vm268, %v3392, %v3412
    %3414 = vrot.lane.b32.xlu0 %v3413, 16
    %v3415 = vpop.permute.xlu0 %3414
    %v3417 = vmul.f32 %v3398, %v3415
    %s3418 = scalar_lea.vmem [#allocation8], 24
    %v3419 = vld [vmem:[%s3418] sm:$0xff]
    %v3420 = vsel %vm547, %v3419, %v3417
    %v3422 = vsel %vm970, %v3420, 0
    %3424 = vmatprep.subr.mxu0 0.0
    %3425 = vmatpush1.msra.mxu0 %v157
    %3426 = vmatprep.subr.mxu0 0.0
    %3427 = vmatpush1.msra.mxu0 %v158
    %3428 = vmatprep.subr.mxu0 0.0
    %3429 = vmatpush1.msra.mxu0 %v159
    %3430 = vmatprep.subr.mxu0 0.0
    %3431 = vmatpush1.msra.mxu0 %v160
    %3432 = vmatprep.subr.mxu0 0.0
    %3433 = vmatpush1.msra.mxu0 %v161
    %3434 = vmatprep.subr.mxu0 0.0
    %3435 = vmatpush1.msra.mxu0 %v162
    %3436 = vmatprep.subr.mxu0 0.0
    %3437 = vmatpush1.msra.mxu0 0.0
    %3438 = vmatprep.subr.mxu0 0.0
    %3439 = vmatpush1.msra.mxu0 0.0
    %3440 = vmatprep.subr.mxu0 0.0
    %3441 = vmatpush1.msra.mxu0 0.0
    %3442 = vmatprep.subr.mxu0 0.0
    %3443 = vmatpush1.msra.mxu0 0.0
    %3444 = vmatprep.subr.mxu0 0.0
    %3445 = vmatpush1.msra.mxu0 0.0
    %3446 = vmatprep.subr.mxu0 0.0
    %3447 = vmatpush1.msra.mxu0 0.0
    %3448 = vmatprep.subr.mxu0 0.0
    %3449 = vmatpush1.msra.mxu0 0.0
    %3450 = vmatprep.subr.mxu0 0.0
    %3451 = vmatpush1.msra.mxu0 0.0
    %3452 = vmatprep.subr.mxu0 0.0
    %3453 = vmatpush1.msra.mxu0 0.0
    %3454 = vmatprep.subr.mxu0 0.0
    %3455 = vmatpush1.msra.mxu0 0.0
    %3456 = vmatprep.subr.mxu0 0.0
    %3457 = vmatpush1.msra.mxu0 0.0
    %3458 = vmatprep.subr.mxu0 0.0
    %3459 = vmatpush1.msra.mxu0 0.0
    %3460 = vmatprep.subr.mxu0 0.0
    %3461 = vmatpush1.msra.mxu0 0.0
    %3462 = vmatprep.subr.mxu0 0.0
    %3463 = vmatpush1.msra.mxu0 0.0
    %3464 = vmatprep.subr.mxu0 0.0
    %3465 = vmatpush1.msra.mxu0 0.0
    %3466 = vmatprep.subr.mxu0 0.0
    %3467 = vmatpush1.msra.mxu0 0.0
    %3468 = vmatprep.subr.mxu0 0.0
    %3469 = vmatpush1.msra.mxu0 0.0
    %3470 = vmatprep.subr.mxu0 0.0
    %3471 = vmatpush1.msra.mxu0 0.0
    %3472 = vmatprep.subr.mxu0 0.0
    %3473 = vmatpush1.msra.mxu0 0.0
    %3474 = vmatprep.subr.mxu0 0.0
    %3475 = vmatpush1.msra.mxu0 0.0
    %3476 = vmatprep.subr.mxu0 0.0
    %3477 = vmatpush1.msra.mxu0 0.0
    %3478 = vmatprep.subr.mxu0 0.0
    %3479 = vmatpush1.msra.mxu0 0.0
    %3480 = vmatprep.subr.mxu0 0.0
    %3481 = vmatpush1.msra.mxu0 0.0
    %3482 = vmatprep.subr.mxu0 0.0
    %3483 = vmatpush1.msra.mxu0 0.0
    %3484 = vmatprep.subr.mxu0 0.0
    %3485 = vmatpush1.msra.mxu0 0.0
    %3486 = vmatprep.subr.mxu0 0.0
    %3487 = vmatpush1.msra.mxu0 0.0
    %3488 = vmatprep.mubr.f32.mxu0 0.0
    %3489 = vmatmul.mubr.f32.gmra.mrb[0].mxu0 %v3422
    %v3490 = vpop.f32.mrb[0].mxu0
    %v3491 = vadd.f32 %v968, %v3490
    %v3492 = vpop.f32.mrb[0].mxu0
    %3493 = vdwg.mxu0
    %3495 = vrot.lane.b32.xlu0 %v2898, 80
    %v3496 = vpop.permute.xlu0 %3495
    %3497 = vrot.lane.b32.xlu0 %v2900, 80
    %v3498 = vpop.permute.xlu0 %3497
    %v3499 = vsel %vm1049, %v3496, %v3498
    %v3501 = vadd.f32 %v3491, %v3499
    %v3502 = vxor.u32 %v3501, 2147483648
    %v3503 = vmul.f32 %v3502, 1.442695
    %v3504 = vpow.pop %v3503
    %v3505 = vadd.f32 %v3504, 1.0
    %v3506 = vrcp.pop %v3505
    %v3507 = vmul.f32 1.0, %v3506
    %v3508 = vtanh.pop %v3501
    %v3509 = vmul.f32 %v3507, %v2704
    %3511 = vrot.lane.b32.xlu0 %v3508, 64
    %v3512 = vpop.permute.xlu0 %3511
    %v3514 = vmul.f32 %v3507, %v3512
    %3516 = vrot.lane.b32.xlu0 %v3514, 32
    %v3517 = vpop.permute.xlu0 %3516
    %v3519 = vadd.f32 %v3509, %v3517
    %v3520 = vtanh.pop %v3519
    %3522 = vrot.lane.b32.xlu0 %v3520, 64
    %v3523 = vpop.permute.xlu0 %3522
    %v3525 = vmul.f32 %v3507, %v3523
    %3527 = vrot.lane.b32.xlu0 %v3525, 32
    %v3528 = vpop.permute.xlu0 %3527
    %v3529 = vsel %vm171, %v3528, 0
    %3531 = vmatprep.subr.mxu0 0.0
    %3532 = vmatpush1.msra.mxu0 %v166
    %3533 = vmatprep.subr.mxu0 0.0
    %3534 = vmatpush1.msra.mxu0 %v167
    %3535 = vmatprep.subr.mxu0 0.0
    %3536 = vmatpush1.msra.mxu0 %v168
    %3537 = vmatprep.subr.mxu0 0.0
    %3538 = vmatpush1.msra.mxu0 %v169
    %3539 = vmatprep.subr.mxu0 0.0
    %3540 = vmatpush1.msra.mxu0 0.0
    %3541 = vmatprep.subr.mxu0 0.0
    %3542 = vmatpush1.msra.mxu0 0.0
    %3543 = vmatprep.subr.mxu0 0.0
    %3544 = vmatpush1.msra.mxu0 0.0
    %3545 = vmatprep.subr.mxu0 0.0
    %3546 = vmatpush1.msra.mxu0 0.0
    %3547 = vmatprep.subr.mxu0 0.0
    %3548 = vmatpush1.msra.mxu0 0.0
    %3549 = vmatprep.subr.mxu0 0.0
    %3550 = vmatpush1.msra.mxu0 0.0
    %3551 = vmatprep.subr.mxu0 0.0
    %3552 = vmatpush1.msra.mxu0 0.0
    %3553 = vmatprep.subr.mxu0 0.0
    %3554 = vmatpush1.msra.mxu0 0.0
    %3555 = vmatprep.subr.mxu0 0.0
    %3556 = vmatpush1.msra.mxu0 0.0
    %3557 = vmatprep.subr.mxu0 0.0
    %3558 = vmatpush1.msra.mxu0 0.0
    %3559 = vmatprep.subr.mxu0 0.0
    %3560 = vmatpush1.msra.mxu0 0.0
    %3561 = vmatprep.subr.mxu0 0.0
    %3562 = vmatpush1.msra.mxu0 0.0
    %3563 = vmatprep.subr.mxu0 0.0
    %3564 = vmatpush1.msra.mxu0 0.0
    %3565 = vmatprep.subr.mxu0 0.0
    %3566 = vmatpush1.msra.mxu0 0.0
    %3567 = vmatprep.subr.mxu0 0.0
    %3568 = vmatpush1.msra.mxu0 0.0
    %3569 = vmatprep.subr.mxu0 0.0
    %3570 = vmatpush1.msra.mxu0 0.0
    %3571 = vmatprep.subr.mxu0 0.0
    %3572 = vmatpush1.msra.mxu0 0.0
    %3573 = vmatprep.subr.mxu0 0.0
    %3574 = vmatpush1.msra.mxu0 0.0
    %3575 = vmatprep.subr.mxu0 0.0
    %3576 = vmatpush1.msra.mxu0 0.0
    %3577 = vmatprep.subr.mxu0 0.0
    %3578 = vmatpush1.msra.mxu0 0.0
    %3579 = vmatprep.subr.mxu0 0.0
    %3580 = vmatpush1.msra.mxu0 0.0
    %3581 = vmatprep.subr.mxu0 0.0
    %3582 = vmatpush1.msra.mxu0 0.0
    %3583 = vmatprep.subr.mxu0 0.0
    %3584 = vmatpush1.msra.mxu0 0.0
    %3585 = vmatprep.subr.mxu0 0.0
    %3586 = vmatpush1.msra.mxu0 0.0
    %3587 = vmatprep.subr.mxu0 0.0
    %3588 = vmatpush1.msra.mxu0 0.0
    %3589 = vmatprep.subr.mxu0 0.0
    %3590 = vmatpush1.msra.mxu0 0.0
    %3591 = vmatprep.subr.mxu0 0.0
    %3592 = vmatpush1.msra.mxu0 0.0
    %3593 = vmatprep.subr.mxu0 0.0
    %3594 = vmatpush1.msra.mxu0 0.0
    %3595 = vmatprep.mubr.f32.mxu0 0.0
    %3596 = vmatmul.mubr.f32.gmra.mrb[0].mxu0 %v3529
    %v3597 = vpop.f32.mrb[0].mxu0
    %v3598 = vadd.f32 %v1081, %v3597
    %v3599 = vpop.f32.mrb[0].mxu0
    %3600 = vdwg.mxu0
    %s3601 = scalar_lea.vmem [#allocation14], 24
    %3602 = vst [vmem:[%s3601] sm:$0xff] %v3598
    %v3603 = vlaneseq
    %v3604 = vshrl.u32 %v3603, 7
    %v3605 = vsub.s32 %v598, %v3604
    %v3606 = vrot.slane %v3292, %v3605
    %v3607 = vlaneseq
    %v3608 = vshrl.u32 %v3607, 7
    %v3609 = vsub.s32 %v598, %v3608
    %v3610 = vrot.slane %v3297, %v3609
    %v3611 = vlaneseq
    %v3612 = vshrl.u32 %v3611, 7
    %v3613 = vsub.s32 %v598, %v3612
    %v3614 = vrot.slane %v3302, %v3613
    %v3615 = vlaneseq
    %v3616 = vshrl.u32 %v3615, 7
    %v3617 = vsub.s32 %v598, %v3616
    %v3618 = vrot.slane %v3307, %v3617
    %v3619 = vlaneseq
    %v3620 = vshrl.u32 %v3619, 7
    %v3621 = vsub.s32 %v598, %v3620
    %v3622 = vrot.slane %v3312, %v3621
    %v3623 = vlaneseq
    %v3624 = vshrl.u32 %v3623, 7
    %v3625 = vsub.s32 %v598, %v3624
    %v3626 = vrot.slane %v3317, %v3625
    %v3627 = vlaneseq
    %v3628 = vshrl.u32 %v3627, 7
    %v3629 = vsub.s32 %v598, %v3628
    %v3630 = vrot.slane %v3322, %v3629
    %v3631 = vlaneseq
    %v3632 = vshrl.u32 %v3631, 7
    %v3633 = vsub.s32 %v598, %v3632
    %v3634 = vrot.slane %v3327, %v3633
    %v3635 = vsel %vm256, %v3610, %v3606
    %v3636 = vsel %vm258, %v3614, %v3635
    %v3637 = vsel %vm260, %v3618, %v3636
    %v3638 = vsel %vm262, %v3622, %v3637
    %v3639 = vsel %vm264, %v3626, %v3638
    %v3640 = vsel %vm266, %v3630, %v3639
    %v3641 = vsel %vm268, %v3634, %v3640
    %v3643 = vsel %vm639, %v3641, 0.0
    %s3644 = scalar_lea.vmem [#allocation15], 24
    %3645 = vst [vmem:[%s3644] sm:$0xff] %v3643
    %3646 = vmatprep.subr.mxu0 %v149
    %3647 = vmatpush1.msra.mxu0 %v148
    %3648 = vmatprep.subr.mxu0 %v151
    %3649 = vmatpush1.msra.mxu0 %v150
    %3650 = vmatprep.subr.mxu0 %v153
    %3651 = vmatpush1.msra.mxu0 %v152
    %3652 = vmatprep.subr.mxu0 %v155
    %3653 = vmatpush1.msra.mxu0 %v154
    %3654 = vmatprep.subr.mxu0 0.0
    %3655 = vmatpush1.msra.mxu0 0.0
    %3656 = vmatprep.subr.mxu0 0.0
    %3657 = vmatpush1.msra.mxu0 0.0
    %3658 = vmatprep.subr.mxu0 0.0
    %3659 = vmatpush1.msra.mxu0 0.0
    %3660 = vmatprep.subr.mxu0 0.0
    %3661 = vmatpush1.msra.mxu0 0.0
    %3662 = vmatprep.subr.mxu0 0.0
    %3663 = vmatpush1.msra.mxu0 0.0
    %3664 = vmatprep.subr.mxu0 0.0
    %3665 = vmatpush1.msra.mxu0 0.0
    %3666 = vmatprep.subr.mxu0 0.0
    %3667 = vmatpush1.msra.mxu0 0.0
    %3668 = vmatprep.subr.mxu0 0.0
    %3669 = vmatpush1.msra.mxu0 0.0
    %3670 = vmatprep.subr.mxu0 0.0
    %3671 = vmatpush1.msra.mxu0 0.0
    %3672 = vmatprep.subr.mxu0 0.0
    %3673 = vmatpush1.msra.mxu0 0.0
    %3674 = vmatprep.subr.mxu0 0.0
    %3675 = vmatpush1.msra.mxu0 0.0
    %3676 = vmatprep.subr.mxu0 0.0
    %3677 = vmatpush1.msra.mxu0 0.0
    %3678 = vmatprep.subr.mxu0 0.0
    %3679 = vmatpush1.msra.mxu0 0.0
    %3680 = vmatprep.subr.mxu0 0.0
    %3681 = vmatpush1.msra.mxu0 0.0
    %3682 = vmatprep.subr.mxu0 0.0
    %3683 = vmatpush1.msra.mxu0 0.0
    %3684 = vmatprep.subr.mxu0 0.0
    %3685 = vmatpush1.msra.mxu0 0.0
    %3686 = vmatprep.subr.mxu0 0.0
    %3687 = vmatpush1.msra.mxu0 0.0
    %3688 = vmatprep.subr.mxu0 0.0
    %3689 = vmatpush1.msra.mxu0 0.0
    %3690 = vmatprep.subr.mxu0 0.0
    %3691 = vmatpush1.msra.mxu0 0.0
    %3692 = vmatprep.subr.mxu0 0.0
    %3693 = vmatpush1.msra.mxu0 0.0
    %3694 = vmatprep.subr.mxu0 0.0
    %3695 = vmatpush1.msra.mxu0 0.0
    %3696 = vmatprep.subr.mxu0 0.0
    %3697 = vmatpush1.msra.mxu0 0.0
    %3698 = vmatprep.subr.mxu0 0.0
    %3699 = vmatpush1.msra.mxu0 0.0
    %3700 = vmatprep.subr.mxu0 0.0
    %3701 = vmatpush1.msra.mxu0 0.0
    %3702 = vmatprep.subr.mxu0 0.0
    %3703 = vmatpush1.msra.mxu0 0.0
    %3704 = vmatprep.subr.mxu0 0.0
    %3705 = vmatpush1.msra.mxu0 0.0
    %3706 = vmatprep.subr.mxu0 0.0
    %3707 = vmatpush1.msra.mxu0 0.0
    %3708 = vmatprep.subr.mxu0 0.0
    %3709 = vmatpush1.msra.mxu0 0.0
    %3710 = vmatprep.mubr.f32.mxu0 0.0
    %3711 = vmatmul.mubr.f32.gmra.mrb[0].mxu0 %v3529
    %v3712 = vpop.f32.mrb[0].mxu0
    %v3713 = vadd.f32 %v346, %v3712
    %v3714 = vpop.f32.mrb[0].mxu0
    %v3715 = vadd.f32 %v350, %v3714
    %3716 = vdwg.mxu0
    %v3718 = vcombine.high %v3713, %v3713
    %v3720 = vunpack.c.l.s4 1966171168
    %v3721 = vunpack.c.0.s8 %v3720
    %v3722 = vlaneseq
    %v3723 = vshrl.u32 %v3722, 7
    %v3724 = vsub.s32 %v3721, %v3723
    %v3725 = vrot.slane %v3713, %v3724
    %v3727 = vunpack.c.l.s4 1966171168
    %v3728 = vunpack.c.0.s8 %v3727
    %v3729 = vlaneseq
    %v3730 = vshrl.u32 %v3729, 7
    %v3731 = vsub.s32 %v3728, %v3730
    %v3732 = vrot.slane %v3718, %v3731
    %v3733 = vcombine.high %v3725, %v3725
    %v3734 = vcombine.high %v3732, %v3732
    %v3736 = vunpack.c.l.s4 1966171168
    %v3737 = vunpack.c.0.s8 %v3736
    %v3738 = vlaneseq
    %v3739 = vshrl.u32 %v3738, 7
    %v3740 = vsub.s32 %v3737, %v3739
    %v3741 = vrot.slane %v3725, %v3740
    %v3743 = vunpack.c.l.s4 1966171168
    %v3744 = vunpack.c.0.s8 %v3743
    %v3745 = vlaneseq
    %v3746 = vshrl.u32 %v3745, 7
    %v3747 = vsub.s32 %v3744, %v3746
    %v3748 = vrot.slane %v3732, %v3747
    %v3750 = vunpack.c.l.s4 1966171168
    %v3751 = vunpack.c.0.s8 %v3750
    %v3752 = vlaneseq
    %v3753 = vshrl.u32 %v3752, 7
    %v3754 = vsub.s32 %v3751, %v3753
    %v3755 = vrot.slane %v3733, %v3754
    %v3757 = vunpack.c.l.s4 1966171168
    %v3758 = vunpack.c.0.s8 %v3757
    %v3759 = vlaneseq
    %v3760 = vshrl.u32 %v3759, 7
    %v3761 = vsub.s32 %v3758, %v3760
    %v3762 = vrot.slane %v3734, %v3761
    %v3763 = vcombine.high %v3741, %v3741
    %v3764 = vcombine.high %v3748, %v3748
    %v3765 = vcombine.high %v3755, %v3755
    %v3766 = vcombine.high %v3762, %v3762
    %v3767 = vlaneseq
    %v3768 = vshrl.u32 %v3767, 7
    %v3769 = vsub.s32 0, %v3768
    %v3770 = vrot.slane %v3741, %v3769
    %v3771 = vlaneseq
    %v3772 = vshrl.u32 %v3771, 7
    %v3773 = vsub.s32 0, %v3772
    %v3774 = vrot.slane %v3755, %v3773
    %v3775 = vlaneseq
    %v3776 = vshrl.u32 %v3775, 7
    %v3777 = vsub.s32 0, %v3776
    %v3778 = vrot.slane %v3763, %v3777
    %v3779 = vlaneseq
    %v3780 = vshrl.u32 %v3779, 7
    %v3781 = vsub.s32 0, %v3780
    %v3782 = vrot.slane %v3765, %v3781
    %v3783 = vlaneseq
    %v3784 = vshrl.u32 %v3783, 7
    %v3785 = vsub.s32 0, %v3784
    %v3786 = vrot.slane %v3748, %v3785
    %v3787 = vlaneseq
    %v3788 = vshrl.u32 %v3787, 7
    %v3789 = vsub.s32 0, %v3788
    %v3790 = vrot.slane %v3762, %v3789
    %v3791 = vlaneseq
    %v3792 = vshrl.u32 %v3791, 7
    %v3793 = vsub.s32 0, %v3792
    %v3794 = vrot.slane %v3764, %v3793
    %v3795 = vlaneseq
    %v3796 = vshrl.u32 %v3795, 7
    %v3797 = vsub.s32 0, %v3796
    %v3798 = vrot.slane %v3766, %v3797
    %v3807 = vadd.f32 %v140, %v3770
    %v3808 = vadd.f32 %v141, %v3774
    %v3809 = vadd.f32 %v142, %v3778
    %v3810 = vadd.f32 %v143, %v3782
    %v3811 = vadd.f32 %v144, %v3786
    %v3812 = vadd.f32 %v145, %v3790
    %v3813 = vadd.f32 %v146, %v3794
    %v3814 = vadd.f32 %v147, %v3798
    %v3815 = vmax.f32 %v3807, 0.0
    %v3816 = vmax.f32 %v3808, 0.0
    %v3817 = vmax.f32 %v3809, 0.0
    %v3818 = vmax.f32 %v3810, 0.0
    %v3819 = vmax.f32 %v3811, 0.0
    %v3820 = vmax.f32 %v3812, 0.0
    %v3821 = vmax.f32 %v3813, 0.0
    %v3822 = vmax.f32 %v3814, 0.0
    %v3823 = vmul.f32 %v3815, %v537
    %v3824 = vmul.f32 %v3816, %v537
    %v3825 = vmul.f32 %v3817, %v537
    %v3826 = vmul.f32 %v3818, %v537
    %v3827 = vmul.f32 %v3819, %v537
    %v3828 = vmul.f32 %v3820, %v537
    %v3829 = vmul.f32 %v3821, %v537
    %v3830 = vmul.f32 %v3822, %v537
    %v3831 = vsel %vm547, %v3823, 0.0
    %3832 = vadd.xlane.f32.xlu0 %v3831
    %v3833 = vpop.xlane.xlu0 %3832
    %v3834 = vsel %vm547, %v3824, 0.0
    %3835 = vadd.xlane.f32.xlu0 %v3834
    %v3836 = vpop.xlane.xlu0 %3835
    %v3837 = vsel %vm547, %v3825, 0.0
    %3838 = vadd.xlane.f32.xlu0 %v3837
    %v3839 = vpop.xlane.xlu0 %3838
    %v3840 = vsel %vm547, %v3826, 0.0
    %3841 = vadd.xlane.f32.xlu0 %v3840
    %v3842 = vpop.xlane.xlu0 %3841
    %v3843 = vsel %vm547, %v3827, 0.0
    %3844 = vadd.xlane.f32.xlu0 %v3843
    %v3845 = vpop.xlane.xlu0 %3844
    %v3846 = vsel %vm547, %v3828, 0.0
    %3847 = vadd.xlane.f32.xlu0 %v3846
    %v3848 = vpop.xlane.xlu0 %3847
    %v3849 = vsel %vm547, %v3829, 0.0
    %3850 = vadd.xlane.f32.xlu0 %v3849
    %v3851 = vpop.xlane.xlu0 %3850
    %v3852 = vsel %vm547, %v3830, 0.0
    %3853 = vadd.xlane.f32.xlu0 %v3852
    %v3854 = vpop.xlane.xlu0 %3853
    %v3855 = vadd.f32 %v3833, %v579
    %v3856 = vadd.f32 %v3836, %v579
    %v3857 = vadd.f32 %v3839, %v579
    %v3858 = vadd.f32 %v3842, %v579
    %v3859 = vadd.f32 %v3845, %v579
    %v3860 = vadd.f32 %v3848, %v579
    %v3861 = vadd.f32 %v3851, %v579
    %v3862 = vadd.f32 %v3854, %v579
    %v3871 = vlaneseq
    %v3872 = vshrl.u32 %v3871, 7
    %v3873 = vsub.s32 %v598, %v3872
    %v3874 = vrot.slane %v3855, %v3873
    %v3875 = vlaneseq
    %v3876 = vshrl.u32 %v3875, 7
    %v3877 = vsub.s32 %v598, %v3876
    %v3878 = vrot.slane %v3856, %v3877
    %v3879 = vlaneseq
    %v3880 = vshrl.u32 %v3879, 7
    %v3881 = vsub.s32 %v598, %v3880
    %v3882 = vrot.slane %v3857, %v3881
    %v3883 = vlaneseq
    %v3884 = vshrl.u32 %v3883, 7
    %v3885 = vsub.s32 %v598, %v3884
    %v3886 = vrot.slane %v3858, %v3885
    %v3887 = vlaneseq
    %v3888 = vshrl.u32 %v3887, 7
    %v3889 = vsub.s32 %v598, %v3888
    %v3890 = vrot.slane %v3859, %v3889
    %v3891 = vlaneseq
    %v3892 = vshrl.u32 %v3891, 7
    %v3893 = vsub.s32 %v598, %v3892
    %v3894 = vrot.slane %v3860, %v3893
    %v3895 = vlaneseq
    %v3896 = vshrl.u32 %v3895, 7
    %v3897 = vsub.s32 %v598, %v3896
    %v3898 = vrot.slane %v3861, %v3897
    %v3899 = vlaneseq
    %v3900 = vshrl.u32 %v3899, 7
    %v3901 = vsub.s32 %v598, %v3900
    %v3902 = vrot.slane %v3862, %v3901
    %v3903 = vsel %vm256, %v3878, %v3874
    %v3904 = vsel %vm258, %v3882, %v3903
    %v3905 = vsel %vm260, %v3886, %v3904
    %v3906 = vsel %vm262, %v3890, %v3905
    %v3907 = vsel %vm264, %v3894, %v3906
    %v3908 = vsel %vm266, %v3898, %v3907
    %v3909 = vsel %vm268, %v3902, %v3908
    %v3911 = vsel %vm639, %v3909, -inf
    %3912 = vmax.xlane.f32.xlu0 %v3911
    %v3913 = vpop.xlane.xlu0 %3912
    %v3915 = vlaneseq
    %v3916 = vshrl.u32 %v3915, 7
    %v3917 = vsub.s32 0, %v3916
    %v3918 = vrot.slane %v3913, %v3917
    %v3919 = vlaneseq
    %v3920 = vshrl.u32 %v3919, 7
    %v3921 = vsub.s32 1, %v3920
    %v3922 = vrot.slane %v3913, %v3921
    %v3923 = vlaneseq
    %v3924 = vshrl.u32 %v3923, 7
    %v3925 = vsub.s32 2, %v3924
    %v3926 = vrot.slane %v3913, %v3925
    %v3927 = vlaneseq
    %v3928 = vshrl.u32 %v3927, 7
    %v3929 = vsub.s32 3, %v3928
    %v3930 = vrot.slane %v3913, %v3929
    %v3931 = vlaneseq
    %v3932 = vshrl.u32 %v3931, 7
    %v3933 = vsub.s32 4, %v3932
    %v3934 = vrot.slane %v3913, %v3933
    %v3935 = vlaneseq
    %v3936 = vshrl.u32 %v3935, 7
    %v3937 = vsub.s32 5, %v3936
    %v3938 = vrot.slane %v3913, %v3937
    %v3939 = vlaneseq
    %v3940 = vshrl.u32 %v3939, 7
    %v3941 = vsub.s32 6, %v3940
    %v3942 = vrot.slane %v3913, %v3941
    %v3943 = vlaneseq
    %v3944 = vshrl.u32 %v3943, 7
    %v3945 = vsub.s32 7, %v3944
    %v3946 = vrot.slane %v3913, %v3945
    %v3955 = vsub.f32 %v3855, %v3918
    %v3956 = vsub.f32 %v3856, %v3922
    %v3957 = vsub.f32 %v3857, %v3926
    %v3958 = vsub.f32 %v3858, %v3930
    %v3959 = vsub.f32 %v3859, %v3934
    %v3960 = vsub.f32 %v3860, %v3938
    %v3961 = vsub.f32 %v3861, %v3942
    %v3962 = vsub.f32 %v3862, %v3946
    %v3963 = vmul.f32 %v3955, 1.442695
    %v3964 = vpow.pop %v3963
    %v3965 = vmul.f32 %v3956, 1.442695
    %v3966 = vpow.pop %v3965
    %v3967 = vmul.f32 %v3957, 1.442695
    %v3968 = vpow.pop %v3967
    %v3969 = vmul.f32 %v3958, 1.442695
    %v3970 = vpow.pop %v3969
    %v3971 = vmul.f32 %v3959, 1.442695
    %v3972 = vpow.pop %v3971
    %v3973 = vmul.f32 %v3960, 1.442695
    %v3974 = vpow.pop %v3973
    %v3975 = vmul.f32 %v3961, 1.442695
    %v3976 = vpow.pop %v3975
    %v3977 = vmul.f32 %v3962, 1.442695
    %v3978 = vpow.pop %v3977
    %3987 = vset.pattern.permute.xlu0 0
    %3988 = vperm.xlu0 %3987, %v3964
    %v3989 = vpop.permute.xlu0 %3988
    %3990 = vset.pattern.permute.xlu0 0
    %3991 = vperm.xlu0 %3990, %v3966
    %v3992 = vpop.permute.xlu0 %3991
    %3993 = vset.pattern.permute.xlu0 0
    %3994 = vperm.xlu0 %3993, %v3968
    %v3995 = vpop.permute.xlu0 %3994
    %3996 = vset.pattern.permute.xlu0 0
    %3997 = vperm.xlu0 %3996, %v3970
    %v3998 = vpop.permute.xlu0 %3997
    %3999 = vset.pattern.permute.xlu0 0
    %4000 = vperm.xlu0 %3999, %v3972
    %v4001 = vpop.permute.xlu0 %4000
    %4002 = vset.pattern.permute.xlu0 0
    %4003 = vperm.xlu0 %4002, %v3974
    %v4004 = vpop.permute.xlu0 %4003
    %4005 = vset.pattern.permute.xlu0 0
    %4006 = vperm.xlu0 %4005, %v3976
    %v4007 = vpop.permute.xlu0 %4006
    %4008 = vset.pattern.permute.xlu0 0
    %4009 = vperm.xlu0 %4008, %v3978
    %v4010 = vpop.permute.xlu0 %4009
    %v4011 = vlaneseq
    %v4012 = vshrl.u32 %v4011, 7
    %v4013 = vsub.s32 %v598, %v4012
    %v4014 = vrot.slane %v3989, %v4013
    %v4015 = vlaneseq
    %v4016 = vshrl.u32 %v4015, 7
    %v4017 = vsub.s32 %v598, %v4016
    %v4018 = vrot.slane %v3992, %v4017
    %v4019 = vlaneseq
    %v4020 = vshrl.u32 %v4019, 7
    %v4021 = vsub.s32 %v598, %v4020
    %v4022 = vrot.slane %v3995, %v4021
    %v4023 = vlaneseq
    %v4024 = vshrl.u32 %v4023, 7
    %v4025 = vsub.s32 %v598, %v4024
    %v4026 = vrot.slane %v3998, %v4025
    %v4027 = vlaneseq
    %v4028 = vshrl.u32 %v4027, 7
    %v4029 = vsub.s32 %v598, %v4028
    %v4030 = vrot.slane %v4001, %v4029
    %v4031 = vlaneseq
    %v4032 = vshrl.u32 %v4031, 7
    %v4033 = vsub.s32 %v598, %v4032
    %v4034 = vrot.slane %v4004, %v4033
    %v4035 = vlaneseq
    %v4036 = vshrl.u32 %v4035, 7
    %v4037 = vsub.s32 %v598, %v4036
    %v4038 = vrot.slane %v4007, %v4037
    %v4039 = vlaneseq
    %v4040 = vshrl.u32 %v4039, 7
    %v4041 = vsub.s32 %v598, %v4040
    %v4042 = vrot.slane %v4010, %v4041
    %v4043 = vsel %vm256, %v4018, %v4014
    %v4044 = vsel %vm258, %v4022, %v4043
    %v4045 = vsel %vm260, %v4026, %v4044
    %v4046 = vsel %vm262, %v4030, %v4045
    %v4047 = vsel %vm264, %v4034, %v4046
    %v4048 = vsel %vm266, %v4038, %v4047
    %v4049 = vsel %vm268, %v4042, %v4048
    %v4051 = vsel %vm639, %v4049, 0.0
    %4052 = vadd.xlane.f32.xlu0 %v4051
    %v4053 = vpop.xlane.xlu0 %4052
    %v4054 = vrcp.pop %v4053
    %v4056 = vlaneseq
    %v4057 = vshrl.u32 %v4056, 7
    %v4058 = vsub.s32 0, %v4057
    %v4059 = vrot.slane %v4054, %v4058
    %v4060 = vlaneseq
    %v4061 = vshrl.u32 %v4060, 7
    %v4062 = vsub.s32 1, %v4061
    %v4063 = vrot.slane %v4054, %v4062
    %v4064 = vlaneseq
    %v4065 = vshrl.u32 %v4064, 7
    %v4066 = vsub.s32 2, %v4065
    %v4067 = vrot.slane %v4054, %v4066
    %v4068 = vlaneseq
    %v4069 = vshrl.u32 %v4068, 7
    %v4070 = vsub.s32 3, %v4069
    %v4071 = vrot.slane %v4054, %v4070
    %v4072 = vlaneseq
    %v4073 = vshrl.u32 %v4072, 7
    %v4074 = vsub.s32 4, %v4073
    %v4075 = vrot.slane %v4054, %v4074
    %v4076 = vlaneseq
    %v4077 = vshrl.u32 %v4076, 7
    %v4078 = vsub.s32 5, %v4077
    %v4079 = vrot.slane %v4054, %v4078
    %v4080 = vlaneseq
    %v4081 = vshrl.u32 %v4080, 7
    %v4082 = vsub.s32 6, %v4081
    %v4083 = vrot.slane %v4054, %v4082
    %v4084 = vlaneseq
    %v4085 = vshrl.u32 %v4084, 7
    %v4086 = vsub.s32 7, %v4085
    %v4087 = vrot.slane %v4054, %v4086
    %v4096 = vmul.f32 %v3964, %v4059
    %v4097 = vmul.f32 %v3966, %v4063
    %v4098 = vmul.f32 %v3968, %v4067
    %v4099 = vmul.f32 %v3970, %v4071
    %v4100 = vmul.f32 %v3972, %v4075
    %v4101 = vmul.f32 %v3974, %v4079
    %v4102 = vmul.f32 %v3976, %v4083
    %v4103 = vmul.f32 %v3978, %v4087
    %4105 = vset.pattern.permute.xlu0 0
    %4106 = vperm.xlu0 %4105, %v4096
    %v4107 = vpop.permute.xlu0 %4106
    %4110 = vset.pattern.permute.xlu0 0
    %4111 = vperm.xlu0 %4110, %v4097
    %v4112 = vpop.permute.xlu0 %4111
    %4115 = vset.pattern.permute.xlu0 0
    %4116 = vperm.xlu0 %4115, %v4098
    %v4117 = vpop.permute.xlu0 %4116
    %4120 = vset.pattern.permute.xlu0 0
    %4121 = vperm.xlu0 %4120, %v4099
    %v4122 = vpop.permute.xlu0 %4121
    %4125 = vset.pattern.permute.xlu0 0
    %4126 = vperm.xlu0 %4125, %v4100
    %v4127 = vpop.permute.xlu0 %4126
    %4130 = vset.pattern.permute.xlu0 0
    %4131 = vperm.xlu0 %4130, %v4101
    %v4132 = vpop.permute.xlu0 %4131
    %4135 = vset.pattern.permute.xlu0 0
    %4136 = vperm.xlu0 %4135, %v4102
    %v4137 = vpop.permute.xlu0 %4136
    %4140 = vset.pattern.permute.xlu0 0
    %4141 = vperm.xlu0 %4140, %v4103
    %v4142 = vpop.permute.xlu0 %4141
    %v4144 = vmul.f32 %v132, %v4107
    %v4145 = vmul.f32 %v133, %v4112
    %v4146 = vmul.f32 %v134, %v4117
    %v4147 = vmul.f32 %v135, %v4122
    %v4148 = vmul.f32 %v136, %v4127
    %v4149 = vmul.f32 %v137, %v4132
    %v4150 = vmul.f32 %v138, %v4137
    %v4151 = vmul.f32 %v139, %v4142
    %v4152 = vsel %vm171, %v4144, 0.0
    %v4153 = vrot.slane %v4152, 4
    %v4154 = vadd.f32 %v4152, %v4153
    %v4155 = vrot.slane %v4154, 2
    %v4156 = vadd.f32 %v4154, %v4155
    %v4157 = vrot.slane %v4156, 1
    %v4158 = vadd.f32 %v4156, %v4157
    %v4159 = vsel %vm171, %v4145, 0.0
    %v4160 = vrot.slane %v4159, 4
    %v4161 = vadd.f32 %v4159, %v4160
    %v4162 = vrot.slane %v4161, 2
    %v4163 = vadd.f32 %v4161, %v4162
    %v4164 = vrot.slane %v4163, 1
    %v4165 = vadd.f32 %v4163, %v4164
    %v4166 = vsel %vm171, %v4146, 0.0
    %v4167 = vrot.slane %v4166, 4
    %v4168 = vadd.f32 %v4166, %v4167
    %v4169 = vrot.slane %v4168, 2
    %v4170 = vadd.f32 %v4168, %v4169
    %v4171 = vrot.slane %v4170, 1
    %v4172 = vadd.f32 %v4170, %v4171
    %v4173 = vsel %vm171, %v4147, 0.0
    %v4174 = vrot.slane %v4173, 4
    %v4175 = vadd.f32 %v4173, %v4174
    %v4176 = vrot.slane %v4175, 2
    %v4177 = vadd.f32 %v4175, %v4176
    %v4178 = vrot.slane %v4177, 1
    %v4179 = vadd.f32 %v4177, %v4178
    %v4180 = vsel %vm171, %v4148, 0.0
    %v4181 = vrot.slane %v4180, 4
    %v4182 = vadd.f32 %v4180, %v4181
    %v4183 = vrot.slane %v4182, 2
    %v4184 = vadd.f32 %v4182, %v4183
    %v4185 = vrot.slane %v4184, 1
    %v4186 = vadd.f32 %v4184, %v4185
    %v4187 = vsel %vm171, %v4149, 0.0
    %v4188 = vrot.slane %v4187, 4
    %v4189 = vadd.f32 %v4187, %v4188
    %v4190 = vrot.slane %v4189, 2
    %v4191 = vadd.f32 %v4189, %v4190
    %v4192 = vrot.slane %v4191, 1
    %v4193 = vadd.f32 %v4191, %v4192
    %v4194 = vsel %vm171, %v4150, 0.0
    %v4195 = vrot.slane %v4194, 4
    %v4196 = vadd.f32 %v4194, %v4195
    %v4197 = vrot.slane %v4196, 2
    %v4198 = vadd.f32 %v4196, %v4197
    %v4199 = vrot.slane %v4198, 1
    %v4200 = vadd.f32 %v4198, %v4199
    %v4201 = vsel %vm171, %v4151, 0.0
    %v4202 = vrot.slane %v4201, 4
    %v4203 = vadd.f32 %v4201, %v4202
    %v4204 = vrot.slane %v4203, 2
    %v4205 = vadd.f32 %v4203, %v4204
    %v4206 = vrot.slane %v4205, 1
    %v4207 = vadd.f32 %v4205, %v4206
    %v4208 = vxor.u32 %v3713, 2147483648
    %v4209 = vmul.f32 %v4208, 1.442695
    %v4210 = vpow.pop %v4209
    %v4211 = vadd.f32 %v4210, 1.0
    %v4212 = vrcp.pop %v4211
    %v4213 = vmul.f32 1.0, %v4212
    %v4222 = vsel %vm256, %v4165, %v4158
    %v4223 = vsel %vm258, %v4172, %v4222
    %v4224 = vsel %vm260, %v4179, %v4223
    %v4225 = vsel %vm262, %v4186, %v4224
    %v4226 = vsel %vm264, %v4193, %v4225
    %v4227 = vsel %vm266, %v4200, %v4226
    %v4228 = vsel %vm268, %v4207, %v4227
    %4229 = vrot.lane.b32.xlu0 %v4228, 16
    %v4230 = vpop.permute.xlu0 %4229
    %v4232 = vmul.f32 %v4213, %v4230
    %s4233 = scalar_lea.vmem [#allocation8], 32
    %v4234 = vld [vmem:[%s4233] sm:$0xff]
    %v4235 = vsel %vm547, %v4234, %v4232
    %v4237 = vsel %vm970, %v4235, 0
    %4239 = vmatprep.subr.mxu0 0.0
    %4240 = vmatpush1.msra.mxu0 %v157
    %4241 = vmatprep.subr.mxu0 0.0
    %4242 = vmatpush1.msra.mxu0 %v158
    %4243 = vmatprep.subr.mxu0 0.0
    %4244 = vmatpush1.msra.mxu0 %v159
    %4245 = vmatprep.subr.mxu0 0.0
    %4246 = vmatpush1.msra.mxu0 %v160
    %4247 = vmatprep.subr.mxu0 0.0
    %4248 = vmatpush1.msra.mxu0 %v161
    %4249 = vmatprep.subr.mxu0 0.0
    %4250 = vmatpush1.msra.mxu0 %v162
    %4251 = vmatprep.subr.mxu0 0.0
    %4252 = vmatpush1.msra.mxu0 0.0
    %4253 = vmatprep.subr.mxu0 0.0
    %4254 = vmatpush1.msra.mxu0 0.0
    %4255 = vmatprep.subr.mxu0 0.0
    %4256 = vmatpush1.msra.mxu0 0.0
    %4257 = vmatprep.subr.mxu0 0.0
    %4258 = vmatpush1.msra.mxu0 0.0
    %4259 = vmatprep.subr.mxu0 0.0
    %4260 = vmatpush1.msra.mxu0 0.0
    %4261 = vmatprep.subr.mxu0 0.0
    %4262 = vmatpush1.msra.mxu0 0.0
    %4263 = vmatprep.subr.mxu0 0.0
    %4264 = vmatpush1.msra.mxu0 0.0
    %4265 = vmatprep.subr.mxu0 0.0
    %4266 = vmatpush1.msra.mxu0 0.0
    %4267 = vmatprep.subr.mxu0 0.0
    %4268 = vmatpush1.msra.mxu0 0.0
    %4269 = vmatprep.subr.mxu0 0.0
    %4270 = vmatpush1.msra.mxu0 0.0
    %4271 = vmatprep.subr.mxu0 0.0
    %4272 = vmatpush1.msra.mxu0 0.0
    %4273 = vmatprep.subr.mxu0 0.0
    %4274 = vmatpush1.msra.mxu0 0.0
    %4275 = vmatprep.subr.mxu0 0.0
    %4276 = vmatpush1.msra.mxu0 0.0
    %4277 = vmatprep.subr.mxu0 0.0
    %4278 = vmatpush1.msra.mxu0 0.0
    %4279 = vmatprep.subr.mxu0 0.0
    %4280 = vmatpush1.msra.mxu0 0.0
    %4281 = vmatprep.subr.mxu0 0.0
    %4282 = vmatpush1.msra.mxu0 0.0
    %4283 = vmatprep.subr.mxu0 0.0
    %4284 = vmatpush1.msra.mxu0 0.0
    %4285 = vmatprep.subr.mxu0 0.0
    %4286 = vmatpush1.msra.mxu0 0.0
    %4287 = vmatprep.subr.mxu0 0.0
    %4288 = vmatpush1.msra.mxu0 0.0
    %4289 = vmatprep.subr.mxu0 0.0
    %4290 = vmatpush1.msra.mxu0 0.0
    %4291 = vmatprep.subr.mxu0 0.0
    %4292 = vmatpush1.msra.mxu0 0.0
    %4293 = vmatprep.subr.mxu0 0.0
    %4294 = vmatpush1.msra.mxu0 0.0
    %4295 = vmatprep.subr.mxu0 0.0
    %4296 = vmatpush1.msra.mxu0 0.0
    %4297 = vmatprep.subr.mxu0 0.0
    %4298 = vmatpush1.msra.mxu0 0.0
    %4299 = vmatprep.subr.mxu0 0.0
    %4300 = vmatpush1.msra.mxu0 0.0
    %4301 = vmatprep.subr.mxu0 0.0
    %4302 = vmatpush1.msra.mxu0 0.0
    %4303 = vmatprep.mubr.f32.mxu0 0.0
    %4304 = vmatmul.mubr.f32.gmra.mrb[0].mxu0 %v4237
    %v4305 = vpop.f32.mrb[0].mxu0
    %v4306 = vadd.f32 %v968, %v4305
    %v4307 = vpop.f32.mrb[0].mxu0
    %4308 = vdwg.mxu0
    %4310 = vrot.lane.b32.xlu0 %v3713, 80
    %v4311 = vpop.permute.xlu0 %4310
    %4312 = vrot.lane.b32.xlu0 %v3715, 80
    %v4313 = vpop.permute.xlu0 %4312
    %v4314 = vsel %vm1049, %v4311, %v4313
    %v4316 = vadd.f32 %v4306, %v4314
    %v4317 = vxor.u32 %v4316, 2147483648
    %v4318 = vmul.f32 %v4317, 1.442695
    %v4319 = vpow.pop %v4318
    %v4320 = vadd.f32 %v4319, 1.0
    %v4321 = vrcp.pop %v4320
    %v4322 = vmul.f32 1.0, %v4321
    %v4323 = vtanh.pop %v4316
    %v4324 = vmul.f32 %v4322, %v3519
    %4326 = vrot.lane.b32.xlu0 %v4323, 64
    %v4327 = vpop.permute.xlu0 %4326
    %v4329 = vmul.f32 %v4322, %v4327
    %4331 = vrot.lane.b32.xlu0 %v4329, 32
    %v4332 = vpop.permute.xlu0 %4331
    %v4334 = vadd.f32 %v4324, %v4332
    %v4335 = vtanh.pop %v4334
    %4337 = vrot.lane.b32.xlu0 %v4335, 64
    %v4338 = vpop.permute.xlu0 %4337
    %v4340 = vmul.f32 %v4322, %v4338
    %4342 = vrot.lane.b32.xlu0 %v4340, 32
    %v4343 = vpop.permute.xlu0 %4342
    %v4344 = vsel %vm171, %v4343, 0
    %4346 = vmatprep.subr.mxu0 0.0
    %4347 = vmatpush1.msra.mxu0 %v166
    %4348 = vmatprep.subr.mxu0 0.0
    %4349 = vmatpush1.msra.mxu0 %v167
    %4350 = vmatprep.subr.mxu0 0.0
    %4351 = vmatpush1.msra.mxu0 %v168
    %4352 = vmatprep.subr.mxu0 0.0
    %4353 = vmatpush1.msra.mxu0 %v169
    %4354 = vmatprep.subr.mxu0 0.0
    %4355 = vmatpush1.msra.mxu0 0.0
    %4356 = vmatprep.subr.mxu0 0.0
    %4357 = vmatpush1.msra.mxu0 0.0
    %4358 = vmatprep.subr.mxu0 0.0
    %4359 = vmatpush1.msra.mxu0 0.0
    %4360 = vmatprep.subr.mxu0 0.0
    %4361 = vmatpush1.msra.mxu0 0.0
    %4362 = vmatprep.subr.mxu0 0.0
    %4363 = vmatpush1.msra.mxu0 0.0
    %4364 = vmatprep.subr.mxu0 0.0
    %4365 = vmatpush1.msra.mxu0 0.0
    %4366 = vmatprep.subr.mxu0 0.0
    %4367 = vmatpush1.msra.mxu0 0.0
    %4368 = vmatprep.subr.mxu0 0.0
    %4369 = vmatpush1.msra.mxu0 0.0
    %4370 = vmatprep.subr.mxu0 0.0
    %4371 = vmatpush1.msra.mxu0 0.0
    %4372 = vmatprep.subr.mxu0 0.0
    %4373 = vmatpush1.msra.mxu0 0.0
    %4374 = vmatprep.subr.mxu0 0.0
    %4375 = vmatpush1.msra.mxu0 0.0
    %4376 = vmatprep.subr.mxu0 0.0
    %4377 = vmatpush1.msra.mxu0 0.0
    %4378 = vmatprep.subr.mxu0 0.0
    %4379 = vmatpush1.msra.mxu0 0.0
    %4380 = vmatprep.subr.mxu0 0.0
    %4381 = vmatpush1.msra.mxu0 0.0
    %4382 = vmatprep.subr.mxu0 0.0
    %4383 = vmatpush1.msra.mxu0 0.0
    %4384 = vmatprep.subr.mxu0 0.0
    %4385 = vmatpush1.msra.mxu0 0.0
    %4386 = vmatprep.subr.mxu0 0.0
    %4387 = vmatpush1.msra.mxu0 0.0
    %4388 = vmatprep.subr.mxu0 0.0
    %4389 = vmatpush1.msra.mxu0 0.0
    %4390 = vmatprep.subr.mxu0 0.0
    %4391 = vmatpush1.msra.mxu0 0.0
    %4392 = vmatprep.subr.mxu0 0.0
    %4393 = vmatpush1.msra.mxu0 0.0
    %4394 = vmatprep.subr.mxu0 0.0
    %4395 = vmatpush1.msra.mxu0 0.0
    %4396 = vmatprep.subr.mxu0 0.0
    %4397 = vmatpush1.msra.mxu0 0.0
    %4398 = vmatprep.subr.mxu0 0.0
    %4399 = vmatpush1.msra.mxu0 0.0
    %4400 = vmatprep.subr.mxu0 0.0
    %4401 = vmatpush1.msra.mxu0 0.0
    %4402 = vmatprep.subr.mxu0 0.0
    %4403 = vmatpush1.msra.mxu0 0.0
    %4404 = vmatprep.subr.mxu0 0.0
    %4405 = vmatpush1.msra.mxu0 0.0
    %4406 = vmatprep.subr.mxu0 0.0
    %4407 = vmatpush1.msra.mxu0 0.0
    %4408 = vmatprep.subr.mxu0 0.0
    %4409 = vmatpush1.msra.mxu0 0.0
    %4410 = vmatprep.mubr.f32.mxu0 0.0
    %4411 = vmatmul.mubr.f32.gmra.mrb[0].mxu0 %v4344
    %v4412 = vpop.f32.mrb[0].mxu0
    %v4413 = vadd.f32 %v1081, %v4412
    %v4414 = vpop.f32.mrb[0].mxu0
    %4415 = vdwg.mxu0
    %s4416 = scalar_lea.vmem [#allocation14], 32
    %4417 = vst [vmem:[%s4416] sm:$0xff] %v4413
    %v4418 = vlaneseq
    %v4419 = vshrl.u32 %v4418, 7
    %v4420 = vsub.s32 %v598, %v4419
    %v4421 = vrot.slane %v4107, %v4420
    %v4422 = vlaneseq
    %v4423 = vshrl.u32 %v4422, 7
    %v4424 = vsub.s32 %v598, %v4423
    %v4425 = vrot.slane %v4112, %v4424
    %v4426 = vlaneseq
    %v4427 = vshrl.u32 %v4426, 7
    %v4428 = vsub.s32 %v598, %v4427
    %v4429 = vrot.slane %v4117, %v4428
    %v4430 = vlaneseq
    %v4431 = vshrl.u32 %v4430, 7
    %v4432 = vsub.s32 %v598, %v4431
    %v4433 = vrot.slane %v4122, %v4432
    %v4434 = vlaneseq
    %v4435 = vshrl.u32 %v4434, 7
    %v4436 = vsub.s32 %v598, %v4435
    %v4437 = vrot.slane %v4127, %v4436
    %v4438 = vlaneseq
    %v4439 = vshrl.u32 %v4438, 7
    %v4440 = vsub.s32 %v598, %v4439
    %v4441 = vrot.slane %v4132, %v4440
    %v4442 = vlaneseq
    %v4443 = vshrl.u32 %v4442, 7
    %v4444 = vsub.s32 %v598, %v4443
    %v4445 = vrot.slane %v4137, %v4444
    %v4446 = vlaneseq
    %v4447 = vshrl.u32 %v4446, 7
    %v4448 = vsub.s32 %v598, %v4447
    %v4449 = vrot.slane %v4142, %v4448
    %v4450 = vsel %vm256, %v4425, %v4421
    %v4451 = vsel %vm258, %v4429, %v4450
    %v4452 = vsel %vm260, %v4433, %v4451
    %v4453 = vsel %vm262, %v4437, %v4452
    %v4454 = vsel %vm264, %v4441, %v4453
    %v4455 = vsel %vm266, %v4445, %v4454
    %v4456 = vsel %vm268, %v4449, %v4455
    %v4458 = vsel %vm639, %v4456, 0.0
    %s4459 = scalar_lea.vmem [#allocation15], 32
    %4460 = vst [vmem:[%s4459] sm:$0xff] %v4458
    %4461 = vmatprep.subr.mxu0 %v149
    %4462 = vmatpush1.msra.mxu0 %v148
    %4463 = vmatprep.subr.mxu0 %v151
    %4464 = vmatpush1.msra.mxu0 %v150
    %4465 = vmatprep.subr.mxu0 %v153
    %4466 = vmatpush1.msra.mxu0 %v152
    %4467 = vmatprep.subr.mxu0 %v155
    %4468 = vmatpush1.msra.mxu0 %v154
    %4469 = vmatprep.subr.mxu0 0.0
    %4470 = vmatpush1.msra.mxu0 0.0
    %4471 = vmatprep.subr.mxu0 0.0
    %4472 = vmatpush1.msra.mxu0 0.0
    %4473 = vmatprep.subr.mxu0 0.0
    %4474 = vmatpush1.msra.mxu0 0.0
    %4475 = vmatprep.subr.mxu0 0.0
    %4476 = vmatpush1.msra.mxu0 0.0
    %4477 = vmatprep.subr.mxu0 0.0
    %4478 = vmatpush1.msra.mxu0 0.0
    %4479 = vmatprep.subr.mxu0 0.0
    %4480 = vmatpush1.msra.mxu0 0.0
    %4481 = vmatprep.subr.mxu0 0.0
    %4482 = vmatpush1.msra.mxu0 0.0
    %4483 = vmatprep.subr.mxu0 0.0
    %4484 = vmatpush1.msra.mxu0 0.0
    %4485 = vmatprep.subr.mxu0 0.0
    %4486 = vmatpush1.msra.mxu0 0.0
    %4487 = vmatprep.subr.mxu0 0.0
    %4488 = vmatpush1.msra.mxu0 0.0
    %4489 = vmatprep.subr.mxu0 0.0
    %4490 = vmatpush1.msra.mxu0 0.0
    %4491 = vmatprep.subr.mxu0 0.0
    %4492 = vmatpush1.msra.mxu0 0.0
    %4493 = vmatprep.subr.mxu0 0.0
    %4494 = vmatpush1.msra.mxu0 0.0
    %4495 = vmatprep.subr.mxu0 0.0
    %4496 = vmatpush1.msra.mxu0 0.0
    %4497 = vmatprep.subr.mxu0 0.0
    %4498 = vmatpush1.msra.mxu0 0.0
    %4499 = vmatprep.subr.mxu0 0.0
    %4500 = vmatpush1.msra.mxu0 0.0
    %4501 = vmatprep.subr.mxu0 0.0
    %4502 = vmatpush1.msra.mxu0 0.0
    %4503 = vmatprep.subr.mxu0 0.0
    %4504 = vmatpush1.msra.mxu0 0.0
    %4505 = vmatprep.subr.mxu0 0.0
    %4506 = vmatpush1.msra.mxu0 0.0
    %4507 = vmatprep.subr.mxu0 0.0
    %4508 = vmatpush1.msra.mxu0 0.0
    %4509 = vmatprep.subr.mxu0 0.0
    %4510 = vmatpush1.msra.mxu0 0.0
    %4511 = vmatprep.subr.mxu0 0.0
    %4512 = vmatpush1.msra.mxu0 0.0
    %4513 = vmatprep.subr.mxu0 0.0
    %4514 = vmatpush1.msra.mxu0 0.0
    %4515 = vmatprep.subr.mxu0 0.0
    %4516 = vmatpush1.msra.mxu0 0.0
    %4517 = vmatprep.subr.mxu0 0.0
    %4518 = vmatpush1.msra.mxu0 0.0
    %4519 = vmatprep.subr.mxu0 0.0
    %4520 = vmatpush1.msra.mxu0 0.0
    %4521 = vmatprep.subr.mxu0 0.0
    %4522 = vmatpush1.msra.mxu0 0.0
    %4523 = vmatprep.subr.mxu0 0.0
    %4524 = vmatpush1.msra.mxu0 0.0
    %4525 = vmatprep.mubr.f32.mxu0 0.0
    %4526 = vmatmul.mubr.f32.gmra.mrb[0].mxu0 %v4344
    %v4527 = vpop.f32.mrb[0].mxu0
    %v4528 = vadd.f32 %v346, %v4527
    %v4529 = vpop.f32.mrb[0].mxu0
    %v4530 = vadd.f32 %v350, %v4529
    %4531 = vdwg.mxu0
    %v4533 = vcombine.high %v4528, %v4528
    %v4535 = vunpack.c.l.s4 1966171168
    %v4536 = vunpack.c.0.s8 %v4535
    %v4537 = vlaneseq
    %v4538 = vshrl.u32 %v4537, 7
    %v4539 = vsub.s32 %v4536, %v4538
    %v4540 = vrot.slane %v4528, %v4539
    %v4542 = vunpack.c.l.s4 1966171168
    %v4543 = vunpack.c.0.s8 %v4542
    %v4544 = vlaneseq
    %v4545 = vshrl.u32 %v4544, 7
    %v4546 = vsub.s32 %v4543, %v4545
    %v4547 = vrot.slane %v4533, %v4546
    %v4548 = vcombine.high %v4540, %v4540
    %v4549 = vcombine.high %v4547, %v4547
    %v4551 = vunpack.c.l.s4 1966171168
    %v4552 = vunpack.c.0.s8 %v4551
    %v4553 = vlaneseq
    %v4554 = vshrl.u32 %v4553, 7
    %v4555 = vsub.s32 %v4552, %v4554
    %v4556 = vrot.slane %v4540, %v4555
    %v4558 = vunpack.c.l.s4 1966171168
    %v4559 = vunpack.c.0.s8 %v4558
    %v4560 = vlaneseq
    %v4561 = vshrl.u32 %v4560, 7
    %v4562 = vsub.s32 %v4559, %v4561
    %v4563 = vrot.slane %v4547, %v4562
    %v4565 = vunpack.c.l.s4 1966171168
    %v4566 = vunpack.c.0.s8 %v4565
    %v4567 = vlaneseq
    %v4568 = vshrl.u32 %v4567, 7
    %v4569 = vsub.s32 %v4566, %v4568
    %v4570 = vrot.slane %v4548, %v4569
    %v4572 = vunpack.c.l.s4 1966171168
    %v4573 = vunpack.c.0.s8 %v4572
    %v4574 = vlaneseq
    %v4575 = vshrl.u32 %v4574, 7
    %v4576 = vsub.s32 %v4573, %v4575
    %v4577 = vrot.slane %v4549, %v4576
    %v4578 = vcombine.high %v4556, %v4556
    %v4579 = vcombine.high %v4563, %v4563
    %v4580 = vcombine.high %v4570, %v4570
    %v4581 = vcombine.high %v4577, %v4577
    %v4582 = vlaneseq
    %v4583 = vshrl.u32 %v4582, 7
    %v4584 = vsub.s32 0, %v4583
    %v4585 = vrot.slane %v4556, %v4584
    %v4586 = vlaneseq
    %v4587 = vshrl.u32 %v4586, 7
    %v4588 = vsub.s32 0, %v4587
    %v4589 = vrot.slane %v4570, %v4588
    %v4590 = vlaneseq
    %v4591 = vshrl.u32 %v4590, 7
    %v4592 = vsub.s32 0, %v4591
    %v4593 = vrot.slane %v4578, %v4592
    %v4594 = vlaneseq
    %v4595 = vshrl.u32 %v4594, 7
    %v4596 = vsub.s32 0, %v4595
    %v4597 = vrot.slane %v4580, %v4596
    %v4598 = vlaneseq
    %v4599 = vshrl.u32 %v4598, 7
    %v4600 = vsub.s32 0, %v4599
    %v4601 = vrot.slane %v4563, %v4600
    %v4602 = vlaneseq
    %v4603 = vshrl.u32 %v4602, 7
    %v4604 = vsub.s32 0, %v4603
    %v4605 = vrot.slane %v4577, %v4604
    %v4606 = vlaneseq
    %v4607 = vshrl.u32 %v4606, 7
    %v4608 = vsub.s32 0, %v4607
    %v4609 = vrot.slane %v4579, %v4608
    %v4610 = vlaneseq
    %v4611 = vshrl.u32 %v4610, 7
    %v4612 = vsub.s32 0, %v4611
    %v4613 = vrot.slane %v4581, %v4612
    %v4622 = vadd.f32 %v140, %v4585
    %v4623 = vadd.f32 %v141, %v4589
    %v4624 = vadd.f32 %v142, %v4593
    %v4625 = vadd.f32 %v143, %v4597
    %v4626 = vadd.f32 %v144, %v4601
    %v4627 = vadd.f32 %v145, %v4605
    %v4628 = vadd.f32 %v146, %v4609
    %v4629 = vadd.f32 %v147, %v4613
    %v4630 = vmax.f32 %v4622, 0.0
    %v4631 = vmax.f32 %v4623, 0.0
    %v4632 = vmax.f32 %v4624, 0.0
    %v4633 = vmax.f32 %v4625, 0.0
    %v4634 = vmax.f32 %v4626, 0.0
    %v4635 = vmax.f32 %v4627, 0.0
    %v4636 = vmax.f32 %v4628, 0.0
    %v4637 = vmax.f32 %v4629, 0.0
    %v4638 = vmul.f32 %v4630, %v537
    %v4639 = vmul.f32 %v4631, %v537
    %v4640 = vmul.f32 %v4632, %v537
    %v4641 = vmul.f32 %v4633, %v537
    %v4642 = vmul.f32 %v4634, %v537
    %v4643 = vmul.f32 %v4635, %v537
    %v4644 = vmul.f32 %v4636, %v537
    %v4645 = vmul.f32 %v4637, %v537
    %v4646 = vsel %vm547, %v4638, 0.0
    %4647 = vadd.xlane.f32.xlu0 %v4646
    %v4648 = vpop.xlane.xlu0 %4647
    %v4649 = vsel %vm547, %v4639, 0.0
    %4650 = vadd.xlane.f32.xlu0 %v4649
    %v4651 = vpop.xlane.xlu0 %4650
    %v4652 = vsel %vm547, %v4640, 0.0
    %4653 = vadd.xlane.f32.xlu0 %v4652
    %v4654 = vpop.xlane.xlu0 %4653
    %v4655 = vsel %vm547, %v4641, 0.0
    %4656 = vadd.xlane.f32.xlu0 %v4655
    %v4657 = vpop.xlane.xlu0 %4656
    %v4658 = vsel %vm547, %v4642, 0.0
    %4659 = vadd.xlane.f32.xlu0 %v4658
    %v4660 = vpop.xlane.xlu0 %4659
    %v4661 = vsel %vm547, %v4643, 0.0
    %4662 = vadd.xlane.f32.xlu0 %v4661
    %v4663 = vpop.xlane.xlu0 %4662
    %v4664 = vsel %vm547, %v4644, 0.0
    %4665 = vadd.xlane.f32.xlu0 %v4664
    %v4666 = vpop.xlane.xlu0 %4665
    %v4667 = vsel %vm547, %v4645, 0.0
    %4668 = vadd.xlane.f32.xlu0 %v4667
    %v4669 = vpop.xlane.xlu0 %4668
    %v4670 = vadd.f32 %v4648, %v579
    %v4671 = vadd.f32 %v4651, %v579
    %v4672 = vadd.f32 %v4654, %v579
    %v4673 = vadd.f32 %v4657, %v579
    %v4674 = vadd.f32 %v4660, %v579
    %v4675 = vadd.f32 %v4663, %v579
    %v4676 = vadd.f32 %v4666, %v579
    %v4677 = vadd.f32 %v4669, %v579
    %v4686 = vlaneseq
    %v4687 = vshrl.u32 %v4686, 7
    %v4688 = vsub.s32 %v598, %v4687
    %v4689 = vrot.slane %v4670, %v4688
    %v4690 = vlaneseq
    %v4691 = vshrl.u32 %v4690, 7
    %v4692 = vsub.s32 %v598, %v4691
    %v4693 = vrot.slane %v4671, %v4692
    %v4694 = vlaneseq
    %v4695 = vshrl.u32 %v4694, 7
    %v4696 = vsub.s32 %v598, %v4695
    %v4697 = vrot.slane %v4672, %v4696
    %v4698 = vlaneseq
    %v4699 = vshrl.u32 %v4698, 7
    %v4700 = vsub.s32 %v598, %v4699
    %v4701 = vrot.slane %v4673, %v4700
    %v4702 = vlaneseq
    %v4703 = vshrl.u32 %v4702, 7
    %v4704 = vsub.s32 %v598, %v4703
    %v4705 = vrot.slane %v4674, %v4704
    %v4706 = vlaneseq
    %v4707 = vshrl.u32 %v4706, 7
    %v4708 = vsub.s32 %v598, %v4707
    %v4709 = vrot.slane %v4675, %v4708
    %v4710 = vlaneseq
    %v4711 = vshrl.u32 %v4710, 7
    %v4712 = vsub.s32 %v598, %v4711
    %v4713 = vrot.slane %v4676, %v4712
    %v4714 = vlaneseq
    %v4715 = vshrl.u32 %v4714, 7
    %v4716 = vsub.s32 %v598, %v4715
    %v4717 = vrot.slane %v4677, %v4716
    %v4718 = vsel %vm256, %v4693, %v4689
    %v4719 = vsel %vm258, %v4697, %v4718
    %v4720 = vsel %vm260, %v4701, %v4719
    %v4721 = vsel %vm262, %v4705, %v4720
    %v4722 = vsel %vm264, %v4709, %v4721
    %v4723 = vsel %vm266, %v4713, %v4722
    %v4724 = vsel %vm268, %v4717, %v4723
    %v4726 = vsel %vm639, %v4724, -inf
    %4727 = vmax.xlane.f32.xlu0 %v4726
    %v4728 = vpop.xlane.xlu0 %4727
    %v4730 = vlaneseq
    %v4731 = vshrl.u32 %v4730, 7
    %v4732 = vsub.s32 0, %v4731
    %v4733 = vrot.slane %v4728, %v4732
    %v4734 = vlaneseq
    %v4735 = vshrl.u32 %v4734, 7
    %v4736 = vsub.s32 1, %v4735
    %v4737 = vrot.slane %v4728, %v4736
    %v4738 = vlaneseq
    %v4739 = vshrl.u32 %v4738, 7
    %v4740 = vsub.s32 2, %v4739
    %v4741 = vrot.slane %v4728, %v4740
    %v4742 = vlaneseq
    %v4743 = vshrl.u32 %v4742, 7
    %v4744 = vsub.s32 3, %v4743
    %v4745 = vrot.slane %v4728, %v4744
    %v4746 = vlaneseq
    %v4747 = vshrl.u32 %v4746, 7
    %v4748 = vsub.s32 4, %v4747
    %v4749 = vrot.slane %v4728, %v4748
    %v4750 = vlaneseq
    %v4751 = vshrl.u32 %v4750, 7
    %v4752 = vsub.s32 5, %v4751
    %v4753 = vrot.slane %v4728, %v4752
    %v4754 = vlaneseq
    %v4755 = vshrl.u32 %v4754, 7
    %v4756 = vsub.s32 6, %v4755
    %v4757 = vrot.slane %v4728, %v4756
    %v4758 = vlaneseq
    %v4759 = vshrl.u32 %v4758, 7
    %v4760 = vsub.s32 7, %v4759
    %v4761 = vrot.slane %v4728, %v4760
    %v4770 = vsub.f32 %v4670, %v4733
    %v4771 = vsub.f32 %v4671, %v4737
    %v4772 = vsub.f32 %v4672, %v4741
    %v4773 = vsub.f32 %v4673, %v4745
    %v4774 = vsub.f32 %v4674, %v4749
    %v4775 = vsub.f32 %v4675, %v4753
    %v4776 = vsub.f32 %v4676, %v4757
    %v4777 = vsub.f32 %v4677, %v4761
    %v4778 = vmul.f32 %v4770, 1.442695
    %v4779 = vpow.pop %v4778
    %v4780 = vmul.f32 %v4771, 1.442695
    %v4781 = vpow.pop %v4780
    %v4782 = vmul.f32 %v4772, 1.442695
    %v4783 = vpow.pop %v4782
    %v4784 = vmul.f32 %v4773, 1.442695
    %v4785 = vpow.pop %v4784
    %v4786 = vmul.f32 %v4774, 1.442695
    %v4787 = vpow.pop %v4786
    %v4788 = vmul.f32 %v4775, 1.442695
    %v4789 = vpow.pop %v4788
    %v4790 = vmul.f32 %v4776, 1.442695
    %v4791 = vpow.pop %v4790
    %v4792 = vmul.f32 %v4777, 1.442695
    %v4793 = vpow.pop %v4792
    %4802 = vset.pattern.permute.xlu0 0
    %4803 = vperm.xlu0 %4802, %v4779
    %v4804 = vpop.permute.xlu0 %4803
    %4805 = vset.pattern.permute.xlu0 0
    %4806 = vperm.xlu0 %4805, %v4781
    %v4807 = vpop.permute.xlu0 %4806
    %4808 = vset.pattern.permute.xlu0 0
    %4809 = vperm.xlu0 %4808, %v4783
    %v4810 = vpop.permute.xlu0 %4809
    %4811 = vset.pattern.permute.xlu0 0
    %4812 = vperm.xlu0 %4811, %v4785
    %v4813 = vpop.permute.xlu0 %4812
    %4814 = vset.pattern.permute.xlu0 0
    %4815 = vperm.xlu0 %4814, %v4787
    %v4816 = vpop.permute.xlu0 %4815
    %4817 = vset.pattern.permute.xlu0 0
    %4818 = vperm.xlu0 %4817, %v4789
    %v4819 = vpop.permute.xlu0 %4818
    %4820 = vset.pattern.permute.xlu0 0
    %4821 = vperm.xlu0 %4820, %v4791
    %v4822 = vpop.permute.xlu0 %4821
    %4823 = vset.pattern.permute.xlu0 0
    %4824 = vperm.xlu0 %4823, %v4793
    %v4825 = vpop.permute.xlu0 %4824
    %v4826 = vlaneseq
    %v4827 = vshrl.u32 %v4826, 7
    %v4828 = vsub.s32 %v598, %v4827
    %v4829 = vrot.slane %v4804, %v4828
    %v4830 = vlaneseq
    %v4831 = vshrl.u32 %v4830, 7
    %v4832 = vsub.s32 %v598, %v4831
    %v4833 = vrot.slane %v4807, %v4832
    %v4834 = vlaneseq
    %v4835 = vshrl.u32 %v4834, 7
    %v4836 = vsub.s32 %v598, %v4835
    %v4837 = vrot.slane %v4810, %v4836
    %v4838 = vlaneseq
    %v4839 = vshrl.u32 %v4838, 7
    %v4840 = vsub.s32 %v598, %v4839
    %v4841 = vrot.slane %v4813, %v4840
    %v4842 = vlaneseq
    %v4843 = vshrl.u32 %v4842, 7
    %v4844 = vsub.s32 %v598, %v4843
    %v4845 = vrot.slane %v4816, %v4844
    %v4846 = vlaneseq
    %v4847 = vshrl.u32 %v4846, 7
    %v4848 = vsub.s32 %v598, %v4847
    %v4849 = vrot.slane %v4819, %v4848
    %v4850 = vlaneseq
    %v4851 = vshrl.u32 %v4850, 7
    %v4852 = vsub.s32 %v598, %v4851
    %v4853 = vrot.slane %v4822, %v4852
    %v4854 = vlaneseq
    %v4855 = vshrl.u32 %v4854, 7
    %v4856 = vsub.s32 %v598, %v4855
    %v4857 = vrot.slane %v4825, %v4856
    %v4858 = vsel %vm256, %v4833, %v4829
    %v4859 = vsel %vm258, %v4837, %v4858
    %v4860 = vsel %vm260, %v4841, %v4859
    %v4861 = vsel %vm262, %v4845, %v4860
    %v4862 = vsel %vm264, %v4849, %v4861
    %v4863 = vsel %vm266, %v4853, %v4862
    %v4864 = vsel %vm268, %v4857, %v4863
    %v4866 = vsel %vm639, %v4864, 0.0
    %4867 = vadd.xlane.f32.xlu0 %v4866
    %v4868 = vpop.xlane.xlu0 %4867
    %v4869 = vrcp.pop %v4868
    %v4871 = vlaneseq
    %v4872 = vshrl.u32 %v4871, 7
    %v4873 = vsub.s32 0, %v4872
    %v4874 = vrot.slane %v4869, %v4873
    %v4875 = vlaneseq
    %v4876 = vshrl.u32 %v4875, 7
    %v4877 = vsub.s32 1, %v4876
    %v4878 = vrot.slane %v4869, %v4877
    %v4879 = vlaneseq
    %v4880 = vshrl.u32 %v4879, 7
    %v4881 = vsub.s32 2, %v4880
    %v4882 = vrot.slane %v4869, %v4881
    %v4883 = vlaneseq
    %v4884 = vshrl.u32 %v4883, 7
    %v4885 = vsub.s32 3, %v4884
    %v4886 = vrot.slane %v4869, %v4885
    %v4887 = vlaneseq
    %v4888 = vshrl.u32 %v4887, 7
    %v4889 = vsub.s32 4, %v4888
    %v4890 = vrot.slane %v4869, %v4889
    %v4891 = vlaneseq
    %v4892 = vshrl.u32 %v4891, 7
    %v4893 = vsub.s32 5, %v4892
    %v4894 = vrot.slane %v4869, %v4893
    %v4895 = vlaneseq
    %v4896 = vshrl.u32 %v4895, 7
    %v4897 = vsub.s32 6, %v4896
    %v4898 = vrot.slane %v4869, %v4897
    %v4899 = vlaneseq
    %v4900 = vshrl.u32 %v4899, 7
    %v4901 = vsub.s32 7, %v4900
    %v4902 = vrot.slane %v4869, %v4901
    %v4911 = vmul.f32 %v4779, %v4874
    %v4912 = vmul.f32 %v4781, %v4878
    %v4913 = vmul.f32 %v4783, %v4882
    %v4914 = vmul.f32 %v4785, %v4886
    %v4915 = vmul.f32 %v4787, %v4890
    %v4916 = vmul.f32 %v4789, %v4894
    %v4917 = vmul.f32 %v4791, %v4898
    %v4918 = vmul.f32 %v4793, %v4902
    %4920 = vset.pattern.permute.xlu0 0
    %4921 = vperm.xlu0 %4920, %v4911
    %v4922 = vpop.permute.xlu0 %4921
    %4925 = vset.pattern.permute.xlu0 0
    %4926 = vperm.xlu0 %4925, %v4912
    %v4927 = vpop.permute.xlu0 %4926
    %4930 = vset.pattern.permute.xlu0 0
    %4931 = vperm.xlu0 %4930, %v4913
    %v4932 = vpop.permute.xlu0 %4931
    %4935 = vset.pattern.permute.xlu0 0
    %4936 = vperm.xlu0 %4935, %v4914
    %v4937 = vpop.permute.xlu0 %4936
    %4940 = vset.pattern.permute.xlu0 0
    %4941 = vperm.xlu0 %4940, %v4915
    %v4942 = vpop.permute.xlu0 %4941
    %4945 = vset.pattern.permute.xlu0 0
    %4946 = vperm.xlu0 %4945, %v4916
    %v4947 = vpop.permute.xlu0 %4946
    %4950 = vset.pattern.permute.xlu0 0
    %4951 = vperm.xlu0 %4950, %v4917
    %v4952 = vpop.permute.xlu0 %4951
    %4955 = vset.pattern.permute.xlu0 0
    %4956 = vperm.xlu0 %4955, %v4918
    %v4957 = vpop.permute.xlu0 %4956
    %v4959 = vmul.f32 %v132, %v4922
    %v4960 = vmul.f32 %v133, %v4927
    %v4961 = vmul.f32 %v134, %v4932
    %v4962 = vmul.f32 %v135, %v4937
    %v4963 = vmul.f32 %v136, %v4942
    %v4964 = vmul.f32 %v137, %v4947
    %v4965 = vmul.f32 %v138, %v4952
    %v4966 = vmul.f32 %v139, %v4957
    %v4967 = vsel %vm171, %v4959, 0.0
    %v4968 = vrot.slane %v4967, 4
    %v4969 = vadd.f32 %v4967, %v4968
    %v4970 = vrot.slane %v4969, 2
    %v4971 = vadd.f32 %v4969, %v4970
    %v4972 = vrot.slane %v4971, 1
    %v4973 = vadd.f32 %v4971, %v4972
    %v4974 = vsel %vm171, %v4960, 0.0
    %v4975 = vrot.slane %v4974, 4
    %v4976 = vadd.f32 %v4974, %v4975
    %v4977 = vrot.slane %v4976, 2
    %v4978 = vadd.f32 %v4976, %v4977
    %v4979 = vrot.slane %v4978, 1
    %v4980 = vadd.f32 %v4978, %v4979
    %v4981 = vsel %vm171, %v4961, 0.0
    %v4982 = vrot.slane %v4981, 4
    %v4983 = vadd.f32 %v4981, %v4982
    %v4984 = vrot.slane %v4983, 2
    %v4985 = vadd.f32 %v4983, %v4984
    %v4986 = vrot.slane %v4985, 1
    %v4987 = vadd.f32 %v4985, %v4986
    %v4988 = vsel %vm171, %v4962, 0.0
    %v4989 = vrot.slane %v4988, 4
    %v4990 = vadd.f32 %v4988, %v4989
    %v4991 = vrot.slane %v4990, 2
    %v4992 = vadd.f32 %v4990, %v4991
    %v4993 = vrot.slane %v4992, 1
    %v4994 = vadd.f32 %v4992, %v4993
    %v4995 = vsel %vm171, %v4963, 0.0
    %v4996 = vrot.slane %v4995, 4
    %v4997 = vadd.f32 %v4995, %v4996
    %v4998 = vrot.slane %v4997, 2
    %v4999 = vadd.f32 %v4997, %v4998
    %v5000 = vrot.slane %v4999, 1
    %v5001 = vadd.f32 %v4999, %v5000
    %v5002 = vsel %vm171, %v4964, 0.0
    %v5003 = vrot.slane %v5002, 4
    %v5004 = vadd.f32 %v5002, %v5003
    %v5005 = vrot.slane %v5004, 2
    %v5006 = vadd.f32 %v5004, %v5005
    %v5007 = vrot.slane %v5006, 1
    %v5008 = vadd.f32 %v5006, %v5007
    %v5009 = vsel %vm171, %v4965, 0.0
    %v5010 = vrot.slane %v5009, 4
    %v5011 = vadd.f32 %v5009, %v5010
    %v5012 = vrot.slane %v5011, 2
    %v5013 = vadd.f32 %v5011, %v5012
    %v5014 = vrot.slane %v5013, 1
    %v5015 = vadd.f32 %v5013, %v5014
    %v5016 = vsel %vm171, %v4966, 0.0
    %v5017 = vrot.slane %v5016, 4
    %v5018 = vadd.f32 %v5016, %v5017
    %v5019 = vrot.slane %v5018, 2
    %v5020 = vadd.f32 %v5018, %v5019
    %v5021 = vrot.slane %v5020, 1
    %v5022 = vadd.f32 %v5020, %v5021
    %v5023 = vxor.u32 %v4528, 2147483648
    %v5024 = vmul.f32 %v5023, 1.442695
    %v5025 = vpow.pop %v5024
    %v5026 = vadd.f32 %v5025, 1.0
    %v5027 = vrcp.pop %v5026
    %v5028 = vmul.f32 1.0, %v5027
    %v5037 = vsel %vm256, %v4980, %v4973
    %v5038 = vsel %vm258, %v4987, %v5037
    %v5039 = vsel %vm260, %v4994, %v5038
    %v5040 = vsel %vm262, %v5001, %v5039
    %v5041 = vsel %vm264, %v5008, %v5040
    %v5042 = vsel %vm266, %v5015, %v5041
    %v5043 = vsel %vm268, %v5022, %v5042
    %5044 = vrot.lane.b32.xlu0 %v5043, 16
    %v5045 = vpop.permute.xlu0 %5044
    %v5047 = vmul.f32 %v5028, %v5045
    %s5048 = scalar_lea.vmem [#allocation8], 40
    %v5049 = vld [vmem:[%s5048] sm:$0xff]
    %v5050 = vsel %vm547, %v5049, %v5047
    %v5052 = vsel %vm970, %v5050, 0
    %5054 = vmatprep.subr.mxu0 0.0
    %5055 = vmatpush1.msra.mxu0 %v157
    %5056 = vmatprep.subr.mxu0 0.0
    %5057 = vmatpush1.msra.mxu0 %v158
    %5058 = vmatprep.subr.mxu0 0.0
    %5059 = vmatpush1.msra.mxu0 %v159
    %5060 = vmatprep.subr.mxu0 0.0
    %5061 = vmatpush1.msra.mxu0 %v160
    %5062 = vmatprep.subr.mxu0 0.0
    %5063 = vmatpush1.msra.mxu0 %v161
    %5064 = vmatprep.subr.mxu0 0.0
    %5065 = vmatpush1.msra.mxu0 %v162
    %5066 = vmatprep.subr.mxu0 0.0
    %5067 = vmatpush1.msra.mxu0 0.0
    %5068 = vmatprep.subr.mxu0 0.0
    %5069 = vmatpush1.msra.mxu0 0.0
    %5070 = vmatprep.subr.mxu0 0.0
    %5071 = vmatpush1.msra.mxu0 0.0
    %5072 = vmatprep.subr.mxu0 0.0
    %5073 = vmatpush1.msra.mxu0 0.0
    %5074 = vmatprep.subr.mxu0 0.0
    %5075 = vmatpush1.msra.mxu0 0.0
    %5076 = vmatprep.subr.mxu0 0.0
    %5077 = vmatpush1.msra.mxu0 0.0
    %5078 = vmatprep.subr.mxu0 0.0
    %5079 = vmatpush1.msra.mxu0 0.0
    %5080 = vmatprep.subr.mxu0 0.0
    %5081 = vmatpush1.msra.mxu0 0.0
    %5082 = vmatprep.subr.mxu0 0.0
    %5083 = vmatpush1.msra.mxu0 0.0
    %5084 = vmatprep.subr.mxu0 0.0
    %5085 = vmatpush1.msra.mxu0 0.0
    %5086 = vmatprep.subr.mxu0 0.0
    %5087 = vmatpush1.msra.mxu0 0.0
    %5088 = vmatprep.subr.mxu0 0.0
    %5089 = vmatpush1.msra.mxu0 0.0
    %5090 = vmatprep.subr.mxu0 0.0
    %5091 = vmatpush1.msra.mxu0 0.0
    %5092 = vmatprep.subr.mxu0 0.0
    %5093 = vmatpush1.msra.mxu0 0.0
    %5094 = vmatprep.subr.mxu0 0.0
    %5095 = vmatpush1.msra.mxu0 0.0
    %5096 = vmatprep.subr.mxu0 0.0
    %5097 = vmatpush1.msra.mxu0 0.0
    %5098 = vmatprep.subr.mxu0 0.0
    %5099 = vmatpush1.msra.mxu0 0.0
    %5100 = vmatprep.subr.mxu0 0.0
    %5101 = vmatpush1.msra.mxu0 0.0
    %5102 = vmatprep.subr.mxu0 0.0
    %5103 = vmatpush1.msra.mxu0 0.0
    %5104 = vmatprep.subr.mxu0 0.0
    %5105 = vmatpush1.msra.mxu0 0.0
    %5106 = vmatprep.subr.mxu0 0.0
    %5107 = vmatpush1.msra.mxu0 0.0
    %5108 = vmatprep.subr.mxu0 0.0
    %5109 = vmatpush1.msra.mxu0 0.0
    %5110 = vmatprep.subr.mxu0 0.0
    %5111 = vmatpush1.msra.mxu0 0.0
    %5112 = vmatprep.subr.mxu0 0.0
    %5113 = vmatpush1.msra.mxu0 0.0
    %5114 = vmatprep.subr.mxu0 0.0
    %5115 = vmatpush1.msra.mxu0 0.0
    %5116 = vmatprep.subr.mxu0 0.0
    %5117 = vmatpush1.msra.mxu0 0.0
    %5118 = vmatprep.mubr.f32.mxu0 0.0
    %5119 = vmatmul.mubr.f32.gmra.mrb[0].mxu0 %v5052
    %v5120 = vpop.f32.mrb[0].mxu0
    %v5121 = vadd.f32 %v968, %v5120
    %v5122 = vpop.f32.mrb[0].mxu0
    %5123 = vdwg.mxu0
    %5125 = vrot.lane.b32.xlu0 %v4528, 80
    %v5126 = vpop.permute.xlu0 %5125
    %5127 = vrot.lane.b32.xlu0 %v4530, 80
    %v5128 = vpop.permute.xlu0 %5127
    %v5129 = vsel %vm1049, %v5126, %v5128
    %v5131 = vadd.f32 %v5121, %v5129
    %v5132 = vxor.u32 %v5131, 2147483648
    %v5133 = vmul.f32 %v5132, 1.442695
    %v5134 = vpow.pop %v5133
    %v5135 = vadd.f32 %v5134, 1.0
    %v5136 = vrcp.pop %v5135
    %v5137 = vmul.f32 1.0, %v5136
    %v5138 = vtanh.pop %v5131
    %v5139 = vmul.f32 %v5137, %v4334
    %5141 = vrot.lane.b32.xlu0 %v5138, 64
    %v5142 = vpop.permute.xlu0 %5141
    %v5144 = vmul.f32 %v5137, %v5142
    %5146 = vrot.lane.b32.xlu0 %v5144, 32
    %v5147 = vpop.permute.xlu0 %5146
    %v5149 = vadd.f32 %v5139, %v5147
    %v5150 = vtanh.pop %v5149
    %5152 = vrot.lane.b32.xlu0 %v5150, 64
    %v5153 = vpop.permute.xlu0 %5152
    %v5155 = vmul.f32 %v5137, %v5153
    %5157 = vrot.lane.b32.xlu0 %v5155, 32
    %v5158 = vpop.permute.xlu0 %5157
    %v5159 = vsel %vm171, %v5158, 0
    %5161 = vmatprep.subr.mxu0 0.0
    %5162 = vmatpush1.msra.mxu0 %v166
    %5163 = vmatprep.subr.mxu0 0.0
    %5164 = vmatpush1.msra.mxu0 %v167
    %5165 = vmatprep.subr.mxu0 0.0
    %5166 = vmatpush1.msra.mxu0 %v168
    %5167 = vmatprep.subr.mxu0 0.0
    %5168 = vmatpush1.msra.mxu0 %v169
    %5169 = vmatprep.subr.mxu0 0.0
    %5170 = vmatpush1.msra.mxu0 0.0
    %5171 = vmatprep.subr.mxu0 0.0
    %5172 = vmatpush1.msra.mxu0 0.0
    %5173 = vmatprep.subr.mxu0 0.0
    %5174 = vmatpush1.msra.mxu0 0.0
    %5175 = vmatprep.subr.mxu0 0.0
    %5176 = vmatpush1.msra.mxu0 0.0
    %5177 = vmatprep.subr.mxu0 0.0
    %5178 = vmatpush1.msra.mxu0 0.0
    %5179 = vmatprep.subr.mxu0 0.0
    %5180 = vmatpush1.msra.mxu0 0.0
    %5181 = vmatprep.subr.mxu0 0.0
    %5182 = vmatpush1.msra.mxu0 0.0
    %5183 = vmatprep.subr.mxu0 0.0
    %5184 = vmatpush1.msra.mxu0 0.0
    %5185 = vmatprep.subr.mxu0 0.0
    %5186 = vmatpush1.msra.mxu0 0.0
    %5187 = vmatprep.subr.mxu0 0.0
    %5188 = vmatpush1.msra.mxu0 0.0
    %5189 = vmatprep.subr.mxu0 0.0
    %5190 = vmatpush1.msra.mxu0 0.0
    %5191 = vmatprep.subr.mxu0 0.0
    %5192 = vmatpush1.msra.mxu0 0.0
    %5193 = vmatprep.subr.mxu0 0.0
    %5194 = vmatpush1.msra.mxu0 0.0
    %5195 = vmatprep.subr.mxu0 0.0
    %5196 = vmatpush1.msra.mxu0 0.0
    %5197 = vmatprep.subr.mxu0 0.0
    %5198 = vmatpush1.msra.mxu0 0.0
    %5199 = vmatprep.subr.mxu0 0.0
    %5200 = vmatpush1.msra.mxu0 0.0
    %5201 = vmatprep.subr.mxu0 0.0
    %5202 = vmatpush1.msra.mxu0 0.0
    %5203 = vmatprep.subr.mxu0 0.0
    %5204 = vmatpush1.msra.mxu0 0.0
    %5205 = vmatprep.subr.mxu0 0.0
    %5206 = vmatpush1.msra.mxu0 0.0
    %5207 = vmatprep.subr.mxu0 0.0
    %5208 = vmatpush1.msra.mxu0 0.0
    %5209 = vmatprep.subr.mxu0 0.0
    %5210 = vmatpush1.msra.mxu0 0.0
    %5211 = vmatprep.subr.mxu0 0.0
    %5212 = vmatpush1.msra.mxu0 0.0
    %5213 = vmatprep.subr.mxu0 0.0
    %5214 = vmatpush1.msra.mxu0 0.0
    %5215 = vmatprep.subr.mxu0 0.0
    %5216 = vmatpush1.msra.mxu0 0.0
    %5217 = vmatprep.subr.mxu0 0.0
    %5218 = vmatpush1.msra.mxu0 0.0
    %5219 = vmatprep.subr.mxu0 0.0
    %5220 = vmatpush1.msra.mxu0 0.0
    %5221 = vmatprep.subr.mxu0 0.0
    %5222 = vmatpush1.msra.mxu0 0.0
    %5223 = vmatprep.subr.mxu0 0.0
    %5224 = vmatpush1.msra.mxu0 0.0
    %5225 = vmatprep.mubr.f32.mxu0 0.0
    %5226 = vmatmul.mubr.f32.gmra.mrb[0].mxu0 %v5159
    %v5227 = vpop.f32.mrb[0].mxu0
    %v5228 = vadd.f32 %v1081, %v5227
    %v5229 = vpop.f32.mrb[0].mxu0
    %5230 = vdwg.mxu0
    %s5231 = scalar_lea.vmem [#allocation14], 40
    %5232 = vst [vmem:[%s5231] sm:$0xff] %v5228
    %v5233 = vlaneseq
    %v5234 = vshrl.u32 %v5233, 7
    %v5235 = vsub.s32 %v598, %v5234
    %v5236 = vrot.slane %v4922, %v5235
    %v5237 = vlaneseq
    %v5238 = vshrl.u32 %v5237, 7
    %v5239 = vsub.s32 %v598, %v5238
    %v5240 = vrot.slane %v4927, %v5239
    %v5241 = vlaneseq
    %v5242 = vshrl.u32 %v5241, 7
    %v5243 = vsub.s32 %v598, %v5242
    %v5244 = vrot.slane %v4932, %v5243
    %v5245 = vlaneseq
    %v5246 = vshrl.u32 %v5245, 7
    %v5247 = vsub.s32 %v598, %v5246
    %v5248 = vrot.slane %v4937, %v5247
    %v5249 = vlaneseq
    %v5250 = vshrl.u32 %v5249, 7
    %v5251 = vsub.s32 %v598, %v5250
    %v5252 = vrot.slane %v4942, %v5251
    %v5253 = vlaneseq
    %v5254 = vshrl.u32 %v5253, 7
    %v5255 = vsub.s32 %v598, %v5254
    %v5256 = vrot.slane %v4947, %v5255
    %v5257 = vlaneseq
    %v5258 = vshrl.u32 %v5257, 7
    %v5259 = vsub.s32 %v598, %v5258
    %v5260 = vrot.slane %v4952, %v5259
    %v5261 = vlaneseq
    %v5262 = vshrl.u32 %v5261, 7
    %v5263 = vsub.s32 %v598, %v5262
    %v5264 = vrot.slane %v4957, %v5263
    %v5265 = vsel %vm256, %v5240, %v5236
    %v5266 = vsel %vm258, %v5244, %v5265
    %v5267 = vsel %vm260, %v5248, %v5266
    %v5268 = vsel %vm262, %v5252, %v5267
    %v5269 = vsel %vm264, %v5256, %v5268
    %v5270 = vsel %vm266, %v5260, %v5269
    %v5271 = vsel %vm268, %v5264, %v5270
    %v5273 = vsel %vm639, %v5271, 0.0
    %s5274 = scalar_lea.vmem [#allocation15], 40
    %5275 = vst [vmem:[%s5274] sm:$0xff] %v5273
    %5276 = vmatprep.subr.mxu0 %v149
    %5277 = vmatpush1.msra.mxu0 %v148
    %5278 = vmatprep.subr.mxu0 %v151
    %5279 = vmatpush1.msra.mxu0 %v150
    %5280 = vmatprep.subr.mxu0 %v153
    %5281 = vmatpush1.msra.mxu0 %v152
    %5282 = vmatprep.subr.mxu0 %v155
    %5283 = vmatpush1.msra.mxu0 %v154
    %5284 = vmatprep.subr.mxu0 0.0
    %5285 = vmatpush1.msra.mxu0 0.0
    %5286 = vmatprep.subr.mxu0 0.0
    %5287 = vmatpush1.msra.mxu0 0.0
    %5288 = vmatprep.subr.mxu0 0.0
    %5289 = vmatpush1.msra.mxu0 0.0
    %5290 = vmatprep.subr.mxu0 0.0
    %5291 = vmatpush1.msra.mxu0 0.0
    %5292 = vmatprep.subr.mxu0 0.0
    %5293 = vmatpush1.msra.mxu0 0.0
    %5294 = vmatprep.subr.mxu0 0.0
    %5295 = vmatpush1.msra.mxu0 0.0
    %5296 = vmatprep.subr.mxu0 0.0
    %5297 = vmatpush1.msra.mxu0 0.0
    %5298 = vmatprep.subr.mxu0 0.0
    %5299 = vmatpush1.msra.mxu0 0.0
    %5300 = vmatprep.subr.mxu0 0.0
    %5301 = vmatpush1.msra.mxu0 0.0
    %5302 = vmatprep.subr.mxu0 0.0
    %5303 = vmatpush1.msra.mxu0 0.0
    %5304 = vmatprep.subr.mxu0 0.0
    %5305 = vmatpush1.msra.mxu0 0.0
    %5306 = vmatprep.subr.mxu0 0.0
    %5307 = vmatpush1.msra.mxu0 0.0
    %5308 = vmatprep.subr.mxu0 0.0
    %5309 = vmatpush1.msra.mxu0 0.0
    %5310 = vmatprep.subr.mxu0 0.0
    %5311 = vmatpush1.msra.mxu0 0.0
    %5312 = vmatprep.subr.mxu0 0.0
    %5313 = vmatpush1.msra.mxu0 0.0
    %5314 = vmatprep.subr.mxu0 0.0
    %5315 = vmatpush1.msra.mxu0 0.0
    %5316 = vmatprep.subr.mxu0 0.0
    %5317 = vmatpush1.msra.mxu0 0.0
    %5318 = vmatprep.subr.mxu0 0.0
    %5319 = vmatpush1.msra.mxu0 0.0
    %5320 = vmatprep.subr.mxu0 0.0
    %5321 = vmatpush1.msra.mxu0 0.0
    %5322 = vmatprep.subr.mxu0 0.0
    %5323 = vmatpush1.msra.mxu0 0.0
    %5324 = vmatprep.subr.mxu0 0.0
    %5325 = vmatpush1.msra.mxu0 0.0
    %5326 = vmatprep.subr.mxu0 0.0
    %5327 = vmatpush1.msra.mxu0 0.0
    %5328 = vmatprep.subr.mxu0 0.0
    %5329 = vmatpush1.msra.mxu0 0.0
    %5330 = vmatprep.subr.mxu0 0.0
    %5331 = vmatpush1.msra.mxu0 0.0
    %5332 = vmatprep.subr.mxu0 0.0
    %5333 = vmatpush1.msra.mxu0 0.0
    %5334 = vmatprep.subr.mxu0 0.0
    %5335 = vmatpush1.msra.mxu0 0.0
    %5336 = vmatprep.subr.mxu0 0.0
    %5337 = vmatpush1.msra.mxu0 0.0
    %5338 = vmatprep.subr.mxu0 0.0
    %5339 = vmatpush1.msra.mxu0 0.0
    %5340 = vmatprep.mubr.f32.mxu0 0.0
    %5341 = vmatmul.mubr.f32.gmra.mrb[0].mxu0 %v5159
    %v5342 = vpop.f32.mrb[0].mxu0
    %v5343 = vadd.f32 %v346, %v5342
    %v5344 = vpop.f32.mrb[0].mxu0
    %v5345 = vadd.f32 %v350, %v5344
    %5346 = vdwg.mxu0
    %v5348 = vcombine.high %v5343, %v5343
    %v5350 = vunpack.c.l.s4 1966171168
    %v5351 = vunpack.c.0.s8 %v5350
    %v5352 = vlaneseq
    %v5353 = vshrl.u32 %v5352, 7
    %v5354 = vsub.s32 %v5351, %v5353
    %v5355 = vrot.slane %v5343, %v5354
    %v5357 = vunpack.c.l.s4 1966171168
    %v5358 = vunpack.c.0.s8 %v5357
    %v5359 = vlaneseq
    %v5360 = vshrl.u32 %v5359, 7
    %v5361 = vsub.s32 %v5358, %v5360
    %v5362 = vrot.slane %v5348, %v5361
    %v5363 = vcombine.high %v5355, %v5355
    %v5364 = vcombine.high %v5362, %v5362
    %v5366 = vunpack.c.l.s4 1966171168
    %v5367 = vunpack.c.0.s8 %v5366
    %v5368 = vlaneseq
    %v5369 = vshrl.u32 %v5368, 7
    %v5370 = vsub.s32 %v5367, %v5369
    %v5371 = vrot.slane %v5355, %v5370
    %v5373 = vunpack.c.l.s4 1966171168
    %v5374 = vunpack.c.0.s8 %v5373
    %v5375 = vlaneseq
    %v5376 = vshrl.u32 %v5375, 7
    %v5377 = vsub.s32 %v5374, %v5376
    %v5378 = vrot.slane %v5362, %v5377
    %v5380 = vunpack.c.l.s4 1966171168
    %v5381 = vunpack.c.0.s8 %v5380
    %v5382 = vlaneseq
    %v5383 = vshrl.u32 %v5382, 7
    %v5384 = vsub.s32 %v5381, %v5383
    %v5385 = vrot.slane %v5363, %v5384
    %v5387 = vunpack.c.l.s4 1966171168
    %v5388 = vunpack.c.0.s8 %v5387
    %v5389 = vlaneseq
    %v5390 = vshrl.u32 %v5389, 7
    %v5391 = vsub.s32 %v5388, %v5390
    %v5392 = vrot.slane %v5364, %v5391
    %v5393 = vcombine.high %v5371, %v5371
    %v5394 = vcombine.high %v5378, %v5378
    %v5395 = vcombine.high %v5385, %v5385
    %v5396 = vcombine.high %v5392, %v5392
    %v5397 = vlaneseq
    %v5398 = vshrl.u32 %v5397, 7
    %v5399 = vsub.s32 0, %v5398
    %v5400 = vrot.slane %v5371, %v5399
    %v5401 = vlaneseq
    %v5402 = vshrl.u32 %v5401, 7
    %v5403 = vsub.s32 0, %v5402
    %v5404 = vrot.slane %v5385, %v5403
    %v5405 = vlaneseq
    %v5406 = vshrl.u32 %v5405, 7
    %v5407 = vsub.s32 0, %v5406
    %v5408 = vrot.slane %v5393, %v5407
    %v5409 = vlaneseq
    %v5410 = vshrl.u32 %v5409, 7
    %v5411 = vsub.s32 0, %v5410
    %v5412 = vrot.slane %v5395, %v5411
    %v5413 = vlaneseq
    %v5414 = vshrl.u32 %v5413, 7
    %v5415 = vsub.s32 0, %v5414
    %v5416 = vrot.slane %v5378, %v5415
    %v5417 = vlaneseq
    %v5418 = vshrl.u32 %v5417, 7
    %v5419 = vsub.s32 0, %v5418
    %v5420 = vrot.slane %v5392, %v5419
    %v5421 = vlaneseq
    %v5422 = vshrl.u32 %v5421, 7
    %v5423 = vsub.s32 0, %v5422
    %v5424 = vrot.slane %v5394, %v5423
    %v5425 = vlaneseq
    %v5426 = vshrl.u32 %v5425, 7
    %v5427 = vsub.s32 0, %v5426
    %v5428 = vrot.slane %v5396, %v5427
    %v5437 = vadd.f32 %v140, %v5400
    %v5438 = vadd.f32 %v141, %v5404
    %v5439 = vadd.f32 %v142, %v5408
    %v5440 = vadd.f32 %v143, %v5412
    %v5441 = vadd.f32 %v144, %v5416
    %v5442 = vadd.f32 %v145, %v5420
    %v5443 = vadd.f32 %v146, %v5424
    %v5444 = vadd.f32 %v147, %v5428
    %v5445 = vmax.f32 %v5437, 0.0
    %v5446 = vmax.f32 %v5438, 0.0
    %v5447 = vmax.f32 %v5439, 0.0
    %v5448 = vmax.f32 %v5440, 0.0
    %v5449 = vmax.f32 %v5441, 0.0
    %v5450 = vmax.f32 %v5442, 0.0
    %v5451 = vmax.f32 %v5443, 0.0
    %v5452 = vmax.f32 %v5444, 0.0
    %v5453 = vmul.f32 %v5445, %v537
    %v5454 = vmul.f32 %v5446, %v537
    %v5455 = vmul.f32 %v5447, %v537
    %v5456 = vmul.f32 %v5448, %v537
    %v5457 = vmul.f32 %v5449, %v537
    %v5458 = vmul.f32 %v5450, %v537
    %v5459 = vmul.f32 %v5451, %v537
    %v5460 = vmul.f32 %v5452, %v537
    %v5461 = vsel %vm547, %v5453, 0.0
    %5462 = vadd.xlane.f32.xlu0 %v5461
    %v5463 = vpop.xlane.xlu0 %5462
    %v5464 = vsel %vm547, %v5454, 0.0
    %5465 = vadd.xlane.f32.xlu0 %v5464
    %v5466 = vpop.xlane.xlu0 %5465
    %v5467 = vsel %vm547, %v5455, 0.0
    %5468 = vadd.xlane.f32.xlu0 %v5467
    %v5469 = vpop.xlane.xlu0 %5468
    %v5470 = vsel %vm547, %v5456, 0.0
    %5471 = vadd.xlane.f32.xlu0 %v5470
    %v5472 = vpop.xlane.xlu0 %5471
    %v5473 = vsel %vm547, %v5457, 0.0
    %5474 = vadd.xlane.f32.xlu0 %v5473
    %v5475 = vpop.xlane.xlu0 %5474
    %v5476 = vsel %vm547, %v5458, 0.0
    %5477 = vadd.xlane.f32.xlu0 %v5476
    %v5478 = vpop.xlane.xlu0 %5477
    %v5479 = vsel %vm547, %v5459, 0.0
    %5480 = vadd.xlane.f32.xlu0 %v5479
    %v5481 = vpop.xlane.xlu0 %5480
    %v5482 = vsel %vm547, %v5460, 0.0
    %5483 = vadd.xlane.f32.xlu0 %v5482
    %v5484 = vpop.xlane.xlu0 %5483
    %v5485 = vadd.f32 %v5463, %v579
    %v5486 = vadd.f32 %v5466, %v579
    %v5487 = vadd.f32 %v5469, %v579
    %v5488 = vadd.f32 %v5472, %v579
    %v5489 = vadd.f32 %v5475, %v579
    %v5490 = vadd.f32 %v5478, %v579
    %v5491 = vadd.f32 %v5481, %v579
    %v5492 = vadd.f32 %v5484, %v579
    %v5501 = vlaneseq
    %v5502 = vshrl.u32 %v5501, 7
    %v5503 = vsub.s32 %v598, %v5502
    %v5504 = vrot.slane %v5485, %v5503
    %v5505 = vlaneseq
    %v5506 = vshrl.u32 %v5505, 7
    %v5507 = vsub.s32 %v598, %v5506
    %v5508 = vrot.slane %v5486, %v5507
    %v5509 = vlaneseq
    %v5510 = vshrl.u32 %v5509, 7
    %v5511 = vsub.s32 %v598, %v5510
    %v5512 = vrot.slane %v5487, %v5511
    %v5513 = vlaneseq
    %v5514 = vshrl.u32 %v5513, 7
    %v5515 = vsub.s32 %v598, %v5514
    %v5516 = vrot.slane %v5488, %v5515
    %v5517 = vlaneseq
    %v5518 = vshrl.u32 %v5517, 7
    %v5519 = vsub.s32 %v598, %v5518
    %v5520 = vrot.slane %v5489, %v5519
    %v5521 = vlaneseq
    %v5522 = vshrl.u32 %v5521, 7
    %v5523 = vsub.s32 %v598, %v5522
    %v5524 = vrot.slane %v5490, %v5523
    %v5525 = vlaneseq
    %v5526 = vshrl.u32 %v5525, 7
    %v5527 = vsub.s32 %v598, %v5526
    %v5528 = vrot.slane %v5491, %v5527
    %v5529 = vlaneseq
    %v5530 = vshrl.u32 %v5529, 7
    %v5531 = vsub.s32 %v598, %v5530
    %v5532 = vrot.slane %v5492, %v5531
    %v5533 = vsel %vm256, %v5508, %v5504
    %v5534 = vsel %vm258, %v5512, %v5533
    %v5535 = vsel %vm260, %v5516, %v5534
    %v5536 = vsel %vm262, %v5520, %v5535
    %v5537 = vsel %vm264, %v5524, %v5536
    %v5538 = vsel %vm266, %v5528, %v5537
    %v5539 = vsel %vm268, %v5532, %v5538
    %v5541 = vsel %vm639, %v5539, -inf
    %5542 = vmax.xlane.f32.xlu0 %v5541
    %v5543 = vpop.xlane.xlu0 %5542
    %v5545 = vlaneseq
    %v5546 = vshrl.u32 %v5545, 7
    %v5547 = vsub.s32 0, %v5546
    %v5548 = vrot.slane %v5543, %v5547
    %v5549 = vlaneseq
    %v5550 = vshrl.u32 %v5549, 7
    %v5551 = vsub.s32 1, %v5550
    %v5552 = vrot.slane %v5543, %v5551
    %v5553 = vlaneseq
    %v5554 = vshrl.u32 %v5553, 7
    %v5555 = vsub.s32 2, %v5554
    %v5556 = vrot.slane %v5543, %v5555
    %v5557 = vlaneseq
    %v5558 = vshrl.u32 %v5557, 7
    %v5559 = vsub.s32 3, %v5558
    %v5560 = vrot.slane %v5543, %v5559
    %v5561 = vlaneseq
    %v5562 = vshrl.u32 %v5561, 7
    %v5563 = vsub.s32 4, %v5562
    %v5564 = vrot.slane %v5543, %v5563
    %v5565 = vlaneseq
    %v5566 = vshrl.u32 %v5565, 7
    %v5567 = vsub.s32 5, %v5566
    %v5568 = vrot.slane %v5543, %v5567
    %v5569 = vlaneseq
    %v5570 = vshrl.u32 %v5569, 7
    %v5571 = vsub.s32 6, %v5570
    %v5572 = vrot.slane %v5543, %v5571
    %v5573 = vlaneseq
    %v5574 = vshrl.u32 %v5573, 7
    %v5575 = vsub.s32 7, %v5574
    %v5576 = vrot.slane %v5543, %v5575
    %v5585 = vsub.f32 %v5485, %v5548
    %v5586 = vsub.f32 %v5486, %v5552
    %v5587 = vsub.f32 %v5487, %v5556
    %v5588 = vsub.f32 %v5488, %v5560
    %v5589 = vsub.f32 %v5489, %v5564
    %v5590 = vsub.f32 %v5490, %v5568
    %v5591 = vsub.f32 %v5491, %v5572
    %v5592 = vsub.f32 %v5492, %v5576
    %v5593 = vmul.f32 %v5585, 1.442695
    %v5594 = vpow.pop %v5593
    %v5595 = vmul.f32 %v5586, 1.442695
    %v5596 = vpow.pop %v5595
    %v5597 = vmul.f32 %v5587, 1.442695
    %v5598 = vpow.pop %v5597
    %v5599 = vmul.f32 %v5588, 1.442695
    %v5600 = vpow.pop %v5599
    %v5601 = vmul.f32 %v5589, 1.442695
    %v5602 = vpow.pop %v5601
    %v5603 = vmul.f32 %v5590, 1.442695
    %v5604 = vpow.pop %v5603
    %v5605 = vmul.f32 %v5591, 1.442695
    %v5606 = vpow.pop %v5605
    %v5607 = vmul.f32 %v5592, 1.442695
    %v5608 = vpow.pop %v5607
    %5617 = vset.pattern.permute.xlu0 0
    %5618 = vperm.xlu0 %5617, %v5594
    %v5619 = vpop.permute.xlu0 %5618
    %5620 = vset.pattern.permute.xlu0 0
    %5621 = vperm.xlu0 %5620, %v5596
    %v5622 = vpop.permute.xlu0 %5621
    %5623 = vset.pattern.permute.xlu0 0
    %5624 = vperm.xlu0 %5623, %v5598
    %v5625 = vpop.permute.xlu0 %5624
    %5626 = vset.pattern.permute.xlu0 0
    %5627 = vperm.xlu0 %5626, %v5600
    %v5628 = vpop.permute.xlu0 %5627
    %5629 = vset.pattern.permute.xlu0 0
    %5630 = vperm.xlu0 %5629, %v5602
    %v5631 = vpop.permute.xlu0 %5630
    %5632 = vset.pattern.permute.xlu0 0
    %5633 = vperm.xlu0 %5632, %v5604
    %v5634 = vpop.permute.xlu0 %5633
    %5635 = vset.pattern.permute.xlu0 0
    %5636 = vperm.xlu0 %5635, %v5606
    %v5637 = vpop.permute.xlu0 %5636
    %5638 = vset.pattern.permute.xlu0 0
    %5639 = vperm.xlu0 %5638, %v5608
    %v5640 = vpop.permute.xlu0 %5639
    %v5641 = vlaneseq
    %v5642 = vshrl.u32 %v5641, 7
    %v5643 = vsub.s32 %v598, %v5642
    %v5644 = vrot.slane %v5619, %v5643
    %v5645 = vlaneseq
    %v5646 = vshrl.u32 %v5645, 7
    %v5647 = vsub.s32 %v598, %v5646
    %v5648 = vrot.slane %v5622, %v5647
    %v5649 = vlaneseq
    %v5650 = vshrl.u32 %v5649, 7
    %v5651 = vsub.s32 %v598, %v5650
    %v5652 = vrot.slane %v5625, %v5651
    %v5653 = vlaneseq
    %v5654 = vshrl.u32 %v5653, 7
    %v5655 = vsub.s32 %v598, %v5654
    %v5656 = vrot.slane %v5628, %v5655
    %v5657 = vlaneseq
    %v5658 = vshrl.u32 %v5657, 7
    %v5659 = vsub.s32 %v598, %v5658
    %v5660 = vrot.slane %v5631, %v5659
    %v5661 = vlaneseq
    %v5662 = vshrl.u32 %v5661, 7
    %v5663 = vsub.s32 %v598, %v5662
    %v5664 = vrot.slane %v5634, %v5663
    %v5665 = vlaneseq
    %v5666 = vshrl.u32 %v5665, 7
    %v5667 = vsub.s32 %v598, %v5666
    %v5668 = vrot.slane %v5637, %v5667
    %v5669 = vlaneseq
    %v5670 = vshrl.u32 %v5669, 7
    %v5671 = vsub.s32 %v598, %v5670
    %v5672 = vrot.slane %v5640, %v5671
    %v5673 = vsel %vm256, %v5648, %v5644
    %v5674 = vsel %vm258, %v5652, %v5673
    %v5675 = vsel %vm260, %v5656, %v5674
    %v5676 = vsel %vm262, %v5660, %v5675
    %v5677 = vsel %vm264, %v5664, %v5676
    %v5678 = vsel %vm266, %v5668, %v5677
    %v5679 = vsel %vm268, %v5672, %v5678
    %v5681 = vsel %vm639, %v5679, 0.0
    %5682 = vadd.xlane.f32.xlu0 %v5681
    %v5683 = vpop.xlane.xlu0 %5682
    %v5684 = vrcp.pop %v5683
    %v5686 = vlaneseq
    %v5687 = vshrl.u32 %v5686, 7
    %v5688 = vsub.s32 0, %v5687
    %v5689 = vrot.slane %v5684, %v5688
    %v5690 = vlaneseq
    %v5691 = vshrl.u32 %v5690, 7
    %v5692 = vsub.s32 1, %v5691
    %v5693 = vrot.slane %v5684, %v5692
    %v5694 = vlaneseq
    %v5695 = vshrl.u32 %v5694, 7
    %v5696 = vsub.s32 2, %v5695
    %v5697 = vrot.slane %v5684, %v5696
    %v5698 = vlaneseq
    %v5699 = vshrl.u32 %v5698, 7
    %v5700 = vsub.s32 3, %v5699
    %v5701 = vrot.slane %v5684, %v5700
    %v5702 = vlaneseq
    %v5703 = vshrl.u32 %v5702, 7
    %v5704 = vsub.s32 4, %v5703
    %v5705 = vrot.slane %v5684, %v5704
    %v5706 = vlaneseq
    %v5707 = vshrl.u32 %v5706, 7
    %v5708 = vsub.s32 5, %v5707
    %v5709 = vrot.slane %v5684, %v5708
    %v5710 = vlaneseq
    %v5711 = vshrl.u32 %v5710, 7
    %v5712 = vsub.s32 6, %v5711
    %v5713 = vrot.slane %v5684, %v5712
    %v5714 = vlaneseq
    %v5715 = vshrl.u32 %v5714, 7
    %v5716 = vsub.s32 7, %v5715
    %v5717 = vrot.slane %v5684, %v5716
    %v5726 = vmul.f32 %v5594, %v5689
    %v5727 = vmul.f32 %v5596, %v5693
    %v5728 = vmul.f32 %v5598, %v5697
    %v5729 = vmul.f32 %v5600, %v5701
    %v5730 = vmul.f32 %v5602, %v5705
    %v5731 = vmul.f32 %v5604, %v5709
    %v5732 = vmul.f32 %v5606, %v5713
    %v5733 = vmul.f32 %v5608, %v5717
    %5735 = vset.pattern.permute.xlu0 0
    %5736 = vperm.xlu0 %5735, %v5726
    %v5737 = vpop.permute.xlu0 %5736
    %5740 = vset.pattern.permute.xlu0 0
    %5741 = vperm.xlu0 %5740, %v5727
    %v5742 = vpop.permute.xlu0 %5741
    %5745 = vset.pattern.permute.xlu0 0
    %5746 = vperm.xlu0 %5745, %v5728
    %v5747 = vpop.permute.xlu0 %5746
    %5750 = vset.pattern.permute.xlu0 0
    %5751 = vperm.xlu0 %5750, %v5729
    %v5752 = vpop.permute.xlu0 %5751
    %5755 = vset.pattern.permute.xlu0 0
    %5756 = vperm.xlu0 %5755, %v5730
    %v5757 = vpop.permute.xlu0 %5756
    %5760 = vset.pattern.permute.xlu0 0
    %5761 = vperm.xlu0 %5760, %v5731
    %v5762 = vpop.permute.xlu0 %5761
    %5765 = vset.pattern.permute.xlu0 0
    %5766 = vperm.xlu0 %5765, %v5732
    %v5767 = vpop.permute.xlu0 %5766
    %5770 = vset.pattern.permute.xlu0 0
    %5771 = vperm.xlu0 %5770, %v5733
    %v5772 = vpop.permute.xlu0 %5771
    %v5774 = vmul.f32 %v132, %v5737
    %v5775 = vmul.f32 %v133, %v5742
    %v5776 = vmul.f32 %v134, %v5747
    %v5777 = vmul.f32 %v135, %v5752
    %v5778 = vmul.f32 %v136, %v5757
    %v5779 = vmul.f32 %v137, %v5762
    %v5780 = vmul.f32 %v138, %v5767
    %v5781 = vmul.f32 %v139, %v5772
    %v5782 = vsel %vm171, %v5774, 0.0
    %v5783 = vrot.slane %v5782, 4
    %v5784 = vadd.f32 %v5782, %v5783
    %v5785 = vrot.slane %v5784, 2
    %v5786 = vadd.f32 %v5784, %v5785
    %v5787 = vrot.slane %v5786, 1
    %v5788 = vadd.f32 %v5786, %v5787
    %v5789 = vsel %vm171, %v5775, 0.0
    %v5790 = vrot.slane %v5789, 4
    %v5791 = vadd.f32 %v5789, %v5790
    %v5792 = vrot.slane %v5791, 2
    %v5793 = vadd.f32 %v5791, %v5792
    %v5794 = vrot.slane %v5793, 1
    %v5795 = vadd.f32 %v5793, %v5794
    %v5796 = vsel %vm171, %v5776, 0.0
    %v5797 = vrot.slane %v5796, 4
    %v5798 = vadd.f32 %v5796, %v5797
    %v5799 = vrot.slane %v5798, 2
    %v5800 = vadd.f32 %v5798, %v5799
    %v5801 = vrot.slane %v5800, 1
    %v5802 = vadd.f32 %v5800, %v5801
    %v5803 = vsel %vm171, %v5777, 0.0
    %v5804 = vrot.slane %v5803, 4
    %v5805 = vadd.f32 %v5803, %v5804
    %v5806 = vrot.slane %v5805, 2
    %v5807 = vadd.f32 %v5805, %v5806
    %v5808 = vrot.slane %v5807, 1
    %v5809 = vadd.f32 %v5807, %v5808
    %v5810 = vsel %vm171, %v5778, 0.0
    %v5811 = vrot.slane %v5810, 4
    %v5812 = vadd.f32 %v5810, %v5811
    %v5813 = vrot.slane %v5812, 2
    %v5814 = vadd.f32 %v5812, %v5813
    %v5815 = vrot.slane %v5814, 1
    %v5816 = vadd.f32 %v5814, %v5815
    %v5817 = vsel %vm171, %v5779, 0.0
    %v5818 = vrot.slane %v5817, 4
    %v5819 = vadd.f32 %v5817, %v5818
    %v5820 = vrot.slane %v5819, 2
    %v5821 = vadd.f32 %v5819, %v5820
    %v5822 = vrot.slane %v5821, 1
    %v5823 = vadd.f32 %v5821, %v5822
    %v5824 = vsel %vm171, %v5780, 0.0
    %v5825 = vrot.slane %v5824, 4
    %v5826 = vadd.f32 %v5824, %v5825
    %v5827 = vrot.slane %v5826, 2
    %v5828 = vadd.f32 %v5826, %v5827
    %v5829 = vrot.slane %v5828, 1
    %v5830 = vadd.f32 %v5828, %v5829
    %v5831 = vsel %vm171, %v5781, 0.0
    %v5832 = vrot.slane %v5831, 4
    %v5833 = vadd.f32 %v5831, %v5832
    %v5834 = vrot.slane %v5833, 2
    %v5835 = vadd.f32 %v5833, %v5834
    %v5836 = vrot.slane %v5835, 1
    %v5837 = vadd.f32 %v5835, %v5836
    %v5838 = vxor.u32 %v5343, 2147483648
    %v5839 = vmul.f32 %v5838, 1.442695
    %v5840 = vpow.pop %v5839
    %v5841 = vadd.f32 %v5840, 1.0
    %v5842 = vrcp.pop %v5841
    %v5843 = vmul.f32 1.0, %v5842
    %v5852 = vsel %vm256, %v5795, %v5788
    %v5853 = vsel %vm258, %v5802, %v5852
    %v5854 = vsel %vm260, %v5809, %v5853
    %v5855 = vsel %vm262, %v5816, %v5854
    %v5856 = vsel %vm264, %v5823, %v5855
    %v5857 = vsel %vm266, %v5830, %v5856
    %v5858 = vsel %vm268, %v5837, %v5857
    %5859 = vrot.lane.b32.xlu0 %v5858, 16
    %v5860 = vpop.permute.xlu0 %5859
    %v5862 = vmul.f32 %v5843, %v5860
    %s5863 = scalar_lea.vmem [#allocation8], 48
    %v5864 = vld [vmem:[%s5863] sm:$0xff]
    %v5865 = vsel %vm547, %v5864, %v5862
    %v5867 = vsel %vm970, %v5865, 0
    %5869 = vmatprep.subr.mxu0 0.0
    %5870 = vmatpush1.msra.mxu0 %v157
    %5871 = vmatprep.subr.mxu0 0.0
    %5872 = vmatpush1.msra.mxu0 %v158
    %5873 = vmatprep.subr.mxu0 0.0
    %5874 = vmatpush1.msra.mxu0 %v159
    %5875 = vmatprep.subr.mxu0 0.0
    %5876 = vmatpush1.msra.mxu0 %v160
    %5877 = vmatprep.subr.mxu0 0.0
    %5878 = vmatpush1.msra.mxu0 %v161
    %5879 = vmatprep.subr.mxu0 0.0
    %5880 = vmatpush1.msra.mxu0 %v162
    %5881 = vmatprep.subr.mxu0 0.0
    %5882 = vmatpush1.msra.mxu0 0.0
    %5883 = vmatprep.subr.mxu0 0.0
    %5884 = vmatpush1.msra.mxu0 0.0
    %5885 = vmatprep.subr.mxu0 0.0
    %5886 = vmatpush1.msra.mxu0 0.0
    %5887 = vmatprep.subr.mxu0 0.0
    %5888 = vmatpush1.msra.mxu0 0.0
    %5889 = vmatprep.subr.mxu0 0.0
    %5890 = vmatpush1.msra.mxu0 0.0
    %5891 = vmatprep.subr.mxu0 0.0
    %5892 = vmatpush1.msra.mxu0 0.0
    %5893 = vmatprep.subr.mxu0 0.0
    %5894 = vmatpush1.msra.mxu0 0.0
    %5895 = vmatprep.subr.mxu0 0.0
    %5896 = vmatpush1.msra.mxu0 0.0
    %5897 = vmatprep.subr.mxu0 0.0
    %5898 = vmatpush1.msra.mxu0 0.0
    %5899 = vmatprep.subr.mxu0 0.0
    %5900 = vmatpush1.msra.mxu0 0.0
    %5901 = vmatprep.subr.mxu0 0.0
    %5902 = vmatpush1.msra.mxu0 0.0
    %5903 = vmatprep.subr.mxu0 0.0
    %5904 = vmatpush1.msra.mxu0 0.0
    %5905 = vmatprep.subr.mxu0 0.0
    %5906 = vmatpush1.msra.mxu0 0.0
    %5907 = vmatprep.subr.mxu0 0.0
    %5908 = vmatpush1.msra.mxu0 0.0
    %5909 = vmatprep.subr.mxu0 0.0
    %5910 = vmatpush1.msra.mxu0 0.0
    %5911 = vmatprep.subr.mxu0 0.0
    %5912 = vmatpush1.msra.mxu0 0.0
    %5913 = vmatprep.subr.mxu0 0.0
    %5914 = vmatpush1.msra.mxu0 0.0
    %5915 = vmatprep.subr.mxu0 0.0
    %5916 = vmatpush1.msra.mxu0 0.0
    %5917 = vmatprep.subr.mxu0 0.0
    %5918 = vmatpush1.msra.mxu0 0.0
    %5919 = vmatprep.subr.mxu0 0.0
    %5920 = vmatpush1.msra.mxu0 0.0
    %5921 = vmatprep.subr.mxu0 0.0
    %5922 = vmatpush1.msra.mxu0 0.0
    %5923 = vmatprep.subr.mxu0 0.0
    %5924 = vmatpush1.msra.mxu0 0.0
    %5925 = vmatprep.subr.mxu0 0.0
    %5926 = vmatpush1.msra.mxu0 0.0
    %5927 = vmatprep.subr.mxu0 0.0
    %5928 = vmatpush1.msra.mxu0 0.0
    %5929 = vmatprep.subr.mxu0 0.0
    %5930 = vmatpush1.msra.mxu0 0.0
    %5931 = vmatprep.subr.mxu0 0.0
    %5932 = vmatpush1.msra.mxu0 0.0
    %5933 = vmatprep.mubr.f32.mxu0 0.0
    %5934 = vmatmul.mubr.f32.gmra.mrb[0].mxu0 %v5867
    %v5935 = vpop.f32.mrb[0].mxu0
    %v5936 = vadd.f32 %v968, %v5935
    %v5937 = vpop.f32.mrb[0].mxu0
    %5938 = vdwg.mxu0
    %5940 = vrot.lane.b32.xlu0 %v5343, 80
    %v5941 = vpop.permute.xlu0 %5940
    %5942 = vrot.lane.b32.xlu0 %v5345, 80
    %v5943 = vpop.permute.xlu0 %5942
    %v5944 = vsel %vm1049, %v5941, %v5943
    %v5946 = vadd.f32 %v5936, %v5944
    %v5947 = vxor.u32 %v5946, 2147483648
    %v5948 = vmul.f32 %v5947, 1.442695
    %v5949 = vpow.pop %v5948
    %v5950 = vadd.f32 %v5949, 1.0
    %v5951 = vrcp.pop %v5950
    %v5952 = vmul.f32 1.0, %v5951
    %v5953 = vtanh.pop %v5946
    %v5954 = vmul.f32 %v5952, %v5149
    %5956 = vrot.lane.b32.xlu0 %v5953, 64
    %v5957 = vpop.permute.xlu0 %5956
    %v5959 = vmul.f32 %v5952, %v5957
    %5961 = vrot.lane.b32.xlu0 %v5959, 32
    %v5962 = vpop.permute.xlu0 %5961
    %v5964 = vadd.f32 %v5954, %v5962
    %v5965 = vtanh.pop %v5964
    %5967 = vrot.lane.b32.xlu0 %v5965, 64
    %v5968 = vpop.permute.xlu0 %5967
    %v5970 = vmul.f32 %v5952, %v5968
    %5972 = vrot.lane.b32.xlu0 %v5970, 32
    %v5973 = vpop.permute.xlu0 %5972
    %v5974 = vsel %vm171, %v5973, 0
    %5976 = vmatprep.subr.mxu0 0.0
    %5977 = vmatpush1.msra.mxu0 %v166
    %5978 = vmatprep.subr.mxu0 0.0
    %5979 = vmatpush1.msra.mxu0 %v167
    %5980 = vmatprep.subr.mxu0 0.0
    %5981 = vmatpush1.msra.mxu0 %v168
    %5982 = vmatprep.subr.mxu0 0.0
    %5983 = vmatpush1.msra.mxu0 %v169
    %5984 = vmatprep.subr.mxu0 0.0
    %5985 = vmatpush1.msra.mxu0 0.0
    %5986 = vmatprep.subr.mxu0 0.0
    %5987 = vmatpush1.msra.mxu0 0.0
    %5988 = vmatprep.subr.mxu0 0.0
    %5989 = vmatpush1.msra.mxu0 0.0
    %5990 = vmatprep.subr.mxu0 0.0
    %5991 = vmatpush1.msra.mxu0 0.0
    %5992 = vmatprep.subr.mxu0 0.0
    %5993 = vmatpush1.msra.mxu0 0.0
    %5994 = vmatprep.subr.mxu0 0.0
    %5995 = vmatpush1.msra.mxu0 0.0
    %5996 = vmatprep.subr.mxu0 0.0
    %5997 = vmatpush1.msra.mxu0 0.0
    %5998 = vmatprep.subr.mxu0 0.0
    %5999 = vmatpush1.msra.mxu0 0.0
    %6000 = vmatprep.subr.mxu0 0.0
    %6001 = vmatpush1.msra.mxu0 0.0
    %6002 = vmatprep.subr.mxu0 0.0
    %6003 = vmatpush1.msra.mxu0 0.0
    %6004 = vmatprep.subr.mxu0 0.0
    %6005 = vmatpush1.msra.mxu0 0.0
    %6006 = vmatprep.subr.mxu0 0.0
    %6007 = vmatpush1.msra.mxu0 0.0
    %6008 = vmatprep.subr.mxu0 0.0
    %6009 = vmatpush1.msra.mxu0 0.0
    %6010 = vmatprep.subr.mxu0 0.0
    %6011 = vmatpush1.msra.mxu0 0.0
    %6012 = vmatprep.subr.mxu0 0.0
    %6013 = vmatpush1.msra.mxu0 0.0
    %6014 = vmatprep.subr.mxu0 0.0
    %6015 = vmatpush1.msra.mxu0 0.0
    %6016 = vmatprep.subr.mxu0 0.0
    %6017 = vmatpush1.msra.mxu0 0.0
    %6018 = vmatprep.subr.mxu0 0.0
    %6019 = vmatpush1.msra.mxu0 0.0
    %6020 = vmatprep.subr.mxu0 0.0
    %6021 = vmatpush1.msra.mxu0 0.0
    %6022 = vmatprep.subr.mxu0 0.0
    %6023 = vmatpush1.msra.mxu0 0.0
    %6024 = vmatprep.subr.mxu0 0.0
    %6025 = vmatpush1.msra.mxu0 0.0
    %6026 = vmatprep.subr.mxu0 0.0
    %6027 = vmatpush1.msra.mxu0 0.0
    %6028 = vmatprep.subr.mxu0 0.0
    %6029 = vmatpush1.msra.mxu0 0.0
    %6030 = vmatprep.subr.mxu0 0.0
    %6031 = vmatpush1.msra.mxu0 0.0
    %6032 = vmatprep.subr.mxu0 0.0
    %6033 = vmatpush1.msra.mxu0 0.0
    %6034 = vmatprep.subr.mxu0 0.0
    %6035 = vmatpush1.msra.mxu0 0.0
    %6036 = vmatprep.subr.mxu0 0.0
    %6037 = vmatpush1.msra.mxu0 0.0
    %6038 = vmatprep.subr.mxu0 0.0
    %6039 = vmatpush1.msra.mxu0 0.0
    %6040 = vmatprep.mubr.f32.mxu0 0.0
    %6041 = vmatmul.mubr.f32.gmra.mrb[0].mxu0 %v5974
    %v6042 = vpop.f32.mrb[0].mxu0
    %v6043 = vadd.f32 %v1081, %v6042
    %v6044 = vpop.f32.mrb[0].mxu0
    %6045 = vdwg.mxu0
    %s6046 = scalar_lea.vmem [#allocation14], 48
    %6047 = vst [vmem:[%s6046] sm:$0xff] %v6043
    %v6048 = vlaneseq
    %v6049 = vshrl.u32 %v6048, 7
    %v6050 = vsub.s32 %v598, %v6049
    %v6051 = vrot.slane %v5737, %v6050
    %v6052 = vlaneseq
    %v6053 = vshrl.u32 %v6052, 7
    %v6054 = vsub.s32 %v598, %v6053
    %v6055 = vrot.slane %v5742, %v6054
    %v6056 = vlaneseq
    %v6057 = vshrl.u32 %v6056, 7
    %v6058 = vsub.s32 %v598, %v6057
    %v6059 = vrot.slane %v5747, %v6058
    %v6060 = vlaneseq
    %v6061 = vshrl.u32 %v6060, 7
    %v6062 = vsub.s32 %v598, %v6061
    %v6063 = vrot.slane %v5752, %v6062
    %v6064 = vlaneseq
    %v6065 = vshrl.u32 %v6064, 7
    %v6066 = vsub.s32 %v598, %v6065
    %v6067 = vrot.slane %v5757, %v6066
    %v6068 = vlaneseq
    %v6069 = vshrl.u32 %v6068, 7
    %v6070 = vsub.s32 %v598, %v6069
    %v6071 = vrot.slane %v5762, %v6070
    %v6072 = vlaneseq
    %v6073 = vshrl.u32 %v6072, 7
    %v6074 = vsub.s32 %v598, %v6073
    %v6075 = vrot.slane %v5767, %v6074
    %v6076 = vlaneseq
    %v6077 = vshrl.u32 %v6076, 7
    %v6078 = vsub.s32 %v598, %v6077
    %v6079 = vrot.slane %v5772, %v6078
    %v6080 = vsel %vm256, %v6055, %v6051
    %v6081 = vsel %vm258, %v6059, %v6080
    %v6082 = vsel %vm260, %v6063, %v6081
    %v6083 = vsel %vm262, %v6067, %v6082
    %v6084 = vsel %vm264, %v6071, %v6083
    %v6085 = vsel %vm266, %v6075, %v6084
    %v6086 = vsel %vm268, %v6079, %v6085
    %v6088 = vsel %vm639, %v6086, 0.0
    %s6089 = scalar_lea.vmem [#allocation15], 48
    %6090 = vst [vmem:[%s6089] sm:$0xff] %v6088
    %6091 = vmatprep.subr.mxu0 %v149
    %6092 = vmatpush1.msra.mxu0 %v148
    %6093 = vmatprep.subr.mxu0 %v151
    %6094 = vmatpush1.msra.mxu0 %v150
    %6095 = vmatprep.subr.mxu0 %v153
    %6096 = vmatpush1.msra.mxu0 %v152
    %6097 = vmatprep.subr.mxu0 %v155
    %6098 = vmatpush1.msra.mxu0 %v154
    %6099 = vmatprep.subr.mxu0 0.0
    %6100 = vmatpush1.msra.mxu0 0.0
    %6101 = vmatprep.subr.mxu0 0.0
    %6102 = vmatpush1.msra.mxu0 0.0
    %6103 = vmatprep.subr.mxu0 0.0
    %6104 = vmatpush1.msra.mxu0 0.0
    %6105 = vmatprep.subr.mxu0 0.0
    %6106 = vmatpush1.msra.mxu0 0.0
    %6107 = vmatprep.subr.mxu0 0.0
    %6108 = vmatpush1.msra.mxu0 0.0
    %6109 = vmatprep.subr.mxu0 0.0
    %6110 = vmatpush1.msra.mxu0 0.0
    %6111 = vmatprep.subr.mxu0 0.0
    %6112 = vmatpush1.msra.mxu0 0.0
    %6113 = vmatprep.subr.mxu0 0.0
    %6114 = vmatpush1.msra.mxu0 0.0
    %6115 = vmatprep.subr.mxu0 0.0
    %6116 = vmatpush1.msra.mxu0 0.0
    %6117 = vmatprep.subr.mxu0 0.0
    %6118 = vmatpush1.msra.mxu0 0.0
    %6119 = vmatprep.subr.mxu0 0.0
    %6120 = vmatpush1.msra.mxu0 0.0
    %6121 = vmatprep.subr.mxu0 0.0
    %6122 = vmatpush1.msra.mxu0 0.0
    %6123 = vmatprep.subr.mxu0 0.0
    %6124 = vmatpush1.msra.mxu0 0.0
    %6125 = vmatprep.subr.mxu0 0.0
    %6126 = vmatpush1.msra.mxu0 0.0
    %6127 = vmatprep.subr.mxu0 0.0
    %6128 = vmatpush1.msra.mxu0 0.0
    %6129 = vmatprep.subr.mxu0 0.0
    %6130 = vmatpush1.msra.mxu0 0.0
    %6131 = vmatprep.subr.mxu0 0.0
    %6132 = vmatpush1.msra.mxu0 0.0
    %6133 = vmatprep.subr.mxu0 0.0
    %6134 = vmatpush1.msra.mxu0 0.0
    %6135 = vmatprep.subr.mxu0 0.0
    %6136 = vmatpush1.msra.mxu0 0.0
    %6137 = vmatprep.subr.mxu0 0.0
    %6138 = vmatpush1.msra.mxu0 0.0
    %6139 = vmatprep.subr.mxu0 0.0
    %6140 = vmatpush1.msra.mxu0 0.0
    %6141 = vmatprep.subr.mxu0 0.0
    %6142 = vmatpush1.msra.mxu0 0.0
    %6143 = vmatprep.subr.mxu0 0.0
    %6144 = vmatpush1.msra.mxu0 0.0
    %6145 = vmatprep.subr.mxu0 0.0
    %6146 = vmatpush1.msra.mxu0 0.0
    %6147 = vmatprep.subr.mxu0 0.0
    %6148 = vmatpush1.msra.mxu0 0.0
    %6149 = vmatprep.subr.mxu0 0.0
    %6150 = vmatpush1.msra.mxu0 0.0
    %6151 = vmatprep.subr.mxu0 0.0
    %6152 = vmatpush1.msra.mxu0 0.0
    %6153 = vmatprep.subr.mxu0 0.0
    %6154 = vmatpush1.msra.mxu0 0.0
    %6155 = vmatprep.mubr.f32.mxu0 0.0
    %6156 = vmatmul.mubr.f32.gmra.mrb[0].mxu0 %v5974
    %v6157 = vpop.f32.mrb[0].mxu0
    %v6158 = vadd.f32 %v346, %v6157
    %v6159 = vpop.f32.mrb[0].mxu0
    %v6160 = vadd.f32 %v350, %v6159
    %6161 = vdwg.mxu0
    %v6163 = vcombine.high %v6158, %v6158
    %v6165 = vunpack.c.l.s4 1966171168
    %v6166 = vunpack.c.0.s8 %v6165
    %v6167 = vlaneseq
    %v6168 = vshrl.u32 %v6167, 7
    %v6169 = vsub.s32 %v6166, %v6168
    %v6170 = vrot.slane %v6158, %v6169
    %v6172 = vunpack.c.l.s4 1966171168
    %v6173 = vunpack.c.0.s8 %v6172
    %v6174 = vlaneseq
    %v6175 = vshrl.u32 %v6174, 7
    %v6176 = vsub.s32 %v6173, %v6175
    %v6177 = vrot.slane %v6163, %v6176
    %v6178 = vcombine.high %v6170, %v6170
    %v6179 = vcombine.high %v6177, %v6177
    %v6181 = vunpack.c.l.s4 1966171168
    %v6182 = vunpack.c.0.s8 %v6181
    %v6183 = vlaneseq
    %v6184 = vshrl.u32 %v6183, 7
    %v6185 = vsub.s32 %v6182, %v6184
    %v6186 = vrot.slane %v6170, %v6185
    %v6188 = vunpack.c.l.s4 1966171168
    %v6189 = vunpack.c.0.s8 %v6188
    %v6190 = vlaneseq
    %v6191 = vshrl.u32 %v6190, 7
    %v6192 = vsub.s32 %v6189, %v6191
    %v6193 = vrot.slane %v6177, %v6192
    %v6195 = vunpack.c.l.s4 1966171168
    %v6196 = vunpack.c.0.s8 %v6195
    %v6197 = vlaneseq
    %v6198 = vshrl.u32 %v6197, 7
    %v6199 = vsub.s32 %v6196, %v6198
    %v6200 = vrot.slane %v6178, %v6199
    %v6202 = vunpack.c.l.s4 1966171168
    %v6203 = vunpack.c.0.s8 %v6202
    %v6204 = vlaneseq
    %v6205 = vshrl.u32 %v6204, 7
    %v6206 = vsub.s32 %v6203, %v6205
    %v6207 = vrot.slane %v6179, %v6206
    %v6208 = vcombine.high %v6186, %v6186
    %v6209 = vcombine.high %v6193, %v6193
    %v6210 = vcombine.high %v6200, %v6200
    %v6211 = vcombine.high %v6207, %v6207
    %v6212 = vlaneseq
    %v6213 = vshrl.u32 %v6212, 7
    %v6214 = vsub.s32 0, %v6213
    %v6215 = vrot.slane %v6186, %v6214
    %v6216 = vlaneseq
    %v6217 = vshrl.u32 %v6216, 7
    %v6218 = vsub.s32 0, %v6217
    %v6219 = vrot.slane %v6200, %v6218
    %v6220 = vlaneseq
    %v6221 = vshrl.u32 %v6220, 7
    %v6222 = vsub.s32 0, %v6221
    %v6223 = vrot.slane %v6208, %v6222
    %v6224 = vlaneseq
    %v6225 = vshrl.u32 %v6224, 7
    %v6226 = vsub.s32 0, %v6225
    %v6227 = vrot.slane %v6210, %v6226
    %v6228 = vlaneseq
    %v6229 = vshrl.u32 %v6228, 7
    %v6230 = vsub.s32 0, %v6229
    %v6231 = vrot.slane %v6193, %v6230
    %v6232 = vlaneseq
    %v6233 = vshrl.u32 %v6232, 7
    %v6234 = vsub.s32 0, %v6233
    %v6235 = vrot.slane %v6207, %v6234
    %v6236 = vlaneseq
    %v6237 = vshrl.u32 %v6236, 7
    %v6238 = vsub.s32 0, %v6237
    %v6239 = vrot.slane %v6209, %v6238
    %v6240 = vlaneseq
    %v6241 = vshrl.u32 %v6240, 7
    %v6242 = vsub.s32 0, %v6241
    %v6243 = vrot.slane %v6211, %v6242
    %v6252 = vadd.f32 %v140, %v6215
    %v6253 = vadd.f32 %v141, %v6219
    %v6254 = vadd.f32 %v142, %v6223
    %v6255 = vadd.f32 %v143, %v6227
    %v6256 = vadd.f32 %v144, %v6231
    %v6257 = vadd.f32 %v145, %v6235
    %v6258 = vadd.f32 %v146, %v6239
    %v6259 = vadd.f32 %v147, %v6243
    %v6260 = vmax.f32 %v6252, 0.0
    %v6261 = vmax.f32 %v6253, 0.0
    %v6262 = vmax.f32 %v6254, 0.0
    %v6263 = vmax.f32 %v6255, 0.0
    %v6264 = vmax.f32 %v6256, 0.0
    %v6265 = vmax.f32 %v6257, 0.0
    %v6266 = vmax.f32 %v6258, 0.0
    %v6267 = vmax.f32 %v6259, 0.0
    %v6268 = vmul.f32 %v6260, %v537
    %v6269 = vmul.f32 %v6261, %v537
    %v6270 = vmul.f32 %v6262, %v537
    %v6271 = vmul.f32 %v6263, %v537
    %v6272 = vmul.f32 %v6264, %v537
    %v6273 = vmul.f32 %v6265, %v537
    %v6274 = vmul.f32 %v6266, %v537
    %v6275 = vmul.f32 %v6267, %v537
    %v6276 = vsel %vm547, %v6268, 0.0
    %6277 = vadd.xlane.f32.xlu0 %v6276
    %v6278 = vpop.xlane.xlu0 %6277
    %v6279 = vsel %vm547, %v6269, 0.0
    %6280 = vadd.xlane.f32.xlu0 %v6279
    %v6281 = vpop.xlane.xlu0 %6280
    %v6282 = vsel %vm547, %v6270, 0.0
    %6283 = vadd.xlane.f32.xlu0 %v6282
    %v6284 = vpop.xlane.xlu0 %6283
    %v6285 = vsel %vm547, %v6271, 0.0
    %6286 = vadd.xlane.f32.xlu0 %v6285
    %v6287 = vpop.xlane.xlu0 %6286
    %v6288 = vsel %vm547, %v6272, 0.0
    %6289 = vadd.xlane.f32.xlu0 %v6288
    %v6290 = vpop.xlane.xlu0 %6289
    %v6291 = vsel %vm547, %v6273, 0.0
    %6292 = vadd.xlane.f32.xlu0 %v6291
    %v6293 = vpop.xlane.xlu0 %6292
    %v6294 = vsel %vm547, %v6274, 0.0
    %6295 = vadd.xlane.f32.xlu0 %v6294
    %v6296 = vpop.xlane.xlu0 %6295
    %v6297 = vsel %vm547, %v6275, 0.0
    %6298 = vadd.xlane.f32.xlu0 %v6297
    %v6299 = vpop.xlane.xlu0 %6298
    %v6300 = vadd.f32 %v6278, %v579
    %v6301 = vadd.f32 %v6281, %v579
    %v6302 = vadd.f32 %v6284, %v579
    %v6303 = vadd.f32 %v6287, %v579
    %v6304 = vadd.f32 %v6290, %v579
    %v6305 = vadd.f32 %v6293, %v579
    %v6306 = vadd.f32 %v6296, %v579
    %v6307 = vadd.f32 %v6299, %v579
    %v6316 = vlaneseq
    %v6317 = vshrl.u32 %v6316, 7
    %v6318 = vsub.s32 %v598, %v6317
    %v6319 = vrot.slane %v6300, %v6318
    %v6320 = vlaneseq
    %v6321 = vshrl.u32 %v6320, 7
    %v6322 = vsub.s32 %v598, %v6321
    %v6323 = vrot.slane %v6301, %v6322
    %v6324 = vlaneseq
    %v6325 = vshrl.u32 %v6324, 7
    %v6326 = vsub.s32 %v598, %v6325
    %v6327 = vrot.slane %v6302, %v6326
    %v6328 = vlaneseq
    %v6329 = vshrl.u32 %v6328, 7
    %v6330 = vsub.s32 %v598, %v6329
    %v6331 = vrot.slane %v6303, %v6330
    %v6332 = vlaneseq
    %v6333 = vshrl.u32 %v6332, 7
    %v6334 = vsub.s32 %v598, %v6333
    %v6335 = vrot.slane %v6304, %v6334
    %v6336 = vlaneseq
    %v6337 = vshrl.u32 %v6336, 7
    %v6338 = vsub.s32 %v598, %v6337
    %v6339 = vrot.slane %v6305, %v6338
    %v6340 = vlaneseq
    %v6341 = vshrl.u32 %v6340, 7
    %v6342 = vsub.s32 %v598, %v6341
    %v6343 = vrot.slane %v6306, %v6342
    %v6344 = vlaneseq
    %v6345 = vshrl.u32 %v6344, 7
    %v6346 = vsub.s32 %v598, %v6345
    %v6347 = vrot.slane %v6307, %v6346
    %v6348 = vsel %vm256, %v6323, %v6319
    %v6349 = vsel %vm258, %v6327, %v6348
    %v6350 = vsel %vm260, %v6331, %v6349
    %v6351 = vsel %vm262, %v6335, %v6350
    %v6352 = vsel %vm264, %v6339, %v6351
    %v6353 = vsel %vm266, %v6343, %v6352
    %v6354 = vsel %vm268, %v6347, %v6353
    %v6356 = vsel %vm639, %v6354, -inf
    %6357 = vmax.xlane.f32.xlu0 %v6356
    %v6358 = vpop.xlane.xlu0 %6357
    %v6360 = vlaneseq
    %v6361 = vshrl.u32 %v6360, 7
    %v6362 = vsub.s32 0, %v6361
    %v6363 = vrot.slane %v6358, %v6362
    %v6364 = vlaneseq
    %v6365 = vshrl.u32 %v6364, 7
    %v6366 = vsub.s32 1, %v6365
    %v6367 = vrot.slane %v6358, %v6366
    %v6368 = vlaneseq
    %v6369 = vshrl.u32 %v6368, 7
    %v6370 = vsub.s32 2, %v6369
    %v6371 = vrot.slane %v6358, %v6370
    %v6372 = vlaneseq
    %v6373 = vshrl.u32 %v6372, 7
    %v6374 = vsub.s32 3, %v6373
    %v6375 = vrot.slane %v6358, %v6374
    %v6376 = vlaneseq
    %v6377 = vshrl.u32 %v6376, 7
    %v6378 = vsub.s32 4, %v6377
    %v6379 = vrot.slane %v6358, %v6378
    %v6380 = vlaneseq
    %v6381 = vshrl.u32 %v6380, 7
    %v6382 = vsub.s32 5, %v6381
    %v6383 = vrot.slane %v6358, %v6382
    %v6384 = vlaneseq
    %v6385 = vshrl.u32 %v6384, 7
    %v6386 = vsub.s32 6, %v6385
    %v6387 = vrot.slane %v6358, %v6386
    %v6388 = vlaneseq
    %v6389 = vshrl.u32 %v6388, 7
    %v6390 = vsub.s32 7, %v6389
    %v6391 = vrot.slane %v6358, %v6390
    %v6400 = vsub.f32 %v6300, %v6363
    %v6401 = vsub.f32 %v6301, %v6367
    %v6402 = vsub.f32 %v6302, %v6371
    %v6403 = vsub.f32 %v6303, %v6375
    %v6404 = vsub.f32 %v6304, %v6379
    %v6405 = vsub.f32 %v6305, %v6383
    %v6406 = vsub.f32 %v6306, %v6387
    %v6407 = vsub.f32 %v6307, %v6391
    %v6408 = vmul.f32 %v6400, 1.442695
    %v6409 = vpow.pop %v6408
    %v6410 = vmul.f32 %v6401, 1.442695
    %v6411 = vpow.pop %v6410
    %v6412 = vmul.f32 %v6402, 1.442695
    %v6413 = vpow.pop %v6412
    %v6414 = vmul.f32 %v6403, 1.442695
    %v6415 = vpow.pop %v6414
    %v6416 = vmul.f32 %v6404, 1.442695
    %v6417 = vpow.pop %v6416
    %v6418 = vmul.f32 %v6405, 1.442695
    %v6419 = vpow.pop %v6418
    %v6420 = vmul.f32 %v6406, 1.442695
    %v6421 = vpow.pop %v6420
    %v6422 = vmul.f32 %v6407, 1.442695
    %v6423 = vpow.pop %v6422
    %6432 = vset.pattern.permute.xlu0 0
    %6433 = vperm.xlu0 %6432, %v6409
    %v6434 = vpop.permute.xlu0 %6433
    %6435 = vset.pattern.permute.xlu0 0
    %6436 = vperm.xlu0 %6435, %v6411
    %v6437 = vpop.permute.xlu0 %6436
    %6438 = vset.pattern.permute.xlu0 0
    %6439 = vperm.xlu0 %6438, %v6413
    %v6440 = vpop.permute.xlu0 %6439
    %6441 = vset.pattern.permute.xlu0 0
    %6442 = vperm.xlu0 %6441, %v6415
    %v6443 = vpop.permute.xlu0 %6442
    %6444 = vset.pattern.permute.xlu0 0
    %6445 = vperm.xlu0 %6444, %v6417
    %v6446 = vpop.permute.xlu0 %6445
    %6447 = vset.pattern.permute.xlu0 0
    %6448 = vperm.xlu0 %6447, %v6419
    %v6449 = vpop.permute.xlu0 %6448
    %6450 = vset.pattern.permute.xlu0 0
    %6451 = vperm.xlu0 %6450, %v6421
    %v6452 = vpop.permute.xlu0 %6451
    %6453 = vset.pattern.permute.xlu0 0
    %6454 = vperm.xlu0 %6453, %v6423
    %v6455 = vpop.permute.xlu0 %6454
    %v6456 = vlaneseq
    %v6457 = vshrl.u32 %v6456, 7
    %v6458 = vsub.s32 %v598, %v6457
    %v6459 = vrot.slane %v6434, %v6458
    %v6460 = vlaneseq
    %v6461 = vshrl.u32 %v6460, 7
    %v6462 = vsub.s32 %v598, %v6461
    %v6463 = vrot.slane %v6437, %v6462
    %v6464 = vlaneseq
    %v6465 = vshrl.u32 %v6464, 7
    %v6466 = vsub.s32 %v598, %v6465
    %v6467 = vrot.slane %v6440, %v6466
    %v6468 = vlaneseq
    %v6469 = vshrl.u32 %v6468, 7
    %v6470 = vsub.s32 %v598, %v6469
    %v6471 = vrot.slane %v6443, %v6470
    %v6472 = vlaneseq
    %v6473 = vshrl.u32 %v6472, 7
    %v6474 = vsub.s32 %v598, %v6473
    %v6475 = vrot.slane %v6446, %v6474
    %v6476 = vlaneseq
    %v6477 = vshrl.u32 %v6476, 7
    %v6478 = vsub.s32 %v598, %v6477
    %v6479 = vrot.slane %v6449, %v6478
    %v6480 = vlaneseq
    %v6481 = vshrl.u32 %v6480, 7
    %v6482 = vsub.s32 %v598, %v6481
    %v6483 = vrot.slane %v6452, %v6482
    %v6484 = vlaneseq
    %v6485 = vshrl.u32 %v6484, 7
    %v6486 = vsub.s32 %v598, %v6485
    %v6487 = vrot.slane %v6455, %v6486
    %v6488 = vsel %vm256, %v6463, %v6459
    %v6489 = vsel %vm258, %v6467, %v6488
    %v6490 = vsel %vm260, %v6471, %v6489
    %v6491 = vsel %vm262, %v6475, %v6490
    %v6492 = vsel %vm264, %v6479, %v6491
    %v6493 = vsel %vm266, %v6483, %v6492
    %v6494 = vsel %vm268, %v6487, %v6493
    %v6496 = vsel %vm639, %v6494, 0.0
    %6497 = vadd.xlane.f32.xlu0 %v6496
    %v6498 = vpop.xlane.xlu0 %6497
    %v6499 = vrcp.pop %v6498
    %v6501 = vlaneseq
    %v6502 = vshrl.u32 %v6501, 7
    %v6503 = vsub.s32 0, %v6502
    %v6504 = vrot.slane %v6499, %v6503
    %v6505 = vlaneseq
    %v6506 = vshrl.u32 %v6505, 7
    %v6507 = vsub.s32 1, %v6506
    %v6508 = vrot.slane %v6499, %v6507
    %v6509 = vlaneseq
    %v6510 = vshrl.u32 %v6509, 7
    %v6511 = vsub.s32 2, %v6510
    %v6512 = vrot.slane %v6499, %v6511
    %v6513 = vlaneseq
    %v6514 = vshrl.u32 %v6513, 7
    %v6515 = vsub.s32 3, %v6514
    %v6516 = vrot.slane %v6499, %v6515
    %v6517 = vlaneseq
    %v6518 = vshrl.u32 %v6517, 7
    %v6519 = vsub.s32 4, %v6518
    %v6520 = vrot.slane %v6499, %v6519
    %v6521 = vlaneseq
    %v6522 = vshrl.u32 %v6521, 7
    %v6523 = vsub.s32 5, %v6522
    %v6524 = vrot.slane %v6499, %v6523
    %v6525 = vlaneseq
    %v6526 = vshrl.u32 %v6525, 7
    %v6527 = vsub.s32 6, %v6526
    %v6528 = vrot.slane %v6499, %v6527
    %v6529 = vlaneseq
    %v6530 = vshrl.u32 %v6529, 7
    %v6531 = vsub.s32 7, %v6530
    %v6532 = vrot.slane %v6499, %v6531
    %v6541 = vmul.f32 %v6409, %v6504
    %v6542 = vmul.f32 %v6411, %v6508
    %v6543 = vmul.f32 %v6413, %v6512
    %v6544 = vmul.f32 %v6415, %v6516
    %v6545 = vmul.f32 %v6417, %v6520
    %v6546 = vmul.f32 %v6419, %v6524
    %v6547 = vmul.f32 %v6421, %v6528
    %v6548 = vmul.f32 %v6423, %v6532
    %6550 = vset.pattern.permute.xlu0 0
    %6551 = vperm.xlu0 %6550, %v6541
    %v6552 = vpop.permute.xlu0 %6551
    %6555 = vset.pattern.permute.xlu0 0
    %6556 = vperm.xlu0 %6555, %v6542
    %v6557 = vpop.permute.xlu0 %6556
    %6560 = vset.pattern.permute.xlu0 0
    %6561 = vperm.xlu0 %6560, %v6543
    %v6562 = vpop.permute.xlu0 %6561
    %6565 = vset.pattern.permute.xlu0 0
    %6566 = vperm.xlu0 %6565, %v6544
    %v6567 = vpop.permute.xlu0 %6566
    %6570 = vset.pattern.permute.xlu0 0
    %6571 = vperm.xlu0 %6570, %v6545
    %v6572 = vpop.permute.xlu0 %6571
    %6575 = vset.pattern.permute.xlu0 0
    %6576 = vperm.xlu0 %6575, %v6546
    %v6577 = vpop.permute.xlu0 %6576
    %6580 = vset.pattern.permute.xlu0 0
    %6581 = vperm.xlu0 %6580, %v6547
    %v6582 = vpop.permute.xlu0 %6581
    %6585 = vset.pattern.permute.xlu0 0
    %6586 = vperm.xlu0 %6585, %v6548
    %v6587 = vpop.permute.xlu0 %6586
    %v6589 = vmul.f32 %v132, %v6552
    %v6590 = vmul.f32 %v133, %v6557
    %v6591 = vmul.f32 %v134, %v6562
    %v6592 = vmul.f32 %v135, %v6567
    %v6593 = vmul.f32 %v136, %v6572
    %v6594 = vmul.f32 %v137, %v6577
    %v6595 = vmul.f32 %v138, %v6582
    %v6596 = vmul.f32 %v139, %v6587
    %v6597 = vsel %vm171, %v6589, 0.0
    %v6598 = vrot.slane %v6597, 4
    %v6599 = vadd.f32 %v6597, %v6598
    %v6600 = vrot.slane %v6599, 2
    %v6601 = vadd.f32 %v6599, %v6600
    %v6602 = vrot.slane %v6601, 1
    %v6603 = vadd.f32 %v6601, %v6602
    %v6604 = vsel %vm171, %v6590, 0.0
    %v6605 = vrot.slane %v6604, 4
    %v6606 = vadd.f32 %v6604, %v6605
    %v6607 = vrot.slane %v6606, 2
    %v6608 = vadd.f32 %v6606, %v6607
    %v6609 = vrot.slane %v6608, 1
    %v6610 = vadd.f32 %v6608, %v6609
    %v6611 = vsel %vm171, %v6591, 0.0
    %v6612 = vrot.slane %v6611, 4
    %v6613 = vadd.f32 %v6611, %v6612
    %v6614 = vrot.slane %v6613, 2
    %v6615 = vadd.f32 %v6613, %v6614
    %v6616 = vrot.slane %v6615, 1
    %v6617 = vadd.f32 %v6615, %v6616
    %v6618 = vsel %vm171, %v6592, 0.0
    %v6619 = vrot.slane %v6618, 4
    %v6620 = vadd.f32 %v6618, %v6619
    %v6621 = vrot.slane %v6620, 2
    %v6622 = vadd.f32 %v6620, %v6621
    %v6623 = vrot.slane %v6622, 1
    %v6624 = vadd.f32 %v6622, %v6623
    %v6625 = vsel %vm171, %v6593, 0.0
    %v6626 = vrot.slane %v6625, 4
    %v6627 = vadd.f32 %v6625, %v6626
    %v6628 = vrot.slane %v6627, 2
    %v6629 = vadd.f32 %v6627, %v6628
    %v6630 = vrot.slane %v6629, 1
    %v6631 = vadd.f32 %v6629, %v6630
    %v6632 = vsel %vm171, %v6594, 0.0
    %v6633 = vrot.slane %v6632, 4
    %v6634 = vadd.f32 %v6632, %v6633
    %v6635 = vrot.slane %v6634, 2
    %v6636 = vadd.f32 %v6634, %v6635
    %v6637 = vrot.slane %v6636, 1
    %v6638 = vadd.f32 %v6636, %v6637
    %v6639 = vsel %vm171, %v6595, 0.0
    %v6640 = vrot.slane %v6639, 4
    %v6641 = vadd.f32 %v6639, %v6640
    %v6642 = vrot.slane %v6641, 2
    %v6643 = vadd.f32 %v6641, %v6642
    %v6644 = vrot.slane %v6643, 1
    %v6645 = vadd.f32 %v6643, %v6644
    %v6646 = vsel %vm171, %v6596, 0.0
    %v6647 = vrot.slane %v6646, 4
    %v6648 = vadd.f32 %v6646, %v6647
    %v6649 = vrot.slane %v6648, 2
    %v6650 = vadd.f32 %v6648, %v6649
    %v6651 = vrot.slane %v6650, 1
    %v6652 = vadd.f32 %v6650, %v6651
    %v6653 = vxor.u32 %v6158, 2147483648
    %v6654 = vmul.f32 %v6653, 1.442695
    %v6655 = vpow.pop %v6654
    %v6656 = vadd.f32 %v6655, 1.0
    %v6657 = vrcp.pop %v6656
    %v6658 = vmul.f32 1.0, %v6657
    %v6667 = vsel %vm256, %v6610, %v6603
    %v6668 = vsel %vm258, %v6617, %v6667
    %v6669 = vsel %vm260, %v6624, %v6668
    %v6670 = vsel %vm262, %v6631, %v6669
    %v6671 = vsel %vm264, %v6638, %v6670
    %v6672 = vsel %vm266, %v6645, %v6671
    %v6673 = vsel %vm268, %v6652, %v6672
    %6674 = vrot.lane.b32.xlu0 %v6673, 16
    %v6675 = vpop.permute.xlu0 %6674
    %v6677 = vmul.f32 %v6658, %v6675
    %s6678 = scalar_lea.vmem [#allocation8], 56
    %v6679 = vld [vmem:[%s6678] sm:$0xff]
    %v6680 = vsel %vm547, %v6679, %v6677
    %v6682 = vsel %vm970, %v6680, 0
    %6684 = vmatprep.subr.mxu0 0.0
    %6685 = vmatpush1.msra.mxu0 %v157
    %6686 = vmatprep.subr.mxu0 0.0
    %6687 = vmatpush1.msra.mxu0 %v158
    %6688 = vmatprep.subr.mxu0 0.0
    %6689 = vmatpush1.msra.mxu0 %v159
    %6690 = vmatprep.subr.mxu0 0.0
    %6691 = vmatpush1.msra.mxu0 %v160
    %6692 = vmatprep.subr.mxu0 0.0
    %6693 = vmatpush1.msra.mxu0 %v161
    %6694 = vmatprep.subr.mxu0 0.0
    %6695 = vmatpush1.msra.mxu0 %v162
    %6696 = vmatprep.subr.mxu0 0.0
    %6697 = vmatpush1.msra.mxu0 0.0
    %6698 = vmatprep.subr.mxu0 0.0
    %6699 = vmatpush1.msra.mxu0 0.0
    %6700 = vmatprep.subr.mxu0 0.0
    %6701 = vmatpush1.msra.mxu0 0.0
    %6702 = vmatprep.subr.mxu0 0.0
    %6703 = vmatpush1.msra.mxu0 0.0
    %6704 = vmatprep.subr.mxu0 0.0
    %6705 = vmatpush1.msra.mxu0 0.0
    %6706 = vmatprep.subr.mxu0 0.0
    %6707 = vmatpush1.msra.mxu0 0.0
    %6708 = vmatprep.subr.mxu0 0.0
    %6709 = vmatpush1.msra.mxu0 0.0
    %6710 = vmatprep.subr.mxu0 0.0
    %6711 = vmatpush1.msra.mxu0 0.0
    %6712 = vmatprep.subr.mxu0 0.0
    %6713 = vmatpush1.msra.mxu0 0.0
    %6714 = vmatprep.subr.mxu0 0.0
    %6715 = vmatpush1.msra.mxu0 0.0
    %6716 = vmatprep.subr.mxu0 0.0
    %6717 = vmatpush1.msra.mxu0 0.0
    %6718 = vmatprep.subr.mxu0 0.0
    %6719 = vmatpush1.msra.mxu0 0.0
    %6720 = vmatprep.subr.mxu0 0.0
    %6721 = vmatpush1.msra.mxu0 0.0
    %6722 = vmatprep.subr.mxu0 0.0
    %6723 = vmatpush1.msra.mxu0 0.0
    %6724 = vmatprep.subr.mxu0 0.0
    %6725 = vmatpush1.msra.mxu0 0.0
    %6726 = vmatprep.subr.mxu0 0.0
    %6727 = vmatpush1.msra.mxu0 0.0
    %6728 = vmatprep.subr.mxu0 0.0
    %6729 = vmatpush1.msra.mxu0 0.0
    %6730 = vmatprep.subr.mxu0 0.0
    %6731 = vmatpush1.msra.mxu0 0.0
    %6732 = vmatprep.subr.mxu0 0.0
    %6733 = vmatpush1.msra.mxu0 0.0
    %6734 = vmatprep.subr.mxu0 0.0
    %6735 = vmatpush1.msra.mxu0 0.0
    %6736 = vmatprep.subr.mxu0 0.0
    %6737 = vmatpush1.msra.mxu0 0.0
    %6738 = vmatprep.subr.mxu0 0.0
    %6739 = vmatpush1.msra.mxu0 0.0
    %6740 = vmatprep.subr.mxu0 0.0
    %6741 = vmatpush1.msra.mxu0 0.0
    %6742 = vmatprep.subr.mxu0 0.0
    %6743 = vmatpush1.msra.mxu0 0.0
    %6744 = vmatprep.subr.mxu0 0.0
    %6745 = vmatpush1.msra.mxu0 0.0
    %6746 = vmatprep.subr.mxu0 0.0
    %6747 = vmatpush1.msra.mxu0 0.0
    %6748 = vmatprep.mubr.f32.mxu0 0.0
    %6749 = vmatmul.mubr.f32.gmra.mrb[0].mxu0 %v6682
    %v6750 = vpop.f32.mrb[0].mxu0
    %v6751 = vadd.f32 %v968, %v6750
    %v6752 = vpop.f32.mrb[0].mxu0
    %6753 = vdwg.mxu0
    %6755 = vrot.lane.b32.xlu0 %v6158, 80
    %v6756 = vpop.permute.xlu0 %6755
    %6757 = vrot.lane.b32.xlu0 %v6160, 80
    %v6758 = vpop.permute.xlu0 %6757
    %v6759 = vsel %vm1049, %v6756, %v6758
    %v6761 = vadd.f32 %v6751, %v6759
    %v6762 = vxor.u32 %v6761, 2147483648
    %v6763 = vmul.f32 %v6762, 1.442695
    %v6764 = vpow.pop %v6763
    %v6765 = vadd.f32 %v6764, 1.0
    %v6766 = vrcp.pop %v6765
    %v6767 = vmul.f32 1.0, %v6766
    %v6768 = vtanh.pop %v6761
    %v6769 = vmul.f32 %v6767, %v5964
    %6771 = vrot.lane.b32.xlu0 %v6768, 64
    %v6772 = vpop.permute.xlu0 %6771
    %v6774 = vmul.f32 %v6767, %v6772
    %6776 = vrot.lane.b32.xlu0 %v6774, 32
    %v6777 = vpop.permute.xlu0 %6776
    %v6779 = vadd.f32 %v6769, %v6777
    %v6780 = vtanh.pop %v6779
    %6782 = vrot.lane.b32.xlu0 %v6780, 64
    %v6783 = vpop.permute.xlu0 %6782
    %v6785 = vmul.f32 %v6767, %v6783
    %6787 = vrot.lane.b32.xlu0 %v6785, 32
    %v6788 = vpop.permute.xlu0 %6787
    %v6789 = vsel %vm171, %v6788, 0
    %6791 = vmatprep.subr.mxu0 0.0
    %6792 = vmatpush1.msra.mxu0 %v166
    %6793 = vmatprep.subr.mxu0 0.0
    %6794 = vmatpush1.msra.mxu0 %v167
    %6795 = vmatprep.subr.mxu0 0.0
    %6796 = vmatpush1.msra.mxu0 %v168
    %6797 = vmatprep.subr.mxu0 0.0
    %6798 = vmatpush1.msra.mxu0 %v169
    %6799 = vmatprep.subr.mxu0 0.0
    %6800 = vmatpush1.msra.mxu0 0.0
    %6801 = vmatprep.subr.mxu0 0.0
    %6802 = vmatpush1.msra.mxu0 0.0
    %6803 = vmatprep.subr.mxu0 0.0
    %6804 = vmatpush1.msra.mxu0 0.0
    %6805 = vmatprep.subr.mxu0 0.0
    %6806 = vmatpush1.msra.mxu0 0.0
    %6807 = vmatprep.subr.mxu0 0.0
    %6808 = vmatpush1.msra.mxu0 0.0
    %6809 = vmatprep.subr.mxu0 0.0
    %6810 = vmatpush1.msra.mxu0 0.0
    %6811 = vmatprep.subr.mxu0 0.0
    %6812 = vmatpush1.msra.mxu0 0.0
    %6813 = vmatprep.subr.mxu0 0.0
    %6814 = vmatpush1.msra.mxu0 0.0
    %6815 = vmatprep.subr.mxu0 0.0
    %6816 = vmatpush1.msra.mxu0 0.0
    %6817 = vmatprep.subr.mxu0 0.0
    %6818 = vmatpush1.msra.mxu0 0.0
    %6819 = vmatprep.subr.mxu0 0.0
    %6820 = vmatpush1.msra.mxu0 0.0
    %6821 = vmatprep.subr.mxu0 0.0
    %6822 = vmatpush1.msra.mxu0 0.0
    %6823 = vmatprep.subr.mxu0 0.0
    %6824 = vmatpush1.msra.mxu0 0.0
    %6825 = vmatprep.subr.mxu0 0.0
    %6826 = vmatpush1.msra.mxu0 0.0
    %6827 = vmatprep.subr.mxu0 0.0
    %6828 = vmatpush1.msra.mxu0 0.0
    %6829 = vmatprep.subr.mxu0 0.0
    %6830 = vmatpush1.msra.mxu0 0.0
    %6831 = vmatprep.subr.mxu0 0.0
    %6832 = vmatpush1.msra.mxu0 0.0
    %6833 = vmatprep.subr.mxu0 0.0
    %6834 = vmatpush1.msra.mxu0 0.0
    %6835 = vmatprep.subr.mxu0 0.0
    %6836 = vmatpush1.msra.mxu0 0.0
    %6837 = vmatprep.subr.mxu0 0.0
    %6838 = vmatpush1.msra.mxu0 0.0
    %6839 = vmatprep.subr.mxu0 0.0
    %6840 = vmatpush1.msra.mxu0 0.0
    %6841 = vmatprep.subr.mxu0 0.0
    %6842 = vmatpush1.msra.mxu0 0.0
    %6843 = vmatprep.subr.mxu0 0.0
    %6844 = vmatpush1.msra.mxu0 0.0
    %6845 = vmatprep.subr.mxu0 0.0
    %6846 = vmatpush1.msra.mxu0 0.0
    %6847 = vmatprep.subr.mxu0 0.0
    %6848 = vmatpush1.msra.mxu0 0.0
    %6849 = vmatprep.subr.mxu0 0.0
    %6850 = vmatpush1.msra.mxu0 0.0
    %6851 = vmatprep.subr.mxu0 0.0
    %6852 = vmatpush1.msra.mxu0 0.0
    %6853 = vmatprep.subr.mxu0 0.0
    %6854 = vmatpush1.msra.mxu0 0.0
    %6855 = vmatprep.mubr.f32.mxu0 0.0
    %6856 = vmatmul.mubr.f32.gmra.mrb[0].mxu0 %v6789
    %v6857 = vpop.f32.mrb[0].mxu0
    %v6858 = vadd.f32 %v1081, %v6857
    %v6859 = vpop.f32.mrb[0].mxu0
    %6860 = vdwg.mxu0
    %s6861 = scalar_lea.vmem [#allocation14], 56
    %6862 = vst [vmem:[%s6861] sm:$0xff] %v6858
    %v6863 = vlaneseq
    %v6864 = vshrl.u32 %v6863, 7
    %v6865 = vsub.s32 %v598, %v6864
    %v6866 = vrot.slane %v6552, %v6865
    %v6867 = vlaneseq
    %v6868 = vshrl.u32 %v6867, 7
    %v6869 = vsub.s32 %v598, %v6868
    %v6870 = vrot.slane %v6557, %v6869
    %v6871 = vlaneseq
    %v6872 = vshrl.u32 %v6871, 7
    %v6873 = vsub.s32 %v598, %v6872
    %v6874 = vrot.slane %v6562, %v6873
    %v6875 = vlaneseq
    %v6876 = vshrl.u32 %v6875, 7
    %v6877 = vsub.s32 %v598, %v6876
    %v6878 = vrot.slane %v6567, %v6877
    %v6879 = vlaneseq
    %v6880 = vshrl.u32 %v6879, 7
    %v6881 = vsub.s32 %v598, %v6880
    %v6882 = vrot.slane %v6572, %v6881
    %v6883 = vlaneseq
    %v6884 = vshrl.u32 %v6883, 7
    %v6885 = vsub.s32 %v598, %v6884
    %v6886 = vrot.slane %v6577, %v6885
    %v6887 = vlaneseq
    %v6888 = vshrl.u32 %v6887, 7
    %v6889 = vsub.s32 %v598, %v6888
    %v6890 = vrot.slane %v6582, %v6889
    %v6891 = vlaneseq
    %v6892 = vshrl.u32 %v6891, 7
    %v6893 = vsub.s32 %v598, %v6892
    %v6894 = vrot.slane %v6587, %v6893
    %v6895 = vsel %vm256, %v6870, %v6866
    %v6896 = vsel %vm258, %v6874, %v6895
    %v6897 = vsel %vm260, %v6878, %v6896
    %v6898 = vsel %vm262, %v6882, %v6897
    %v6899 = vsel %vm264, %v6886, %v6898
    %v6900 = vsel %vm266, %v6890, %v6899
    %v6901 = vsel %vm268, %v6894, %v6900
    %v6903 = vsel %vm639, %v6901, 0.0
    %s6904 = scalar_lea.vmem [#allocation15], 56
    %6905 = vst [vmem:[%s6904] sm:$0xff] %v6903
    // Predicated region
    $region78: #{tpu_custom_call.1} parent=1 // pred_check
      _
    $region79: #{tpu_custom_call.1} parent=1 // pred_check_branch
      %6907 = sbr.rel (0) target = $region81
    $region80: #{tpu_custom_call.1} parent=1 // pred_region
      %s6909 = ssub.s32 1024, 1024
      %6910 = vsyncadd [#allocation5], %s6909
      %s6911 = sshll.u32 [#allocation14], 4
      %s6912 = int_to_ptr.vmem [resolvable:$true] %s6911
      %6917 = dma.vmem_to_hbm [thread:$0]  %s6912, 1024, %s13, [#allocation5], 128, 128, 8
    $region81: #{tpu_custom_call.1} parent=1 // pred_fallthru
      _
    // Predicated region
    $region82: #{tpu_custom_call.1} parent=1 // pred_check
      _
    $region83: #{tpu_custom_call.1} parent=1 // pred_check_branch
      %6919 = sbr.rel (0) target = $region85
    $region84: #{tpu_custom_call.1} parent=1 // pred_region
      %s6921 = ssub.s32 1024, 1024
      %6922 = vsyncadd [#allocation16], %s6921
      %s6923 = sshll.u32 [#allocation15], 4
      %s6924 = int_to_ptr.vmem [resolvable:$true] %s6923
      %6929 = dma.vmem_to_hbm [thread:$0]  %s6924, 1024, %s14, [#allocation16], 128, 128, 8
    $region85: #{tpu_custom_call.1} parent=1 // pred_fallthru
      _
    // Predicated region
    $region86: #{tpu_custom_call.1} parent=1 // pred_check
      _
    $region87: #{tpu_custom_call.1} parent=1 // pred_check_branch
      %6931 = sbr.rel (0) target = $region89
    $region88: #{tpu_custom_call.1} parent=1 // pred_region
      %6932 = dma.done [#allocation5], 1024
    $region89: #{tpu_custom_call.1} parent=1 // pred_fallthru
      _
    // Predicated region
    $region90: #{tpu_custom_call.1} parent=1 // pred_check
      _
    $region91: #{tpu_custom_call.1} parent=1 // pred_check_branch
      %6934 = sbr.rel (0) target = $region93
    $region92: #{tpu_custom_call.1} parent=1 // pred_region
      %6935 = dma.done [#allocation16], 1024
    $region93: #{tpu_custom_call.1} parent=1 // pred_fallthru
      _
    %6936 = vsyncpa [#allocation4], 1
    %6937 = vsyncpa [#allocation7], 1
    %6938 = vsyncpa [#allocation10], 1
    %6939 = vsyncpa [#allocation13], 1
    %6940 = vsyncpa [#allocation5], 1
    %6941 = vsyncpa [#allocation16], 1

</llo_original>
